<compile_context>
chip_gen: v7x
topology: tpu7x:2x2x1
jax: 0.10.0
libtpu: 0.0.40
codegen_flags: <defaults>
</compile_context>

<pallas_src>
import numpy as np
import jax
import jax.numpy as jnp
from jax import lax
from jax.experimental import pallas as pl
from jax.experimental.pallas import tpu as pltpu


# ---------------------------------------------------------------------------
# Static 3x3 / stride-2 / pad-1 tap selector matrices (numpy, shape-dependent)
# ---------------------------------------------------------------------------
def _make_tap_selectors(N, H, W):
    """0/1 matrices G[t] with (G[t] @ flat_nhwc(x)) == tap t of a 3x3/s2/p1 conv.

    flat_nhwc(x) has rows ordered (n, h, w) row-major with channels as the
    trailing matmul dim.  Tap t = 3*kh + kw; rows whose source index falls
    outside the image are left all-zero, which folds the zero padding into
    the selector (so no jnp.pad is needed anywhere).
    """
    Ho, Wo = (H + 1) // 2, (W + 1) // 2
    G = np.zeros((9, N * Ho * Wo, N * H * W), np.float32)
    for kh in range(3):
        for kw in range(3):
            t = 3 * kh + kw
            for i in range(Ho):
                r = 2 * i + kh - 1
                if r < 0 or r >= H:
                    continue
                for j in range(Wo):
                    s = 2 * j + kw - 1
                    if s < 0 or s >= W:
                        continue
                    for n in range(N):
                        G[t, (n * Ho + i) * Wo + j, (n * H + r) * W + s] = 1.0
    return G, Ho, Wo


# ---------------------------------------------------------------------------
# Pallas kernel: all 4 conv3x3/s2 + bias + ReLU layers, activations in VMEM
# ---------------------------------------------------------------------------
def _fused_backbone_kernel(x_ref, *refs):
    """refs = (g1, w1, b1, ..., g4, w4, b4, o1, o2, o3, o4)

    x_ref : (N*H*W, Cin)      bf16  flattened NHWC input
    g*    : (9, M_out, M_in)  bf16  0/1 tap selectors (pad + stride folded in)
    w*    : (9, Cin, Cout)    bf16  conv weights per tap
    b*    : (1, Cout)         f32   bias
    o*    : (M_out, Cout)     f32   per-layer feature output (tiny stores)
    """
    num_layers = len(refs) // 4                    # 3 inputs + 1 output per layer
    in_refs, out_refs = refs[:3 * num_layers], refs[3 * num_layers:]

    a = x_ref[...]                                 # (M0, C0) bf16, VMEM-resident
    for l in range(num_layers):
        g_ref, w_ref, b_ref = in_refs[3 * l: 3 * l + 3]
        m_out, cout = g_ref.shape[1], w_ref.shape[2]
        acc = jnp.zeros((m_out, cout), jnp.float32)
        for t in range(9):                         # unrolled 3x3 taps (static)
            # gather tap t via 0/1 matmul (exact), then apply the tap weights
            p = jnp.dot(g_ref[t], a, preferred_element_type=jnp.float32)
            acc = acc + jnp.dot(p.astype(jnp.bfloat16), w_ref[t],
                                preferred_element_type=jnp.float32)
        acc = jnp.maximum(acc + b_ref[...], 0.0)   # bias + ReLU in f32
        out_refs[l][...] = acc                     # f32 feature store (tiny)
        a = acc.astype(jnp.bfloat16)               # bf16 feed to next layer (MXU)


# ---------------------------------------------------------------------------
# Mask "F.interpolate(mode='nearest')": pure integer gather in plain JAX
# ---------------------------------------------------------------------------
def interpolate_mask_nearest(mask_bool, Ho, Wo):
    N, H, W = mask_bool.shape
    rows = (np.arange(Ho) * H) // Ho
    cols = (np.arange(Wo) * W) // Wo
    return mask_bool[:, rows][:, :, cols]


# ---------------------------------------------------------------------------
# BackboneBase
# ---------------------------------------------------------------------------
class BackboneBase:
    """Synthetic backbone (layer1..layer4, each 3x3/s2 conv + ReLU) wrapped
    exactly like DETR's BackboneBase: returns {name: (features_NCHW, mask)}."""

    def __init__(self, train_backbone, num_channels, return_interm_layers, key):
        # requires_grad_(False) freezing only affects training, not forward.
        del train_backbone
        # TODO(synk): a pretrained ResNet + IntermediateLayerGetter is replaced
        # by this deterministic synthetic 4-stage conv backbone.
        chans = [3, 8, 16, 24, num_channels]
        self.params = []
        for i in range(4):
            key, kw, kb = jax.random.split(key, 3)
            w = jax.random.normal(kw, (3, 3, chans[i], chans[i + 1]),
                                  jnp.float32) * 0.1
            b = jax.random.normal(kb, (chans[i + 1],), jnp.float32) * 0.01
            self.params.append((w, b))
        self.num_channels = num_channels
        if return_interm_layers:
            self.return_layers = {0: '0', 1: '1', 2: '2', 3: '3'}
        else:
            self.return_layers = {3: '0'}
        # one XLA program: glue ops fuse around the single pallas_call
        self._forward_jit = jax.jit(self._forward_impl)

    # -- implementation (traced under jit; shapes are static at trace time) --
    def _forward_impl(self, tensors_nchw, mask_bool):
        N, Cin0, H, W = tensors_nchw.shape

        # Spatial pyramid + tap selectors (numpy constants, built per shape).
        shapes, selectors = [], []
        h, w = H, W
        for _ in range(len(self.params)):
            G, ho, wo = _make_tap_selectors(N, h, w)
            selectors.append(G)
            shapes.append((h, w, ho, wo))
            h, w = ho, wo

        # Flatten NHWC input once; bf16 halves the (already tiny) HBM read.
        x2 = jnp.transpose(tensors_nchw, (0, 2, 3, 1)).reshape(N * H * W, Cin0)
        x2 = x2.astype(jnp.bfloat16)

        flat_inputs, out_shapes = [], []
        for l, (wgt, bias) in enumerate(self.params):
            cin, cout = wgt.shape[2], wgt.shape[3]
            _, _, ho, wo = shapes[l]
            flat_inputs += [
                jnp.asarray(selectors[l], jnp.bfloat16),          # (9, Mo, Mi)
                wgt.reshape(9, cin, cout).astype(jnp.bfloat16),   # (9, Ci, Co)
                bias.reshape(1, cout).astype(jnp.float32),        # (1, Co)
            ]
            out_shapes.append(
                jax.ShapeDtypeStruct((N * ho * wo, cout), jnp.float32))

        n_in = 1 + len(flat_inputs)
        # Total VMEM footprint (all selectors + weights + activations) is
        # ~1.4 MiB at these shapes; no grid -> no double-buffering needed.
        outs = pl.pallas_call(
            _fused_backbone_kernel,
            out_shape=tuple(out_shapes),
            in_specs=[pl.BlockSpec(memory_space=pltpu.MemorySpace.VMEM)] * n_in,
            out_specs=tuple(pl.BlockSpec(memory_space=pltpu.MemorySpace.VMEM)
                            for _ in out_shapes),
            compiler_params=pltpu.CompilerParams(
                vmem_limit_bytes=16 * 1024 * 1024),
        )(x2, *flat_inputs)

        out = {}
        for l, name in self.return_layers.items():
            _, _, ho, wo = shapes[l]
            cout = self.params[l][0].shape[3]
            feat = outs[l].reshape(N, ho, wo, cout).transpose(0, 3, 1, 2)  # NCHW
            m = interpolate_mask_nearest(mask_bool, ho, wo)
            out[name] = (feat, m)            # NestedTensor(features, mask)
        return out

    def forward(self, tensors_nchw, mask_bool):
        return self._forward_jit(tensors_nchw, mask_bool)


# ---------------------------------------------------------------------------
if __name__ == "__main__":
    key = jax.random.PRNGKey(0)
    kimg, kparams = jax.random.split(key)

    N, C, H, W = 2, 3, 16, 16
    imgs = jax.random.normal(kimg, (N, C, H, W), jnp.float32)

    # NestedTensor mask: True marks padded pixels (deterministic padding)
    valid_w = jnp.array([W, 12])
    valid_h = jnp.array([H, 10])
    pad_cols = jnp.arange(W)[None, None, :] >= valid_w[:, None, None]
    pad_rows = jnp.arange(H)[None, :, None] >= valid_h[:, None, None]
    mask = jnp.logical_or(pad_cols, pad_rows)            # (N, H, W) bool

    model = BackboneBase(train_backbone=False, num_channels=32,
                         return_interm_layers=True, key=kparams)
    out = model.forward(imgs, mask)
    out = jax.tree_util.tree_map(jax.block_until_ready, out)

    # shape / dtype checks (layer '1'/'2' included so NCHW ordering is validated,
    # not just the Cout==Ho coincidence of layer '0')
    assert out['0'][0].shape == (N, 8, 8, 8)
    assert out['1'][0].shape == (N, 16, 4, 4)
    assert out['2'][0].shape == (N, 24, 2, 2)
    assert out['3'][0].shape == (N, 32, 1, 1)
    assert out['0'][1].shape == (N, 8, 8) and out['0'][1].dtype == jnp.bool_
    assert out['1'][1].shape == (N, 4, 4)
    assert out['3'][1].shape == (N, 1, 1) and out['3'][1].dtype == jnp.bool_

    # numerical check against an f32 XLA conv reference (kernel uses bf16 MXU
    # inputs with f32 accumulation -> loose tolerance)
    xcur, ref = imgs, {}
    for li, (wgt, bias) in enumerate(model.params):
        xcur = lax.conv_general_dilated(
            xcur, wgt, window_strides=(2, 2), padding=((1, 1), (1, 1)),
            dimension_numbers=('NCHW', 'HWIO', 'NCHW'))
        xcur = jnp.maximum(xcur + bias[None, :, None, None], 0.0)
        ref[str(li)] = xcur
    for name in ['0', '1', '2', '3']:
        np.testing.assert_allclose(np.asarray(out[name][0]),
                                   np.asarray(ref[name]), rtol=5e-2, atol=5e-2)

    print("KERNEL_OK")
</pallas_src>

<mosaic_0001>
module attributes {stable_mosaic.version = 11 : i64} {
  func.func @_fused_backbone_kernel(%arg0: memref<512x3xbf16, #tpu.memory_space<vmem>>, %arg1: memref<9x128x512xbf16, #tpu.memory_space<vmem>>, %arg2: memref<9x3x8xbf16, #tpu.memory_space<vmem>>, %arg3: memref<1x8xf32, #tpu.memory_space<vmem>>, %arg4: memref<9x32x128xbf16, #tpu.memory_space<vmem>>, %arg5: memref<9x8x16xbf16, #tpu.memory_space<vmem>>, %arg6: memref<1x16xf32, #tpu.memory_space<vmem>>, %arg7: memref<9x8x32xbf16, #tpu.memory_space<vmem>>, %arg8: memref<9x16x24xbf16, #tpu.memory_space<vmem>>, %arg9: memref<1x24xf32, #tpu.memory_space<vmem>>, %arg10: memref<9x2x8xbf16, #tpu.memory_space<vmem>>, %arg11: memref<9x24x32xbf16, #tpu.memory_space<vmem>>, %arg12: memref<1x32xf32, #tpu.memory_space<vmem>>, %arg13: memref<128x8xf32, #tpu.memory_space<vmem>>, %arg14: memref<32x16xf32, #tpu.memory_space<vmem>>, %arg15: memref<8x24xf32, #tpu.memory_space<vmem>>, %arg16: memref<2x32xf32, #tpu.memory_space<vmem>>) attributes {dimension_semantics = [], scalar_prefetch = 0 : i64, scratch_operands = 0 : i64, tpu.core_type = #tpu.core_type<tc>} {
    %c0 = arith.constant 0 : index
    %c0_0 = arith.constant 0 : index
    %0 = vector.load %arg0[%c0, %c0_0] : memref<512x3xbf16, #tpu.memory_space<vmem>>, vector<512x3xbf16>
    %cst = arith.constant 0.000000e+00 : f32
    %1 = vector.broadcast %cst : f32 to vector<128x8xf32>
    %c0_1 = arith.constant 0 : index
    %c0_2 = arith.constant 0 : index
    %c0_3 = arith.constant 0 : index
    %2 = vector.load %arg1[%c0_1, %c0_2, %c0_3] : memref<9x128x512xbf16, #tpu.memory_space<vmem>>, vector<1x128x512xbf16>
    %3 = vector.shape_cast %2 : vector<1x128x512xbf16> to vector<128x512xbf16>
    %cst_4 = arith.constant dense<0.000000e+00> : vector<128x3xf32>
    %4 = tpu.matmul %3, %0, %cst_4 {dimension_numbers = #tpu.dot_dimension_numbers<[1], [0], [0], [1], [0, 0, 1, 1], [], []>} : vector<128x512xbf16>, vector<512x3xbf16>, vector<128x3xf32> -> vector<128x3xf32>
    %5 = arith.truncf %4 : vector<128x3xf32> to vector<128x3xbf16>
    %c0_5 = arith.constant 0 : index
    %c0_6 = arith.constant 0 : index
    %c0_7 = arith.constant 0 : index
    %6 = vector.load %arg2[%c0_5, %c0_6, %c0_7] : memref<9x3x8xbf16, #tpu.memory_space<vmem>>, vector<1x3x8xbf16>
    %7 = vector.shape_cast %6 : vector<1x3x8xbf16> to vector<3x8xbf16>
    %cst_8 = arith.constant dense<0.000000e+00> : vector<128x8xf32>
    %8 = tpu.matmul %5, %7, %cst_8 {dimension_numbers = #tpu.dot_dimension_numbers<[1], [0], [0], [1], [0, 0, 1, 1], [], []>} : vector<128x3xbf16>, vector<3x8xbf16>, vector<128x8xf32> -> vector<128x8xf32>
    %9 = arith.addf %1, %8 : vector<128x8xf32>
    %c1 = arith.constant 1 : index
    %c0_9 = arith.constant 0 : index
    %c0_10 = arith.constant 0 : index
    %10 = vector.load %arg1[%c1, %c0_9, %c0_10] : memref<9x128x512xbf16, #tpu.memory_space<vmem>>, vector<1x128x512xbf16>
    %11 = vector.shape_cast %10 : vector<1x128x512xbf16> to vector<128x512xbf16>
    %cst_11 = arith.constant dense<0.000000e+00> : vector<128x3xf32>
    %12 = tpu.matmul %11, %0, %cst_11 {dimension_numbers = #tpu.dot_dimension_numbers<[1], [0], [0], [1], [0, 0, 1, 1], [], []>} : vector<128x512xbf16>, vector<512x3xbf16>, vector<128x3xf32> -> vector<128x3xf32>
    %13 = arith.truncf %12 : vector<128x3xf32> to vector<128x3xbf16>
    %c1_12 = arith.constant 1 : index
    %c0_13 = arith.constant 0 : index
    %c0_14 = arith.constant 0 : index
    %14 = vector.load %arg2[%c1_12, %c0_13, %c0_14] : memref<9x3x8xbf16, #tpu.memory_space<vmem>>, vector<1x3x8xbf16>
    %15 = vector.shape_cast %14 : vector<1x3x8xbf16> to vector<3x8xbf16>
    %cst_15 = arith.constant dense<0.000000e+00> : vector<128x8xf32>
    %16 = tpu.matmul %13, %15, %cst_15 {dimension_numbers = #tpu.dot_dimension_numbers<[1], [0], [0], [1], [0, 0, 1, 1], [], []>} : vector<128x3xbf16>, vector<3x8xbf16>, vector<128x8xf32> -> vector<128x8xf32>
    %17 = arith.addf %9, %16 : vector<128x8xf32>
    %c2 = arith.constant 2 : index
    %c0_16 = arith.constant 0 : index
    %c0_17 = arith.constant 0 : index
    %18 = vector.load %arg1[%c2, %c0_16, %c0_17] : memref<9x128x512xbf16, #tpu.memory_space<vmem>>, vector<1x128x512xbf16>
    %19 = vector.shape_cast %18 : vector<1x128x512xbf16> to vector<128x512xbf16>
    %cst_18 = arith.constant dense<0.000000e+00> : vector<128x3xf32>
    %20 = tpu.matmul %19, %0, %cst_18 {dimension_numbers = #tpu.dot_dimension_numbers<[1], [0], [0], [1], [0, 0, 1, 1], [], []>} : vector<128x512xbf16>, vector<512x3xbf16>, vector<128x3xf32> -> vector<128x3xf32>
    %21 = arith.truncf %20 : vector<128x3xf32> to vector<128x3xbf16>
    %c2_19 = arith.constant 2 : index
    %c0_20 = arith.constant 0 : index
    %c0_21 = arith.constant 0 : index
    %22 = vector.load %arg2[%c2_19, %c0_20, %c0_21] : memref<9x3x8xbf16, #tpu.memory_space<vmem>>, vector<1x3x8xbf16>
    %23 = vector.shape_cast %22 : vector<1x3x8xbf16> to vector<3x8xbf16>
    %cst_22 = arith.constant dense<0.000000e+00> : vector<128x8xf32>
    %24 = tpu.matmul %21, %23, %cst_22 {dimension_numbers = #tpu.dot_dimension_numbers<[1], [0], [0], [1], [0, 0, 1, 1], [], []>} : vector<128x3xbf16>, vector<3x8xbf16>, vector<128x8xf32> -> vector<128x8xf32>
    %25 = arith.addf %17, %24 : vector<128x8xf32>
    %c3 = arith.constant 3 : index
    %c0_23 = arith.constant 0 : index
    %c0_24 = arith.constant 0 : index
    %26 = vector.load %arg1[%c3, %c0_23, %c0_24] : memref<9x128x512xbf16, #tpu.memory_space<vmem>>, vector<1x128x512xbf16>
    %27 = vector.shape_cast %26 : vector<1x128x512xbf16> to vector<128x512xbf16>
    %cst_25 = arith.constant dense<0.000000e+00> : vector<128x3xf32>
    %28 = tpu.matmul %27, %0, %cst_25 {dimension_numbers = #tpu.dot_dimension_numbers<[1], [0], [0], [1], [0, 0, 1, 1], [], []>} : vector<128x512xbf16>, vector<512x3xbf16>, vector<128x3xf32> -> vector<128x3xf32>
    %29 = arith.truncf %28 : vector<128x3xf32> to vector<128x3xbf16>
    %c3_26 = arith.constant 3 : index
    %c0_27 = arith.constant 0 : index
    %c0_28 = arith.constant 0 : index
    %30 = vector.load %arg2[%c3_26, %c0_27, %c0_28] : memref<9x3x8xbf16, #tpu.memory_space<vmem>>, vector<1x3x8xbf16>
    %31 = vector.shape_cast %30 : vector<1x3x8xbf16> to vector<3x8xbf16>
    %cst_29 = arith.constant dense<0.000000e+00> : vector<128x8xf32>
    %32 = tpu.matmul %29, %31, %cst_29 {dimension_numbers = #tpu.dot_dimension_numbers<[1], [0], [0], [1], [0, 0, 1, 1], [], []>} : vector<128x3xbf16>, vector<3x8xbf16>, vector<128x8xf32> -> vector<128x8xf32>
    %33 = arith.addf %25, %32 : vector<128x8xf32>
    %c4 = arith.constant 4 : index
    %c0_30 = arith.constant 0 : index
    %c0_31 = arith.constant 0 : index
    %34 = vector.load %arg1[%c4, %c0_30, %c0_31] : memref<9x128x512xbf16, #tpu.memory_space<vmem>>, vector<1x128x512xbf16>
    %35 = vector.shape_cast %34 : vector<1x128x512xbf16> to vector<128x512xbf16>
    %cst_32 = arith.constant dense<0.000000e+00> : vector<128x3xf32>
    %36 = tpu.matmul %35, %0, %cst_32 {dimension_numbers = #tpu.dot_dimension_numbers<[1], [0], [0], [1], [0, 0, 1, 1], [], []>} : vector<128x512xbf16>, vector<512x3xbf16>, vector<128x3xf32> -> vector<128x3xf32>
    %37 = arith.truncf %36 : vector<128x3xf32> to vector<128x3xbf16>
    %c4_33 = arith.constant 4 : index
    %c0_34 = arith.constant 0 : index
    %c0_35 = arith.constant 0 : index
    %38 = vector.load %arg2[%c4_33, %c0_34, %c0_35] : memref<9x3x8xbf16, #tpu.memory_space<vmem>>, vector<1x3x8xbf16>
    %39 = vector.shape_cast %38 : vector<1x3x8xbf16> to vector<3x8xbf16>
    %cst_36 = arith.constant dense<0.000000e+00> : vector<128x8xf32>
    %40 = tpu.matmul %37, %39, %cst_36 {dimension_numbers = #tpu.dot_dimension_numbers<[1], [0], [0], [1], [0, 0, 1, 1], [], []>} : vector<128x3xbf16>, vector<3x8xbf16>, vector<128x8xf32> -> vector<128x8xf32>
    %41 = arith.addf %33, %40 : vector<128x8xf32>
    %c5 = arith.constant 5 : index
    %c0_37 = arith.constant 0 : index
    %c0_38 = arith.constant 0 : index
    %42 = vector.load %arg1[%c5, %c0_37, %c0_38] : memref<9x128x512xbf16, #tpu.memory_space<vmem>>, vector<1x128x512xbf16>
    %43 = vector.shape_cast %42 : vector<1x128x512xbf16> to vector<128x512xbf16>
    %cst_39 = arith.constant dense<0.000000e+00> : vector<128x3xf32>
    %44 = tpu.matmul %43, %0, %cst_39 {dimension_numbers = #tpu.dot_dimension_numbers<[1], [0], [0], [1], [0, 0, 1, 1], [], []>} : vector<128x512xbf16>, vector<512x3xbf16>, vector<128x3xf32> -> vector<128x3xf32>
    %45 = arith.truncf %44 : vector<128x3xf32> to vector<128x3xbf16>
    %c5_40 = arith.constant 5 : index
    %c0_41 = arith.constant 0 : index
    %c0_42 = arith.constant 0 : index
    %46 = vector.load %arg2[%c5_40, %c0_41, %c0_42] : memref<9x3x8xbf16, #tpu.memory_space<vmem>>, vector<1x3x8xbf16>
    %47 = vector.shape_cast %46 : vector<1x3x8xbf16> to vector<3x8xbf16>
    %cst_43 = arith.constant dense<0.000000e+00> : vector<128x8xf32>
    %48 = tpu.matmul %45, %47, %cst_43 {dimension_numbers = #tpu.dot_dimension_numbers<[1], [0], [0], [1], [0, 0, 1, 1], [], []>} : vector<128x3xbf16>, vector<3x8xbf16>, vector<128x8xf32> -> vector<128x8xf32>
    %49 = arith.addf %41, %48 : vector<128x8xf32>
    %c6 = arith.constant 6 : index
    %c0_44 = arith.constant 0 : index
    %c0_45 = arith.constant 0 : index
    %50 = vector.load %arg1[%c6, %c0_44, %c0_45] : memref<9x128x512xbf16, #tpu.memory_space<vmem>>, vector<1x128x512xbf16>
    %51 = vector.shape_cast %50 : vector<1x128x512xbf16> to vector<128x512xbf16>
    %cst_46 = arith.constant dense<0.000000e+00> : vector<128x3xf32>
    %52 = tpu.matmul %51, %0, %cst_46 {dimension_numbers = #tpu.dot_dimension_numbers<[1], [0], [0], [1], [0, 0, 1, 1], [], []>} : vector<128x512xbf16>, vector<512x3xbf16>, vector<128x3xf32> -> vector<128x3xf32>
    %53 = arith.truncf %52 : vector<128x3xf32> to vector<128x3xbf16>
    %c6_47 = arith.constant 6 : index
    %c0_48 = arith.constant 0 : index
    %c0_49 = arith.constant 0 : index
    %54 = vector.load %arg2[%c6_47, %c0_48, %c0_49] : memref<9x3x8xbf16, #tpu.memory_space<vmem>>, vector<1x3x8xbf16>
    %55 = vector.shape_cast %54 : vector<1x3x8xbf16> to vector<3x8xbf16>
    %cst_50 = arith.constant dense<0.000000e+00> : vector<128x8xf32>
    %56 = tpu.matmul %53, %55, %cst_50 {dimension_numbers = #tpu.dot_dimension_numbers<[1], [0], [0], [1], [0, 0, 1, 1], [], []>} : vector<128x3xbf16>, vector<3x8xbf16>, vector<128x8xf32> -> vector<128x8xf32>
    %57 = arith.addf %49, %56 : vector<128x8xf32>
    %c7 = arith.constant 7 : index
    %c0_51 = arith.constant 0 : index
    %c0_52 = arith.constant 0 : index
    %58 = vector.load %arg1[%c7, %c0_51, %c0_52] : memref<9x128x512xbf16, #tpu.memory_space<vmem>>, vector<1x128x512xbf16>
    %59 = vector.shape_cast %58 : vector<1x128x512xbf16> to vector<128x512xbf16>
    %cst_53 = arith.constant dense<0.000000e+00> : vector<128x3xf32>
    %60 = tpu.matmul %59, %0, %cst_53 {dimension_numbers = #tpu.dot_dimension_numbers<[1], [0], [0], [1], [0, 0, 1, 1], [], []>} : vector<128x512xbf16>, vector<512x3xbf16>, vector<128x3xf32> -> vector<128x3xf32>
    %61 = arith.truncf %60 : vector<128x3xf32> to vector<128x3xbf16>
    %c7_54 = arith.constant 7 : index
    %c0_55 = arith.constant 0 : index
    %c0_56 = arith.constant 0 : index
    %62 = vector.load %arg2[%c7_54, %c0_55, %c0_56] : memref<9x3x8xbf16, #tpu.memory_space<vmem>>, vector<1x3x8xbf16>
    %63 = vector.shape_cast %62 : vector<1x3x8xbf16> to vector<3x8xbf16>
    %cst_57 = arith.constant dense<0.000000e+00> : vector<128x8xf32>
    %64 = tpu.matmul %61, %63, %cst_57 {dimension_numbers = #tpu.dot_dimension_numbers<[1], [0], [0], [1], [0, 0, 1, 1], [], []>} : vector<128x3xbf16>, vector<3x8xbf16>, vector<128x8xf32> -> vector<128x8xf32>
    %65 = arith.addf %57, %64 : vector<128x8xf32>
    %c8 = arith.constant 8 : index
    %c0_58 = arith.constant 0 : index
    %c0_59 = arith.constant 0 : index
    %66 = vector.load %arg1[%c8, %c0_58, %c0_59] : memref<9x128x512xbf16, #tpu.memory_space<vmem>>, vector<1x128x512xbf16>
    %67 = vector.shape_cast %66 : vector<1x128x512xbf16> to vector<128x512xbf16>
    %cst_60 = arith.constant dense<0.000000e+00> : vector<128x3xf32>
    %68 = tpu.matmul %67, %0, %cst_60 {dimension_numbers = #tpu.dot_dimension_numbers<[1], [0], [0], [1], [0, 0, 1, 1], [], []>} : vector<128x512xbf16>, vector<512x3xbf16>, vector<128x3xf32> -> vector<128x3xf32>
    %69 = arith.truncf %68 : vector<128x3xf32> to vector<128x3xbf16>
    %c8_61 = arith.constant 8 : index
    %c0_62 = arith.constant 0 : index
    %c0_63 = arith.constant 0 : index
    %70 = vector.load %arg2[%c8_61, %c0_62, %c0_63] : memref<9x3x8xbf16, #tpu.memory_space<vmem>>, vector<1x3x8xbf16>
    %71 = vector.shape_cast %70 : vector<1x3x8xbf16> to vector<3x8xbf16>
    %cst_64 = arith.constant dense<0.000000e+00> : vector<128x8xf32>
    %72 = tpu.matmul %69, %71, %cst_64 {dimension_numbers = #tpu.dot_dimension_numbers<[1], [0], [0], [1], [0, 0, 1, 1], [], []>} : vector<128x3xbf16>, vector<3x8xbf16>, vector<128x8xf32> -> vector<128x8xf32>
    %73 = arith.addf %65, %72 : vector<128x8xf32>
    %c0_65 = arith.constant 0 : index
    %c0_66 = arith.constant 0 : index
    %74 = vector.load %arg3[%c0_65, %c0_66] : memref<1x8xf32, #tpu.memory_space<vmem>>, vector<1x8xf32>
    %75 = vector.broadcast %74 : vector<1x8xf32> to vector<128x8xf32>
    %76 = arith.addf %73, %75 : vector<128x8xf32>
    %cst_67 = arith.constant 0.000000e+00 : f32
    %77 = vector.broadcast %cst_67 : f32 to vector<128x8xf32>
    %78 = arith.maximumf %76, %77 : vector<128x8xf32>
    %c0_68 = arith.constant 0 : index
    %c0_69 = arith.constant 0 : index
    %79 = vector.load %arg13[%c0_68, %c0_69] : memref<128x8xf32, #tpu.memory_space<vmem>>, vector<128x8xf32>
    tpu.vector_store %arg13[%c0_68, %c0_69], %78 {strides = array<i32>} : memref<128x8xf32, #tpu.memory_space<vmem>>, vector<128x8xf32>,
    %80 = arith.truncf %78 : vector<128x8xf32> to vector<128x8xbf16>
    %cst_70 = arith.constant 0.000000e+00 : f32
    %81 = vector.broadcast %cst_70 : f32 to vector<32x16xf32>
    %c0_71 = arith.constant 0 : index
    %c0_72 = arith.constant 0 : index
    %c0_73 = arith.constant 0 : index
    %82 = vector.load %arg4[%c0_71, %c0_72, %c0_73] : memref<9x32x128xbf16, #tpu.memory_space<vmem>>, vector<1x32x128xbf16>
    %83 = vector.shape_cast %82 : vector<1x32x128xbf16> to vector<32x128xbf16>
    %cst_74 = arith.constant dense<0.000000e+00> : vector<32x8xf32>
    %84 = tpu.matmul %83, %80, %cst_74 {dimension_numbers = #tpu.dot_dimension_numbers<[1], [0], [0], [1], [0, 0, 1, 1], [], []>} : vector<32x128xbf16>, vector<128x8xbf16>, vector<32x8xf32> -> vector<32x8xf32>
    %85 = arith.truncf %84 : vector<32x8xf32> to vector<32x8xbf16>
    %c0_75 = arith.constant 0 : index
    %c0_76 = arith.constant 0 : index
    %c0_77 = arith.constant 0 : index
    %86 = vector.load %arg5[%c0_75, %c0_76, %c0_77] : memref<9x8x16xbf16, #tpu.memory_space<vmem>>, vector<1x8x16xbf16>
    %87 = vector.shape_cast %86 : vector<1x8x16xbf16> to vector<8x16xbf16>
    %cst_78 = arith.constant dense<0.000000e+00> : vector<32x16xf32>
    %88 = tpu.matmul %85, %87, %cst_78 {dimension_numbers = #tpu.dot_dimension_numbers<[1], [0], [0], [1], [0, 0, 1, 1], [], []>} : vector<32x8xbf16>, vector<8x16xbf16>, vector<32x16xf32> -> vector<32x16xf32>
    %89 = arith.addf %81, %88 : vector<32x16xf32>
    %c1_79 = arith.constant 1 : index
    %c0_80 = arith.constant 0 : index
    %c0_81 = arith.constant 0 : index
    %90 = vector.load %arg4[%c1_79, %c0_80, %c0_81] : memref<9x32x128xbf16, #tpu.memory_space<vmem>>, vector<1x32x128xbf16>
    %91 = vector.shape_cast %90 : vector<1x32x128xbf16> to vector<32x128xbf16>
    %cst_82 = arith.constant dense<0.000000e+00> : vector<32x8xf32>
    %92 = tpu.matmul %91, %80, %cst_82 {dimension_numbers = #tpu.dot_dimension_numbers<[1], [0], [0], [1], [0, 0, 1, 1], [], []>} : vector<32x128xbf16>, vector<128x8xbf16>, vector<32x8xf32> -> vector<32x8xf32>
    %93 = arith.truncf %92 : vector<32x8xf32> to vector<32x8xbf16>
    %c1_83 = arith.constant 1 : index
    %c0_84 = arith.constant 0 : index
    %c0_85 = arith.constant 0 : index
    %94 = vector.load %arg5[%c1_83, %c0_84, %c0_85] : memref<9x8x16xbf16, #tpu.memory_space<vmem>>, vector<1x8x16xbf16>
    %95 = vector.shape_cast %94 : vector<1x8x16xbf16> to vector<8x16xbf16>
    %cst_86 = arith.constant dense<0.000000e+00> : vector<32x16xf32>
    %96 = tpu.matmul %93, %95, %cst_86 {dimension_numbers = #tpu.dot_dimension_numbers<[1], [0], [0], [1], [0, 0, 1, 1], [], []>} : vector<32x8xbf16>, vector<8x16xbf16>, vector<32x16xf32> -> vector<32x16xf32>
    %97 = arith.addf %89, %96 : vector<32x16xf32>
    %c2_87 = arith.constant 2 : index
    %c0_88 = arith.constant 0 : index
    %c0_89 = arith.constant 0 : index
    %98 = vector.load %arg4[%c2_87, %c0_88, %c0_89] : memref<9x32x128xbf16, #tpu.memory_space<vmem>>, vector<1x32x128xbf16>
    %99 = vector.shape_cast %98 : vector<1x32x128xbf16> to vector<32x128xbf16>
    %cst_90 = arith.constant dense<0.000000e+00> : vector<32x8xf32>
    %100 = tpu.matmul %99, %80, %cst_90 {dimension_numbers = #tpu.dot_dimension_numbers<[1], [0], [0], [1], [0, 0, 1, 1], [], []>} : vector<32x128xbf16>, vector<128x8xbf16>, vector<32x8xf32> -> vector<32x8xf32>
    %101 = arith.truncf %100 : vector<32x8xf32> to vector<32x8xbf16>
    %c2_91 = arith.constant 2 : index
    %c0_92 = arith.constant 0 : index
    %c0_93 = arith.constant 0 : index
    %102 = vector.load %arg5[%c2_91, %c0_92, %c0_93] : memref<9x8x16xbf16, #tpu.memory_space<vmem>>, vector<1x8x16xbf16>
    %103 = vector.shape_cast %102 : vector<1x8x16xbf16> to vector<8x16xbf16>
    %cst_94 = arith.constant dense<0.000000e+00> : vector<32x16xf32>
    %104 = tpu.matmul %101, %103, %cst_94 {dimension_numbers = #tpu.dot_dimension_numbers<[1], [0], [0], [1], [0, 0, 1, 1], [], []>} : vector<32x8xbf16>, vector<8x16xbf16>, vector<32x16xf32> -> vector<32x16xf32>
    %105 = arith.addf %97, %104 : vector<32x16xf32>
    %c3_95 = arith.constant 3 : index
    %c0_96 = arith.constant 0 : index
    %c0_97 = arith.constant 0 : index
    %106 = vector.load %arg4[%c3_95, %c0_96, %c0_97] : memref<9x32x128xbf16, #tpu.memory_space<vmem>>, vector<1x32x128xbf16>
    %107 = vector.shape_cast %106 : vector<1x32x128xbf16> to vector<32x128xbf16>
    %cst_98 = arith.constant dense<0.000000e+00> : vector<32x8xf32>
    %108 = tpu.matmul %107, %80, %cst_98 {dimension_numbers = #tpu.dot_dimension_numbers<[1], [0], [0], [1], [0, 0, 1, 1], [], []>} : vector<32x128xbf16>, vector<128x8xbf16>, vector<32x8xf32> -> vector<32x8xf32>
    %109 = arith.truncf %108 : vector<32x8xf32> to vector<32x8xbf16>
    %c3_99 = arith.constant 3 : index
    %c0_100 = arith.constant 0 : index
    %c0_101 = arith.constant 0 : index
    %110 = vector.load %arg5[%c3_99, %c0_100, %c0_101] : memref<9x8x16xbf16, #tpu.memory_space<vmem>>, vector<1x8x16xbf16>
    %111 = vector.shape_cast %110 : vector<1x8x16xbf16> to vector<8x16xbf16>
    %cst_102 = arith.constant dense<0.000000e+00> : vector<32x16xf32>
    %112 = tpu.matmul %109, %111, %cst_102 {dimension_numbers = #tpu.dot_dimension_numbers<[1], [0], [0], [1], [0, 0, 1, 1], [], []>} : vector<32x8xbf16>, vector<8x16xbf16>, vector<32x16xf32> -> vector<32x16xf32>
    %113 = arith.addf %105, %112 : vector<32x16xf32>
    %c4_103 = arith.constant 4 : index
    %c0_104 = arith.constant 0 : index
    %c0_105 = arith.constant 0 : index
    %114 = vector.load %arg4[%c4_103, %c0_104, %c0_105] : memref<9x32x128xbf16, #tpu.memory_space<vmem>>, vector<1x32x128xbf16>
    %115 = vector.shape_cast %114 : vector<1x32x128xbf16> to vector<32x128xbf16>
    %cst_106 = arith.constant dense<0.000000e+00> : vector<32x8xf32>
    %116 = tpu.matmul %115, %80, %cst_106 {dimension_numbers = #tpu.dot_dimension_numbers<[1], [0], [0], [1], [0, 0, 1, 1], [], []>} : vector<32x128xbf16>, vector<128x8xbf16>, vector<32x8xf32> -> vector<32x8xf32>
    %117 = arith.truncf %116 : vector<32x8xf32> to vector<32x8xbf16>
    %c4_107 = arith.constant 4 : index
    %c0_108 = arith.constant 0 : index
    %c0_109 = arith.constant 0 : index
    %118 = vector.load %arg5[%c4_107, %c0_108, %c0_109] : memref<9x8x16xbf16, #tpu.memory_space<vmem>>, vector<1x8x16xbf16>
    %119 = vector.shape_cast %118 : vector<1x8x16xbf16> to vector<8x16xbf16>
    %cst_110 = arith.constant dense<0.000000e+00> : vector<32x16xf32>
    %120 = tpu.matmul %117, %119, %cst_110 {dimension_numbers = #tpu.dot_dimension_numbers<[1], [0], [0], [1], [0, 0, 1, 1], [], []>} : vector<32x8xbf16>, vector<8x16xbf16>, vector<32x16xf32> -> vector<32x16xf32>
    %121 = arith.addf %113, %120 : vector<32x16xf32>
    %c5_111 = arith.constant 5 : index
    %c0_112 = arith.constant 0 : index
    %c0_113 = arith.constant 0 : index
    %122 = vector.load %arg4[%c5_111, %c0_112, %c0_113] : memref<9x32x128xbf16, #tpu.memory_space<vmem>>, vector<1x32x128xbf16>
    %123 = vector.shape_cast %122 : vector<1x32x128xbf16> to vector<32x128xbf16>
    %cst_114 = arith.constant dense<0.000000e+00> : vector<32x8xf32>
    %124 = tpu.matmul %123, %80, %cst_114 {dimension_numbers = #tpu.dot_dimension_numbers<[1], [0], [0], [1], [0, 0, 1, 1], [], []>} : vector<32x128xbf16>, vector<128x8xbf16>, vector<32x8xf32> -> vector<32x8xf32>
    %125 = arith.truncf %124 : vector<32x8xf32> to vector<32x8xbf16>
    %c5_115 = arith.constant 5 : index
    %c0_116 = arith.constant 0 : index
    %c0_117 = arith.constant 0 : index
    %126 = vector.load %arg5[%c5_115, %c0_116, %c0_117] : memref<9x8x16xbf16, #tpu.memory_space<vmem>>, vector<1x8x16xbf16>
    %127 = vector.shape_cast %126 : vector<1x8x16xbf16> to vector<8x16xbf16>
    %cst_118 = arith.constant dense<0.000000e+00> : vector<32x16xf32>
    %128 = tpu.matmul %125, %127, %cst_118 {dimension_numbers = #tpu.dot_dimension_numbers<[1], [0], [0], [1], [0, 0, 1, 1], [], []>} : vector<32x8xbf16>, vector<8x16xbf16>, vector<32x16xf32> -> vector<32x16xf32>
    %129 = arith.addf %121, %128 : vector<32x16xf32>
    %c6_119 = arith.constant 6 : index
    %c0_120 = arith.constant 0 : index
    %c0_121 = arith.constant 0 : index
    %130 = vector.load %arg4[%c6_119, %c0_120, %c0_121] : memref<9x32x128xbf16, #tpu.memory_space<vmem>>, vector<1x32x128xbf16>
    %131 = vector.shape_cast %130 : vector<1x32x128xbf16> to vector<32x128xbf16>
    %cst_122 = arith.constant dense<0.000000e+00> : vector<32x8xf32>
    %132 = tpu.matmul %131, %80, %cst_122 {dimension_numbers = #tpu.dot_dimension_numbers<[1], [0], [0], [1], [0, 0, 1, 1], [], []>} : vector<32x128xbf16>, vector<128x8xbf16>, vector<32x8xf32> -> vector<32x8xf32>
    %133 = arith.truncf %132 : vector<32x8xf32> to vector<32x8xbf16>
    %c6_123 = arith.constant 6 : index
    %c0_124 = arith.constant 0 : index
    %c0_125 = arith.constant 0 : index
    %134 = vector.load %arg5[%c6_123, %c0_124, %c0_125] : memref<9x8x16xbf16, #tpu.memory_space<vmem>>, vector<1x8x16xbf16>
    %135 = vector.shape_cast %134 : vector<1x8x16xbf16> to vector<8x16xbf16>
    %cst_126 = arith.constant dense<0.000000e+00> : vector<32x16xf32>
    %136 = tpu.matmul %133, %135, %cst_126 {dimension_numbers = #tpu.dot_dimension_numbers<[1], [0], [0], [1], [0, 0, 1, 1], [], []>} : vector<32x8xbf16>, vector<8x16xbf16>, vector<32x16xf32> -> vector<32x16xf32>
    %137 = arith.addf %129, %136 : vector<32x16xf32>
    %c7_127 = arith.constant 7 : index
    %c0_128 = arith.constant 0 : index
    %c0_129 = arith.constant 0 : index
    %138 = vector.load %arg4[%c7_127, %c0_128, %c0_129] : memref<9x32x128xbf16, #tpu.memory_space<vmem>>, vector<1x32x128xbf16>
    %139 = vector.shape_cast %138 : vector<1x32x128xbf16> to vector<32x128xbf16>
    %cst_130 = arith.constant dense<0.000000e+00> : vector<32x8xf32>
    %140 = tpu.matmul %139, %80, %cst_130 {dimension_numbers = #tpu.dot_dimension_numbers<[1], [0], [0], [1], [0, 0, 1, 1], [], []>} : vector<32x128xbf16>, vector<128x8xbf16>, vector<32x8xf32> -> vector<32x8xf32>
    %141 = arith.truncf %140 : vector<32x8xf32> to vector<32x8xbf16>
    %c7_131 = arith.constant 7 : index
    %c0_132 = arith.constant 0 : index
    %c0_133 = arith.constant 0 : index
    %142 = vector.load %arg5[%c7_131, %c0_132, %c0_133] : memref<9x8x16xbf16, #tpu.memory_space<vmem>>, vector<1x8x16xbf16>
    %143 = vector.shape_cast %142 : vector<1x8x16xbf16> to vector<8x16xbf16>
    %cst_134 = arith.constant dense<0.000000e+00> : vector<32x16xf32>
    %144 = tpu.matmul %141, %143, %cst_134 {dimension_numbers = #tpu.dot_dimension_numbers<[1], [0], [0], [1], [0, 0, 1, 1], [], []>} : vector<32x8xbf16>, vector<8x16xbf16>, vector<32x16xf32> -> vector<32x16xf32>
    %145 = arith.addf %137, %144 : vector<32x16xf32>
    %c8_135 = arith.constant 8 : index
    %c0_136 = arith.constant 0 : index
    %c0_137 = arith.constant 0 : index
    %146 = vector.load %arg4[%c8_135, %c0_136, %c0_137] : memref<9x32x128xbf16, #tpu.memory_space<vmem>>, vector<1x32x128xbf16>
    %147 = vector.shape_cast %146 : vector<1x32x128xbf16> to vector<32x128xbf16>
    %cst_138 = arith.constant dense<0.000000e+00> : vector<32x8xf32>
    %148 = tpu.matmul %147, %80, %cst_138 {dimension_numbers = #tpu.dot_dimension_numbers<[1], [0], [0], [1], [0, 0, 1, 1], [], []>} : vector<32x128xbf16>, vector<128x8xbf16>, vector<32x8xf32> -> vector<32x8xf32>
    %149 = arith.truncf %148 : vector<32x8xf32> to vector<32x8xbf16>
    %c8_139 = arith.constant 8 : index
    %c0_140 = arith.constant 0 : index
    %c0_141 = arith.constant 0 : index
    %150 = vector.load %arg5[%c8_139, %c0_140, %c0_141] : memref<9x8x16xbf16, #tpu.memory_space<vmem>>, vector<1x8x16xbf16>
    %151 = vector.shape_cast %150 : vector<1x8x16xbf16> to vector<8x16xbf16>
    %cst_142 = arith.constant dense<0.000000e+00> : vector<32x16xf32>
    %152 = tpu.matmul %149, %151, %cst_142 {dimension_numbers = #tpu.dot_dimension_numbers<[1], [0], [0], [1], [0, 0, 1, 1], [], []>} : vector<32x8xbf16>, vector<8x16xbf16>, vector<32x16xf32> -> vector<32x16xf32>
    %153 = arith.addf %145, %152 : vector<32x16xf32>
    %c0_143 = arith.constant 0 : index
    %c0_144 = arith.constant 0 : index
    %154 = vector.load %arg6[%c0_143, %c0_144] : memref<1x16xf32, #tpu.memory_space<vmem>>, vector<1x16xf32>
    %155 = vector.broadcast %154 : vector<1x16xf32> to vector<32x16xf32>
    %156 = arith.addf %153, %155 : vector<32x16xf32>
    %cst_145 = arith.constant 0.000000e+00 : f32
    %157 = vector.broadcast %cst_145 : f32 to vector<32x16xf32>
    %158 = arith.maximumf %156, %157 : vector<32x16xf32>
    %c0_146 = arith.constant 0 : index
    %c0_147 = arith.constant 0 : index
    %159 = vector.load %arg14[%c0_146, %c0_147] : memref<32x16xf32, #tpu.memory_space<vmem>>, vector<32x16xf32>
    tpu.vector_store %arg14[%c0_146, %c0_147], %158 {strides = array<i32>} : memref<32x16xf32, #tpu.memory_space<vmem>>, vector<32x16xf32>,
    %160 = arith.truncf %158 : vector<32x16xf32> to vector<32x16xbf16>
    %cst_148 = arith.constant 0.000000e+00 : f32
    %161 = vector.broadcast %cst_148 : f32 to vector<8x24xf32>
    %c0_149 = arith.constant 0 : index
    %c0_150 = arith.constant 0 : index
    %c0_151 = arith.constant 0 : index
    %162 = vector.load %arg7[%c0_149, %c0_150, %c0_151] : memref<9x8x32xbf16, #tpu.memory_space<vmem>>, vector<1x8x32xbf16>
    %163 = vector.shape_cast %162 : vector<1x8x32xbf16> to vector<8x32xbf16>
    %cst_152 = arith.constant dense<0.000000e+00> : vector<8x16xf32>
    %164 = tpu.matmul %163, %160, %cst_152 {dimension_numbers = #tpu.dot_dimension_numbers<[1], [0], [0], [1], [0, 0, 1, 1], [], []>} : vector<8x32xbf16>, vector<32x16xbf16>, vector<8x16xf32> -> vector<8x16xf32>
    %165 = arith.truncf %164 : vector<8x16xf32> to vector<8x16xbf16>
    %c0_153 = arith.constant 0 : index
    %c0_154 = arith.constant 0 : index
    %c0_155 = arith.constant 0 : index
    %166 = vector.load %arg8[%c0_153, %c0_154, %c0_155] : memref<9x16x24xbf16, #tpu.memory_space<vmem>>, vector<1x16x24xbf16>
    %167 = vector.shape_cast %166 : vector<1x16x24xbf16> to vector<16x24xbf16>
    %cst_156 = arith.constant dense<0.000000e+00> : vector<8x24xf32>
    %168 = tpu.matmul %165, %167, %cst_156 {dimension_numbers = #tpu.dot_dimension_numbers<[1], [0], [0], [1], [0, 0, 1, 1], [], []>} : vector<8x16xbf16>, vector<16x24xbf16>, vector<8x24xf32> -> vector<8x24xf32>
    %169 = arith.addf %161, %168 : vector<8x24xf32>
    %c1_157 = arith.constant 1 : index
    %c0_158 = arith.constant 0 : index
    %c0_159 = arith.constant 0 : index
    %170 = vector.load %arg7[%c1_157, %c0_158, %c0_159] : memref<9x8x32xbf16, #tpu.memory_space<vmem>>, vector<1x8x32xbf16>
    %171 = vector.shape_cast %170 : vector<1x8x32xbf16> to vector<8x32xbf16>
    %cst_160 = arith.constant dense<0.000000e+00> : vector<8x16xf32>
    %172 = tpu.matmul %171, %160, %cst_160 {dimension_numbers = #tpu.dot_dimension_numbers<[1], [0], [0], [1], [0, 0, 1, 1], [], []>} : vector<8x32xbf16>, vector<32x16xbf16>, vector<8x16xf32> -> vector<8x16xf32>
    %173 = arith.truncf %172 : vector<8x16xf32> to vector<8x16xbf16>
    %c1_161 = arith.constant 1 : index
    %c0_162 = arith.constant 0 : index
    %c0_163 = arith.constant 0 : index
    %174 = vector.load %arg8[%c1_161, %c0_162, %c0_163] : memref<9x16x24xbf16, #tpu.memory_space<vmem>>, vector<1x16x24xbf16>
    %175 = vector.shape_cast %174 : vector<1x16x24xbf16> to vector<16x24xbf16>
    %cst_164 = arith.constant dense<0.000000e+00> : vector<8x24xf32>
    %176 = tpu.matmul %173, %175, %cst_164 {dimension_numbers = #tpu.dot_dimension_numbers<[1], [0], [0], [1], [0, 0, 1, 1], [], []>} : vector<8x16xbf16>, vector<16x24xbf16>, vector<8x24xf32> -> vector<8x24xf32>
    %177 = arith.addf %169, %176 : vector<8x24xf32>
    %c2_165 = arith.constant 2 : index
    %c0_166 = arith.constant 0 : index
    %c0_167 = arith.constant 0 : index
    %178 = vector.load %arg7[%c2_165, %c0_166, %c0_167] : memref<9x8x32xbf16, #tpu.memory_space<vmem>>, vector<1x8x32xbf16>
    %179 = vector.shape_cast %178 : vector<1x8x32xbf16> to vector<8x32xbf16>
    %cst_168 = arith.constant dense<0.000000e+00> : vector<8x16xf32>
    %180 = tpu.matmul %179, %160, %cst_168 {dimension_numbers = #tpu.dot_dimension_numbers<[1], [0], [0], [1], [0, 0, 1, 1], [], []>} : vector<8x32xbf16>, vector<32x16xbf16>, vector<8x16xf32> -> vector<8x16xf32>
    %181 = arith.truncf %180 : vector<8x16xf32> to vector<8x16xbf16>
    %c2_169 = arith.constant 2 : index
    %c0_170 = arith.constant 0 : index
    %c0_171 = arith.constant 0 : index
    %182 = vector.load %arg8[%c2_169, %c0_170, %c0_171] : memref<9x16x24xbf16, #tpu.memory_space<vmem>>, vector<1x16x24xbf16>
    %183 = vector.shape_cast %182 : vector<1x16x24xbf16> to vector<16x24xbf16>
    %cst_172 = arith.constant dense<0.000000e+00> : vector<8x24xf32>
    %184 = tpu.matmul %181, %183, %cst_172 {dimension_numbers = #tpu.dot_dimension_numbers<[1], [0], [0], [1], [0, 0, 1, 1], [], []>} : vector<8x16xbf16>, vector<16x24xbf16>, vector<8x24xf32> -> vector<8x24xf32>
    %185 = arith.addf %177, %184 : vector<8x24xf32>
    %c3_173 = arith.constant 3 : index
    %c0_174 = arith.constant 0 : index
    %c0_175 = arith.constant 0 : index
    %186 = vector.load %arg7[%c3_173, %c0_174, %c0_175] : memref<9x8x32xbf16, #tpu.memory_space<vmem>>, vector<1x8x32xbf16>
    %187 = vector.shape_cast %186 : vector<1x8x32xbf16> to vector<8x32xbf16>
    %cst_176 = arith.constant dense<0.000000e+00> : vector<8x16xf32>
    %188 = tpu.matmul %187, %160, %cst_176 {dimension_numbers = #tpu.dot_dimension_numbers<[1], [0], [0], [1], [0, 0, 1, 1], [], []>} : vector<8x32xbf16>, vector<32x16xbf16>, vector<8x16xf32> -> vector<8x16xf32>
    %189 = arith.truncf %188 : vector<8x16xf32> to vector<8x16xbf16>
    %c3_177 = arith.constant 3 : index
    %c0_178 = arith.constant 0 : index
    %c0_179 = arith.constant 0 : index
    %190 = vector.load %arg8[%c3_177, %c0_178, %c0_179] : memref<9x16x24xbf16, #tpu.memory_space<vmem>>, vector<1x16x24xbf16>
    %191 = vector.shape_cast %190 : vector<1x16x24xbf16> to vector<16x24xbf16>
    %cst_180 = arith.constant dense<0.000000e+00> : vector<8x24xf32>
    %192 = tpu.matmul %189, %191, %cst_180 {dimension_numbers = #tpu.dot_dimension_numbers<[1], [0], [0], [1], [0, 0, 1, 1], [], []>} : vector<8x16xbf16>, vector<16x24xbf16>, vector<8x24xf32> -> vector<8x24xf32>
    %193 = arith.addf %185, %192 : vector<8x24xf32>
    %c4_181 = arith.constant 4 : index
    %c0_182 = arith.constant 0 : index
    %c0_183 = arith.constant 0 : index
    %194 = vector.load %arg7[%c4_181, %c0_182, %c0_183] : memref<9x8x32xbf16, #tpu.memory_space<vmem>>, vector<1x8x32xbf16>
    %195 = vector.shape_cast %194 : vector<1x8x32xbf16> to vector<8x32xbf16>
    %cst_184 = arith.constant dense<0.000000e+00> : vector<8x16xf32>
    %196 = tpu.matmul %195, %160, %cst_184 {dimension_numbers = #tpu.dot_dimension_numbers<[1], [0], [0], [1], [0, 0, 1, 1], [], []>} : vector<8x32xbf16>, vector<32x16xbf16>, vector<8x16xf32> -> vector<8x16xf32>
    %197 = arith.truncf %196 : vector<8x16xf32> to vector<8x16xbf16>
    %c4_185 = arith.constant 4 : index
    %c0_186 = arith.constant 0 : index
    %c0_187 = arith.constant 0 : index
    %198 = vector.load %arg8[%c4_185, %c0_186, %c0_187] : memref<9x16x24xbf16, #tpu.memory_space<vmem>>, vector<1x16x24xbf16>
    %199 = vector.shape_cast %198 : vector<1x16x24xbf16> to vector<16x24xbf16>
    %cst_188 = arith.constant dense<0.000000e+00> : vector<8x24xf32>
    %200 = tpu.matmul %197, %199, %cst_188 {dimension_numbers = #tpu.dot_dimension_numbers<[1], [0], [0], [1], [0, 0, 1, 1], [], []>} : vector<8x16xbf16>, vector<16x24xbf16>, vector<8x24xf32> -> vector<8x24xf32>
    %201 = arith.addf %193, %200 : vector<8x24xf32>
    %c5_189 = arith.constant 5 : index
    %c0_190 = arith.constant 0 : index
    %c0_191 = arith.constant 0 : index
    %202 = vector.load %arg7[%c5_189, %c0_190, %c0_191] : memref<9x8x32xbf16, #tpu.memory_space<vmem>>, vector<1x8x32xbf16>
    %203 = vector.shape_cast %202 : vector<1x8x32xbf16> to vector<8x32xbf16>
    %cst_192 = arith.constant dense<0.000000e+00> : vector<8x16xf32>
    %204 = tpu.matmul %203, %160, %cst_192 {dimension_numbers = #tpu.dot_dimension_numbers<[1], [0], [0], [1], [0, 0, 1, 1], [], []>} : vector<8x32xbf16>, vector<32x16xbf16>, vector<8x16xf32> -> vector<8x16xf32>
    %205 = arith.truncf %204 : vector<8x16xf32> to vector<8x16xbf16>
    %c5_193 = arith.constant 5 : index
    %c0_194 = arith.constant 0 : index
    %c0_195 = arith.constant 0 : index
    %206 = vector.load %arg8[%c5_193, %c0_194, %c0_195] : memref<9x16x24xbf16, #tpu.memory_space<vmem>>, vector<1x16x24xbf16>
    %207 = vector.shape_cast %206 : vector<1x16x24xbf16> to vector<16x24xbf16>
    %cst_196 = arith.constant dense<0.000000e+00> : vector<8x24xf32>
    %208 = tpu.matmul %205, %207, %cst_196 {dimension_numbers = #tpu.dot_dimension_numbers<[1], [0], [0], [1], [0, 0, 1, 1], [], []>} : vector<8x16xbf16>, vector<16x24xbf16>, vector<8x24xf32> -> vector<8x24xf32>
    %209 = arith.addf %201, %208 : vector<8x24xf32>
    %c6_197 = arith.constant 6 : index
    %c0_198 = arith.constant 0 : index
    %c0_199 = arith.constant 0 : index
    %210 = vector.load %arg7[%c6_197, %c0_198, %c0_199] : memref<9x8x32xbf16, #tpu.memory_space<vmem>>, vector<1x8x32xbf16>
    %211 = vector.shape_cast %210 : vector<1x8x32xbf16> to vector<8x32xbf16>
    %cst_200 = arith.constant dense<0.000000e+00> : vector<8x16xf32>
    %212 = tpu.matmul %211, %160, %cst_200 {dimension_numbers = #tpu.dot_dimension_numbers<[1], [0], [0], [1], [0, 0, 1, 1], [], []>} : vector<8x32xbf16>, vector<32x16xbf16>, vector<8x16xf32> -> vector<8x16xf32>
    %213 = arith.truncf %212 : vector<8x16xf32> to vector<8x16xbf16>
    %c6_201 = arith.constant 6 : index
    %c0_202 = arith.constant 0 : index
    %c0_203 = arith.constant 0 : index
    %214 = vector.load %arg8[%c6_201, %c0_202, %c0_203] : memref<9x16x24xbf16, #tpu.memory_space<vmem>>, vector<1x16x24xbf16>
    %215 = vector.shape_cast %214 : vector<1x16x24xbf16> to vector<16x24xbf16>
    %cst_204 = arith.constant dense<0.000000e+00> : vector<8x24xf32>
    %216 = tpu.matmul %213, %215, %cst_204 {dimension_numbers = #tpu.dot_dimension_numbers<[1], [0], [0], [1], [0, 0, 1, 1], [], []>} : vector<8x16xbf16>, vector<16x24xbf16>, vector<8x24xf32> -> vector<8x24xf32>
    %217 = arith.addf %209, %216 : vector<8x24xf32>
    %c7_205 = arith.constant 7 : index
    %c0_206 = arith.constant 0 : index
    %c0_207 = arith.constant 0 : index
    %218 = vector.load %arg7[%c7_205, %c0_206, %c0_207] : memref<9x8x32xbf16, #tpu.memory_space<vmem>>, vector<1x8x32xbf16>
    %219 = vector.shape_cast %218 : vector<1x8x32xbf16> to vector<8x32xbf16>
    %cst_208 = arith.constant dense<0.000000e+00> : vector<8x16xf32>
    %220 = tpu.matmul %219, %160, %cst_208 {dimension_numbers = #tpu.dot_dimension_numbers<[1], [0], [0], [1], [0, 0, 1, 1], [], []>} : vector<8x32xbf16>, vector<32x16xbf16>, vector<8x16xf32> -> vector<8x16xf32>
    %221 = arith.truncf %220 : vector<8x16xf32> to vector<8x16xbf16>
    %c7_209 = arith.constant 7 : index
    %c0_210 = arith.constant 0 : index
    %c0_211 = arith.constant 0 : index
    %222 = vector.load %arg8[%c7_209, %c0_210, %c0_211] : memref<9x16x24xbf16, #tpu.memory_space<vmem>>, vector<1x16x24xbf16>
    %223 = vector.shape_cast %222 : vector<1x16x24xbf16> to vector<16x24xbf16>
    %cst_212 = arith.constant dense<0.000000e+00> : vector<8x24xf32>
    %224 = tpu.matmul %221, %223, %cst_212 {dimension_numbers = #tpu.dot_dimension_numbers<[1], [0], [0], [1], [0, 0, 1, 1], [], []>} : vector<8x16xbf16>, vector<16x24xbf16>, vector<8x24xf32> -> vector<8x24xf32>
    %225 = arith.addf %217, %224 : vector<8x24xf32>
    %c8_213 = arith.constant 8 : index
    %c0_214 = arith.constant 0 : index
    %c0_215 = arith.constant 0 : index
    %226 = vector.load %arg7[%c8_213, %c0_214, %c0_215] : memref<9x8x32xbf16, #tpu.memory_space<vmem>>, vector<1x8x32xbf16>
    %227 = vector.shape_cast %226 : vector<1x8x32xbf16> to vector<8x32xbf16>
    %cst_216 = arith.constant dense<0.000000e+00> : vector<8x16xf32>
    %228 = tpu.matmul %227, %160, %cst_216 {dimension_numbers = #tpu.dot_dimension_numbers<[1], [0], [0], [1], [0, 0, 1, 1], [], []>} : vector<8x32xbf16>, vector<32x16xbf16>, vector<8x16xf32> -> vector<8x16xf32>
    %229 = arith.truncf %228 : vector<8x16xf32> to vector<8x16xbf16>
    %c8_217 = arith.constant 8 : index
    %c0_218 = arith.constant 0 : index
    %c0_219 = arith.constant 0 : index
    %230 = vector.load %arg8[%c8_217, %c0_218, %c0_219] : memref<9x16x24xbf16, #tpu.memory_space<vmem>>, vector<1x16x24xbf16>
    %231 = vector.shape_cast %230 : vector<1x16x24xbf16> to vector<16x24xbf16>
    %cst_220 = arith.constant dense<0.000000e+00> : vector<8x24xf32>
    %232 = tpu.matmul %229, %231, %cst_220 {dimension_numbers = #tpu.dot_dimension_numbers<[1], [0], [0], [1], [0, 0, 1, 1], [], []>} : vector<8x16xbf16>, vector<16x24xbf16>, vector<8x24xf32> -> vector<8x24xf32>
    %233 = arith.addf %225, %232 : vector<8x24xf32>
    %c0_221 = arith.constant 0 : index
    %c0_222 = arith.constant 0 : index
    %234 = vector.load %arg9[%c0_221, %c0_222] : memref<1x24xf32, #tpu.memory_space<vmem>>, vector<1x24xf32>
    %235 = vector.broadcast %234 : vector<1x24xf32> to vector<8x24xf32>
    %236 = arith.addf %233, %235 : vector<8x24xf32>
    %cst_223 = arith.constant 0.000000e+00 : f32
    %237 = vector.broadcast %cst_223 : f32 to vector<8x24xf32>
    %238 = arith.maximumf %236, %237 : vector<8x24xf32>
    %c0_224 = arith.constant 0 : index
    %c0_225 = arith.constant 0 : index
    %239 = vector.load %arg15[%c0_224, %c0_225] : memref<8x24xf32, #tpu.memory_space<vmem>>, vector<8x24xf32>
    tpu.vector_store %arg15[%c0_224, %c0_225], %238 {strides = array<i32>} : memref<8x24xf32, #tpu.memory_space<vmem>>, vector<8x24xf32>,
    %240 = arith.truncf %238 : vector<8x24xf32> to vector<8x24xbf16>
    %cst_226 = arith.constant 0.000000e+00 : f32
    %241 = vector.broadcast %cst_226 : f32 to vector<2x32xf32>
    %c0_227 = arith.constant 0 : index
    %c0_228 = arith.constant 0 : index
    %c0_229 = arith.constant 0 : index
    %242 = vector.load %arg10[%c0_227, %c0_228, %c0_229] : memref<9x2x8xbf16, #tpu.memory_space<vmem>>, vector<1x2x8xbf16>
    %243 = vector.shape_cast %242 : vector<1x2x8xbf16> to vector<2x8xbf16>
    %cst_230 = arith.constant dense<0.000000e+00> : vector<2x24xf32>
    %244 = tpu.matmul %243, %240, %cst_230 {dimension_numbers = #tpu.dot_dimension_numbers<[1], [0], [0], [1], [0, 0, 1, 1], [], []>} : vector<2x8xbf16>, vector<8x24xbf16>, vector<2x24xf32> -> vector<2x24xf32>
    %245 = arith.truncf %244 : vector<2x24xf32> to vector<2x24xbf16>
    %c0_231 = arith.constant 0 : index
    %c0_232 = arith.constant 0 : index
    %c0_233 = arith.constant 0 : index
    %246 = vector.load %arg11[%c0_231, %c0_232, %c0_233] : memref<9x24x32xbf16, #tpu.memory_space<vmem>>, vector<1x24x32xbf16>
    %247 = vector.shape_cast %246 : vector<1x24x32xbf16> to vector<24x32xbf16>
    %cst_234 = arith.constant dense<0.000000e+00> : vector<2x32xf32>
    %248 = tpu.matmul %245, %247, %cst_234 {dimension_numbers = #tpu.dot_dimension_numbers<[1], [0], [0], [1], [0, 0, 1, 1], [], []>} : vector<2x24xbf16>, vector<24x32xbf16>, vector<2x32xf32> -> vector<2x32xf32>
    %249 = arith.addf %241, %248 : vector<2x32xf32>
    %c1_235 = arith.constant 1 : index
    %c0_236 = arith.constant 0 : index
    %c0_237 = arith.constant 0 : index
    %250 = vector.load %arg10[%c1_235, %c0_236, %c0_237] : memref<9x2x8xbf16, #tpu.memory_space<vmem>>, vector<1x2x8xbf16>
    %251 = vector.shape_cast %250 : vector<1x2x8xbf16> to vector<2x8xbf16>
    %cst_238 = arith.constant dense<0.000000e+00> : vector<2x24xf32>
    %252 = tpu.matmul %251, %240, %cst_238 {dimension_numbers = #tpu.dot_dimension_numbers<[1], [0], [0], [1], [0, 0, 1, 1], [], []>} : vector<2x8xbf16>, vector<8x24xbf16>, vector<2x24xf32> -> vector<2x24xf32>
    %253 = arith.truncf %252 : vector<2x24xf32> to vector<2x24xbf16>
    %c1_239 = arith.constant 1 : index
    %c0_240 = arith.constant 0 : index
    %c0_241 = arith.constant 0 : index
    %254 = vector.load %arg11[%c1_239, %c0_240, %c0_241] : memref<9x24x32xbf16, #tpu.memory_space<vmem>>, vector<1x24x32xbf16>
    %255 = vector.shape_cast %254 : vector<1x24x32xbf16> to vector<24x32xbf16>
    %cst_242 = arith.constant dense<0.000000e+00> : vector<2x32xf32>
    %256 = tpu.matmul %253, %255, %cst_242 {dimension_numbers = #tpu.dot_dimension_numbers<[1], [0], [0], [1], [0, 0, 1, 1], [], []>} : vector<2x24xbf16>, vector<24x32xbf16>, vector<2x32xf32> -> vector<2x32xf32>
    %257 = arith.addf %249, %256 : vector<2x32xf32>
    %c2_243 = arith.constant 2 : index
    %c0_244 = arith.constant 0 : index
    %c0_245 = arith.constant 0 : index
    %258 = vector.load %arg10[%c2_243, %c0_244, %c0_245] : memref<9x2x8xbf16, #tpu.memory_space<vmem>>, vector<1x2x8xbf16>
    %259 = vector.shape_cast %258 : vector<1x2x8xbf16> to vector<2x8xbf16>
    %cst_246 = arith.constant dense<0.000000e+00> : vector<2x24xf32>
    %260 = tpu.matmul %259, %240, %cst_246 {dimension_numbers = #tpu.dot_dimension_numbers<[1], [0], [0], [1], [0, 0, 1, 1], [], []>} : vector<2x8xbf16>, vector<8x24xbf16>, vector<2x24xf32> -> vector<2x24xf32>
    %261 = arith.truncf %260 : vector<2x24xf32> to vector<2x24xbf16>
    %c2_247 = arith.constant 2 : index
    %c0_248 = arith.constant 0 : index
    %c0_249 = arith.constant 0 : index
    %262 = vector.load %arg11[%c2_247, %c0_248, %c0_249] : memref<9x24x32xbf16, #tpu.memory_space<vmem>>, vector<1x24x32xbf16>
    %263 = vector.shape_cast %262 : vector<1x24x32xbf16> to vector<24x32xbf16>
    %cst_250 = arith.constant dense<0.000000e+00> : vector<2x32xf32>
    %264 = tpu.matmul %261, %263, %cst_250 {dimension_numbers = #tpu.dot_dimension_numbers<[1], [0], [0], [1], [0, 0, 1, 1], [], []>} : vector<2x24xbf16>, vector<24x32xbf16>, vector<2x32xf32> -> vector<2x32xf32>
    %265 = arith.addf %257, %264 : vector<2x32xf32>
    %c3_251 = arith.constant 3 : index
    %c0_252 = arith.constant 0 : index
    %c0_253 = arith.constant 0 : index
    %266 = vector.load %arg10[%c3_251, %c0_252, %c0_253] : memref<9x2x8xbf16, #tpu.memory_space<vmem>>, vector<1x2x8xbf16>
    %267 = vector.shape_cast %266 : vector<1x2x8xbf16> to vector<2x8xbf16>
    %cst_254 = arith.constant dense<0.000000e+00> : vector<2x24xf32>
    %268 = tpu.matmul %267, %240, %cst_254 {dimension_numbers = #tpu.dot_dimension_numbers<[1], [0], [0], [1], [0, 0, 1, 1], [], []>} : vector<2x8xbf16>, vector<8x24xbf16>, vector<2x24xf32> -> vector<2x24xf32>
    %269 = arith.truncf %268 : vector<2x24xf32> to vector<2x24xbf16>
    %c3_255 = arith.constant 3 : index
    %c0_256 = arith.constant 0 : index
    %c0_257 = arith.constant 0 : index
    %270 = vector.load %arg11[%c3_255, %c0_256, %c0_257] : memref<9x24x32xbf16, #tpu.memory_space<vmem>>, vector<1x24x32xbf16>
    %271 = vector.shape_cast %270 : vector<1x24x32xbf16> to vector<24x32xbf16>
    %cst_258 = arith.constant dense<0.000000e+00> : vector<2x32xf32>
    %272 = tpu.matmul %269, %271, %cst_258 {dimension_numbers = #tpu.dot_dimension_numbers<[1], [0], [0], [1], [0, 0, 1, 1], [], []>} : vector<2x24xbf16>, vector<24x32xbf16>, vector<2x32xf32> -> vector<2x32xf32>
    %273 = arith.addf %265, %272 : vector<2x32xf32>
    %c4_259 = arith.constant 4 : index
    %c0_260 = arith.constant 0 : index
    %c0_261 = arith.constant 0 : index
    %274 = vector.load %arg10[%c4_259, %c0_260, %c0_261] : memref<9x2x8xbf16, #tpu.memory_space<vmem>>, vector<1x2x8xbf16>
    %275 = vector.shape_cast %274 : vector<1x2x8xbf16> to vector<2x8xbf16>
    %cst_262 = arith.constant dense<0.000000e+00> : vector<2x24xf32>
    %276 = tpu.matmul %275, %240, %cst_262 {dimension_numbers = #tpu.dot_dimension_numbers<[1], [0], [0], [1], [0, 0, 1, 1], [], []>} : vector<2x8xbf16>, vector<8x24xbf16>, vector<2x24xf32> -> vector<2x24xf32>
    %277 = arith.truncf %276 : vector<2x24xf32> to vector<2x24xbf16>
    %c4_263 = arith.constant 4 : index
    %c0_264 = arith.constant 0 : index
    %c0_265 = arith.constant 0 : index
    %278 = vector.load %arg11[%c4_263, %c0_264, %c0_265] : memref<9x24x32xbf16, #tpu.memory_space<vmem>>, vector<1x24x32xbf16>
    %279 = vector.shape_cast %278 : vector<1x24x32xbf16> to vector<24x32xbf16>
    %cst_266 = arith.constant dense<0.000000e+00> : vector<2x32xf32>
    %280 = tpu.matmul %277, %279, %cst_266 {dimension_numbers = #tpu.dot_dimension_numbers<[1], [0], [0], [1], [0, 0, 1, 1], [], []>} : vector<2x24xbf16>, vector<24x32xbf16>, vector<2x32xf32> -> vector<2x32xf32>
    %281 = arith.addf %273, %280 : vector<2x32xf32>
    %c5_267 = arith.constant 5 : index
    %c0_268 = arith.constant 0 : index
    %c0_269 = arith.constant 0 : index
    %282 = vector.load %arg10[%c5_267, %c0_268, %c0_269] : memref<9x2x8xbf16, #tpu.memory_space<vmem>>, vector<1x2x8xbf16>
    %283 = vector.shape_cast %282 : vector<1x2x8xbf16> to vector<2x8xbf16>
    %cst_270 = arith.constant dense<0.000000e+00> : vector<2x24xf32>
    %284 = tpu.matmul %283, %240, %cst_270 {dimension_numbers = #tpu.dot_dimension_numbers<[1], [0], [0], [1], [0, 0, 1, 1], [], []>} : vector<2x8xbf16>, vector<8x24xbf16>, vector<2x24xf32> -> vector<2x24xf32>
    %285 = arith.truncf %284 : vector<2x24xf32> to vector<2x24xbf16>
    %c5_271 = arith.constant 5 : index
    %c0_272 = arith.constant 0 : index
    %c0_273 = arith.constant 0 : index
    %286 = vector.load %arg11[%c5_271, %c0_272, %c0_273] : memref<9x24x32xbf16, #tpu.memory_space<vmem>>, vector<1x24x32xbf16>
    %287 = vector.shape_cast %286 : vector<1x24x32xbf16> to vector<24x32xbf16>
    %cst_274 = arith.constant dense<0.000000e+00> : vector<2x32xf32>
    %288 = tpu.matmul %285, %287, %cst_274 {dimension_numbers = #tpu.dot_dimension_numbers<[1], [0], [0], [1], [0, 0, 1, 1], [], []>} : vector<2x24xbf16>, vector<24x32xbf16>, vector<2x32xf32> -> vector<2x32xf32>
    %289 = arith.addf %281, %288 : vector<2x32xf32>
    %c6_275 = arith.constant 6 : index
    %c0_276 = arith.constant 0 : index
    %c0_277 = arith.constant 0 : index
    %290 = vector.load %arg10[%c6_275, %c0_276, %c0_277] : memref<9x2x8xbf16, #tpu.memory_space<vmem>>, vector<1x2x8xbf16>
    %291 = vector.shape_cast %290 : vector<1x2x8xbf16> to vector<2x8xbf16>
    %cst_278 = arith.constant dense<0.000000e+00> : vector<2x24xf32>
    %292 = tpu.matmul %291, %240, %cst_278 {dimension_numbers = #tpu.dot_dimension_numbers<[1], [0], [0], [1], [0, 0, 1, 1], [], []>} : vector<2x8xbf16>, vector<8x24xbf16>, vector<2x24xf32> -> vector<2x24xf32>
    %293 = arith.truncf %292 : vector<2x24xf32> to vector<2x24xbf16>
    %c6_279 = arith.constant 6 : index
    %c0_280 = arith.constant 0 : index
    %c0_281 = arith.constant 0 : index
    %294 = vector.load %arg11[%c6_279, %c0_280, %c0_281] : memref<9x24x32xbf16, #tpu.memory_space<vmem>>, vector<1x24x32xbf16>
    %295 = vector.shape_cast %294 : vector<1x24x32xbf16> to vector<24x32xbf16>
    %cst_282 = arith.constant dense<0.000000e+00> : vector<2x32xf32>
    %296 = tpu.matmul %293, %295, %cst_282 {dimension_numbers = #tpu.dot_dimension_numbers<[1], [0], [0], [1], [0, 0, 1, 1], [], []>} : vector<2x24xbf16>, vector<24x32xbf16>, vector<2x32xf32> -> vector<2x32xf32>
    %297 = arith.addf %289, %296 : vector<2x32xf32>
    %c7_283 = arith.constant 7 : index
    %c0_284 = arith.constant 0 : index
    %c0_285 = arith.constant 0 : index
    %298 = vector.load %arg10[%c7_283, %c0_284, %c0_285] : memref<9x2x8xbf16, #tpu.memory_space<vmem>>, vector<1x2x8xbf16>
    %299 = vector.shape_cast %298 : vector<1x2x8xbf16> to vector<2x8xbf16>
    %cst_286 = arith.constant dense<0.000000e+00> : vector<2x24xf32>
    %300 = tpu.matmul %299, %240, %cst_286 {dimension_numbers = #tpu.dot_dimension_numbers<[1], [0], [0], [1], [0, 0, 1, 1], [], []>} : vector<2x8xbf16>, vector<8x24xbf16>, vector<2x24xf32> -> vector<2x24xf32>
    %301 = arith.truncf %300 : vector<2x24xf32> to vector<2x24xbf16>
    %c7_287 = arith.constant 7 : index
    %c0_288 = arith.constant 0 : index
    %c0_289 = arith.constant 0 : index
    %302 = vector.load %arg11[%c7_287, %c0_288, %c0_289] : memref<9x24x32xbf16, #tpu.memory_space<vmem>>, vector<1x24x32xbf16>
    %303 = vector.shape_cast %302 : vector<1x24x32xbf16> to vector<24x32xbf16>
    %cst_290 = arith.constant dense<0.000000e+00> : vector<2x32xf32>
    %304 = tpu.matmul %301, %303, %cst_290 {dimension_numbers = #tpu.dot_dimension_numbers<[1], [0], [0], [1], [0, 0, 1, 1], [], []>} : vector<2x24xbf16>, vector<24x32xbf16>, vector<2x32xf32> -> vector<2x32xf32>
    %305 = arith.addf %297, %304 : vector<2x32xf32>
    %c8_291 = arith.constant 8 : index
    %c0_292 = arith.constant 0 : index
    %c0_293 = arith.constant 0 : index
    %306 = vector.load %arg10[%c8_291, %c0_292, %c0_293] : memref<9x2x8xbf16, #tpu.memory_space<vmem>>, vector<1x2x8xbf16>
    %307 = vector.shape_cast %306 : vector<1x2x8xbf16> to vector<2x8xbf16>
    %cst_294 = arith.constant dense<0.000000e+00> : vector<2x24xf32>
    %308 = tpu.matmul %307, %240, %cst_294 {dimension_numbers = #tpu.dot_dimension_numbers<[1], [0], [0], [1], [0, 0, 1, 1], [], []>} : vector<2x8xbf16>, vector<8x24xbf16>, vector<2x24xf32> -> vector<2x24xf32>
    %309 = arith.truncf %308 : vector<2x24xf32> to vector<2x24xbf16>
    %c8_295 = arith.constant 8 : index
    %c0_296 = arith.constant 0 : index
    %c0_297 = arith.constant 0 : index
    %310 = vector.load %arg11[%c8_295, %c0_296, %c0_297] : memref<9x24x32xbf16, #tpu.memory_space<vmem>>, vector<1x24x32xbf16>
    %311 = vector.shape_cast %310 : vector<1x24x32xbf16> to vector<24x32xbf16>
    %cst_298 = arith.constant dense<0.000000e+00> : vector<2x32xf32>
    %312 = tpu.matmul %309, %311, %cst_298 {dimension_numbers = #tpu.dot_dimension_numbers<[1], [0], [0], [1], [0, 0, 1, 1], [], []>} : vector<2x24xbf16>, vector<24x32xbf16>, vector<2x32xf32> -> vector<2x32xf32>
    %313 = arith.addf %305, %312 : vector<2x32xf32>
    %c0_299 = arith.constant 0 : index
    %c0_300 = arith.constant 0 : index
    %314 = vector.load %arg12[%c0_299, %c0_300] : memref<1x32xf32, #tpu.memory_space<vmem>>, vector<1x32xf32>
    %315 = vector.broadcast %314 : vector<1x32xf32> to vector<2x32xf32>
    %316 = arith.addf %313, %315 : vector<2x32xf32>
    %cst_301 = arith.constant 0.000000e+00 : f32
    %317 = vector.broadcast %cst_301 : f32 to vector<2x32xf32>
    %318 = arith.maximumf %316, %317 : vector<2x32xf32>
    %c0_302 = arith.constant 0 : index
    %c0_303 = arith.constant 0 : index
    %319 = vector.load %arg16[%c0_302, %c0_303] : memref<2x32xf32, #tpu.memory_space<vmem>>, vector<2x32xf32>
    tpu.vector_store %arg16[%c0_302, %c0_303], %318 {strides = array<i32>} : memref<2x32xf32, #tpu.memory_space<vmem>>, vector<2x32xf32>,
    return
  }
}

</mosaic_0001>

<llo_original>
// kernel: _forward_impl.1
$region0: #{_forward_impl.1}
  #allocation0 [shape = 'u32[]', space=smem, size = 0x4, offset = 0x4, fixed_abs, tag = 'smem constant byte address 0x4 - core index']
  #allocation1 [shape = 'u32[144,128]{1,0:T(1,128)}', space=vmem, size = 0x12000, scoped, tag = 'internal scratch']
  %s0 = inlined_call_operand.vmem [shape: bf16[512,3], index: 0, kind: input, shape index: {}]
  %s1 = inlined_call_operand.vmem [shape: bf16[9,128,512], index: 1, kind: input, shape index: {}]
  %s2 = inlined_call_operand.vmem [shape: bf16[9,3,8], index: 2, kind: input, shape index: {}]
  %s3 = inlined_call_operand.vmem [shape: f32[1,8], index: 3, kind: input, shape index: {}]
  %s4 = inlined_call_operand.vmem [shape: bf16[9,32,128], index: 4, kind: input, shape index: {}]
  %s5 = inlined_call_operand.vmem [shape: bf16[9,8,16], index: 5, kind: input, shape index: {}]
  %s6 = inlined_call_operand.vmem [shape: f32[1,16], index: 6, kind: input, shape index: {}]
  %s7 = inlined_call_operand.vmem [shape: bf16[9,8,32], index: 7, kind: input, shape index: {}]
  %s8 = inlined_call_operand.vmem [shape: bf16[9,16,24], index: 8, kind: input, shape index: {}]
  %s9 = inlined_call_operand.vmem [shape: f32[1,24], index: 9, kind: input, shape index: {}]
  %s10 = inlined_call_operand.vmem [shape: bf16[9,2,8], index: 10, kind: input, shape index: {}]
  %s11 = inlined_call_operand.vmem [shape: bf16[9,24,32], index: 11, kind: input, shape index: {}]
  %s12 = inlined_call_operand.vmem [shape: f32[1,32], index: 12, kind: input, shape index: {}]
  %s13 = inlined_call_operand.vmem [shape: f32[128,8], index: 13, kind: output, shape index: {0}]
  %s14 = inlined_call_operand.hbm [shape: f32[32,16], index: 14, kind: output, shape index: {1}]
  %s15 = inlined_call_operand.hbm [shape: f32[8,24], index: 15, kind: output, shape index: {2}]
  %s16 = inlined_call_operand.hbm [shape: f32[2,32], index: 16, kind: output, shape index: {3}]
  %17 = xla_tuple %s13, %s14, %s15, %s16
  %s18 = sld [smem:[#allocation0]]
  $region86: #{_forward_impl.1} parent=0
    _
  %s20 = ssub.s32 1, %s18
  %s21 = scalar_select 0, %s20, %s18
  $region1: #{_forward_impl.1} parent=0
    #allocation2 [shape = 'u8[16384]{0}', space=vmem, size = 0x4000, scoped, tag = 'output window, operand 1, single buffered']
    #allocation3 [shape = 's32[1]{0}', space=sflag, size = 0x4, scoped, tag = 'scoped memory for _forward_impl.1']
    #allocation4 [shape = 'u8[4096]{0}', space=vmem, size = 0x1000, scoped, tag = 'output window, operand 2, single buffered']
    #allocation5 [shape = 's32[1]{0}', space=sflag, size = 0x4, scoped, tag = 'scoped memory for _forward_impl.1']
    #allocation6 [shape = 'u8[1024]{0}', space=vmem, size = 0x400, scoped, tag = 'output window, operand 3, single buffered']
    %22 = vsyncpa [#allocation3], 0
    %23 = vsyncpa [#allocation5], 0
    // Predicated region
    $region2: #{_forward_impl.1} parent=1 // pred_check
      _
    $region3: #{_forward_impl.1} parent=1 // pred_check_branch
      %25 = sbr.rel (0) target = $region5
    $region4: #{_forward_impl.1} parent=1 // pred_region
      _
    $region5: #{_forward_impl.1} parent=1 // pred_fallthru
      _
    // Predicated region
    $region6: #{_forward_impl.1} parent=1 // pred_check
      _
    $region7: #{_forward_impl.1} parent=1 // pred_check_branch
      %27 = sbr.rel (0) target = $region9
    $region8: #{_forward_impl.1} parent=1 // pred_region
      _
    $region9: #{_forward_impl.1} parent=1 // pred_fallthru
      _
    // Predicated region
    $region10: #{_forward_impl.1} parent=1 // pred_check
      _
    $region11: #{_forward_impl.1} parent=1 // pred_check_branch
      %29 = sbr.rel (0) target = $region13
    $region12: #{_forward_impl.1} parent=1 // pred_region
      _
    $region13: #{_forward_impl.1} parent=1 // pred_fallthru
      _
    // Predicated region
    $region14: #{_forward_impl.1} parent=1 // pred_check
      _
    $region15: #{_forward_impl.1} parent=1 // pred_check_branch
      %31 = sbr.rel (0) target = $region17
    $region16: #{_forward_impl.1} parent=1 // pred_region
      _
    $region17: #{_forward_impl.1} parent=1 // pred_fallthru
      _
    // Predicated region
    $region18: #{_forward_impl.1} parent=1 // pred_check
      _
    $region19: #{_forward_impl.1} parent=1 // pred_check_branch
      %33 = sbr.rel (0) target = $region21
    $region20: #{_forward_impl.1} parent=1 // pred_region
      _
    $region21: #{_forward_impl.1} parent=1 // pred_fallthru
      _
    // Predicated region
    $region22: #{_forward_impl.1} parent=1 // pred_check
      _
    $region23: #{_forward_impl.1} parent=1 // pred_check_branch
      %35 = sbr.rel (0) target = $region25
    $region24: #{_forward_impl.1} parent=1 // pred_region
      _
    $region25: #{_forward_impl.1} parent=1 // pred_fallthru
      _
    // Predicated region
    $region26: #{_forward_impl.1} parent=1 // pred_check
      _
    $region27: #{_forward_impl.1} parent=1 // pred_check_branch
      %37 = sbr.rel (0) target = $region29
    $region28: #{_forward_impl.1} parent=1 // pred_region
      _
    $region29: #{_forward_impl.1} parent=1 // pred_fallthru
      _
    // Predicated region
    $region30: #{_forward_impl.1} parent=1 // pred_check
      _
    $region31: #{_forward_impl.1} parent=1 // pred_check_branch
      %39 = sbr.rel (0) target = $region33
    $region32: #{_forward_impl.1} parent=1 // pred_region
      _
    $region33: #{_forward_impl.1} parent=1 // pred_fallthru
      _
    // Predicated region
    $region34: #{_forward_impl.1} parent=1 // pred_check
      _
    $region35: #{_forward_impl.1} parent=1 // pred_check_branch
      %41 = sbr.rel (0) target = $region37
    $region36: #{_forward_impl.1} parent=1 // pred_region
      _
    $region37: #{_forward_impl.1} parent=1 // pred_fallthru
      _
    // Predicated region
    $region38: #{_forward_impl.1} parent=1 // pred_check
      _
    $region39: #{_forward_impl.1} parent=1 // pred_check_branch
      %43 = sbr.rel (0) target = $region41
    $region40: #{_forward_impl.1} parent=1 // pred_region
      _
    $region41: #{_forward_impl.1} parent=1 // pred_fallthru
      _
    // Predicated region
    $region42: #{_forward_impl.1} parent=1 // pred_check
      _
    $region43: #{_forward_impl.1} parent=1 // pred_check_branch
      %45 = sbr.rel (0) target = $region45
    $region44: #{_forward_impl.1} parent=1 // pred_region
      _
    $region45: #{_forward_impl.1} parent=1 // pred_fallthru
      _
    // Predicated region
    $region46: #{_forward_impl.1} parent=1 // pred_check
      _
    $region47: #{_forward_impl.1} parent=1 // pred_check_branch
      %47 = sbr.rel (0) target = $region49
    $region48: #{_forward_impl.1} parent=1 // pred_region
      _
    $region49: #{_forward_impl.1} parent=1 // pred_fallthru
      _
    // Predicated region
    $region50: #{_forward_impl.1} parent=1 // pred_check
      _
    $region51: #{_forward_impl.1} parent=1 // pred_check_branch
      %49 = sbr.rel (0) target = $region53
    $region52: #{_forward_impl.1} parent=1 // pred_region
      _
    $region53: #{_forward_impl.1} parent=1 // pred_fallthru
      _
    %v51 = vld [vmem:[%s0] sm:$0xf]
    %v52 = vld [vmem:[%s0 + $0x4] sm:$0xf]
    %v53 = vld [vmem:[%s0 + $0x8] sm:$0xf]
    %v54 = vld [vmem:[%s0 + $0xc] sm:$0xf]
    %v55 = vld [vmem:[%s0 + $0x10] sm:$0xf]
    %v56 = vld [vmem:[%s0 + $0x14] sm:$0xf]
    %v57 = vld [vmem:[%s0 + $0x18] sm:$0xf]
    %v58 = vld [vmem:[%s0 + $0x1c] sm:$0xf]
    %v59 = vld [vmem:[%s0 + $0x20] sm:$0xf]
    %v60 = vld [vmem:[%s0 + $0x24] sm:$0xf]
    %v61 = vld [vmem:[%s0 + $0x28] sm:$0xf]
    %v62 = vld [vmem:[%s0 + $0x2c] sm:$0xf]
    %v63 = vld [vmem:[%s0 + $0x30] sm:$0xf]
    %v64 = vld [vmem:[%s0 + $0x34] sm:$0xf]
    %v65 = vld [vmem:[%s0 + $0x38] sm:$0xf]
    %v66 = vld [vmem:[%s0 + $0x3c] sm:$0xf]
    %v67 = vld [vmem:[%s0 + $0x40] sm:$0xf]
    %v68 = vld [vmem:[%s0 + $0x44] sm:$0xf]
    %v69 = vld [vmem:[%s0 + $0x48] sm:$0xf]
    %v70 = vld [vmem:[%s0 + $0x4c] sm:$0xf]
    %v71 = vld [vmem:[%s0 + $0x50] sm:$0xf]
    %v72 = vld [vmem:[%s0 + $0x54] sm:$0xf]
    %v73 = vld [vmem:[%s0 + $0x58] sm:$0xf]
    %v74 = vld [vmem:[%s0 + $0x5c] sm:$0xf]
    %v75 = vld [vmem:[%s0 + $0x60] sm:$0xf]
    %v76 = vld [vmem:[%s0 + $0x64] sm:$0xf]
    %v77 = vld [vmem:[%s0 + $0x68] sm:$0xf]
    %v78 = vld [vmem:[%s0 + $0x6c] sm:$0xf]
    %v79 = vld [vmem:[%s0 + $0x70] sm:$0xf]
    %v80 = vld [vmem:[%s0 + $0x74] sm:$0xf]
    %v81 = vld [vmem:[%s0 + $0x78] sm:$0xf]
    %v82 = vld [vmem:[%s0 + $0x7c] sm:$0xf]
    %v83 = vld [vmem:[%s0 + $0x80] sm:$0xf]
    %v84 = vld [vmem:[%s0 + $0x84] sm:$0xf]
    %v85 = vld [vmem:[%s0 + $0x88] sm:$0xf]
    %v86 = vld [vmem:[%s0 + $0x8c] sm:$0xf]
    %v87 = vld [vmem:[%s0 + $0x90] sm:$0xf]
    %v88 = vld [vmem:[%s0 + $0x94] sm:$0xf]
    %v89 = vld [vmem:[%s0 + $0x98] sm:$0xf]
    %v90 = vld [vmem:[%s0 + $0x9c] sm:$0xf]
    %v91 = vld [vmem:[%s0 + $0xa0] sm:$0xf]
    %v92 = vld [vmem:[%s0 + $0xa4] sm:$0xf]
    %v93 = vld [vmem:[%s0 + $0xa8] sm:$0xf]
    %v94 = vld [vmem:[%s0 + $0xac] sm:$0xf]
    %v95 = vld [vmem:[%s0 + $0xb0] sm:$0xf]
    %v96 = vld [vmem:[%s0 + $0xb4] sm:$0xf]
    %v97 = vld [vmem:[%s0 + $0xb8] sm:$0xf]
    %v98 = vld [vmem:[%s0 + $0xbc] sm:$0xf]
    %v99 = vld [vmem:[%s0 + $0xc0] sm:$0xf]
    %v100 = vld [vmem:[%s0 + $0xc4] sm:$0xf]
    %v101 = vld [vmem:[%s0 + $0xc8] sm:$0xf]
    %v102 = vld [vmem:[%s0 + $0xcc] sm:$0xf]
    %v103 = vld [vmem:[%s0 + $0xd0] sm:$0xf]
    %v104 = vld [vmem:[%s0 + $0xd4] sm:$0xf]
    %v105 = vld [vmem:[%s0 + $0xd8] sm:$0xf]
    %v106 = vld [vmem:[%s0 + $0xdc] sm:$0xf]
    %v107 = vld [vmem:[%s0 + $0xe0] sm:$0xf]
    %v108 = vld [vmem:[%s0 + $0xe4] sm:$0xf]
    %v109 = vld [vmem:[%s0 + $0xe8] sm:$0xf]
    %v110 = vld [vmem:[%s0 + $0xec] sm:$0xf]
    %v111 = vld [vmem:[%s0 + $0xf0] sm:$0xf]
    %v112 = vld [vmem:[%s0 + $0xf4] sm:$0xf]
    %v113 = vld [vmem:[%s0 + $0xf8] sm:$0xf]
    %v114 = vld [vmem:[%s0 + $0xfc] sm:$0xf]
    %v115 = vld [vmem:[%s1] sm:$0xff]
    %v116 = vld [vmem:[%s1 + $0x8] sm:$0xff]
    %v117 = vld [vmem:[%s1 + $0x10] sm:$0xff]
    %v118 = vld [vmem:[%s1 + $0x18] sm:$0xff]
    %v119 = vld [vmem:[%s1 + $0x20] sm:$0xff]
    %v120 = vld [vmem:[%s1 + $0x28] sm:$0xff]
    %v121 = vld [vmem:[%s1 + $0x30] sm:$0xff]
    %v122 = vld [vmem:[%s1 + $0x38] sm:$0xff]
    %v123 = vld [vmem:[%s1 + $0x40] sm:$0xff]
    %v124 = vld [vmem:[%s1 + $0x48] sm:$0xff]
    %v125 = vld [vmem:[%s1 + $0x50] sm:$0xff]
    %v126 = vld [vmem:[%s1 + $0x58] sm:$0xff]
    %v127 = vld [vmem:[%s1 + $0x60] sm:$0xff]
    %v128 = vld [vmem:[%s1 + $0x68] sm:$0xff]
    %v129 = vld [vmem:[%s1 + $0x70] sm:$0xff]
    %v130 = vld [vmem:[%s1 + $0x78] sm:$0xff]
    %v131 = vld [vmem:[%s1 + $0x80] sm:$0xff]
    %v132 = vld [vmem:[%s1 + $0x88] sm:$0xff]
    %v133 = vld [vmem:[%s1 + $0x90] sm:$0xff]
    %v134 = vld [vmem:[%s1 + $0x98] sm:$0xff]
    %v135 = vld [vmem:[%s1 + $0xa0] sm:$0xff]
    %v136 = vld [vmem:[%s1 + $0xa8] sm:$0xff]
    %v137 = vld [vmem:[%s1 + $0xb0] sm:$0xff]
    %v138 = vld [vmem:[%s1 + $0xb8] sm:$0xff]
    %v139 = vld [vmem:[%s1 + $0xc0] sm:$0xff]
    %v140 = vld [vmem:[%s1 + $0xc8] sm:$0xff]
    %v141 = vld [vmem:[%s1 + $0xd0] sm:$0xff]
    %v142 = vld [vmem:[%s1 + $0xd8] sm:$0xff]
    %v143 = vld [vmem:[%s1 + $0xe0] sm:$0xff]
    %v144 = vld [vmem:[%s1 + $0xe8] sm:$0xff]
    %v145 = vld [vmem:[%s1 + $0xf0] sm:$0xff]
    %v146 = vld [vmem:[%s1 + $0xf8] sm:$0xff]
    %v179 = vunpack.c.l.b16 %v115
    %v180 = vunpack.c.h.b16 %v115
    %v181 = vunpack.c.l.b16 %v116
    %v182 = vunpack.c.h.b16 %v116
    %v183 = vunpack.c.l.b16 %v117
    %v184 = vunpack.c.h.b16 %v117
    %v185 = vunpack.c.l.b16 %v118
    %v186 = vunpack.c.h.b16 %v118
    %v187 = vunpack.c.l.b16 %v119
    %v188 = vunpack.c.h.b16 %v119
    %v189 = vunpack.c.l.b16 %v120
    %v190 = vunpack.c.h.b16 %v120
    %v191 = vunpack.c.l.b16 %v121
    %v192 = vunpack.c.h.b16 %v121
    %v193 = vunpack.c.l.b16 %v122
    %v194 = vunpack.c.h.b16 %v122
    %v195 = vunpack.c.l.b16 %v123
    %v196 = vunpack.c.h.b16 %v123
    %v197 = vunpack.c.l.b16 %v124
    %v198 = vunpack.c.h.b16 %v124
    %v199 = vunpack.c.l.b16 %v125
    %v200 = vunpack.c.h.b16 %v125
    %v201 = vunpack.c.l.b16 %v126
    %v202 = vunpack.c.h.b16 %v126
    %v203 = vunpack.c.l.b16 %v127
    %v204 = vunpack.c.h.b16 %v127
    %v205 = vunpack.c.l.b16 %v128
    %v206 = vunpack.c.h.b16 %v128
    %v207 = vunpack.c.l.b16 %v129
    %v208 = vunpack.c.h.b16 %v129
    %v209 = vunpack.c.l.b16 %v130
    %v210 = vunpack.c.h.b16 %v130
    %v211 = vunpack.c.l.b16 %v131
    %v212 = vunpack.c.h.b16 %v131
    %v213 = vunpack.c.l.b16 %v132
    %v214 = vunpack.c.h.b16 %v132
    %v215 = vunpack.c.l.b16 %v133
    %v216 = vunpack.c.h.b16 %v133
    %v217 = vunpack.c.l.b16 %v134
    %v218 = vunpack.c.h.b16 %v134
    %v219 = vunpack.c.l.b16 %v135
    %v220 = vunpack.c.h.b16 %v135
    %v221 = vunpack.c.l.b16 %v136
    %v222 = vunpack.c.h.b16 %v136
    %v223 = vunpack.c.l.b16 %v137
    %v224 = vunpack.c.h.b16 %v137
    %v225 = vunpack.c.l.b16 %v138
    %v226 = vunpack.c.h.b16 %v138
    %v227 = vunpack.c.l.b16 %v139
    %v228 = vunpack.c.h.b16 %v139
    %v229 = vunpack.c.l.b16 %v140
    %v230 = vunpack.c.h.b16 %v140
    %v231 = vunpack.c.l.b16 %v141
    %v232 = vunpack.c.h.b16 %v141
    %v233 = vunpack.c.l.b16 %v142
    %v234 = vunpack.c.h.b16 %v142
    %v235 = vunpack.c.l.b16 %v143
    %v236 = vunpack.c.h.b16 %v143
    %v237 = vunpack.c.l.b16 %v144
    %v238 = vunpack.c.h.b16 %v144
    %v239 = vunpack.c.l.b16 %v145
    %v240 = vunpack.c.h.b16 %v145
    %v241 = vunpack.c.l.b16 %v146
    %v242 = vunpack.c.h.b16 %v146
    %v243 = vpack.c.b16 %v183, %v179
    %v244 = vpack.c.b16 %v184, %v180
    %v245 = vpack.c.b16 %v185, %v181
    %v246 = vpack.c.b16 %v186, %v182
    %v247 = vpack.c.b16 %v191, %v187
    %v248 = vpack.c.b16 %v192, %v188
    %v249 = vpack.c.b16 %v193, %v189
    %v250 = vpack.c.b16 %v194, %v190
    %v251 = vpack.c.b16 %v199, %v195
    %v252 = vpack.c.b16 %v200, %v196
    %v253 = vpack.c.b16 %v201, %v197
    %v254 = vpack.c.b16 %v202, %v198
    %v255 = vpack.c.b16 %v207, %v203
    %v256 = vpack.c.b16 %v208, %v204
    %v257 = vpack.c.b16 %v209, %v205
    %v258 = vpack.c.b16 %v210, %v206
    %v259 = vpack.c.b16 %v215, %v211
    %v260 = vpack.c.b16 %v216, %v212
    %v261 = vpack.c.b16 %v217, %v213
    %v262 = vpack.c.b16 %v218, %v214
    %v263 = vpack.c.b16 %v223, %v219
    %v264 = vpack.c.b16 %v224, %v220
    %v265 = vpack.c.b16 %v225, %v221
    %v266 = vpack.c.b16 %v226, %v222
    %v267 = vpack.c.b16 %v231, %v227
    %v268 = vpack.c.b16 %v232, %v228
    %v269 = vpack.c.b16 %v233, %v229
    %v270 = vpack.c.b16 %v234, %v230
    %v271 = vpack.c.b16 %v239, %v235
    %v272 = vpack.c.b16 %v240, %v236
    %v273 = vpack.c.b16 %v241, %v237
    %v274 = vpack.c.b16 %v242, %v238
    %v371 = vunpack.c.l.b16 %v51
    %v372 = vunpack.c.l.b16 %v52
    %v373 = vunpack.c.l.b16 %v53
    %v374 = vunpack.c.l.b16 %v54
    %v375 = vunpack.c.l.b16 %v55
    %v376 = vunpack.c.l.b16 %v56
    %v377 = vunpack.c.l.b16 %v57
    %v378 = vunpack.c.l.b16 %v58
    %v379 = vunpack.c.l.b16 %v59
    %v380 = vunpack.c.l.b16 %v60
    %v381 = vunpack.c.l.b16 %v61
    %v382 = vunpack.c.l.b16 %v62
    %v383 = vunpack.c.l.b16 %v63
    %v384 = vunpack.c.l.b16 %v64
    %v385 = vunpack.c.l.b16 %v65
    %v386 = vunpack.c.l.b16 %v66
    %v387 = vunpack.c.l.b16 %v67
    %v388 = vunpack.c.l.b16 %v68
    %v389 = vunpack.c.l.b16 %v69
    %v390 = vunpack.c.l.b16 %v70
    %v391 = vunpack.c.l.b16 %v71
    %v392 = vunpack.c.l.b16 %v72
    %v393 = vunpack.c.l.b16 %v73
    %v394 = vunpack.c.l.b16 %v74
    %v395 = vunpack.c.l.b16 %v75
    %v396 = vunpack.c.l.b16 %v76
    %v397 = vunpack.c.l.b16 %v77
    %v398 = vunpack.c.l.b16 %v78
    %v399 = vunpack.c.l.b16 %v79
    %v400 = vunpack.c.l.b16 %v80
    %v401 = vunpack.c.l.b16 %v81
    %v402 = vunpack.c.l.b16 %v82
    %v403 = vunpack.c.l.b16 %v83
    %v404 = vunpack.c.l.b16 %v84
    %v405 = vunpack.c.l.b16 %v85
    %v406 = vunpack.c.l.b16 %v86
    %v407 = vunpack.c.l.b16 %v87
    %v408 = vunpack.c.l.b16 %v88
    %v409 = vunpack.c.l.b16 %v89
    %v410 = vunpack.c.l.b16 %v90
    %v411 = vunpack.c.l.b16 %v91
    %v412 = vunpack.c.l.b16 %v92
    %v413 = vunpack.c.l.b16 %v93
    %v414 = vunpack.c.l.b16 %v94
    %v415 = vunpack.c.l.b16 %v95
    %v416 = vunpack.c.l.b16 %v96
    %v417 = vunpack.c.l.b16 %v97
    %v418 = vunpack.c.l.b16 %v98
    %v419 = vunpack.c.l.b16 %v99
    %v420 = vunpack.c.l.b16 %v100
    %v421 = vunpack.c.l.b16 %v101
    %v422 = vunpack.c.l.b16 %v102
    %v423 = vunpack.c.l.b16 %v103
    %v424 = vunpack.c.l.b16 %v104
    %v425 = vunpack.c.l.b16 %v105
    %v426 = vunpack.c.l.b16 %v106
    %v427 = vunpack.c.l.b16 %v107
    %v428 = vunpack.c.l.b16 %v108
    %v429 = vunpack.c.l.b16 %v109
    %v430 = vunpack.c.l.b16 %v110
    %v431 = vunpack.c.l.b16 %v111
    %v432 = vunpack.c.l.b16 %v112
    %v433 = vunpack.c.l.b16 %v113
    %v434 = vunpack.c.l.b16 %v114
    %v435 = vpack.c.b16 %v372, %v371
    %v436 = vpack.c.b16 %v374, %v373
    %v437 = vpack.c.b16 %v376, %v375
    %v438 = vpack.c.b16 %v378, %v377
    %v439 = vpack.c.b16 %v380, %v379
    %v440 = vpack.c.b16 %v382, %v381
    %v441 = vpack.c.b16 %v384, %v383
    %v442 = vpack.c.b16 %v386, %v385
    %v443 = vpack.c.b16 %v388, %v387
    %v444 = vpack.c.b16 %v390, %v389
    %v445 = vpack.c.b16 %v392, %v391
    %v446 = vpack.c.b16 %v394, %v393
    %v447 = vpack.c.b16 %v396, %v395
    %v448 = vpack.c.b16 %v398, %v397
    %v449 = vpack.c.b16 %v400, %v399
    %v450 = vpack.c.b16 %v402, %v401
    %v451 = vpack.c.b16 %v404, %v403
    %v452 = vpack.c.b16 %v406, %v405
    %v453 = vpack.c.b16 %v408, %v407
    %v454 = vpack.c.b16 %v410, %v409
    %v455 = vpack.c.b16 %v412, %v411
    %v456 = vpack.c.b16 %v414, %v413
    %v457 = vpack.c.b16 %v416, %v415
    %v458 = vpack.c.b16 %v418, %v417
    %v459 = vpack.c.b16 %v420, %v419
    %v460 = vpack.c.b16 %v422, %v421
    %v461 = vpack.c.b16 %v424, %v423
    %v462 = vpack.c.b16 %v426, %v425
    %v463 = vpack.c.b16 %v428, %v427
    %v464 = vpack.c.b16 %v430, %v429
    %v465 = vpack.c.b16 %v432, %v431
    %v466 = vpack.c.b16 %v434, %v433
    %499 = vmatprep.subr.bf16.mxu0 0
    %500 = vmatpush1.bf16.msra.mxu0 %v435
    %501 = vmatprep.subr.bf16.mxu0 0
    %502 = vmatpush1.bf16.msra.mxu0 %v436
    %503 = vmatprep.subr.bf16.mxu0 0
    %504 = vmatpush1.bf16.msra.mxu0 %v437
    %505 = vmatprep.subr.bf16.mxu0 0
    %506 = vmatpush1.bf16.msra.mxu0 %v438
    %507 = vmatprep.subr.bf16.mxu0 0
    %508 = vmatpush1.bf16.msra.mxu0 %v439
    %509 = vmatprep.subr.bf16.mxu0 0
    %510 = vmatpush1.bf16.msra.mxu0 %v440
    %511 = vmatprep.subr.bf16.mxu0 0
    %512 = vmatpush1.bf16.msra.mxu0 %v441
    %513 = vmatprep.subr.bf16.mxu0 0
    %514 = vmatpush1.bf16.msra.mxu0 %v442
    %515 = vmatprep.subr.bf16.mxu0 0
    %516 = vmatpush1.bf16.msra.mxu0 %v443
    %517 = vmatprep.subr.bf16.mxu0 0
    %518 = vmatpush1.bf16.msra.mxu0 %v444
    %519 = vmatprep.subr.bf16.mxu0 0
    %520 = vmatpush1.bf16.msra.mxu0 %v445
    %521 = vmatprep.subr.bf16.mxu0 0
    %522 = vmatpush1.bf16.msra.mxu0 %v446
    %523 = vmatprep.subr.bf16.mxu0 0
    %524 = vmatpush1.bf16.msra.mxu0 %v447
    %525 = vmatprep.subr.bf16.mxu0 0
    %526 = vmatpush1.bf16.msra.mxu0 %v448
    %527 = vmatprep.subr.bf16.mxu0 0
    %528 = vmatpush1.bf16.msra.mxu0 %v449
    %529 = vmatprep.subr.bf16.mxu0 0
    %530 = vmatpush1.bf16.msra.mxu0 %v450
    %531 = vmatprep.mubr.bf16.mxu0 %v244
    %532 = vmatmul.mubr.bf16.gmra.mrb[0].mxu0 %v243
    %v533 = vpop.f32.mrb[0].mxu0
    %v534 = vadd.f32 0.0, %v533
    %v535 = vpop.f32.mrb[0].mxu0
    %v536 = vpop.f32.mrb[0].mxu0
    %v537 = vadd.f32 0.0, %v536
    %v538 = vpop.f32.mrb[0].mxu0
    %539 = vmatprep.mubr.bf16.mxu0 %v248
    %540 = vmatmul.mubr.bf16.gmra.mrb[0].mxu0 %v247
    %v541 = vpop.f32.mrb[0].mxu0
    %v542 = vadd.f32 0.0, %v541
    %v543 = vpop.f32.mrb[0].mxu0
    %v544 = vpop.f32.mrb[0].mxu0
    %v545 = vadd.f32 0.0, %v544
    %v546 = vpop.f32.mrb[0].mxu0
    %547 = vmatprep.mubr.bf16.mxu0 %v252
    %548 = vmatmul.mubr.bf16.gmra.mrb[0].mxu0 %v251
    %v549 = vpop.f32.mrb[0].mxu0
    %v550 = vadd.f32 0.0, %v549
    %v551 = vpop.f32.mrb[0].mxu0
    %v552 = vpop.f32.mrb[0].mxu0
    %v553 = vadd.f32 0.0, %v552
    %v554 = vpop.f32.mrb[0].mxu0
    %555 = vmatprep.mubr.bf16.mxu0 %v256
    %556 = vmatmul.mubr.bf16.gmra.mrb[0].mxu0 %v255
    %v557 = vpop.f32.mrb[0].mxu0
    %v558 = vadd.f32 0.0, %v557
    %v559 = vpop.f32.mrb[0].mxu0
    %v560 = vpop.f32.mrb[0].mxu0
    %v561 = vadd.f32 0.0, %v560
    %v562 = vpop.f32.mrb[0].mxu0
    %563 = vmatprep.mubr.bf16.mxu0 %v260
    %564 = vmatmul.mubr.bf16.gmra.mrb[0].mxu0 %v259
    %v565 = vpop.f32.mrb[0].mxu0
    %v566 = vadd.f32 0.0, %v565
    %v567 = vpop.f32.mrb[0].mxu0
    %v568 = vpop.f32.mrb[0].mxu0
    %v569 = vadd.f32 0.0, %v568
    %v570 = vpop.f32.mrb[0].mxu0
    %571 = vmatprep.mubr.bf16.mxu0 %v264
    %572 = vmatmul.mubr.bf16.gmra.mrb[0].mxu0 %v263
    %v573 = vpop.f32.mrb[0].mxu0
    %v574 = vadd.f32 0.0, %v573
    %v575 = vpop.f32.mrb[0].mxu0
    %v576 = vpop.f32.mrb[0].mxu0
    %v577 = vadd.f32 0.0, %v576
    %v578 = vpop.f32.mrb[0].mxu0
    %579 = vmatprep.mubr.bf16.mxu0 %v268
    %580 = vmatmul.mubr.bf16.gmra.mrb[0].mxu0 %v267
    %v581 = vpop.f32.mrb[0].mxu0
    %v582 = vadd.f32 0.0, %v581
    %v583 = vpop.f32.mrb[0].mxu0
    %v584 = vpop.f32.mrb[0].mxu0
    %v585 = vadd.f32 0.0, %v584
    %v586 = vpop.f32.mrb[0].mxu0
    %587 = vmatprep.mubr.bf16.mxu0 %v272
    %588 = vmatmul.mubr.bf16.gmra.mrb[0].mxu0 %v271
    %v589 = vpop.f32.mrb[0].mxu0
    %v590 = vadd.f32 0.0, %v589
    %v591 = vpop.f32.mrb[0].mxu0
    %v592 = vpop.f32.mrb[0].mxu0
    %v593 = vadd.f32 0.0, %v592
    %v594 = vpop.f32.mrb[0].mxu0
    %595 = vdwg.mxu0
    %596 = vmatprep.subr.bf16.mxu0 0
    %597 = vmatpush1.bf16.msra.mxu0 %v451
    %598 = vmatprep.subr.bf16.mxu0 0
    %599 = vmatpush1.bf16.msra.mxu0 %v452
    %600 = vmatprep.subr.bf16.mxu0 0
    %601 = vmatpush1.bf16.msra.mxu0 %v453
    %602 = vmatprep.subr.bf16.mxu0 0
    %603 = vmatpush1.bf16.msra.mxu0 %v454
    %604 = vmatprep.subr.bf16.mxu0 0
    %605 = vmatpush1.bf16.msra.mxu0 %v455
    %606 = vmatprep.subr.bf16.mxu0 0
    %607 = vmatpush1.bf16.msra.mxu0 %v456
    %608 = vmatprep.subr.bf16.mxu0 0
    %609 = vmatpush1.bf16.msra.mxu0 %v457
    %610 = vmatprep.subr.bf16.mxu0 0
    %611 = vmatpush1.bf16.msra.mxu0 %v458
    %612 = vmatprep.subr.bf16.mxu0 0
    %613 = vmatpush1.bf16.msra.mxu0 %v459
    %614 = vmatprep.subr.bf16.mxu0 0
    %615 = vmatpush1.bf16.msra.mxu0 %v460
    %616 = vmatprep.subr.bf16.mxu0 0
    %617 = vmatpush1.bf16.msra.mxu0 %v461
    %618 = vmatprep.subr.bf16.mxu0 0
    %619 = vmatpush1.bf16.msra.mxu0 %v462
    %620 = vmatprep.subr.bf16.mxu0 0
    %621 = vmatpush1.bf16.msra.mxu0 %v463
    %622 = vmatprep.subr.bf16.mxu0 0
    %623 = vmatpush1.bf16.msra.mxu0 %v464
    %624 = vmatprep.subr.bf16.mxu0 0
    %625 = vmatpush1.bf16.msra.mxu0 %v465
    %626 = vmatprep.subr.bf16.mxu0 0
    %627 = vmatpush1.bf16.msra.mxu0 %v466
    %628 = vmatprep.mubr.bf16.mxu0 %v246
    %629 = vmatmul.mubr.bf16.gmra.mrb[0].mxu0 %v245
    %v630 = vpop.f32.mrb[0].mxu0
    %v631 = vadd.f32 %v534, %v630
    %v632 = vpop.f32.mrb[0].mxu0
    %v633 = vpop.f32.mrb[0].mxu0
    %v634 = vadd.f32 %v537, %v633
    %v635 = vpop.f32.mrb[0].mxu0
    %636 = vmatprep.mubr.bf16.mxu0 %v250
    %637 = vmatmul.mubr.bf16.gmra.mrb[0].mxu0 %v249
    %v638 = vpop.f32.mrb[0].mxu0
    %v639 = vadd.f32 %v542, %v638
    %v640 = vpop.f32.mrb[0].mxu0
    %v641 = vpop.f32.mrb[0].mxu0
    %v642 = vadd.f32 %v545, %v641
    %v643 = vpop.f32.mrb[0].mxu0
    %644 = vmatprep.mubr.bf16.mxu0 %v254
    %645 = vmatmul.mubr.bf16.gmra.mrb[0].mxu0 %v253
    %v646 = vpop.f32.mrb[0].mxu0
    %v647 = vadd.f32 %v550, %v646
    %v648 = vpop.f32.mrb[0].mxu0
    %v649 = vpop.f32.mrb[0].mxu0
    %v650 = vadd.f32 %v553, %v649
    %v651 = vpop.f32.mrb[0].mxu0
    %652 = vmatprep.mubr.bf16.mxu0 %v258
    %653 = vmatmul.mubr.bf16.gmra.mrb[0].mxu0 %v257
    %v654 = vpop.f32.mrb[0].mxu0
    %v655 = vadd.f32 %v558, %v654
    %v656 = vpop.f32.mrb[0].mxu0
    %v657 = vpop.f32.mrb[0].mxu0
    %v658 = vadd.f32 %v561, %v657
    %v659 = vpop.f32.mrb[0].mxu0
    %660 = vmatprep.mubr.bf16.mxu0 %v262
    %661 = vmatmul.mubr.bf16.gmra.mrb[0].mxu0 %v261
    %v662 = vpop.f32.mrb[0].mxu0
    %v663 = vadd.f32 %v566, %v662
    %v664 = vpop.f32.mrb[0].mxu0
    %v665 = vpop.f32.mrb[0].mxu0
    %v666 = vadd.f32 %v569, %v665
    %v667 = vpop.f32.mrb[0].mxu0
    %668 = vmatprep.mubr.bf16.mxu0 %v266
    %669 = vmatmul.mubr.bf16.gmra.mrb[0].mxu0 %v265
    %v670 = vpop.f32.mrb[0].mxu0
    %v671 = vadd.f32 %v574, %v670
    %v672 = vpop.f32.mrb[0].mxu0
    %v673 = vpop.f32.mrb[0].mxu0
    %v674 = vadd.f32 %v577, %v673
    %v675 = vpop.f32.mrb[0].mxu0
    %676 = vmatprep.mubr.bf16.mxu0 %v270
    %677 = vmatmul.mubr.bf16.gmra.mrb[0].mxu0 %v269
    %v678 = vpop.f32.mrb[0].mxu0
    %v679 = vadd.f32 %v582, %v678
    %v680 = vpop.f32.mrb[0].mxu0
    %v681 = vpop.f32.mrb[0].mxu0
    %v682 = vadd.f32 %v585, %v681
    %v683 = vpop.f32.mrb[0].mxu0
    %684 = vmatprep.mubr.bf16.mxu0 %v274
    %685 = vmatmul.mubr.bf16.gmra.mrb[0].mxu0 %v273
    %v686 = vpop.f32.mrb[0].mxu0
    %v687 = vadd.f32 %v590, %v686
    %v688 = vpop.f32.mrb[0].mxu0
    %v689 = vpop.f32.mrb[0].mxu0
    %v690 = vadd.f32 %v593, %v689
    %v691 = vpop.f32.mrb[0].mxu0
    %692 = vdwg.mxu0
    %v693 = vpack.c.bf16 %v634, %v631
    %v694 = vpack.c.bf16 %v642, %v639
    %v695 = vpack.c.bf16 %v650, %v647
    %v696 = vpack.c.bf16 %v658, %v655
    %v697 = vpack.c.bf16 %v666, %v663
    %v698 = vpack.c.bf16 %v674, %v671
    %v699 = vpack.c.bf16 %v682, %v679
    %v700 = vpack.c.bf16 %v690, %v687
    %v701 = vld [vmem:[%s2] sm:$0x3]
    %s702 = scalar_lea.vmem %s1, 256
    %v703 = vld [vmem:[%s702] sm:$0xff]
    %v704 = vld [vmem:[%s702 + $0x8] sm:$0xff]
    %v705 = vld [vmem:[%s702 + $0x10] sm:$0xff]
    %v706 = vld [vmem:[%s702 + $0x18] sm:$0xff]
    %v707 = vld [vmem:[%s702 + $0x20] sm:$0xff]
    %v708 = vld [vmem:[%s702 + $0x28] sm:$0xff]
    %v709 = vld [vmem:[%s702 + $0x30] sm:$0xff]
    %v710 = vld [vmem:[%s702 + $0x38] sm:$0xff]
    %v711 = vld [vmem:[%s702 + $0x40] sm:$0xff]
    %v712 = vld [vmem:[%s702 + $0x48] sm:$0xff]
    %v713 = vld [vmem:[%s702 + $0x50] sm:$0xff]
    %v714 = vld [vmem:[%s702 + $0x58] sm:$0xff]
    %v715 = vld [vmem:[%s702 + $0x60] sm:$0xff]
    %v716 = vld [vmem:[%s702 + $0x68] sm:$0xff]
    %v717 = vld [vmem:[%s702 + $0x70] sm:$0xff]
    %v718 = vld [vmem:[%s702 + $0x78] sm:$0xff]
    %v719 = vld [vmem:[%s702 + $0x80] sm:$0xff]
    %v720 = vld [vmem:[%s702 + $0x88] sm:$0xff]
    %v721 = vld [vmem:[%s702 + $0x90] sm:$0xff]
    %v722 = vld [vmem:[%s702 + $0x98] sm:$0xff]
    %v723 = vld [vmem:[%s702 + $0xa0] sm:$0xff]
    %v724 = vld [vmem:[%s702 + $0xa8] sm:$0xff]
    %v725 = vld [vmem:[%s702 + $0xb0] sm:$0xff]
    %v726 = vld [vmem:[%s702 + $0xb8] sm:$0xff]
    %v727 = vld [vmem:[%s702 + $0xc0] sm:$0xff]
    %v728 = vld [vmem:[%s702 + $0xc8] sm:$0xff]
    %v729 = vld [vmem:[%s702 + $0xd0] sm:$0xff]
    %v730 = vld [vmem:[%s702 + $0xd8] sm:$0xff]
    %v731 = vld [vmem:[%s702 + $0xe0] sm:$0xff]
    %v732 = vld [vmem:[%s702 + $0xe8] sm:$0xff]
    %v733 = vld [vmem:[%s702 + $0xf0] sm:$0xff]
    %v734 = vld [vmem:[%s702 + $0xf8] sm:$0xff]
    %v767 = vunpack.c.l.b16 %v703
    %v768 = vunpack.c.h.b16 %v703
    %v769 = vunpack.c.l.b16 %v704
    %v770 = vunpack.c.h.b16 %v704
    %v771 = vunpack.c.l.b16 %v705
    %v772 = vunpack.c.h.b16 %v705
    %v773 = vunpack.c.l.b16 %v706
    %v774 = vunpack.c.h.b16 %v706
    %v775 = vunpack.c.l.b16 %v707
    %v776 = vunpack.c.h.b16 %v707
    %v777 = vunpack.c.l.b16 %v708
    %v778 = vunpack.c.h.b16 %v708
    %v779 = vunpack.c.l.b16 %v709
    %v780 = vunpack.c.h.b16 %v709
    %v781 = vunpack.c.l.b16 %v710
    %v782 = vunpack.c.h.b16 %v710
    %v783 = vunpack.c.l.b16 %v711
    %v784 = vunpack.c.h.b16 %v711
    %v785 = vunpack.c.l.b16 %v712
    %v786 = vunpack.c.h.b16 %v712
    %v787 = vunpack.c.l.b16 %v713
    %v788 = vunpack.c.h.b16 %v713
    %v789 = vunpack.c.l.b16 %v714
    %v790 = vunpack.c.h.b16 %v714
    %v791 = vunpack.c.l.b16 %v715
    %v792 = vunpack.c.h.b16 %v715
    %v793 = vunpack.c.l.b16 %v716
    %v794 = vunpack.c.h.b16 %v716
    %v795 = vunpack.c.l.b16 %v717
    %v796 = vunpack.c.h.b16 %v717
    %v797 = vunpack.c.l.b16 %v718
    %v798 = vunpack.c.h.b16 %v718
    %v799 = vunpack.c.l.b16 %v719
    %v800 = vunpack.c.h.b16 %v719
    %v801 = vunpack.c.l.b16 %v720
    %v802 = vunpack.c.h.b16 %v720
    %v803 = vunpack.c.l.b16 %v721
    %v804 = vunpack.c.h.b16 %v721
    %v805 = vunpack.c.l.b16 %v722
    %v806 = vunpack.c.h.b16 %v722
    %v807 = vunpack.c.l.b16 %v723
    %v808 = vunpack.c.h.b16 %v723
    %v809 = vunpack.c.l.b16 %v724
    %v810 = vunpack.c.h.b16 %v724
    %v811 = vunpack.c.l.b16 %v725
    %v812 = vunpack.c.h.b16 %v725
    %v813 = vunpack.c.l.b16 %v726
    %v814 = vunpack.c.h.b16 %v726
    %v815 = vunpack.c.l.b16 %v727
    %v816 = vunpack.c.h.b16 %v727
    %v817 = vunpack.c.l.b16 %v728
    %v818 = vunpack.c.h.b16 %v728
    %v819 = vunpack.c.l.b16 %v729
    %v820 = vunpack.c.h.b16 %v729
    %v821 = vunpack.c.l.b16 %v730
    %v822 = vunpack.c.h.b16 %v730
    %v823 = vunpack.c.l.b16 %v731
    %v824 = vunpack.c.h.b16 %v731
    %v825 = vunpack.c.l.b16 %v732
    %v826 = vunpack.c.h.b16 %v732
    %v827 = vunpack.c.l.b16 %v733
    %v828 = vunpack.c.h.b16 %v733
    %v829 = vunpack.c.l.b16 %v734
    %v830 = vunpack.c.h.b16 %v734
    %v831 = vpack.c.b16 %v771, %v767
    %v832 = vpack.c.b16 %v772, %v768
    %v833 = vpack.c.b16 %v773, %v769
    %v834 = vpack.c.b16 %v774, %v770
    %v835 = vpack.c.b16 %v779, %v775
    %v836 = vpack.c.b16 %v780, %v776
    %v837 = vpack.c.b16 %v781, %v777
    %v838 = vpack.c.b16 %v782, %v778
    %v839 = vpack.c.b16 %v787, %v783
    %v840 = vpack.c.b16 %v788, %v784
    %v841 = vpack.c.b16 %v789, %v785
    %v842 = vpack.c.b16 %v790, %v786
    %v843 = vpack.c.b16 %v795, %v791
    %v844 = vpack.c.b16 %v796, %v792
    %v845 = vpack.c.b16 %v797, %v793
    %v846 = vpack.c.b16 %v798, %v794
    %v847 = vpack.c.b16 %v803, %v799
    %v848 = vpack.c.b16 %v804, %v800
    %v849 = vpack.c.b16 %v805, %v801
    %v850 = vpack.c.b16 %v806, %v802
    %v851 = vpack.c.b16 %v811, %v807
    %v852 = vpack.c.b16 %v812, %v808
    %v853 = vpack.c.b16 %v813, %v809
    %v854 = vpack.c.b16 %v814, %v810
    %v855 = vpack.c.b16 %v819, %v815
    %v856 = vpack.c.b16 %v820, %v816
    %v857 = vpack.c.b16 %v821, %v817
    %v858 = vpack.c.b16 %v822, %v818
    %v859 = vpack.c.b16 %v827, %v823
    %v860 = vpack.c.b16 %v828, %v824
    %v861 = vpack.c.b16 %v829, %v825
    %v862 = vpack.c.b16 %v830, %v826
    %895 = vmatprep.subr.bf16.mxu0 0
    %896 = vmatpush1.bf16.msra.mxu0 %v435
    %897 = vmatprep.subr.bf16.mxu0 0
    %898 = vmatpush1.bf16.msra.mxu0 %v436
    %899 = vmatprep.subr.bf16.mxu0 0
    %900 = vmatpush1.bf16.msra.mxu0 %v437
    %901 = vmatprep.subr.bf16.mxu0 0
    %902 = vmatpush1.bf16.msra.mxu0 %v438
    %903 = vmatprep.subr.bf16.mxu0 0
    %904 = vmatpush1.bf16.msra.mxu0 %v439
    %905 = vmatprep.subr.bf16.mxu0 0
    %906 = vmatpush1.bf16.msra.mxu0 %v440
    %907 = vmatprep.subr.bf16.mxu0 0
    %908 = vmatpush1.bf16.msra.mxu0 %v441
    %909 = vmatprep.subr.bf16.mxu0 0
    %910 = vmatpush1.bf16.msra.mxu0 %v442
    %911 = vmatprep.subr.bf16.mxu0 0
    %912 = vmatpush1.bf16.msra.mxu0 %v443
    %913 = vmatprep.subr.bf16.mxu0 0
    %914 = vmatpush1.bf16.msra.mxu0 %v444
    %915 = vmatprep.subr.bf16.mxu0 0
    %916 = vmatpush1.bf16.msra.mxu0 %v445
    %917 = vmatprep.subr.bf16.mxu0 0
    %918 = vmatpush1.bf16.msra.mxu0 %v446
    %919 = vmatprep.subr.bf16.mxu0 0
    %920 = vmatpush1.bf16.msra.mxu0 %v447
    %921 = vmatprep.subr.bf16.mxu0 0
    %922 = vmatpush1.bf16.msra.mxu0 %v448
    %923 = vmatprep.subr.bf16.mxu0 0
    %924 = vmatpush1.bf16.msra.mxu0 %v449
    %925 = vmatprep.subr.bf16.mxu0 0
    %926 = vmatpush1.bf16.msra.mxu0 %v450
    %927 = vmatprep.mubr.bf16.mxu0 %v832
    %928 = vmatmul.mubr.bf16.gmra.mrb[0].mxu0 %v831
    %v929 = vpop.f32.mrb[0].mxu0
    %v930 = vadd.f32 0.0, %v929
    %v931 = vpop.f32.mrb[0].mxu0
    %v932 = vpop.f32.mrb[0].mxu0
    %v933 = vadd.f32 0.0, %v932
    %v934 = vpop.f32.mrb[0].mxu0
    %935 = vmatprep.mubr.bf16.mxu0 %v836
    %936 = vmatmul.mubr.bf16.gmra.mrb[0].mxu0 %v835
    %v937 = vpop.f32.mrb[0].mxu0
    %v938 = vadd.f32 0.0, %v937
    %v939 = vpop.f32.mrb[0].mxu0
    %v940 = vpop.f32.mrb[0].mxu0
    %v941 = vadd.f32 0.0, %v940
    %v942 = vpop.f32.mrb[0].mxu0
    %943 = vmatprep.mubr.bf16.mxu0 %v840
    %944 = vmatmul.mubr.bf16.gmra.mrb[0].mxu0 %v839
    %v945 = vpop.f32.mrb[0].mxu0
    %v946 = vadd.f32 0.0, %v945
    %v947 = vpop.f32.mrb[0].mxu0
    %v948 = vpop.f32.mrb[0].mxu0
    %v949 = vadd.f32 0.0, %v948
    %v950 = vpop.f32.mrb[0].mxu0
    %951 = vmatprep.mubr.bf16.mxu0 %v844
    %952 = vmatmul.mubr.bf16.gmra.mrb[0].mxu0 %v843
    %v953 = vpop.f32.mrb[0].mxu0
    %v954 = vadd.f32 0.0, %v953
    %v955 = vpop.f32.mrb[0].mxu0
    %v956 = vpop.f32.mrb[0].mxu0
    %v957 = vadd.f32 0.0, %v956
    %v958 = vpop.f32.mrb[0].mxu0
    %959 = vmatprep.mubr.bf16.mxu0 %v848
    %960 = vmatmul.mubr.bf16.gmra.mrb[0].mxu0 %v847
    %v961 = vpop.f32.mrb[0].mxu0
    %v962 = vadd.f32 0.0, %v961
    %v963 = vpop.f32.mrb[0].mxu0
    %v964 = vpop.f32.mrb[0].mxu0
    %v965 = vadd.f32 0.0, %v964
    %v966 = vpop.f32.mrb[0].mxu0
    %967 = vmatprep.mubr.bf16.mxu0 %v852
    %968 = vmatmul.mubr.bf16.gmra.mrb[0].mxu0 %v851
    %v969 = vpop.f32.mrb[0].mxu0
    %v970 = vadd.f32 0.0, %v969
    %v971 = vpop.f32.mrb[0].mxu0
    %v972 = vpop.f32.mrb[0].mxu0
    %v973 = vadd.f32 0.0, %v972
    %v974 = vpop.f32.mrb[0].mxu0
    %975 = vmatprep.mubr.bf16.mxu0 %v856
    %976 = vmatmul.mubr.bf16.gmra.mrb[0].mxu0 %v855
    %v977 = vpop.f32.mrb[0].mxu0
    %v978 = vadd.f32 0.0, %v977
    %v979 = vpop.f32.mrb[0].mxu0
    %v980 = vpop.f32.mrb[0].mxu0
    %v981 = vadd.f32 0.0, %v980
    %v982 = vpop.f32.mrb[0].mxu0
    %983 = vmatprep.mubr.bf16.mxu0 %v860
    %984 = vmatmul.mubr.bf16.gmra.mrb[0].mxu0 %v859
    %v985 = vpop.f32.mrb[0].mxu0
    %v986 = vadd.f32 0.0, %v985
    %v987 = vpop.f32.mrb[0].mxu0
    %v988 = vpop.f32.mrb[0].mxu0
    %v989 = vadd.f32 0.0, %v988
    %v990 = vpop.f32.mrb[0].mxu0
    %991 = vdwg.mxu0
    %992 = vmatprep.subr.bf16.mxu0 0
    %993 = vmatpush1.bf16.msra.mxu0 %v451
    %994 = vmatprep.subr.bf16.mxu0 0
    %995 = vmatpush1.bf16.msra.mxu0 %v452
    %996 = vmatprep.subr.bf16.mxu0 0
    %997 = vmatpush1.bf16.msra.mxu0 %v453
    %998 = vmatprep.subr.bf16.mxu0 0
    %999 = vmatpush1.bf16.msra.mxu0 %v454
    %1000 = vmatprep.subr.bf16.mxu0 0
    %1001 = vmatpush1.bf16.msra.mxu0 %v455
    %1002 = vmatprep.subr.bf16.mxu0 0
    %1003 = vmatpush1.bf16.msra.mxu0 %v456
    %1004 = vmatprep.subr.bf16.mxu0 0
    %1005 = vmatpush1.bf16.msra.mxu0 %v457
    %1006 = vmatprep.subr.bf16.mxu0 0
    %1007 = vmatpush1.bf16.msra.mxu0 %v458
    %1008 = vmatprep.subr.bf16.mxu0 0
    %1009 = vmatpush1.bf16.msra.mxu0 %v459
    %1010 = vmatprep.subr.bf16.mxu0 0
    %1011 = vmatpush1.bf16.msra.mxu0 %v460
    %1012 = vmatprep.subr.bf16.mxu0 0
    %1013 = vmatpush1.bf16.msra.mxu0 %v461
    %1014 = vmatprep.subr.bf16.mxu0 0
    %1015 = vmatpush1.bf16.msra.mxu0 %v462
    %1016 = vmatprep.subr.bf16.mxu0 0
    %1017 = vmatpush1.bf16.msra.mxu0 %v463
    %1018 = vmatprep.subr.bf16.mxu0 0
    %1019 = vmatpush1.bf16.msra.mxu0 %v464
    %1020 = vmatprep.subr.bf16.mxu0 0
    %1021 = vmatpush1.bf16.msra.mxu0 %v465
    %1022 = vmatprep.subr.bf16.mxu0 0
    %1023 = vmatpush1.bf16.msra.mxu0 %v466
    %1024 = vmatprep.mubr.bf16.mxu0 %v834
    %1025 = vmatmul.mubr.bf16.gmra.mrb[0].mxu0 %v833
    %v1026 = vpop.f32.mrb[0].mxu0
    %v1027 = vadd.f32 %v930, %v1026
    %v1028 = vpop.f32.mrb[0].mxu0
    %v1029 = vpop.f32.mrb[0].mxu0
    %v1030 = vadd.f32 %v933, %v1029
    %v1031 = vpop.f32.mrb[0].mxu0
    %1032 = vmatprep.mubr.bf16.mxu0 %v838
    %1033 = vmatmul.mubr.bf16.gmra.mrb[0].mxu0 %v837
    %v1034 = vpop.f32.mrb[0].mxu0
    %v1035 = vadd.f32 %v938, %v1034
    %v1036 = vpop.f32.mrb[0].mxu0
    %v1037 = vpop.f32.mrb[0].mxu0
    %v1038 = vadd.f32 %v941, %v1037
    %v1039 = vpop.f32.mrb[0].mxu0
    %1040 = vmatprep.mubr.bf16.mxu0 %v842
    %1041 = vmatmul.mubr.bf16.gmra.mrb[0].mxu0 %v841
    %v1042 = vpop.f32.mrb[0].mxu0
    %v1043 = vadd.f32 %v946, %v1042
    %v1044 = vpop.f32.mrb[0].mxu0
    %v1045 = vpop.f32.mrb[0].mxu0
    %v1046 = vadd.f32 %v949, %v1045
    %v1047 = vpop.f32.mrb[0].mxu0
    %1048 = vmatprep.mubr.bf16.mxu0 %v846
    %1049 = vmatmul.mubr.bf16.gmra.mrb[0].mxu0 %v845
    %v1050 = vpop.f32.mrb[0].mxu0
    %v1051 = vadd.f32 %v954, %v1050
    %v1052 = vpop.f32.mrb[0].mxu0
    %v1053 = vpop.f32.mrb[0].mxu0
    %v1054 = vadd.f32 %v957, %v1053
    %v1055 = vpop.f32.mrb[0].mxu0
    %1056 = vmatprep.mubr.bf16.mxu0 %v850
    %1057 = vmatmul.mubr.bf16.gmra.mrb[0].mxu0 %v849
    %v1058 = vpop.f32.mrb[0].mxu0
    %v1059 = vadd.f32 %v962, %v1058
    %v1060 = vpop.f32.mrb[0].mxu0
    %v1061 = vpop.f32.mrb[0].mxu0
    %v1062 = vadd.f32 %v965, %v1061
    %v1063 = vpop.f32.mrb[0].mxu0
    %1064 = vmatprep.mubr.bf16.mxu0 %v854
    %1065 = vmatmul.mubr.bf16.gmra.mrb[0].mxu0 %v853
    %v1066 = vpop.f32.mrb[0].mxu0
    %v1067 = vadd.f32 %v970, %v1066
    %v1068 = vpop.f32.mrb[0].mxu0
    %v1069 = vpop.f32.mrb[0].mxu0
    %v1070 = vadd.f32 %v973, %v1069
    %v1071 = vpop.f32.mrb[0].mxu0
    %1072 = vmatprep.mubr.bf16.mxu0 %v858
    %1073 = vmatmul.mubr.bf16.gmra.mrb[0].mxu0 %v857
    %v1074 = vpop.f32.mrb[0].mxu0
    %v1075 = vadd.f32 %v978, %v1074
    %v1076 = vpop.f32.mrb[0].mxu0
    %v1077 = vpop.f32.mrb[0].mxu0
    %v1078 = vadd.f32 %v981, %v1077
    %v1079 = vpop.f32.mrb[0].mxu0
    %1080 = vmatprep.mubr.bf16.mxu0 %v862
    %1081 = vmatmul.mubr.bf16.gmra.mrb[0].mxu0 %v861
    %v1082 = vpop.f32.mrb[0].mxu0
    %v1083 = vadd.f32 %v986, %v1082
    %v1084 = vpop.f32.mrb[0].mxu0
    %v1085 = vpop.f32.mrb[0].mxu0
    %v1086 = vadd.f32 %v989, %v1085
    %v1087 = vpop.f32.mrb[0].mxu0
    %1088 = vdwg.mxu0
    %v1089 = vpack.c.bf16 %v1030, %v1027
    %v1090 = vpack.c.bf16 %v1038, %v1035
    %v1091 = vpack.c.bf16 %v1046, %v1043
    %v1092 = vpack.c.bf16 %v1054, %v1051
    %v1093 = vpack.c.bf16 %v1062, %v1059
    %v1094 = vpack.c.bf16 %v1070, %v1067
    %v1095 = vpack.c.bf16 %v1078, %v1075
    %v1096 = vpack.c.bf16 %v1086, %v1083
    %s1097 = scalar_lea.vmem %s2, 2
    %v1098 = vld [vmem:[%s1097] sm:$0x3]
    %vm1099 = vcmask 23552
    %v1101 = vsel %vm1099, %v1089, 0
    %v1104 = vsel %vm1099, %v1090, 0
    %v1107 = vsel %vm1099, %v1091, 0
    %v1110 = vsel %vm1099, %v1092, 0
    %v1113 = vsel %vm1099, %v1093, 0
    %v1116 = vsel %vm1099, %v1094, 0
    %v1119 = vsel %vm1099, %v1095, 0
    %v1122 = vsel %vm1099, %v1096, 0
    %vm1124 = vcmask 1040384
    %vm1125 = vcmask 1041408
    %v1126 = vsel %vm1124, 4294967295, 65535
    %v1127 = vsel %vm1125, %v1126, 0
    %v1129 = vand.u32 %v1098, %v1127
    %1131 = vmatprep.subr.bf16.mxu0 0
    %1132 = vmatpush1.bf16.msra.mxu0 %v1129
    %1133 = vmatprep.subr.bf16.mxu0 0
    %1134 = vmatpush1.bf16.msra.mxu0 0
    %1135 = vmatprep.subr.bf16.mxu0 0
    %1136 = vmatpush1.bf16.msra.mxu0 0
    %1137 = vmatprep.subr.bf16.mxu0 0
    %1138 = vmatpush1.bf16.msra.mxu0 0
    %1139 = vmatprep.subr.bf16.mxu0 0
    %1140 = vmatpush1.bf16.msra.mxu0 0
    %1141 = vmatprep.subr.bf16.mxu0 0
    %1142 = vmatpush1.bf16.msra.mxu0 0
    %1143 = vmatprep.subr.bf16.mxu0 0
    %1144 = vmatpush1.bf16.msra.mxu0 0
    %1145 = vmatprep.subr.bf16.mxu0 0
    %1146 = vmatpush1.bf16.msra.mxu0 0
    %1147 = vmatprep.subr.bf16.mxu0 0
    %1148 = vmatpush1.bf16.msra.mxu0 0
    %1149 = vmatprep.subr.bf16.mxu0 0
    %1150 = vmatpush1.bf16.msra.mxu0 0
    %1151 = vmatprep.subr.bf16.mxu0 0
    %1152 = vmatpush1.bf16.msra.mxu0 0
    %1153 = vmatprep.subr.bf16.mxu0 0
    %1154 = vmatpush1.bf16.msra.mxu0 0
    %1155 = vmatprep.subr.bf16.mxu0 0
    %1156 = vmatpush1.bf16.msra.mxu0 0
    %1157 = vmatprep.subr.bf16.mxu0 0
    %1158 = vmatpush1.bf16.msra.mxu0 0
    %1159 = vmatprep.subr.bf16.mxu0 0
    %1160 = vmatpush1.bf16.msra.mxu0 0
    %1161 = vmatprep.subr.bf16.mxu0 0
    %1162 = vmatpush1.bf16.msra.mxu0 0
    %1163 = vmatprep.mubr.bf16.mxu0 0
    %1164 = vmatmul.mubr.bf16.gmra.mrb[0].mxu0 %v1101
    %v1165 = vpop.f32.mrb[0].mxu0
    %v1166 = vadd.f32 0.0, %v1165
    %v1167 = vpop.f32.mrb[0].mxu0
    %v1168 = vpop.f32.mrb[0].mxu0
    %v1169 = vadd.f32 0.0, %v1168
    %v1170 = vpop.f32.mrb[0].mxu0
    %1171 = vmatprep.mubr.bf16.mxu0 0
    %1172 = vmatmul.mubr.bf16.gmra.mrb[0].mxu0 %v1104
    %v1173 = vpop.f32.mrb[0].mxu0
    %v1174 = vadd.f32 0.0, %v1173
    %v1175 = vpop.f32.mrb[0].mxu0
    %v1176 = vpop.f32.mrb[0].mxu0
    %v1177 = vadd.f32 0.0, %v1176
    %v1178 = vpop.f32.mrb[0].mxu0
    %1179 = vmatprep.mubr.bf16.mxu0 0
    %1180 = vmatmul.mubr.bf16.gmra.mrb[0].mxu0 %v1107
    %v1181 = vpop.f32.mrb[0].mxu0
    %v1182 = vadd.f32 0.0, %v1181
    %v1183 = vpop.f32.mrb[0].mxu0
    %v1184 = vpop.f32.mrb[0].mxu0
    %v1185 = vadd.f32 0.0, %v1184
    %v1186 = vpop.f32.mrb[0].mxu0
    %1187 = vmatprep.mubr.bf16.mxu0 0
    %1188 = vmatmul.mubr.bf16.gmra.mrb[0].mxu0 %v1110
    %v1189 = vpop.f32.mrb[0].mxu0
    %v1190 = vadd.f32 0.0, %v1189
    %v1191 = vpop.f32.mrb[0].mxu0
    %v1192 = vpop.f32.mrb[0].mxu0
    %v1193 = vadd.f32 0.0, %v1192
    %v1194 = vpop.f32.mrb[0].mxu0
    %1195 = vmatprep.mubr.bf16.mxu0 0
    %1196 = vmatmul.mubr.bf16.gmra.mrb[0].mxu0 %v1113
    %v1197 = vpop.f32.mrb[0].mxu0
    %v1198 = vadd.f32 0.0, %v1197
    %v1199 = vpop.f32.mrb[0].mxu0
    %v1200 = vpop.f32.mrb[0].mxu0
    %v1201 = vadd.f32 0.0, %v1200
    %v1202 = vpop.f32.mrb[0].mxu0
    %1203 = vmatprep.mubr.bf16.mxu0 0
    %1204 = vmatmul.mubr.bf16.gmra.mrb[0].mxu0 %v1116
    %v1205 = vpop.f32.mrb[0].mxu0
    %v1206 = vadd.f32 0.0, %v1205
    %v1207 = vpop.f32.mrb[0].mxu0
    %v1208 = vpop.f32.mrb[0].mxu0
    %v1209 = vadd.f32 0.0, %v1208
    %v1210 = vpop.f32.mrb[0].mxu0
    %1211 = vmatprep.mubr.bf16.mxu0 0
    %1212 = vmatmul.mubr.bf16.gmra.mrb[0].mxu0 %v1119
    %v1213 = vpop.f32.mrb[0].mxu0
    %v1214 = vadd.f32 0.0, %v1213
    %v1215 = vpop.f32.mrb[0].mxu0
    %v1216 = vpop.f32.mrb[0].mxu0
    %v1217 = vadd.f32 0.0, %v1216
    %v1218 = vpop.f32.mrb[0].mxu0
    %1219 = vmatprep.mubr.bf16.mxu0 0
    %1220 = vmatmul.mubr.bf16.gmra.mrb[0].mxu0 %v1122
    %v1221 = vpop.f32.mrb[0].mxu0
    %v1222 = vadd.f32 0.0, %v1221
    %v1223 = vpop.f32.mrb[0].mxu0
    %v1224 = vpop.f32.mrb[0].mxu0
    %v1225 = vadd.f32 0.0, %v1224
    %v1226 = vpop.f32.mrb[0].mxu0
    %1227 = vdwg.mxu0
    %v1229 = vsel %vm1099, %v693, 0
    %v1232 = vsel %vm1099, %v694, 0
    %v1235 = vsel %vm1099, %v695, 0
    %v1238 = vsel %vm1099, %v696, 0
    %v1241 = vsel %vm1099, %v697, 0
    %v1244 = vsel %vm1099, %v698, 0
    %v1247 = vsel %vm1099, %v699, 0
    %v1250 = vsel %vm1099, %v700, 0
    %v1253 = vand.u32 %v701, %v1127
    %1255 = vmatprep.subr.bf16.mxu0 0
    %1256 = vmatpush1.bf16.msra.mxu0 %v1253
    %1257 = vmatprep.subr.bf16.mxu0 0
    %1258 = vmatpush1.bf16.msra.mxu0 0
    %1259 = vmatprep.subr.bf16.mxu0 0
    %1260 = vmatpush1.bf16.msra.mxu0 0
    %1261 = vmatprep.subr.bf16.mxu0 0
    %1262 = vmatpush1.bf16.msra.mxu0 0
    %1263 = vmatprep.subr.bf16.mxu0 0
    %1264 = vmatpush1.bf16.msra.mxu0 0
    %1265 = vmatprep.subr.bf16.mxu0 0
    %1266 = vmatpush1.bf16.msra.mxu0 0
    %1267 = vmatprep.subr.bf16.mxu0 0
    %1268 = vmatpush1.bf16.msra.mxu0 0
    %1269 = vmatprep.subr.bf16.mxu0 0
    %1270 = vmatpush1.bf16.msra.mxu0 0
    %1271 = vmatprep.subr.bf16.mxu0 0
    %1272 = vmatpush1.bf16.msra.mxu0 0
    %1273 = vmatprep.subr.bf16.mxu0 0
    %1274 = vmatpush1.bf16.msra.mxu0 0
    %1275 = vmatprep.subr.bf16.mxu0 0
    %1276 = vmatpush1.bf16.msra.mxu0 0
    %1277 = vmatprep.subr.bf16.mxu0 0
    %1278 = vmatpush1.bf16.msra.mxu0 0
    %1279 = vmatprep.subr.bf16.mxu0 0
    %1280 = vmatpush1.bf16.msra.mxu0 0
    %1281 = vmatprep.subr.bf16.mxu0 0
    %1282 = vmatpush1.bf16.msra.mxu0 0
    %1283 = vmatprep.subr.bf16.mxu0 0
    %1284 = vmatpush1.bf16.msra.mxu0 0
    %1285 = vmatprep.subr.bf16.mxu0 0
    %1286 = vmatpush1.bf16.msra.mxu0 0
    %1287 = vmatprep.mubr.bf16.mxu0 0
    %1288 = vmatmul.mubr.bf16.gmra.mrb[0].mxu0 %v1229
    %v1289 = vpop.f32.mrb[0].mxu0
    %v1290 = vadd.f32 %v1166, %v1289
    %v1291 = vpop.f32.mrb[0].mxu0
    %v1292 = vpop.f32.mrb[0].mxu0
    %v1293 = vadd.f32 %v1169, %v1292
    %v1294 = vpop.f32.mrb[0].mxu0
    %1295 = vmatprep.mubr.bf16.mxu0 0
    %1296 = vmatmul.mubr.bf16.gmra.mrb[0].mxu0 %v1232
    %v1297 = vpop.f32.mrb[0].mxu0
    %v1298 = vadd.f32 %v1174, %v1297
    %v1299 = vpop.f32.mrb[0].mxu0
    %v1300 = vpop.f32.mrb[0].mxu0
    %v1301 = vadd.f32 %v1177, %v1300
    %v1302 = vpop.f32.mrb[0].mxu0
    %1303 = vmatprep.mubr.bf16.mxu0 0
    %1304 = vmatmul.mubr.bf16.gmra.mrb[0].mxu0 %v1235
    %v1305 = vpop.f32.mrb[0].mxu0
    %v1306 = vadd.f32 %v1182, %v1305
    %v1307 = vpop.f32.mrb[0].mxu0
    %v1308 = vpop.f32.mrb[0].mxu0
    %v1309 = vadd.f32 %v1185, %v1308
    %v1310 = vpop.f32.mrb[0].mxu0
    %1311 = vmatprep.mubr.bf16.mxu0 0
    %1312 = vmatmul.mubr.bf16.gmra.mrb[0].mxu0 %v1238
    %v1313 = vpop.f32.mrb[0].mxu0
    %v1314 = vadd.f32 %v1190, %v1313
    %v1315 = vpop.f32.mrb[0].mxu0
    %v1316 = vpop.f32.mrb[0].mxu0
    %v1317 = vadd.f32 %v1193, %v1316
    %v1318 = vpop.f32.mrb[0].mxu0
    %1319 = vmatprep.mubr.bf16.mxu0 0
    %1320 = vmatmul.mubr.bf16.gmra.mrb[0].mxu0 %v1241
    %v1321 = vpop.f32.mrb[0].mxu0
    %v1322 = vadd.f32 %v1198, %v1321
    %v1323 = vpop.f32.mrb[0].mxu0
    %v1324 = vpop.f32.mrb[0].mxu0
    %v1325 = vadd.f32 %v1201, %v1324
    %v1326 = vpop.f32.mrb[0].mxu0
    %1327 = vmatprep.mubr.bf16.mxu0 0
    %1328 = vmatmul.mubr.bf16.gmra.mrb[0].mxu0 %v1244
    %v1329 = vpop.f32.mrb[0].mxu0
    %v1330 = vadd.f32 %v1206, %v1329
    %v1331 = vpop.f32.mrb[0].mxu0
    %v1332 = vpop.f32.mrb[0].mxu0
    %v1333 = vadd.f32 %v1209, %v1332
    %v1334 = vpop.f32.mrb[0].mxu0
    %1335 = vmatprep.mubr.bf16.mxu0 0
    %1336 = vmatmul.mubr.bf16.gmra.mrb[0].mxu0 %v1247
    %v1337 = vpop.f32.mrb[0].mxu0
    %v1338 = vadd.f32 %v1214, %v1337
    %v1339 = vpop.f32.mrb[0].mxu0
    %v1340 = vpop.f32.mrb[0].mxu0
    %v1341 = vadd.f32 %v1217, %v1340
    %v1342 = vpop.f32.mrb[0].mxu0
    %1343 = vmatprep.mubr.bf16.mxu0 0
    %1344 = vmatmul.mubr.bf16.gmra.mrb[0].mxu0 %v1250
    %v1345 = vpop.f32.mrb[0].mxu0
    %v1346 = vadd.f32 %v1222, %v1345
    %v1347 = vpop.f32.mrb[0].mxu0
    %v1348 = vpop.f32.mrb[0].mxu0
    %v1349 = vadd.f32 %v1225, %v1348
    %v1350 = vpop.f32.mrb[0].mxu0
    %1351 = vdwg.mxu0
    %s1352 = scalar_lea.vmem %s1, 512
    %v1353 = vld [vmem:[%s1352] sm:$0xff]
    %v1354 = vld [vmem:[%s1352 + $0x8] sm:$0xff]
    %v1355 = vld [vmem:[%s1352 + $0x10] sm:$0xff]
    %v1356 = vld [vmem:[%s1352 + $0x18] sm:$0xff]
    %v1357 = vld [vmem:[%s1352 + $0x20] sm:$0xff]
    %v1358 = vld [vmem:[%s1352 + $0x28] sm:$0xff]
    %v1359 = vld [vmem:[%s1352 + $0x30] sm:$0xff]
    %v1360 = vld [vmem:[%s1352 + $0x38] sm:$0xff]
    %v1361 = vld [vmem:[%s1352 + $0x40] sm:$0xff]
    %v1362 = vld [vmem:[%s1352 + $0x48] sm:$0xff]
    %v1363 = vld [vmem:[%s1352 + $0x50] sm:$0xff]
    %v1364 = vld [vmem:[%s1352 + $0x58] sm:$0xff]
    %v1365 = vld [vmem:[%s1352 + $0x60] sm:$0xff]
    %v1366 = vld [vmem:[%s1352 + $0x68] sm:$0xff]
    %v1367 = vld [vmem:[%s1352 + $0x70] sm:$0xff]
    %v1368 = vld [vmem:[%s1352 + $0x78] sm:$0xff]
    %v1369 = vld [vmem:[%s1352 + $0x80] sm:$0xff]
    %v1370 = vld [vmem:[%s1352 + $0x88] sm:$0xff]
    %v1371 = vld [vmem:[%s1352 + $0x90] sm:$0xff]
    %v1372 = vld [vmem:[%s1352 + $0x98] sm:$0xff]
    %v1373 = vld [vmem:[%s1352 + $0xa0] sm:$0xff]
    %v1374 = vld [vmem:[%s1352 + $0xa8] sm:$0xff]
    %v1375 = vld [vmem:[%s1352 + $0xb0] sm:$0xff]
    %v1376 = vld [vmem:[%s1352 + $0xb8] sm:$0xff]
    %v1377 = vld [vmem:[%s1352 + $0xc0] sm:$0xff]
    %v1378 = vld [vmem:[%s1352 + $0xc8] sm:$0xff]
    %v1379 = vld [vmem:[%s1352 + $0xd0] sm:$0xff]
    %v1380 = vld [vmem:[%s1352 + $0xd8] sm:$0xff]
    %v1381 = vld [vmem:[%s1352 + $0xe0] sm:$0xff]
    %v1382 = vld [vmem:[%s1352 + $0xe8] sm:$0xff]
    %v1383 = vld [vmem:[%s1352 + $0xf0] sm:$0xff]
    %v1384 = vld [vmem:[%s1352 + $0xf8] sm:$0xff]
    %v1417 = vunpack.c.l.b16 %v1353
    %v1418 = vunpack.c.h.b16 %v1353
    %v1419 = vunpack.c.l.b16 %v1354
    %v1420 = vunpack.c.h.b16 %v1354
    %v1421 = vunpack.c.l.b16 %v1355
    %v1422 = vunpack.c.h.b16 %v1355
    %v1423 = vunpack.c.l.b16 %v1356
    %v1424 = vunpack.c.h.b16 %v1356
    %v1425 = vunpack.c.l.b16 %v1357
    %v1426 = vunpack.c.h.b16 %v1357
    %v1427 = vunpack.c.l.b16 %v1358
    %v1428 = vunpack.c.h.b16 %v1358
    %v1429 = vunpack.c.l.b16 %v1359
    %v1430 = vunpack.c.h.b16 %v1359
    %v1431 = vunpack.c.l.b16 %v1360
    %v1432 = vunpack.c.h.b16 %v1360
    %v1433 = vunpack.c.l.b16 %v1361
    %v1434 = vunpack.c.h.b16 %v1361
    %v1435 = vunpack.c.l.b16 %v1362
    %v1436 = vunpack.c.h.b16 %v1362
    %v1437 = vunpack.c.l.b16 %v1363
    %v1438 = vunpack.c.h.b16 %v1363
    %v1439 = vunpack.c.l.b16 %v1364
    %v1440 = vunpack.c.h.b16 %v1364
    %v1441 = vunpack.c.l.b16 %v1365
    %v1442 = vunpack.c.h.b16 %v1365
    %v1443 = vunpack.c.l.b16 %v1366
    %v1444 = vunpack.c.h.b16 %v1366
    %v1445 = vunpack.c.l.b16 %v1367
    %v1446 = vunpack.c.h.b16 %v1367
    %v1447 = vunpack.c.l.b16 %v1368
    %v1448 = vunpack.c.h.b16 %v1368
    %v1449 = vunpack.c.l.b16 %v1369
    %v1450 = vunpack.c.h.b16 %v1369
    %v1451 = vunpack.c.l.b16 %v1370
    %v1452 = vunpack.c.h.b16 %v1370
    %v1453 = vunpack.c.l.b16 %v1371
    %v1454 = vunpack.c.h.b16 %v1371
    %v1455 = vunpack.c.l.b16 %v1372
    %v1456 = vunpack.c.h.b16 %v1372
    %v1457 = vunpack.c.l.b16 %v1373
    %v1458 = vunpack.c.h.b16 %v1373
    %v1459 = vunpack.c.l.b16 %v1374
    %v1460 = vunpack.c.h.b16 %v1374
    %v1461 = vunpack.c.l.b16 %v1375
    %v1462 = vunpack.c.h.b16 %v1375
    %v1463 = vunpack.c.l.b16 %v1376
    %v1464 = vunpack.c.h.b16 %v1376
    %v1465 = vunpack.c.l.b16 %v1377
    %v1466 = vunpack.c.h.b16 %v1377
    %v1467 = vunpack.c.l.b16 %v1378
    %v1468 = vunpack.c.h.b16 %v1378
    %v1469 = vunpack.c.l.b16 %v1379
    %v1470 = vunpack.c.h.b16 %v1379
    %v1471 = vunpack.c.l.b16 %v1380
    %v1472 = vunpack.c.h.b16 %v1380
    %v1473 = vunpack.c.l.b16 %v1381
    %v1474 = vunpack.c.h.b16 %v1381
    %v1475 = vunpack.c.l.b16 %v1382
    %v1476 = vunpack.c.h.b16 %v1382
    %v1477 = vunpack.c.l.b16 %v1383
    %v1478 = vunpack.c.h.b16 %v1383
    %v1479 = vunpack.c.l.b16 %v1384
    %v1480 = vunpack.c.h.b16 %v1384
    %v1481 = vpack.c.b16 %v1421, %v1417
    %v1482 = vpack.c.b16 %v1422, %v1418
    %v1483 = vpack.c.b16 %v1423, %v1419
    %v1484 = vpack.c.b16 %v1424, %v1420
    %v1485 = vpack.c.b16 %v1429, %v1425
    %v1486 = vpack.c.b16 %v1430, %v1426
    %v1487 = vpack.c.b16 %v1431, %v1427
    %v1488 = vpack.c.b16 %v1432, %v1428
    %v1489 = vpack.c.b16 %v1437, %v1433
    %v1490 = vpack.c.b16 %v1438, %v1434
    %v1491 = vpack.c.b16 %v1439, %v1435
    %v1492 = vpack.c.b16 %v1440, %v1436
    %v1493 = vpack.c.b16 %v1445, %v1441
    %v1494 = vpack.c.b16 %v1446, %v1442
    %v1495 = vpack.c.b16 %v1447, %v1443
    %v1496 = vpack.c.b16 %v1448, %v1444
    %v1497 = vpack.c.b16 %v1453, %v1449
    %v1498 = vpack.c.b16 %v1454, %v1450
    %v1499 = vpack.c.b16 %v1455, %v1451
    %v1500 = vpack.c.b16 %v1456, %v1452
    %v1501 = vpack.c.b16 %v1461, %v1457
    %v1502 = vpack.c.b16 %v1462, %v1458
    %v1503 = vpack.c.b16 %v1463, %v1459
    %v1504 = vpack.c.b16 %v1464, %v1460
    %v1505 = vpack.c.b16 %v1469, %v1465
    %v1506 = vpack.c.b16 %v1470, %v1466
    %v1507 = vpack.c.b16 %v1471, %v1467
    %v1508 = vpack.c.b16 %v1472, %v1468
    %v1509 = vpack.c.b16 %v1477, %v1473
    %v1510 = vpack.c.b16 %v1478, %v1474
    %v1511 = vpack.c.b16 %v1479, %v1475
    %v1512 = vpack.c.b16 %v1480, %v1476
    %1545 = vmatprep.subr.bf16.mxu0 0
    %1546 = vmatpush1.bf16.msra.mxu0 %v435
    %1547 = vmatprep.subr.bf16.mxu0 0
    %1548 = vmatpush1.bf16.msra.mxu0 %v436
    %1549 = vmatprep.subr.bf16.mxu0 0
    %1550 = vmatpush1.bf16.msra.mxu0 %v437
    %1551 = vmatprep.subr.bf16.mxu0 0
    %1552 = vmatpush1.bf16.msra.mxu0 %v438
    %1553 = vmatprep.subr.bf16.mxu0 0
    %1554 = vmatpush1.bf16.msra.mxu0 %v439
    %1555 = vmatprep.subr.bf16.mxu0 0
    %1556 = vmatpush1.bf16.msra.mxu0 %v440
    %1557 = vmatprep.subr.bf16.mxu0 0
    %1558 = vmatpush1.bf16.msra.mxu0 %v441
    %1559 = vmatprep.subr.bf16.mxu0 0
    %1560 = vmatpush1.bf16.msra.mxu0 %v442
    %1561 = vmatprep.subr.bf16.mxu0 0
    %1562 = vmatpush1.bf16.msra.mxu0 %v443
    %1563 = vmatprep.subr.bf16.mxu0 0
    %1564 = vmatpush1.bf16.msra.mxu0 %v444
    %1565 = vmatprep.subr.bf16.mxu0 0
    %1566 = vmatpush1.bf16.msra.mxu0 %v445
    %1567 = vmatprep.subr.bf16.mxu0 0
    %1568 = vmatpush1.bf16.msra.mxu0 %v446
    %1569 = vmatprep.subr.bf16.mxu0 0
    %1570 = vmatpush1.bf16.msra.mxu0 %v447
    %1571 = vmatprep.subr.bf16.mxu0 0
    %1572 = vmatpush1.bf16.msra.mxu0 %v448
    %1573 = vmatprep.subr.bf16.mxu0 0
    %1574 = vmatpush1.bf16.msra.mxu0 %v449
    %1575 = vmatprep.subr.bf16.mxu0 0
    %1576 = vmatpush1.bf16.msra.mxu0 %v450
    %1577 = vmatprep.mubr.bf16.mxu0 %v1482
    %1578 = vmatmul.mubr.bf16.gmra.mrb[0].mxu0 %v1481
    %v1579 = vpop.f32.mrb[0].mxu0
    %v1580 = vadd.f32 0.0, %v1579
    %v1581 = vpop.f32.mrb[0].mxu0
    %v1582 = vpop.f32.mrb[0].mxu0
    %v1583 = vadd.f32 0.0, %v1582
    %v1584 = vpop.f32.mrb[0].mxu0
    %1585 = vmatprep.mubr.bf16.mxu0 %v1486
    %1586 = vmatmul.mubr.bf16.gmra.mrb[0].mxu0 %v1485
    %v1587 = vpop.f32.mrb[0].mxu0
    %v1588 = vadd.f32 0.0, %v1587
    %v1589 = vpop.f32.mrb[0].mxu0
    %v1590 = vpop.f32.mrb[0].mxu0
    %v1591 = vadd.f32 0.0, %v1590
    %v1592 = vpop.f32.mrb[0].mxu0
    %1593 = vmatprep.mubr.bf16.mxu0 %v1490
    %1594 = vmatmul.mubr.bf16.gmra.mrb[0].mxu0 %v1489
    %v1595 = vpop.f32.mrb[0].mxu0
    %v1596 = vadd.f32 0.0, %v1595
    %v1597 = vpop.f32.mrb[0].mxu0
    %v1598 = vpop.f32.mrb[0].mxu0
    %v1599 = vadd.f32 0.0, %v1598
    %v1600 = vpop.f32.mrb[0].mxu0
    %1601 = vmatprep.mubr.bf16.mxu0 %v1494
    %1602 = vmatmul.mubr.bf16.gmra.mrb[0].mxu0 %v1493
    %v1603 = vpop.f32.mrb[0].mxu0
    %v1604 = vadd.f32 0.0, %v1603
    %v1605 = vpop.f32.mrb[0].mxu0
    %v1606 = vpop.f32.mrb[0].mxu0
    %v1607 = vadd.f32 0.0, %v1606
    %v1608 = vpop.f32.mrb[0].mxu0
    %1609 = vmatprep.mubr.bf16.mxu0 %v1498
    %1610 = vmatmul.mubr.bf16.gmra.mrb[0].mxu0 %v1497
    %v1611 = vpop.f32.mrb[0].mxu0
    %v1612 = vadd.f32 0.0, %v1611
    %v1613 = vpop.f32.mrb[0].mxu0
    %v1614 = vpop.f32.mrb[0].mxu0
    %v1615 = vadd.f32 0.0, %v1614
    %v1616 = vpop.f32.mrb[0].mxu0
    %1617 = vmatprep.mubr.bf16.mxu0 %v1502
    %1618 = vmatmul.mubr.bf16.gmra.mrb[0].mxu0 %v1501
    %v1619 = vpop.f32.mrb[0].mxu0
    %v1620 = vadd.f32 0.0, %v1619
    %v1621 = vpop.f32.mrb[0].mxu0
    %v1622 = vpop.f32.mrb[0].mxu0
    %v1623 = vadd.f32 0.0, %v1622
    %v1624 = vpop.f32.mrb[0].mxu0
    %1625 = vmatprep.mubr.bf16.mxu0 %v1506
    %1626 = vmatmul.mubr.bf16.gmra.mrb[0].mxu0 %v1505
    %v1627 = vpop.f32.mrb[0].mxu0
    %v1628 = vadd.f32 0.0, %v1627
    %v1629 = vpop.f32.mrb[0].mxu0
    %v1630 = vpop.f32.mrb[0].mxu0
    %v1631 = vadd.f32 0.0, %v1630
    %v1632 = vpop.f32.mrb[0].mxu0
    %1633 = vmatprep.mubr.bf16.mxu0 %v1510
    %1634 = vmatmul.mubr.bf16.gmra.mrb[0].mxu0 %v1509
    %v1635 = vpop.f32.mrb[0].mxu0
    %v1636 = vadd.f32 0.0, %v1635
    %v1637 = vpop.f32.mrb[0].mxu0
    %v1638 = vpop.f32.mrb[0].mxu0
    %v1639 = vadd.f32 0.0, %v1638
    %v1640 = vpop.f32.mrb[0].mxu0
    %1641 = vdwg.mxu0
    %1642 = vmatprep.subr.bf16.mxu0 0
    %1643 = vmatpush1.bf16.msra.mxu0 %v451
    %1644 = vmatprep.subr.bf16.mxu0 0
    %1645 = vmatpush1.bf16.msra.mxu0 %v452
    %1646 = vmatprep.subr.bf16.mxu0 0
    %1647 = vmatpush1.bf16.msra.mxu0 %v453
    %1648 = vmatprep.subr.bf16.mxu0 0
    %1649 = vmatpush1.bf16.msra.mxu0 %v454
    %1650 = vmatprep.subr.bf16.mxu0 0
    %1651 = vmatpush1.bf16.msra.mxu0 %v455
    %1652 = vmatprep.subr.bf16.mxu0 0
    %1653 = vmatpush1.bf16.msra.mxu0 %v456
    %1654 = vmatprep.subr.bf16.mxu0 0
    %1655 = vmatpush1.bf16.msra.mxu0 %v457
    %1656 = vmatprep.subr.bf16.mxu0 0
    %1657 = vmatpush1.bf16.msra.mxu0 %v458
    %1658 = vmatprep.subr.bf16.mxu0 0
    %1659 = vmatpush1.bf16.msra.mxu0 %v459
    %1660 = vmatprep.subr.bf16.mxu0 0
    %1661 = vmatpush1.bf16.msra.mxu0 %v460
    %1662 = vmatprep.subr.bf16.mxu0 0
    %1663 = vmatpush1.bf16.msra.mxu0 %v461
    %1664 = vmatprep.subr.bf16.mxu0 0
    %1665 = vmatpush1.bf16.msra.mxu0 %v462
    %1666 = vmatprep.subr.bf16.mxu0 0
    %1667 = vmatpush1.bf16.msra.mxu0 %v463
    %1668 = vmatprep.subr.bf16.mxu0 0
    %1669 = vmatpush1.bf16.msra.mxu0 %v464
    %1670 = vmatprep.subr.bf16.mxu0 0
    %1671 = vmatpush1.bf16.msra.mxu0 %v465
    %1672 = vmatprep.subr.bf16.mxu0 0
    %1673 = vmatpush1.bf16.msra.mxu0 %v466
    %1674 = vmatprep.mubr.bf16.mxu0 %v1484
    %1675 = vmatmul.mubr.bf16.gmra.mrb[0].mxu0 %v1483
    %v1676 = vpop.f32.mrb[0].mxu0
    %v1677 = vadd.f32 %v1580, %v1676
    %v1678 = vpop.f32.mrb[0].mxu0
    %v1679 = vpop.f32.mrb[0].mxu0
    %v1680 = vadd.f32 %v1583, %v1679
    %v1681 = vpop.f32.mrb[0].mxu0
    %1682 = vmatprep.mubr.bf16.mxu0 %v1488
    %1683 = vmatmul.mubr.bf16.gmra.mrb[0].mxu0 %v1487
    %v1684 = vpop.f32.mrb[0].mxu0
    %v1685 = vadd.f32 %v1588, %v1684
    %v1686 = vpop.f32.mrb[0].mxu0
    %v1687 = vpop.f32.mrb[0].mxu0
    %v1688 = vadd.f32 %v1591, %v1687
    %v1689 = vpop.f32.mrb[0].mxu0
    %1690 = vmatprep.mubr.bf16.mxu0 %v1492
    %1691 = vmatmul.mubr.bf16.gmra.mrb[0].mxu0 %v1491
    %v1692 = vpop.f32.mrb[0].mxu0
    %v1693 = vadd.f32 %v1596, %v1692
    %v1694 = vpop.f32.mrb[0].mxu0
    %v1695 = vpop.f32.mrb[0].mxu0
    %v1696 = vadd.f32 %v1599, %v1695
    %v1697 = vpop.f32.mrb[0].mxu0
    %1698 = vmatprep.mubr.bf16.mxu0 %v1496
    %1699 = vmatmul.mubr.bf16.gmra.mrb[0].mxu0 %v1495
    %v1700 = vpop.f32.mrb[0].mxu0
    %v1701 = vadd.f32 %v1604, %v1700
    %v1702 = vpop.f32.mrb[0].mxu0
    %v1703 = vpop.f32.mrb[0].mxu0
    %v1704 = vadd.f32 %v1607, %v1703
    %v1705 = vpop.f32.mrb[0].mxu0
    %1706 = vmatprep.mubr.bf16.mxu0 %v1500
    %1707 = vmatmul.mubr.bf16.gmra.mrb[0].mxu0 %v1499
    %v1708 = vpop.f32.mrb[0].mxu0
    %v1709 = vadd.f32 %v1612, %v1708
    %v1710 = vpop.f32.mrb[0].mxu0
    %v1711 = vpop.f32.mrb[0].mxu0
    %v1712 = vadd.f32 %v1615, %v1711
    %v1713 = vpop.f32.mrb[0].mxu0
    %1714 = vmatprep.mubr.bf16.mxu0 %v1504
    %1715 = vmatmul.mubr.bf16.gmra.mrb[0].mxu0 %v1503
    %v1716 = vpop.f32.mrb[0].mxu0
    %v1717 = vadd.f32 %v1620, %v1716
    %v1718 = vpop.f32.mrb[0].mxu0
    %v1719 = vpop.f32.mrb[0].mxu0
    %v1720 = vadd.f32 %v1623, %v1719
    %v1721 = vpop.f32.mrb[0].mxu0
    %1722 = vmatprep.mubr.bf16.mxu0 %v1508
    %1723 = vmatmul.mubr.bf16.gmra.mrb[0].mxu0 %v1507
    %v1724 = vpop.f32.mrb[0].mxu0
    %v1725 = vadd.f32 %v1628, %v1724
    %v1726 = vpop.f32.mrb[0].mxu0
    %v1727 = vpop.f32.mrb[0].mxu0
    %v1728 = vadd.f32 %v1631, %v1727
    %v1729 = vpop.f32.mrb[0].mxu0
    %1730 = vmatprep.mubr.bf16.mxu0 %v1512
    %1731 = vmatmul.mubr.bf16.gmra.mrb[0].mxu0 %v1511
    %v1732 = vpop.f32.mrb[0].mxu0
    %v1733 = vadd.f32 %v1636, %v1732
    %v1734 = vpop.f32.mrb[0].mxu0
    %v1735 = vpop.f32.mrb[0].mxu0
    %v1736 = vadd.f32 %v1639, %v1735
    %v1737 = vpop.f32.mrb[0].mxu0
    %1738 = vdwg.mxu0
    %v1739 = vpack.c.bf16 %v1680, %v1677
    %v1740 = vpack.c.bf16 %v1688, %v1685
    %v1741 = vpack.c.bf16 %v1696, %v1693
    %v1742 = vpack.c.bf16 %v1704, %v1701
    %v1743 = vpack.c.bf16 %v1712, %v1709
    %v1744 = vpack.c.bf16 %v1720, %v1717
    %v1745 = vpack.c.bf16 %v1728, %v1725
    %v1746 = vpack.c.bf16 %v1736, %v1733
    %s1747 = scalar_lea.vmem %s2, 4
    %v1748 = vld [vmem:[%s1747] sm:$0x3]
    %v1750 = vsel %vm1099, %v1739, 0
    %v1753 = vsel %vm1099, %v1740, 0
    %v1756 = vsel %vm1099, %v1741, 0
    %v1759 = vsel %vm1099, %v1742, 0
    %v1762 = vsel %vm1099, %v1743, 0
    %v1765 = vsel %vm1099, %v1744, 0
    %v1768 = vsel %vm1099, %v1745, 0
    %v1771 = vsel %vm1099, %v1746, 0
    %v1774 = vand.u32 %v1748, %v1127
    %1776 = vmatprep.subr.bf16.mxu0 0
    %1777 = vmatpush1.bf16.msra.mxu0 %v1774
    %1778 = vmatprep.subr.bf16.mxu0 0
    %1779 = vmatpush1.bf16.msra.mxu0 0
    %1780 = vmatprep.subr.bf16.mxu0 0
    %1781 = vmatpush1.bf16.msra.mxu0 0
    %1782 = vmatprep.subr.bf16.mxu0 0
    %1783 = vmatpush1.bf16.msra.mxu0 0
    %1784 = vmatprep.subr.bf16.mxu0 0
    %1785 = vmatpush1.bf16.msra.mxu0 0
    %1786 = vmatprep.subr.bf16.mxu0 0
    %1787 = vmatpush1.bf16.msra.mxu0 0
    %1788 = vmatprep.subr.bf16.mxu0 0
    %1789 = vmatpush1.bf16.msra.mxu0 0
    %1790 = vmatprep.subr.bf16.mxu0 0
    %1791 = vmatpush1.bf16.msra.mxu0 0
    %1792 = vmatprep.subr.bf16.mxu0 0
    %1793 = vmatpush1.bf16.msra.mxu0 0
    %1794 = vmatprep.subr.bf16.mxu0 0
    %1795 = vmatpush1.bf16.msra.mxu0 0
    %1796 = vmatprep.subr.bf16.mxu0 0
    %1797 = vmatpush1.bf16.msra.mxu0 0
    %1798 = vmatprep.subr.bf16.mxu0 0
    %1799 = vmatpush1.bf16.msra.mxu0 0
    %1800 = vmatprep.subr.bf16.mxu0 0
    %1801 = vmatpush1.bf16.msra.mxu0 0
    %1802 = vmatprep.subr.bf16.mxu0 0
    %1803 = vmatpush1.bf16.msra.mxu0 0
    %1804 = vmatprep.subr.bf16.mxu0 0
    %1805 = vmatpush1.bf16.msra.mxu0 0
    %1806 = vmatprep.subr.bf16.mxu0 0
    %1807 = vmatpush1.bf16.msra.mxu0 0
    %1808 = vmatprep.mubr.bf16.mxu0 0
    %1809 = vmatmul.mubr.bf16.gmra.mrb[0].mxu0 %v1750
    %v1810 = vpop.f32.mrb[0].mxu0
    %v1811 = vadd.f32 0.0, %v1810
    %v1812 = vpop.f32.mrb[0].mxu0
    %v1813 = vpop.f32.mrb[0].mxu0
    %v1814 = vadd.f32 0.0, %v1813
    %v1815 = vpop.f32.mrb[0].mxu0
    %1816 = vmatprep.mubr.bf16.mxu0 0
    %1817 = vmatmul.mubr.bf16.gmra.mrb[0].mxu0 %v1753
    %v1818 = vpop.f32.mrb[0].mxu0
    %v1819 = vadd.f32 0.0, %v1818
    %v1820 = vpop.f32.mrb[0].mxu0
    %v1821 = vpop.f32.mrb[0].mxu0
    %v1822 = vadd.f32 0.0, %v1821
    %v1823 = vpop.f32.mrb[0].mxu0
    %1824 = vmatprep.mubr.bf16.mxu0 0
    %1825 = vmatmul.mubr.bf16.gmra.mrb[0].mxu0 %v1756
    %v1826 = vpop.f32.mrb[0].mxu0
    %v1827 = vadd.f32 0.0, %v1826
    %v1828 = vpop.f32.mrb[0].mxu0
    %v1829 = vpop.f32.mrb[0].mxu0
    %v1830 = vadd.f32 0.0, %v1829
    %v1831 = vpop.f32.mrb[0].mxu0
    %1832 = vmatprep.mubr.bf16.mxu0 0
    %1833 = vmatmul.mubr.bf16.gmra.mrb[0].mxu0 %v1759
    %v1834 = vpop.f32.mrb[0].mxu0
    %v1835 = vadd.f32 0.0, %v1834
    %v1836 = vpop.f32.mrb[0].mxu0
    %v1837 = vpop.f32.mrb[0].mxu0
    %v1838 = vadd.f32 0.0, %v1837
    %v1839 = vpop.f32.mrb[0].mxu0
    %1840 = vmatprep.mubr.bf16.mxu0 0
    %1841 = vmatmul.mubr.bf16.gmra.mrb[0].mxu0 %v1762
    %v1842 = vpop.f32.mrb[0].mxu0
    %v1843 = vadd.f32 0.0, %v1842
    %v1844 = vpop.f32.mrb[0].mxu0
    %v1845 = vpop.f32.mrb[0].mxu0
    %v1846 = vadd.f32 0.0, %v1845
    %v1847 = vpop.f32.mrb[0].mxu0
    %1848 = vmatprep.mubr.bf16.mxu0 0
    %1849 = vmatmul.mubr.bf16.gmra.mrb[0].mxu0 %v1765
    %v1850 = vpop.f32.mrb[0].mxu0
    %v1851 = vadd.f32 0.0, %v1850
    %v1852 = vpop.f32.mrb[0].mxu0
    %v1853 = vpop.f32.mrb[0].mxu0
    %v1854 = vadd.f32 0.0, %v1853
    %v1855 = vpop.f32.mrb[0].mxu0
    %1856 = vmatprep.mubr.bf16.mxu0 0
    %1857 = vmatmul.mubr.bf16.gmra.mrb[0].mxu0 %v1768
    %v1858 = vpop.f32.mrb[0].mxu0
    %v1859 = vadd.f32 0.0, %v1858
    %v1860 = vpop.f32.mrb[0].mxu0
    %v1861 = vpop.f32.mrb[0].mxu0
    %v1862 = vadd.f32 0.0, %v1861
    %v1863 = vpop.f32.mrb[0].mxu0
    %1864 = vmatprep.mubr.bf16.mxu0 0
    %1865 = vmatmul.mubr.bf16.gmra.mrb[0].mxu0 %v1771
    %v1866 = vpop.f32.mrb[0].mxu0
    %v1867 = vadd.f32 0.0, %v1866
    %v1868 = vpop.f32.mrb[0].mxu0
    %v1869 = vpop.f32.mrb[0].mxu0
    %v1870 = vadd.f32 0.0, %v1869
    %v1871 = vpop.f32.mrb[0].mxu0
    %1872 = vdwg.mxu0
    %v1873 = vadd.f32 %v1290, %v1811
    %v1874 = vadd.f32 %v1293, %v1814
    %v1875 = vadd.f32 %v1298, %v1819
    %v1876 = vadd.f32 %v1301, %v1822
    %v1877 = vadd.f32 %v1306, %v1827
    %v1878 = vadd.f32 %v1309, %v1830
    %v1879 = vadd.f32 %v1314, %v1835
    %v1880 = vadd.f32 %v1317, %v1838
    %v1881 = vadd.f32 %v1322, %v1843
    %v1882 = vadd.f32 %v1325, %v1846
    %v1883 = vadd.f32 %v1330, %v1851
    %v1884 = vadd.f32 %v1333, %v1854
    %v1885 = vadd.f32 %v1338, %v1859
    %v1886 = vadd.f32 %v1341, %v1862
    %v1887 = vadd.f32 %v1346, %v1867
    %v1888 = vadd.f32 %v1349, %v1870
    %s1889 = scalar_lea.vmem %s1, 768
    %v1890 = vld [vmem:[%s1889] sm:$0xff]
    %v1891 = vld [vmem:[%s1889 + $0x8] sm:$0xff]
    %v1892 = vld [vmem:[%s1889 + $0x10] sm:$0xff]
    %v1893 = vld [vmem:[%s1889 + $0x18] sm:$0xff]
    %v1894 = vld [vmem:[%s1889 + $0x20] sm:$0xff]
    %v1895 = vld [vmem:[%s1889 + $0x28] sm:$0xff]
    %v1896 = vld [vmem:[%s1889 + $0x30] sm:$0xff]
    %v1897 = vld [vmem:[%s1889 + $0x38] sm:$0xff]
    %v1898 = vld [vmem:[%s1889 + $0x40] sm:$0xff]
    %v1899 = vld [vmem:[%s1889 + $0x48] sm:$0xff]
    %v1900 = vld [vmem:[%s1889 + $0x50] sm:$0xff]
    %v1901 = vld [vmem:[%s1889 + $0x58] sm:$0xff]
    %v1902 = vld [vmem:[%s1889 + $0x60] sm:$0xff]
    %v1903 = vld [vmem:[%s1889 + $0x68] sm:$0xff]
    %v1904 = vld [vmem:[%s1889 + $0x70] sm:$0xff]
    %v1905 = vld [vmem:[%s1889 + $0x78] sm:$0xff]
    %v1906 = vld [vmem:[%s1889 + $0x80] sm:$0xff]
    %v1907 = vld [vmem:[%s1889 + $0x88] sm:$0xff]
    %v1908 = vld [vmem:[%s1889 + $0x90] sm:$0xff]
    %v1909 = vld [vmem:[%s1889 + $0x98] sm:$0xff]
    %v1910 = vld [vmem:[%s1889 + $0xa0] sm:$0xff]
    %v1911 = vld [vmem:[%s1889 + $0xa8] sm:$0xff]
    %v1912 = vld [vmem:[%s1889 + $0xb0] sm:$0xff]
    %v1913 = vld [vmem:[%s1889 + $0xb8] sm:$0xff]
    %v1914 = vld [vmem:[%s1889 + $0xc0] sm:$0xff]
    %v1915 = vld [vmem:[%s1889 + $0xc8] sm:$0xff]
    %v1916 = vld [vmem:[%s1889 + $0xd0] sm:$0xff]
    %v1917 = vld [vmem:[%s1889 + $0xd8] sm:$0xff]
    %v1918 = vld [vmem:[%s1889 + $0xe0] sm:$0xff]
    %v1919 = vld [vmem:[%s1889 + $0xe8] sm:$0xff]
    %v1920 = vld [vmem:[%s1889 + $0xf0] sm:$0xff]
    %v1921 = vld [vmem:[%s1889 + $0xf8] sm:$0xff]
    %v1954 = vunpack.c.l.b16 %v1890
    %v1955 = vunpack.c.h.b16 %v1890
    %v1956 = vunpack.c.l.b16 %v1891
    %v1957 = vunpack.c.h.b16 %v1891
    %v1958 = vunpack.c.l.b16 %v1892
    %v1959 = vunpack.c.h.b16 %v1892
    %v1960 = vunpack.c.l.b16 %v1893
    %v1961 = vunpack.c.h.b16 %v1893
    %v1962 = vunpack.c.l.b16 %v1894
    %v1963 = vunpack.c.h.b16 %v1894
    %v1964 = vunpack.c.l.b16 %v1895
    %v1965 = vunpack.c.h.b16 %v1895
    %v1966 = vunpack.c.l.b16 %v1896
    %v1967 = vunpack.c.h.b16 %v1896
    %v1968 = vunpack.c.l.b16 %v1897
    %v1969 = vunpack.c.h.b16 %v1897
    %v1970 = vunpack.c.l.b16 %v1898
    %v1971 = vunpack.c.h.b16 %v1898
    %v1972 = vunpack.c.l.b16 %v1899
    %v1973 = vunpack.c.h.b16 %v1899
    %v1974 = vunpack.c.l.b16 %v1900
    %v1975 = vunpack.c.h.b16 %v1900
    %v1976 = vunpack.c.l.b16 %v1901
    %v1977 = vunpack.c.h.b16 %v1901
    %v1978 = vunpack.c.l.b16 %v1902
    %v1979 = vunpack.c.h.b16 %v1902
    %v1980 = vunpack.c.l.b16 %v1903
    %v1981 = vunpack.c.h.b16 %v1903
    %v1982 = vunpack.c.l.b16 %v1904
    %v1983 = vunpack.c.h.b16 %v1904
    %v1984 = vunpack.c.l.b16 %v1905
    %v1985 = vunpack.c.h.b16 %v1905
    %v1986 = vunpack.c.l.b16 %v1906
    %v1987 = vunpack.c.h.b16 %v1906
    %v1988 = vunpack.c.l.b16 %v1907
    %v1989 = vunpack.c.h.b16 %v1907
    %v1990 = vunpack.c.l.b16 %v1908
    %v1991 = vunpack.c.h.b16 %v1908
    %v1992 = vunpack.c.l.b16 %v1909
    %v1993 = vunpack.c.h.b16 %v1909
    %v1994 = vunpack.c.l.b16 %v1910
    %v1995 = vunpack.c.h.b16 %v1910
    %v1996 = vunpack.c.l.b16 %v1911
    %v1997 = vunpack.c.h.b16 %v1911
    %v1998 = vunpack.c.l.b16 %v1912
    %v1999 = vunpack.c.h.b16 %v1912
    %v2000 = vunpack.c.l.b16 %v1913
    %v2001 = vunpack.c.h.b16 %v1913
    %v2002 = vunpack.c.l.b16 %v1914
    %v2003 = vunpack.c.h.b16 %v1914
    %v2004 = vunpack.c.l.b16 %v1915
    %v2005 = vunpack.c.h.b16 %v1915
    %v2006 = vunpack.c.l.b16 %v1916
    %v2007 = vunpack.c.h.b16 %v1916
    %v2008 = vunpack.c.l.b16 %v1917
    %v2009 = vunpack.c.h.b16 %v1917
    %v2010 = vunpack.c.l.b16 %v1918
    %v2011 = vunpack.c.h.b16 %v1918
    %v2012 = vunpack.c.l.b16 %v1919
    %v2013 = vunpack.c.h.b16 %v1919
    %v2014 = vunpack.c.l.b16 %v1920
    %v2015 = vunpack.c.h.b16 %v1920
    %v2016 = vunpack.c.l.b16 %v1921
    %v2017 = vunpack.c.h.b16 %v1921
    %v2018 = vpack.c.b16 %v1958, %v1954
    %v2019 = vpack.c.b16 %v1959, %v1955
    %v2020 = vpack.c.b16 %v1960, %v1956
    %v2021 = vpack.c.b16 %v1961, %v1957
    %v2022 = vpack.c.b16 %v1966, %v1962
    %v2023 = vpack.c.b16 %v1967, %v1963
    %v2024 = vpack.c.b16 %v1968, %v1964
    %v2025 = vpack.c.b16 %v1969, %v1965
    %v2026 = vpack.c.b16 %v1974, %v1970
    %v2027 = vpack.c.b16 %v1975, %v1971
    %v2028 = vpack.c.b16 %v1976, %v1972
    %v2029 = vpack.c.b16 %v1977, %v1973
    %v2030 = vpack.c.b16 %v1982, %v1978
    %v2031 = vpack.c.b16 %v1983, %v1979
    %v2032 = vpack.c.b16 %v1984, %v1980
    %v2033 = vpack.c.b16 %v1985, %v1981
    %v2034 = vpack.c.b16 %v1990, %v1986
    %v2035 = vpack.c.b16 %v1991, %v1987
    %v2036 = vpack.c.b16 %v1992, %v1988
    %v2037 = vpack.c.b16 %v1993, %v1989
    %v2038 = vpack.c.b16 %v1998, %v1994
    %v2039 = vpack.c.b16 %v1999, %v1995
    %v2040 = vpack.c.b16 %v2000, %v1996
    %v2041 = vpack.c.b16 %v2001, %v1997
    %v2042 = vpack.c.b16 %v2006, %v2002
    %v2043 = vpack.c.b16 %v2007, %v2003
    %v2044 = vpack.c.b16 %v2008, %v2004
    %v2045 = vpack.c.b16 %v2009, %v2005
    %v2046 = vpack.c.b16 %v2014, %v2010
    %v2047 = vpack.c.b16 %v2015, %v2011
    %v2048 = vpack.c.b16 %v2016, %v2012
    %v2049 = vpack.c.b16 %v2017, %v2013
    %2082 = vmatprep.subr.bf16.mxu0 0
    %2083 = vmatpush1.bf16.msra.mxu0 %v435
    %2084 = vmatprep.subr.bf16.mxu0 0
    %2085 = vmatpush1.bf16.msra.mxu0 %v436
    %2086 = vmatprep.subr.bf16.mxu0 0
    %2087 = vmatpush1.bf16.msra.mxu0 %v437
    %2088 = vmatprep.subr.bf16.mxu0 0
    %2089 = vmatpush1.bf16.msra.mxu0 %v438
    %2090 = vmatprep.subr.bf16.mxu0 0
    %2091 = vmatpush1.bf16.msra.mxu0 %v439
    %2092 = vmatprep.subr.bf16.mxu0 0
    %2093 = vmatpush1.bf16.msra.mxu0 %v440
    %2094 = vmatprep.subr.bf16.mxu0 0
    %2095 = vmatpush1.bf16.msra.mxu0 %v441
    %2096 = vmatprep.subr.bf16.mxu0 0
    %2097 = vmatpush1.bf16.msra.mxu0 %v442
    %2098 = vmatprep.subr.bf16.mxu0 0
    %2099 = vmatpush1.bf16.msra.mxu0 %v443
    %2100 = vmatprep.subr.bf16.mxu0 0
    %2101 = vmatpush1.bf16.msra.mxu0 %v444
    %2102 = vmatprep.subr.bf16.mxu0 0
    %2103 = vmatpush1.bf16.msra.mxu0 %v445
    %2104 = vmatprep.subr.bf16.mxu0 0
    %2105 = vmatpush1.bf16.msra.mxu0 %v446
    %2106 = vmatprep.subr.bf16.mxu0 0
    %2107 = vmatpush1.bf16.msra.mxu0 %v447
    %2108 = vmatprep.subr.bf16.mxu0 0
    %2109 = vmatpush1.bf16.msra.mxu0 %v448
    %2110 = vmatprep.subr.bf16.mxu0 0
    %2111 = vmatpush1.bf16.msra.mxu0 %v449
    %2112 = vmatprep.subr.bf16.mxu0 0
    %2113 = vmatpush1.bf16.msra.mxu0 %v450
    %2114 = vmatprep.mubr.bf16.mxu0 %v2019
    %2115 = vmatmul.mubr.bf16.gmra.mrb[0].mxu0 %v2018
    %v2116 = vpop.f32.mrb[0].mxu0
    %v2117 = vadd.f32 0.0, %v2116
    %v2118 = vpop.f32.mrb[0].mxu0
    %v2119 = vpop.f32.mrb[0].mxu0
    %v2120 = vadd.f32 0.0, %v2119
    %v2121 = vpop.f32.mrb[0].mxu0
    %2122 = vmatprep.mubr.bf16.mxu0 %v2023
    %2123 = vmatmul.mubr.bf16.gmra.mrb[0].mxu0 %v2022
    %v2124 = vpop.f32.mrb[0].mxu0
    %v2125 = vadd.f32 0.0, %v2124
    %v2126 = vpop.f32.mrb[0].mxu0
    %v2127 = vpop.f32.mrb[0].mxu0
    %v2128 = vadd.f32 0.0, %v2127
    %v2129 = vpop.f32.mrb[0].mxu0
    %2130 = vmatprep.mubr.bf16.mxu0 %v2027
    %2131 = vmatmul.mubr.bf16.gmra.mrb[0].mxu0 %v2026
    %v2132 = vpop.f32.mrb[0].mxu0
    %v2133 = vadd.f32 0.0, %v2132
    %v2134 = vpop.f32.mrb[0].mxu0
    %v2135 = vpop.f32.mrb[0].mxu0
    %v2136 = vadd.f32 0.0, %v2135
    %v2137 = vpop.f32.mrb[0].mxu0
    %2138 = vmatprep.mubr.bf16.mxu0 %v2031
    %2139 = vmatmul.mubr.bf16.gmra.mrb[0].mxu0 %v2030
    %v2140 = vpop.f32.mrb[0].mxu0
    %v2141 = vadd.f32 0.0, %v2140
    %v2142 = vpop.f32.mrb[0].mxu0
    %v2143 = vpop.f32.mrb[0].mxu0
    %v2144 = vadd.f32 0.0, %v2143
    %v2145 = vpop.f32.mrb[0].mxu0
    %2146 = vmatprep.mubr.bf16.mxu0 %v2035
    %2147 = vmatmul.mubr.bf16.gmra.mrb[0].mxu0 %v2034
    %v2148 = vpop.f32.mrb[0].mxu0
    %v2149 = vadd.f32 0.0, %v2148
    %v2150 = vpop.f32.mrb[0].mxu0
    %v2151 = vpop.f32.mrb[0].mxu0
    %v2152 = vadd.f32 0.0, %v2151
    %v2153 = vpop.f32.mrb[0].mxu0
    %2154 = vmatprep.mubr.bf16.mxu0 %v2039
    %2155 = vmatmul.mubr.bf16.gmra.mrb[0].mxu0 %v2038
    %v2156 = vpop.f32.mrb[0].mxu0
    %v2157 = vadd.f32 0.0, %v2156
    %v2158 = vpop.f32.mrb[0].mxu0
    %v2159 = vpop.f32.mrb[0].mxu0
    %v2160 = vadd.f32 0.0, %v2159
    %v2161 = vpop.f32.mrb[0].mxu0
    %2162 = vmatprep.mubr.bf16.mxu0 %v2043
    %2163 = vmatmul.mubr.bf16.gmra.mrb[0].mxu0 %v2042
    %v2164 = vpop.f32.mrb[0].mxu0
    %v2165 = vadd.f32 0.0, %v2164
    %v2166 = vpop.f32.mrb[0].mxu0
    %v2167 = vpop.f32.mrb[0].mxu0
    %v2168 = vadd.f32 0.0, %v2167
    %v2169 = vpop.f32.mrb[0].mxu0
    %2170 = vmatprep.mubr.bf16.mxu0 %v2047
    %2171 = vmatmul.mubr.bf16.gmra.mrb[0].mxu0 %v2046
    %v2172 = vpop.f32.mrb[0].mxu0
    %v2173 = vadd.f32 0.0, %v2172
    %v2174 = vpop.f32.mrb[0].mxu0
    %v2175 = vpop.f32.mrb[0].mxu0
    %v2176 = vadd.f32 0.0, %v2175
    %v2177 = vpop.f32.mrb[0].mxu0
    %2178 = vdwg.mxu0
    %2179 = vmatprep.subr.bf16.mxu0 0
    %2180 = vmatpush1.bf16.msra.mxu0 %v451
    %2181 = vmatprep.subr.bf16.mxu0 0
    %2182 = vmatpush1.bf16.msra.mxu0 %v452
    %2183 = vmatprep.subr.bf16.mxu0 0
    %2184 = vmatpush1.bf16.msra.mxu0 %v453
    %2185 = vmatprep.subr.bf16.mxu0 0
    %2186 = vmatpush1.bf16.msra.mxu0 %v454
    %2187 = vmatprep.subr.bf16.mxu0 0
    %2188 = vmatpush1.bf16.msra.mxu0 %v455
    %2189 = vmatprep.subr.bf16.mxu0 0
    %2190 = vmatpush1.bf16.msra.mxu0 %v456
    %2191 = vmatprep.subr.bf16.mxu0 0
    %2192 = vmatpush1.bf16.msra.mxu0 %v457
    %2193 = vmatprep.subr.bf16.mxu0 0
    %2194 = vmatpush1.bf16.msra.mxu0 %v458
    %2195 = vmatprep.subr.bf16.mxu0 0
    %2196 = vmatpush1.bf16.msra.mxu0 %v459
    %2197 = vmatprep.subr.bf16.mxu0 0
    %2198 = vmatpush1.bf16.msra.mxu0 %v460
    %2199 = vmatprep.subr.bf16.mxu0 0
    %2200 = vmatpush1.bf16.msra.mxu0 %v461
    %2201 = vmatprep.subr.bf16.mxu0 0
    %2202 = vmatpush1.bf16.msra.mxu0 %v462
    %2203 = vmatprep.subr.bf16.mxu0 0
    %2204 = vmatpush1.bf16.msra.mxu0 %v463
    %2205 = vmatprep.subr.bf16.mxu0 0
    %2206 = vmatpush1.bf16.msra.mxu0 %v464
    %2207 = vmatprep.subr.bf16.mxu0 0
    %2208 = vmatpush1.bf16.msra.mxu0 %v465
    %2209 = vmatprep.subr.bf16.mxu0 0
    %2210 = vmatpush1.bf16.msra.mxu0 %v466
    %2211 = vmatprep.mubr.bf16.mxu0 %v2021
    %2212 = vmatmul.mubr.bf16.gmra.mrb[0].mxu0 %v2020
    %v2213 = vpop.f32.mrb[0].mxu0
    %v2214 = vadd.f32 %v2117, %v2213
    %v2215 = vpop.f32.mrb[0].mxu0
    %v2216 = vpop.f32.mrb[0].mxu0
    %v2217 = vadd.f32 %v2120, %v2216
    %v2218 = vpop.f32.mrb[0].mxu0
    %2219 = vmatprep.mubr.bf16.mxu0 %v2025
    %2220 = vmatmul.mubr.bf16.gmra.mrb[0].mxu0 %v2024
    %v2221 = vpop.f32.mrb[0].mxu0
    %v2222 = vadd.f32 %v2125, %v2221
    %v2223 = vpop.f32.mrb[0].mxu0
    %v2224 = vpop.f32.mrb[0].mxu0
    %v2225 = vadd.f32 %v2128, %v2224
    %v2226 = vpop.f32.mrb[0].mxu0
    %2227 = vmatprep.mubr.bf16.mxu0 %v2029
    %2228 = vmatmul.mubr.bf16.gmra.mrb[0].mxu0 %v2028
    %v2229 = vpop.f32.mrb[0].mxu0
    %v2230 = vadd.f32 %v2133, %v2229
    %v2231 = vpop.f32.mrb[0].mxu0
    %v2232 = vpop.f32.mrb[0].mxu0
    %v2233 = vadd.f32 %v2136, %v2232
    %v2234 = vpop.f32.mrb[0].mxu0
    %2235 = vmatprep.mubr.bf16.mxu0 %v2033
    %2236 = vmatmul.mubr.bf16.gmra.mrb[0].mxu0 %v2032
    %v2237 = vpop.f32.mrb[0].mxu0
    %v2238 = vadd.f32 %v2141, %v2237
    %v2239 = vpop.f32.mrb[0].mxu0
    %v2240 = vpop.f32.mrb[0].mxu0
    %v2241 = vadd.f32 %v2144, %v2240
    %v2242 = vpop.f32.mrb[0].mxu0
    %2243 = vmatprep.mubr.bf16.mxu0 %v2037
    %2244 = vmatmul.mubr.bf16.gmra.mrb[0].mxu0 %v2036
    %v2245 = vpop.f32.mrb[0].mxu0
    %v2246 = vadd.f32 %v2149, %v2245
    %v2247 = vpop.f32.mrb[0].mxu0
    %v2248 = vpop.f32.mrb[0].mxu0
    %v2249 = vadd.f32 %v2152, %v2248
    %v2250 = vpop.f32.mrb[0].mxu0
    %2251 = vmatprep.mubr.bf16.mxu0 %v2041
    %2252 = vmatmul.mubr.bf16.gmra.mrb[0].mxu0 %v2040
    %v2253 = vpop.f32.mrb[0].mxu0
    %v2254 = vadd.f32 %v2157, %v2253
    %v2255 = vpop.f32.mrb[0].mxu0
    %v2256 = vpop.f32.mrb[0].mxu0
    %v2257 = vadd.f32 %v2160, %v2256
    %v2258 = vpop.f32.mrb[0].mxu0
    %2259 = vmatprep.mubr.bf16.mxu0 %v2045
    %2260 = vmatmul.mubr.bf16.gmra.mrb[0].mxu0 %v2044
    %v2261 = vpop.f32.mrb[0].mxu0
    %v2262 = vadd.f32 %v2165, %v2261
    %v2263 = vpop.f32.mrb[0].mxu0
    %v2264 = vpop.f32.mrb[0].mxu0
    %v2265 = vadd.f32 %v2168, %v2264
    %v2266 = vpop.f32.mrb[0].mxu0
    %2267 = vmatprep.mubr.bf16.mxu0 %v2049
    %2268 = vmatmul.mubr.bf16.gmra.mrb[0].mxu0 %v2048
    %v2269 = vpop.f32.mrb[0].mxu0
    %v2270 = vadd.f32 %v2173, %v2269
    %v2271 = vpop.f32.mrb[0].mxu0
    %v2272 = vpop.f32.mrb[0].mxu0
    %v2273 = vadd.f32 %v2176, %v2272
    %v2274 = vpop.f32.mrb[0].mxu0
    %2275 = vdwg.mxu0
    %v2276 = vpack.c.bf16 %v2217, %v2214
    %v2277 = vpack.c.bf16 %v2225, %v2222
    %v2278 = vpack.c.bf16 %v2233, %v2230
    %v2279 = vpack.c.bf16 %v2241, %v2238
    %v2280 = vpack.c.bf16 %v2249, %v2246
    %v2281 = vpack.c.bf16 %v2257, %v2254
    %v2282 = vpack.c.bf16 %v2265, %v2262
    %v2283 = vpack.c.bf16 %v2273, %v2270
    %s2284 = scalar_lea.vmem %s2, 6
    %v2285 = vld [vmem:[%s2284] sm:$0x3]
    %v2287 = vsel %vm1099, %v2276, 0
    %v2290 = vsel %vm1099, %v2277, 0
    %v2293 = vsel %vm1099, %v2278, 0
    %v2296 = vsel %vm1099, %v2279, 0
    %v2299 = vsel %vm1099, %v2280, 0
    %v2302 = vsel %vm1099, %v2281, 0
    %v2305 = vsel %vm1099, %v2282, 0
    %v2308 = vsel %vm1099, %v2283, 0
    %v2311 = vand.u32 %v2285, %v1127
    %2313 = vmatprep.subr.bf16.mxu0 0
    %2314 = vmatpush1.bf16.msra.mxu0 %v2311
    %2315 = vmatprep.subr.bf16.mxu0 0
    %2316 = vmatpush1.bf16.msra.mxu0 0
    %2317 = vmatprep.subr.bf16.mxu0 0
    %2318 = vmatpush1.bf16.msra.mxu0 0
    %2319 = vmatprep.subr.bf16.mxu0 0
    %2320 = vmatpush1.bf16.msra.mxu0 0
    %2321 = vmatprep.subr.bf16.mxu0 0
    %2322 = vmatpush1.bf16.msra.mxu0 0
    %2323 = vmatprep.subr.bf16.mxu0 0
    %2324 = vmatpush1.bf16.msra.mxu0 0
    %2325 = vmatprep.subr.bf16.mxu0 0
    %2326 = vmatpush1.bf16.msra.mxu0 0
    %2327 = vmatprep.subr.bf16.mxu0 0
    %2328 = vmatpush1.bf16.msra.mxu0 0
    %2329 = vmatprep.subr.bf16.mxu0 0
    %2330 = vmatpush1.bf16.msra.mxu0 0
    %2331 = vmatprep.subr.bf16.mxu0 0
    %2332 = vmatpush1.bf16.msra.mxu0 0
    %2333 = vmatprep.subr.bf16.mxu0 0
    %2334 = vmatpush1.bf16.msra.mxu0 0
    %2335 = vmatprep.subr.bf16.mxu0 0
    %2336 = vmatpush1.bf16.msra.mxu0 0
    %2337 = vmatprep.subr.bf16.mxu0 0
    %2338 = vmatpush1.bf16.msra.mxu0 0
    %2339 = vmatprep.subr.bf16.mxu0 0
    %2340 = vmatpush1.bf16.msra.mxu0 0
    %2341 = vmatprep.subr.bf16.mxu0 0
    %2342 = vmatpush1.bf16.msra.mxu0 0
    %2343 = vmatprep.subr.bf16.mxu0 0
    %2344 = vmatpush1.bf16.msra.mxu0 0
    %2345 = vmatprep.mubr.bf16.mxu0 0
    %2346 = vmatmul.mubr.bf16.gmra.mrb[0].mxu0 %v2287
    %v2347 = vpop.f32.mrb[0].mxu0
    %v2348 = vadd.f32 0.0, %v2347
    %v2349 = vpop.f32.mrb[0].mxu0
    %v2350 = vpop.f32.mrb[0].mxu0
    %v2351 = vadd.f32 0.0, %v2350
    %v2352 = vpop.f32.mrb[0].mxu0
    %2353 = vmatprep.mubr.bf16.mxu0 0
    %2354 = vmatmul.mubr.bf16.gmra.mrb[0].mxu0 %v2290
    %v2355 = vpop.f32.mrb[0].mxu0
    %v2356 = vadd.f32 0.0, %v2355
    %v2357 = vpop.f32.mrb[0].mxu0
    %v2358 = vpop.f32.mrb[0].mxu0
    %v2359 = vadd.f32 0.0, %v2358
    %v2360 = vpop.f32.mrb[0].mxu0
    %2361 = vmatprep.mubr.bf16.mxu0 0
    %2362 = vmatmul.mubr.bf16.gmra.mrb[0].mxu0 %v2293
    %v2363 = vpop.f32.mrb[0].mxu0
    %v2364 = vadd.f32 0.0, %v2363
    %v2365 = vpop.f32.mrb[0].mxu0
    %v2366 = vpop.f32.mrb[0].mxu0
    %v2367 = vadd.f32 0.0, %v2366
    %v2368 = vpop.f32.mrb[0].mxu0
    %2369 = vmatprep.mubr.bf16.mxu0 0
    %2370 = vmatmul.mubr.bf16.gmra.mrb[0].mxu0 %v2296
    %v2371 = vpop.f32.mrb[0].mxu0
    %v2372 = vadd.f32 0.0, %v2371
    %v2373 = vpop.f32.mrb[0].mxu0
    %v2374 = vpop.f32.mrb[0].mxu0
    %v2375 = vadd.f32 0.0, %v2374
    %v2376 = vpop.f32.mrb[0].mxu0
    %2377 = vmatprep.mubr.bf16.mxu0 0
    %2378 = vmatmul.mubr.bf16.gmra.mrb[0].mxu0 %v2299
    %v2379 = vpop.f32.mrb[0].mxu0
    %v2380 = vadd.f32 0.0, %v2379
    %v2381 = vpop.f32.mrb[0].mxu0
    %v2382 = vpop.f32.mrb[0].mxu0
    %v2383 = vadd.f32 0.0, %v2382
    %v2384 = vpop.f32.mrb[0].mxu0
    %2385 = vmatprep.mubr.bf16.mxu0 0
    %2386 = vmatmul.mubr.bf16.gmra.mrb[0].mxu0 %v2302
    %v2387 = vpop.f32.mrb[0].mxu0
    %v2388 = vadd.f32 0.0, %v2387
    %v2389 = vpop.f32.mrb[0].mxu0
    %v2390 = vpop.f32.mrb[0].mxu0
    %v2391 = vadd.f32 0.0, %v2390
    %v2392 = vpop.f32.mrb[0].mxu0
    %2393 = vmatprep.mubr.bf16.mxu0 0
    %2394 = vmatmul.mubr.bf16.gmra.mrb[0].mxu0 %v2305
    %v2395 = vpop.f32.mrb[0].mxu0
    %v2396 = vadd.f32 0.0, %v2395
    %v2397 = vpop.f32.mrb[0].mxu0
    %v2398 = vpop.f32.mrb[0].mxu0
    %v2399 = vadd.f32 0.0, %v2398
    %v2400 = vpop.f32.mrb[0].mxu0
    %2401 = vmatprep.mubr.bf16.mxu0 0
    %2402 = vmatmul.mubr.bf16.gmra.mrb[0].mxu0 %v2308
    %v2403 = vpop.f32.mrb[0].mxu0
    %v2404 = vadd.f32 0.0, %v2403
    %v2405 = vpop.f32.mrb[0].mxu0
    %v2406 = vpop.f32.mrb[0].mxu0
    %v2407 = vadd.f32 0.0, %v2406
    %v2408 = vpop.f32.mrb[0].mxu0
    %2409 = vdwg.mxu0
    %v2410 = vadd.f32 %v1873, %v2348
    %v2411 = vadd.f32 %v1874, %v2351
    %v2412 = vadd.f32 %v1875, %v2356
    %v2413 = vadd.f32 %v1876, %v2359
    %v2414 = vadd.f32 %v1877, %v2364
    %v2415 = vadd.f32 %v1878, %v2367
    %v2416 = vadd.f32 %v1879, %v2372
    %v2417 = vadd.f32 %v1880, %v2375
    %v2418 = vadd.f32 %v1881, %v2380
    %v2419 = vadd.f32 %v1882, %v2383
    %v2420 = vadd.f32 %v1883, %v2388
    %v2421 = vadd.f32 %v1884, %v2391
    %v2422 = vadd.f32 %v1885, %v2396
    %v2423 = vadd.f32 %v1886, %v2399
    %v2424 = vadd.f32 %v1887, %v2404
    %v2425 = vadd.f32 %v1888, %v2407
    %s2426 = scalar_lea.vmem %s1, 1024
    %v2427 = vld [vmem:[%s2426] sm:$0xff]
    %v2428 = vld [vmem:[%s2426 + $0x8] sm:$0xff]
    %v2429 = vld [vmem:[%s2426 + $0x10] sm:$0xff]
    %v2430 = vld [vmem:[%s2426 + $0x18] sm:$0xff]
    %v2431 = vld [vmem:[%s2426 + $0x20] sm:$0xff]
    %v2432 = vld [vmem:[%s2426 + $0x28] sm:$0xff]
    %v2433 = vld [vmem:[%s2426 + $0x30] sm:$0xff]
    %v2434 = vld [vmem:[%s2426 + $0x38] sm:$0xff]
    %v2435 = vld [vmem:[%s2426 + $0x40] sm:$0xff]
    %v2436 = vld [vmem:[%s2426 + $0x48] sm:$0xff]
    %v2437 = vld [vmem:[%s2426 + $0x50] sm:$0xff]
    %v2438 = vld [vmem:[%s2426 + $0x58] sm:$0xff]
    %v2439 = vld [vmem:[%s2426 + $0x60] sm:$0xff]
    %v2440 = vld [vmem:[%s2426 + $0x68] sm:$0xff]
    %v2441 = vld [vmem:[%s2426 + $0x70] sm:$0xff]
    %v2442 = vld [vmem:[%s2426 + $0x78] sm:$0xff]
    %v2443 = vld [vmem:[%s2426 + $0x80] sm:$0xff]
    %v2444 = vld [vmem:[%s2426 + $0x88] sm:$0xff]
    %v2445 = vld [vmem:[%s2426 + $0x90] sm:$0xff]
    %v2446 = vld [vmem:[%s2426 + $0x98] sm:$0xff]
    %v2447 = vld [vmem:[%s2426 + $0xa0] sm:$0xff]
    %v2448 = vld [vmem:[%s2426 + $0xa8] sm:$0xff]
    %v2449 = vld [vmem:[%s2426 + $0xb0] sm:$0xff]
    %v2450 = vld [vmem:[%s2426 + $0xb8] sm:$0xff]
    %v2451 = vld [vmem:[%s2426 + $0xc0] sm:$0xff]
    %v2452 = vld [vmem:[%s2426 + $0xc8] sm:$0xff]
    %v2453 = vld [vmem:[%s2426 + $0xd0] sm:$0xff]
    %v2454 = vld [vmem:[%s2426 + $0xd8] sm:$0xff]
    %v2455 = vld [vmem:[%s2426 + $0xe0] sm:$0xff]
    %v2456 = vld [vmem:[%s2426 + $0xe8] sm:$0xff]
    %v2457 = vld [vmem:[%s2426 + $0xf0] sm:$0xff]
    %v2458 = vld [vmem:[%s2426 + $0xf8] sm:$0xff]
    %v2491 = vunpack.c.l.b16 %v2427
    %v2492 = vunpack.c.h.b16 %v2427
    %v2493 = vunpack.c.l.b16 %v2428
    %v2494 = vunpack.c.h.b16 %v2428
    %v2495 = vunpack.c.l.b16 %v2429
    %v2496 = vunpack.c.h.b16 %v2429
    %v2497 = vunpack.c.l.b16 %v2430
    %v2498 = vunpack.c.h.b16 %v2430
    %v2499 = vunpack.c.l.b16 %v2431
    %v2500 = vunpack.c.h.b16 %v2431
    %v2501 = vunpack.c.l.b16 %v2432
    %v2502 = vunpack.c.h.b16 %v2432
    %v2503 = vunpack.c.l.b16 %v2433
    %v2504 = vunpack.c.h.b16 %v2433
    %v2505 = vunpack.c.l.b16 %v2434
    %v2506 = vunpack.c.h.b16 %v2434
    %v2507 = vunpack.c.l.b16 %v2435
    %v2508 = vunpack.c.h.b16 %v2435
    %v2509 = vunpack.c.l.b16 %v2436
    %v2510 = vunpack.c.h.b16 %v2436
    %v2511 = vunpack.c.l.b16 %v2437
    %v2512 = vunpack.c.h.b16 %v2437
    %v2513 = vunpack.c.l.b16 %v2438
    %v2514 = vunpack.c.h.b16 %v2438
    %v2515 = vunpack.c.l.b16 %v2439
    %v2516 = vunpack.c.h.b16 %v2439
    %v2517 = vunpack.c.l.b16 %v2440
    %v2518 = vunpack.c.h.b16 %v2440
    %v2519 = vunpack.c.l.b16 %v2441
    %v2520 = vunpack.c.h.b16 %v2441
    %v2521 = vunpack.c.l.b16 %v2442
    %v2522 = vunpack.c.h.b16 %v2442
    %v2523 = vunpack.c.l.b16 %v2443
    %v2524 = vunpack.c.h.b16 %v2443
    %v2525 = vunpack.c.l.b16 %v2444
    %v2526 = vunpack.c.h.b16 %v2444
    %v2527 = vunpack.c.l.b16 %v2445
    %v2528 = vunpack.c.h.b16 %v2445
    %v2529 = vunpack.c.l.b16 %v2446
    %v2530 = vunpack.c.h.b16 %v2446
    %v2531 = vunpack.c.l.b16 %v2447
    %v2532 = vunpack.c.h.b16 %v2447
    %v2533 = vunpack.c.l.b16 %v2448
    %v2534 = vunpack.c.h.b16 %v2448
    %v2535 = vunpack.c.l.b16 %v2449
    %v2536 = vunpack.c.h.b16 %v2449
    %v2537 = vunpack.c.l.b16 %v2450
    %v2538 = vunpack.c.h.b16 %v2450
    %v2539 = vunpack.c.l.b16 %v2451
    %v2540 = vunpack.c.h.b16 %v2451
    %v2541 = vunpack.c.l.b16 %v2452
    %v2542 = vunpack.c.h.b16 %v2452
    %v2543 = vunpack.c.l.b16 %v2453
    %v2544 = vunpack.c.h.b16 %v2453
    %v2545 = vunpack.c.l.b16 %v2454
    %v2546 = vunpack.c.h.b16 %v2454
    %v2547 = vunpack.c.l.b16 %v2455
    %v2548 = vunpack.c.h.b16 %v2455
    %v2549 = vunpack.c.l.b16 %v2456
    %v2550 = vunpack.c.h.b16 %v2456
    %v2551 = vunpack.c.l.b16 %v2457
    %v2552 = vunpack.c.h.b16 %v2457
    %v2553 = vunpack.c.l.b16 %v2458
    %v2554 = vunpack.c.h.b16 %v2458
    %v2555 = vpack.c.b16 %v2495, %v2491
    %v2556 = vpack.c.b16 %v2496, %v2492
    %v2557 = vpack.c.b16 %v2497, %v2493
    %v2558 = vpack.c.b16 %v2498, %v2494
    %v2559 = vpack.c.b16 %v2503, %v2499
    %v2560 = vpack.c.b16 %v2504, %v2500
    %v2561 = vpack.c.b16 %v2505, %v2501
    %v2562 = vpack.c.b16 %v2506, %v2502
    %v2563 = vpack.c.b16 %v2511, %v2507
    %v2564 = vpack.c.b16 %v2512, %v2508
    %v2565 = vpack.c.b16 %v2513, %v2509
    %v2566 = vpack.c.b16 %v2514, %v2510
    %v2567 = vpack.c.b16 %v2519, %v2515
    %v2568 = vpack.c.b16 %v2520, %v2516
    %v2569 = vpack.c.b16 %v2521, %v2517
    %v2570 = vpack.c.b16 %v2522, %v2518
    %v2571 = vpack.c.b16 %v2527, %v2523
    %v2572 = vpack.c.b16 %v2528, %v2524
    %v2573 = vpack.c.b16 %v2529, %v2525
    %v2574 = vpack.c.b16 %v2530, %v2526
    %v2575 = vpack.c.b16 %v2535, %v2531
    %v2576 = vpack.c.b16 %v2536, %v2532
    %v2577 = vpack.c.b16 %v2537, %v2533
    %v2578 = vpack.c.b16 %v2538, %v2534
    %v2579 = vpack.c.b16 %v2543, %v2539
    %v2580 = vpack.c.b16 %v2544, %v2540
    %v2581 = vpack.c.b16 %v2545, %v2541
    %v2582 = vpack.c.b16 %v2546, %v2542
    %v2583 = vpack.c.b16 %v2551, %v2547
    %v2584 = vpack.c.b16 %v2552, %v2548
    %v2585 = vpack.c.b16 %v2553, %v2549
    %v2586 = vpack.c.b16 %v2554, %v2550
    %2619 = vmatprep.subr.bf16.mxu0 0
    %2620 = vmatpush1.bf16.msra.mxu0 %v435
    %2621 = vmatprep.subr.bf16.mxu0 0
    %2622 = vmatpush1.bf16.msra.mxu0 %v436
    %2623 = vmatprep.subr.bf16.mxu0 0
    %2624 = vmatpush1.bf16.msra.mxu0 %v437
    %2625 = vmatprep.subr.bf16.mxu0 0
    %2626 = vmatpush1.bf16.msra.mxu0 %v438
    %2627 = vmatprep.subr.bf16.mxu0 0
    %2628 = vmatpush1.bf16.msra.mxu0 %v439
    %2629 = vmatprep.subr.bf16.mxu0 0
    %2630 = vmatpush1.bf16.msra.mxu0 %v440
    %2631 = vmatprep.subr.bf16.mxu0 0
    %2632 = vmatpush1.bf16.msra.mxu0 %v441
    %2633 = vmatprep.subr.bf16.mxu0 0
    %2634 = vmatpush1.bf16.msra.mxu0 %v442
    %2635 = vmatprep.subr.bf16.mxu0 0
    %2636 = vmatpush1.bf16.msra.mxu0 %v443
    %2637 = vmatprep.subr.bf16.mxu0 0
    %2638 = vmatpush1.bf16.msra.mxu0 %v444
    %2639 = vmatprep.subr.bf16.mxu0 0
    %2640 = vmatpush1.bf16.msra.mxu0 %v445
    %2641 = vmatprep.subr.bf16.mxu0 0
    %2642 = vmatpush1.bf16.msra.mxu0 %v446
    %2643 = vmatprep.subr.bf16.mxu0 0
    %2644 = vmatpush1.bf16.msra.mxu0 %v447
    %2645 = vmatprep.subr.bf16.mxu0 0
    %2646 = vmatpush1.bf16.msra.mxu0 %v448
    %2647 = vmatprep.subr.bf16.mxu0 0
    %2648 = vmatpush1.bf16.msra.mxu0 %v449
    %2649 = vmatprep.subr.bf16.mxu0 0
    %2650 = vmatpush1.bf16.msra.mxu0 %v450
    %2651 = vmatprep.mubr.bf16.mxu0 %v2556
    %2652 = vmatmul.mubr.bf16.gmra.mrb[0].mxu0 %v2555
    %v2653 = vpop.f32.mrb[0].mxu0
    %v2654 = vadd.f32 0.0, %v2653
    %v2655 = vpop.f32.mrb[0].mxu0
    %v2656 = vpop.f32.mrb[0].mxu0
    %v2657 = vadd.f32 0.0, %v2656
    %v2658 = vpop.f32.mrb[0].mxu0
    %2659 = vmatprep.mubr.bf16.mxu0 %v2560
    %2660 = vmatmul.mubr.bf16.gmra.mrb[0].mxu0 %v2559
    %v2661 = vpop.f32.mrb[0].mxu0
    %v2662 = vadd.f32 0.0, %v2661
    %v2663 = vpop.f32.mrb[0].mxu0
    %v2664 = vpop.f32.mrb[0].mxu0
    %v2665 = vadd.f32 0.0, %v2664
    %v2666 = vpop.f32.mrb[0].mxu0
    %2667 = vmatprep.mubr.bf16.mxu0 %v2564
    %2668 = vmatmul.mubr.bf16.gmra.mrb[0].mxu0 %v2563
    %v2669 = vpop.f32.mrb[0].mxu0
    %v2670 = vadd.f32 0.0, %v2669
    %v2671 = vpop.f32.mrb[0].mxu0
    %v2672 = vpop.f32.mrb[0].mxu0
    %v2673 = vadd.f32 0.0, %v2672
    %v2674 = vpop.f32.mrb[0].mxu0
    %2675 = vmatprep.mubr.bf16.mxu0 %v2568
    %2676 = vmatmul.mubr.bf16.gmra.mrb[0].mxu0 %v2567
    %v2677 = vpop.f32.mrb[0].mxu0
    %v2678 = vadd.f32 0.0, %v2677
    %v2679 = vpop.f32.mrb[0].mxu0
    %v2680 = vpop.f32.mrb[0].mxu0
    %v2681 = vadd.f32 0.0, %v2680
    %v2682 = vpop.f32.mrb[0].mxu0
    %2683 = vmatprep.mubr.bf16.mxu0 %v2572
    %2684 = vmatmul.mubr.bf16.gmra.mrb[0].mxu0 %v2571
    %v2685 = vpop.f32.mrb[0].mxu0
    %v2686 = vadd.f32 0.0, %v2685
    %v2687 = vpop.f32.mrb[0].mxu0
    %v2688 = vpop.f32.mrb[0].mxu0
    %v2689 = vadd.f32 0.0, %v2688
    %v2690 = vpop.f32.mrb[0].mxu0
    %2691 = vmatprep.mubr.bf16.mxu0 %v2576
    %2692 = vmatmul.mubr.bf16.gmra.mrb[0].mxu0 %v2575
    %v2693 = vpop.f32.mrb[0].mxu0
    %v2694 = vadd.f32 0.0, %v2693
    %v2695 = vpop.f32.mrb[0].mxu0
    %v2696 = vpop.f32.mrb[0].mxu0
    %v2697 = vadd.f32 0.0, %v2696
    %v2698 = vpop.f32.mrb[0].mxu0
    %2699 = vmatprep.mubr.bf16.mxu0 %v2580
    %2700 = vmatmul.mubr.bf16.gmra.mrb[0].mxu0 %v2579
    %v2701 = vpop.f32.mrb[0].mxu0
    %v2702 = vadd.f32 0.0, %v2701
    %v2703 = vpop.f32.mrb[0].mxu0
    %v2704 = vpop.f32.mrb[0].mxu0
    %v2705 = vadd.f32 0.0, %v2704
    %v2706 = vpop.f32.mrb[0].mxu0
    %2707 = vmatprep.mubr.bf16.mxu0 %v2584
    %2708 = vmatmul.mubr.bf16.gmra.mrb[0].mxu0 %v2583
    %v2709 = vpop.f32.mrb[0].mxu0
    %v2710 = vadd.f32 0.0, %v2709
    %v2711 = vpop.f32.mrb[0].mxu0
    %v2712 = vpop.f32.mrb[0].mxu0
    %v2713 = vadd.f32 0.0, %v2712
    %v2714 = vpop.f32.mrb[0].mxu0
    %2715 = vdwg.mxu0
    %2716 = vmatprep.subr.bf16.mxu0 0
    %2717 = vmatpush1.bf16.msra.mxu0 %v451
    %2718 = vmatprep.subr.bf16.mxu0 0
    %2719 = vmatpush1.bf16.msra.mxu0 %v452
    %2720 = vmatprep.subr.bf16.mxu0 0
    %2721 = vmatpush1.bf16.msra.mxu0 %v453
    %2722 = vmatprep.subr.bf16.mxu0 0
    %2723 = vmatpush1.bf16.msra.mxu0 %v454
    %2724 = vmatprep.subr.bf16.mxu0 0
    %2725 = vmatpush1.bf16.msra.mxu0 %v455
    %2726 = vmatprep.subr.bf16.mxu0 0
    %2727 = vmatpush1.bf16.msra.mxu0 %v456
    %2728 = vmatprep.subr.bf16.mxu0 0
    %2729 = vmatpush1.bf16.msra.mxu0 %v457
    %2730 = vmatprep.subr.bf16.mxu0 0
    %2731 = vmatpush1.bf16.msra.mxu0 %v458
    %2732 = vmatprep.subr.bf16.mxu0 0
    %2733 = vmatpush1.bf16.msra.mxu0 %v459
    %2734 = vmatprep.subr.bf16.mxu0 0
    %2735 = vmatpush1.bf16.msra.mxu0 %v460
    %2736 = vmatprep.subr.bf16.mxu0 0
    %2737 = vmatpush1.bf16.msra.mxu0 %v461
    %2738 = vmatprep.subr.bf16.mxu0 0
    %2739 = vmatpush1.bf16.msra.mxu0 %v462
    %2740 = vmatprep.subr.bf16.mxu0 0
    %2741 = vmatpush1.bf16.msra.mxu0 %v463
    %2742 = vmatprep.subr.bf16.mxu0 0
    %2743 = vmatpush1.bf16.msra.mxu0 %v464
    %2744 = vmatprep.subr.bf16.mxu0 0
    %2745 = vmatpush1.bf16.msra.mxu0 %v465
    %2746 = vmatprep.subr.bf16.mxu0 0
    %2747 = vmatpush1.bf16.msra.mxu0 %v466
    %2748 = vmatprep.mubr.bf16.mxu0 %v2558
    %2749 = vmatmul.mubr.bf16.gmra.mrb[0].mxu0 %v2557
    %v2750 = vpop.f32.mrb[0].mxu0
    %v2751 = vadd.f32 %v2654, %v2750
    %v2752 = vpop.f32.mrb[0].mxu0
    %v2753 = vpop.f32.mrb[0].mxu0
    %v2754 = vadd.f32 %v2657, %v2753
    %v2755 = vpop.f32.mrb[0].mxu0
    %2756 = vmatprep.mubr.bf16.mxu0 %v2562
    %2757 = vmatmul.mubr.bf16.gmra.mrb[0].mxu0 %v2561
    %v2758 = vpop.f32.mrb[0].mxu0
    %v2759 = vadd.f32 %v2662, %v2758
    %v2760 = vpop.f32.mrb[0].mxu0
    %v2761 = vpop.f32.mrb[0].mxu0
    %v2762 = vadd.f32 %v2665, %v2761
    %v2763 = vpop.f32.mrb[0].mxu0
    %2764 = vmatprep.mubr.bf16.mxu0 %v2566
    %2765 = vmatmul.mubr.bf16.gmra.mrb[0].mxu0 %v2565
    %v2766 = vpop.f32.mrb[0].mxu0
    %v2767 = vadd.f32 %v2670, %v2766
    %v2768 = vpop.f32.mrb[0].mxu0
    %v2769 = vpop.f32.mrb[0].mxu0
    %v2770 = vadd.f32 %v2673, %v2769
    %v2771 = vpop.f32.mrb[0].mxu0
    %2772 = vmatprep.mubr.bf16.mxu0 %v2570
    %2773 = vmatmul.mubr.bf16.gmra.mrb[0].mxu0 %v2569
    %v2774 = vpop.f32.mrb[0].mxu0
    %v2775 = vadd.f32 %v2678, %v2774
    %v2776 = vpop.f32.mrb[0].mxu0
    %v2777 = vpop.f32.mrb[0].mxu0
    %v2778 = vadd.f32 %v2681, %v2777
    %v2779 = vpop.f32.mrb[0].mxu0
    %2780 = vmatprep.mubr.bf16.mxu0 %v2574
    %2781 = vmatmul.mubr.bf16.gmra.mrb[0].mxu0 %v2573
    %v2782 = vpop.f32.mrb[0].mxu0
    %v2783 = vadd.f32 %v2686, %v2782
    %v2784 = vpop.f32.mrb[0].mxu0
    %v2785 = vpop.f32.mrb[0].mxu0
    %v2786 = vadd.f32 %v2689, %v2785
    %v2787 = vpop.f32.mrb[0].mxu0
    %2788 = vmatprep.mubr.bf16.mxu0 %v2578
    %2789 = vmatmul.mubr.bf16.gmra.mrb[0].mxu0 %v2577
    %v2790 = vpop.f32.mrb[0].mxu0
    %v2791 = vadd.f32 %v2694, %v2790
    %v2792 = vpop.f32.mrb[0].mxu0
    %v2793 = vpop.f32.mrb[0].mxu0
    %v2794 = vadd.f32 %v2697, %v2793
    %v2795 = vpop.f32.mrb[0].mxu0
    %2796 = vmatprep.mubr.bf16.mxu0 %v2582
    %2797 = vmatmul.mubr.bf16.gmra.mrb[0].mxu0 %v2581
    %v2798 = vpop.f32.mrb[0].mxu0
    %v2799 = vadd.f32 %v2702, %v2798
    %v2800 = vpop.f32.mrb[0].mxu0
    %v2801 = vpop.f32.mrb[0].mxu0
    %v2802 = vadd.f32 %v2705, %v2801
    %v2803 = vpop.f32.mrb[0].mxu0
    %2804 = vmatprep.mubr.bf16.mxu0 %v2586
    %2805 = vmatmul.mubr.bf16.gmra.mrb[0].mxu0 %v2585
    %v2806 = vpop.f32.mrb[0].mxu0
    %v2807 = vadd.f32 %v2710, %v2806
    %v2808 = vpop.f32.mrb[0].mxu0
    %v2809 = vpop.f32.mrb[0].mxu0
    %v2810 = vadd.f32 %v2713, %v2809
    %v2811 = vpop.f32.mrb[0].mxu0
    %2812 = vdwg.mxu0
    %v2813 = vpack.c.bf16 %v2754, %v2751
    %v2814 = vpack.c.bf16 %v2762, %v2759
    %v2815 = vpack.c.bf16 %v2770, %v2767
    %v2816 = vpack.c.bf16 %v2778, %v2775
    %v2817 = vpack.c.bf16 %v2786, %v2783
    %v2818 = vpack.c.bf16 %v2794, %v2791
    %v2819 = vpack.c.bf16 %v2802, %v2799
    %v2820 = vpack.c.bf16 %v2810, %v2807
    %s2821 = scalar_lea.vmem %s2, 8
    %v2822 = vld [vmem:[%s2821] sm:$0x3]
    %v2824 = vsel %vm1099, %v2813, 0
    %v2827 = vsel %vm1099, %v2814, 0
    %v2830 = vsel %vm1099, %v2815, 0
    %v2833 = vsel %vm1099, %v2816, 0
    %v2836 = vsel %vm1099, %v2817, 0
    %v2839 = vsel %vm1099, %v2818, 0
    %v2842 = vsel %vm1099, %v2819, 0
    %v2845 = vsel %vm1099, %v2820, 0
    %v2848 = vand.u32 %v2822, %v1127
    %2850 = vmatprep.subr.bf16.mxu0 0
    %2851 = vmatpush1.bf16.msra.mxu0 %v2848
    %2852 = vmatprep.subr.bf16.mxu0 0
    %2853 = vmatpush1.bf16.msra.mxu0 0
    %2854 = vmatprep.subr.bf16.mxu0 0
    %2855 = vmatpush1.bf16.msra.mxu0 0
    %2856 = vmatprep.subr.bf16.mxu0 0
    %2857 = vmatpush1.bf16.msra.mxu0 0
    %2858 = vmatprep.subr.bf16.mxu0 0
    %2859 = vmatpush1.bf16.msra.mxu0 0
    %2860 = vmatprep.subr.bf16.mxu0 0
    %2861 = vmatpush1.bf16.msra.mxu0 0
    %2862 = vmatprep.subr.bf16.mxu0 0
    %2863 = vmatpush1.bf16.msra.mxu0 0
    %2864 = vmatprep.subr.bf16.mxu0 0
    %2865 = vmatpush1.bf16.msra.mxu0 0
    %2866 = vmatprep.subr.bf16.mxu0 0
    %2867 = vmatpush1.bf16.msra.mxu0 0
    %2868 = vmatprep.subr.bf16.mxu0 0
    %2869 = vmatpush1.bf16.msra.mxu0 0
    %2870 = vmatprep.subr.bf16.mxu0 0
    %2871 = vmatpush1.bf16.msra.mxu0 0
    %2872 = vmatprep.subr.bf16.mxu0 0
    %2873 = vmatpush1.bf16.msra.mxu0 0
    %2874 = vmatprep.subr.bf16.mxu0 0
    %2875 = vmatpush1.bf16.msra.mxu0 0
    %2876 = vmatprep.subr.bf16.mxu0 0
    %2877 = vmatpush1.bf16.msra.mxu0 0
    %2878 = vmatprep.subr.bf16.mxu0 0
    %2879 = vmatpush1.bf16.msra.mxu0 0
    %2880 = vmatprep.subr.bf16.mxu0 0
    %2881 = vmatpush1.bf16.msra.mxu0 0
    %2882 = vmatprep.mubr.bf16.mxu0 0
    %2883 = vmatmul.mubr.bf16.gmra.mrb[0].mxu0 %v2824
    %v2884 = vpop.f32.mrb[0].mxu0
    %v2885 = vadd.f32 0.0, %v2884
    %v2886 = vpop.f32.mrb[0].mxu0
    %v2887 = vpop.f32.mrb[0].mxu0
    %v2888 = vadd.f32 0.0, %v2887
    %v2889 = vpop.f32.mrb[0].mxu0
    %2890 = vmatprep.mubr.bf16.mxu0 0
    %2891 = vmatmul.mubr.bf16.gmra.mrb[0].mxu0 %v2827
    %v2892 = vpop.f32.mrb[0].mxu0
    %v2893 = vadd.f32 0.0, %v2892
    %v2894 = vpop.f32.mrb[0].mxu0
    %v2895 = vpop.f32.mrb[0].mxu0
    %v2896 = vadd.f32 0.0, %v2895
    %v2897 = vpop.f32.mrb[0].mxu0
    %2898 = vmatprep.mubr.bf16.mxu0 0
    %2899 = vmatmul.mubr.bf16.gmra.mrb[0].mxu0 %v2830
    %v2900 = vpop.f32.mrb[0].mxu0
    %v2901 = vadd.f32 0.0, %v2900
    %v2902 = vpop.f32.mrb[0].mxu0
    %v2903 = vpop.f32.mrb[0].mxu0
    %v2904 = vadd.f32 0.0, %v2903
    %v2905 = vpop.f32.mrb[0].mxu0
    %2906 = vmatprep.mubr.bf16.mxu0 0
    %2907 = vmatmul.mubr.bf16.gmra.mrb[0].mxu0 %v2833
    %v2908 = vpop.f32.mrb[0].mxu0
    %v2909 = vadd.f32 0.0, %v2908
    %v2910 = vpop.f32.mrb[0].mxu0
    %v2911 = vpop.f32.mrb[0].mxu0
    %v2912 = vadd.f32 0.0, %v2911
    %v2913 = vpop.f32.mrb[0].mxu0
    %2914 = vmatprep.mubr.bf16.mxu0 0
    %2915 = vmatmul.mubr.bf16.gmra.mrb[0].mxu0 %v2836
    %v2916 = vpop.f32.mrb[0].mxu0
    %v2917 = vadd.f32 0.0, %v2916
    %v2918 = vpop.f32.mrb[0].mxu0
    %v2919 = vpop.f32.mrb[0].mxu0
    %v2920 = vadd.f32 0.0, %v2919
    %v2921 = vpop.f32.mrb[0].mxu0
    %2922 = vmatprep.mubr.bf16.mxu0 0
    %2923 = vmatmul.mubr.bf16.gmra.mrb[0].mxu0 %v2839
    %v2924 = vpop.f32.mrb[0].mxu0
    %v2925 = vadd.f32 0.0, %v2924
    %v2926 = vpop.f32.mrb[0].mxu0
    %v2927 = vpop.f32.mrb[0].mxu0
    %v2928 = vadd.f32 0.0, %v2927
    %v2929 = vpop.f32.mrb[0].mxu0
    %2930 = vmatprep.mubr.bf16.mxu0 0
    %2931 = vmatmul.mubr.bf16.gmra.mrb[0].mxu0 %v2842
    %v2932 = vpop.f32.mrb[0].mxu0
    %v2933 = vadd.f32 0.0, %v2932
    %v2934 = vpop.f32.mrb[0].mxu0
    %v2935 = vpop.f32.mrb[0].mxu0
    %v2936 = vadd.f32 0.0, %v2935
    %v2937 = vpop.f32.mrb[0].mxu0
    %2938 = vmatprep.mubr.bf16.mxu0 0
    %2939 = vmatmul.mubr.bf16.gmra.mrb[0].mxu0 %v2845
    %v2940 = vpop.f32.mrb[0].mxu0
    %v2941 = vadd.f32 0.0, %v2940
    %v2942 = vpop.f32.mrb[0].mxu0
    %v2943 = vpop.f32.mrb[0].mxu0
    %v2944 = vadd.f32 0.0, %v2943
    %v2945 = vpop.f32.mrb[0].mxu0
    %2946 = vdwg.mxu0
    %v2947 = vadd.f32 %v2410, %v2885
    %v2948 = vadd.f32 %v2411, %v2888
    %v2949 = vadd.f32 %v2412, %v2893
    %v2950 = vadd.f32 %v2413, %v2896
    %v2951 = vadd.f32 %v2414, %v2901
    %v2952 = vadd.f32 %v2415, %v2904
    %v2953 = vadd.f32 %v2416, %v2909
    %v2954 = vadd.f32 %v2417, %v2912
    %v2955 = vadd.f32 %v2418, %v2917
    %v2956 = vadd.f32 %v2419, %v2920
    %v2957 = vadd.f32 %v2420, %v2925
    %v2958 = vadd.f32 %v2421, %v2928
    %v2959 = vadd.f32 %v2422, %v2933
    %v2960 = vadd.f32 %v2423, %v2936
    %v2961 = vadd.f32 %v2424, %v2941
    %v2962 = vadd.f32 %v2425, %v2944
    %s2963 = scalar_lea.vmem %s1, 1280
    %v2964 = vld [vmem:[%s2963] sm:$0xff]
    %v2965 = vld [vmem:[%s2963 + $0x8] sm:$0xff]
    %v2966 = vld [vmem:[%s2963 + $0x10] sm:$0xff]
    %v2967 = vld [vmem:[%s2963 + $0x18] sm:$0xff]
    %v2968 = vld [vmem:[%s2963 + $0x20] sm:$0xff]
    %v2969 = vld [vmem:[%s2963 + $0x28] sm:$0xff]
    %v2970 = vld [vmem:[%s2963 + $0x30] sm:$0xff]
    %v2971 = vld [vmem:[%s2963 + $0x38] sm:$0xff]
    %v2972 = vld [vmem:[%s2963 + $0x40] sm:$0xff]
    %v2973 = vld [vmem:[%s2963 + $0x48] sm:$0xff]
    %v2974 = vld [vmem:[%s2963 + $0x50] sm:$0xff]
    %v2975 = vld [vmem:[%s2963 + $0x58] sm:$0xff]
    %v2976 = vld [vmem:[%s2963 + $0x60] sm:$0xff]
    %v2977 = vld [vmem:[%s2963 + $0x68] sm:$0xff]
    %v2978 = vld [vmem:[%s2963 + $0x70] sm:$0xff]
    %v2979 = vld [vmem:[%s2963 + $0x78] sm:$0xff]
    %v2980 = vld [vmem:[%s2963 + $0x80] sm:$0xff]
    %v2981 = vld [vmem:[%s2963 + $0x88] sm:$0xff]
    %v2982 = vld [vmem:[%s2963 + $0x90] sm:$0xff]
    %v2983 = vld [vmem:[%s2963 + $0x98] sm:$0xff]
    %v2984 = vld [vmem:[%s2963 + $0xa0] sm:$0xff]
    %v2985 = vld [vmem:[%s2963 + $0xa8] sm:$0xff]
    %v2986 = vld [vmem:[%s2963 + $0xb0] sm:$0xff]
    %v2987 = vld [vmem:[%s2963 + $0xb8] sm:$0xff]
    %v2988 = vld [vmem:[%s2963 + $0xc0] sm:$0xff]
    %v2989 = vld [vmem:[%s2963 + $0xc8] sm:$0xff]
    %v2990 = vld [vmem:[%s2963 + $0xd0] sm:$0xff]
    %v2991 = vld [vmem:[%s2963 + $0xd8] sm:$0xff]
    %v2992 = vld [vmem:[%s2963 + $0xe0] sm:$0xff]
    %v2993 = vld [vmem:[%s2963 + $0xe8] sm:$0xff]
    %v2994 = vld [vmem:[%s2963 + $0xf0] sm:$0xff]
    %v2995 = vld [vmem:[%s2963 + $0xf8] sm:$0xff]
    %v3028 = vunpack.c.l.b16 %v2964
    %v3029 = vunpack.c.h.b16 %v2964
    %v3030 = vunpack.c.l.b16 %v2965
    %v3031 = vunpack.c.h.b16 %v2965
    %v3032 = vunpack.c.l.b16 %v2966
    %v3033 = vunpack.c.h.b16 %v2966
    %v3034 = vunpack.c.l.b16 %v2967
    %v3035 = vunpack.c.h.b16 %v2967
    %v3036 = vunpack.c.l.b16 %v2968
    %v3037 = vunpack.c.h.b16 %v2968
    %v3038 = vunpack.c.l.b16 %v2969
    %v3039 = vunpack.c.h.b16 %v2969
    %v3040 = vunpack.c.l.b16 %v2970
    %v3041 = vunpack.c.h.b16 %v2970
    %v3042 = vunpack.c.l.b16 %v2971
    %v3043 = vunpack.c.h.b16 %v2971
    %v3044 = vunpack.c.l.b16 %v2972
    %v3045 = vunpack.c.h.b16 %v2972
    %v3046 = vunpack.c.l.b16 %v2973
    %v3047 = vunpack.c.h.b16 %v2973
    %v3048 = vunpack.c.l.b16 %v2974
    %v3049 = vunpack.c.h.b16 %v2974
    %v3050 = vunpack.c.l.b16 %v2975
    %v3051 = vunpack.c.h.b16 %v2975
    %v3052 = vunpack.c.l.b16 %v2976
    %v3053 = vunpack.c.h.b16 %v2976
    %v3054 = vunpack.c.l.b16 %v2977
    %v3055 = vunpack.c.h.b16 %v2977
    %v3056 = vunpack.c.l.b16 %v2978
    %v3057 = vunpack.c.h.b16 %v2978
    %v3058 = vunpack.c.l.b16 %v2979
    %v3059 = vunpack.c.h.b16 %v2979
    %v3060 = vunpack.c.l.b16 %v2980
    %v3061 = vunpack.c.h.b16 %v2980
    %v3062 = vunpack.c.l.b16 %v2981
    %v3063 = vunpack.c.h.b16 %v2981
    %v3064 = vunpack.c.l.b16 %v2982
    %v3065 = vunpack.c.h.b16 %v2982
    %v3066 = vunpack.c.l.b16 %v2983
    %v3067 = vunpack.c.h.b16 %v2983
    %v3068 = vunpack.c.l.b16 %v2984
    %v3069 = vunpack.c.h.b16 %v2984
    %v3070 = vunpack.c.l.b16 %v2985
    %v3071 = vunpack.c.h.b16 %v2985
    %v3072 = vunpack.c.l.b16 %v2986
    %v3073 = vunpack.c.h.b16 %v2986
    %v3074 = vunpack.c.l.b16 %v2987
    %v3075 = vunpack.c.h.b16 %v2987
    %v3076 = vunpack.c.l.b16 %v2988
    %v3077 = vunpack.c.h.b16 %v2988
    %v3078 = vunpack.c.l.b16 %v2989
    %v3079 = vunpack.c.h.b16 %v2989
    %v3080 = vunpack.c.l.b16 %v2990
    %v3081 = vunpack.c.h.b16 %v2990
    %v3082 = vunpack.c.l.b16 %v2991
    %v3083 = vunpack.c.h.b16 %v2991
    %v3084 = vunpack.c.l.b16 %v2992
    %v3085 = vunpack.c.h.b16 %v2992
    %v3086 = vunpack.c.l.b16 %v2993
    %v3087 = vunpack.c.h.b16 %v2993
    %v3088 = vunpack.c.l.b16 %v2994
    %v3089 = vunpack.c.h.b16 %v2994
    %v3090 = vunpack.c.l.b16 %v2995
    %v3091 = vunpack.c.h.b16 %v2995
    %v3092 = vpack.c.b16 %v3032, %v3028
    %v3093 = vpack.c.b16 %v3033, %v3029
    %v3094 = vpack.c.b16 %v3034, %v3030
    %v3095 = vpack.c.b16 %v3035, %v3031
    %v3096 = vpack.c.b16 %v3040, %v3036
    %v3097 = vpack.c.b16 %v3041, %v3037
    %v3098 = vpack.c.b16 %v3042, %v3038
    %v3099 = vpack.c.b16 %v3043, %v3039
    %v3100 = vpack.c.b16 %v3048, %v3044
    %v3101 = vpack.c.b16 %v3049, %v3045
    %v3102 = vpack.c.b16 %v3050, %v3046
    %v3103 = vpack.c.b16 %v3051, %v3047
    %v3104 = vpack.c.b16 %v3056, %v3052
    %v3105 = vpack.c.b16 %v3057, %v3053
    %v3106 = vpack.c.b16 %v3058, %v3054
    %v3107 = vpack.c.b16 %v3059, %v3055
    %v3108 = vpack.c.b16 %v3064, %v3060
    %v3109 = vpack.c.b16 %v3065, %v3061
    %v3110 = vpack.c.b16 %v3066, %v3062
    %v3111 = vpack.c.b16 %v3067, %v3063
    %v3112 = vpack.c.b16 %v3072, %v3068
    %v3113 = vpack.c.b16 %v3073, %v3069
    %v3114 = vpack.c.b16 %v3074, %v3070
    %v3115 = vpack.c.b16 %v3075, %v3071
    %v3116 = vpack.c.b16 %v3080, %v3076
    %v3117 = vpack.c.b16 %v3081, %v3077
    %v3118 = vpack.c.b16 %v3082, %v3078
    %v3119 = vpack.c.b16 %v3083, %v3079
    %v3120 = vpack.c.b16 %v3088, %v3084
    %v3121 = vpack.c.b16 %v3089, %v3085
    %v3122 = vpack.c.b16 %v3090, %v3086
    %v3123 = vpack.c.b16 %v3091, %v3087
    %3156 = vmatprep.subr.bf16.mxu0 0
    %3157 = vmatpush1.bf16.msra.mxu0 %v435
    %3158 = vmatprep.subr.bf16.mxu0 0
    %3159 = vmatpush1.bf16.msra.mxu0 %v436
    %3160 = vmatprep.subr.bf16.mxu0 0
    %3161 = vmatpush1.bf16.msra.mxu0 %v437
    %3162 = vmatprep.subr.bf16.mxu0 0
    %3163 = vmatpush1.bf16.msra.mxu0 %v438
    %3164 = vmatprep.subr.bf16.mxu0 0
    %3165 = vmatpush1.bf16.msra.mxu0 %v439
    %3166 = vmatprep.subr.bf16.mxu0 0
    %3167 = vmatpush1.bf16.msra.mxu0 %v440
    %3168 = vmatprep.subr.bf16.mxu0 0
    %3169 = vmatpush1.bf16.msra.mxu0 %v441
    %3170 = vmatprep.subr.bf16.mxu0 0
    %3171 = vmatpush1.bf16.msra.mxu0 %v442
    %3172 = vmatprep.subr.bf16.mxu0 0
    %3173 = vmatpush1.bf16.msra.mxu0 %v443
    %3174 = vmatprep.subr.bf16.mxu0 0
    %3175 = vmatpush1.bf16.msra.mxu0 %v444
    %3176 = vmatprep.subr.bf16.mxu0 0
    %3177 = vmatpush1.bf16.msra.mxu0 %v445
    %3178 = vmatprep.subr.bf16.mxu0 0
    %3179 = vmatpush1.bf16.msra.mxu0 %v446
    %3180 = vmatprep.subr.bf16.mxu0 0
    %3181 = vmatpush1.bf16.msra.mxu0 %v447
    %3182 = vmatprep.subr.bf16.mxu0 0
    %3183 = vmatpush1.bf16.msra.mxu0 %v448
    %3184 = vmatprep.subr.bf16.mxu0 0
    %3185 = vmatpush1.bf16.msra.mxu0 %v449
    %3186 = vmatprep.subr.bf16.mxu0 0
    %3187 = vmatpush1.bf16.msra.mxu0 %v450
    %3188 = vmatprep.mubr.bf16.mxu0 %v3093
    %3189 = vmatmul.mubr.bf16.gmra.mrb[0].mxu0 %v3092
    %v3190 = vpop.f32.mrb[0].mxu0
    %v3191 = vadd.f32 0.0, %v3190
    %v3192 = vpop.f32.mrb[0].mxu0
    %v3193 = vpop.f32.mrb[0].mxu0
    %v3194 = vadd.f32 0.0, %v3193
    %v3195 = vpop.f32.mrb[0].mxu0
    %3196 = vmatprep.mubr.bf16.mxu0 %v3097
    %3197 = vmatmul.mubr.bf16.gmra.mrb[0].mxu0 %v3096
    %v3198 = vpop.f32.mrb[0].mxu0
    %v3199 = vadd.f32 0.0, %v3198
    %v3200 = vpop.f32.mrb[0].mxu0
    %v3201 = vpop.f32.mrb[0].mxu0
    %v3202 = vadd.f32 0.0, %v3201
    %v3203 = vpop.f32.mrb[0].mxu0
    %3204 = vmatprep.mubr.bf16.mxu0 %v3101
    %3205 = vmatmul.mubr.bf16.gmra.mrb[0].mxu0 %v3100
    %v3206 = vpop.f32.mrb[0].mxu0
    %v3207 = vadd.f32 0.0, %v3206
    %v3208 = vpop.f32.mrb[0].mxu0
    %v3209 = vpop.f32.mrb[0].mxu0
    %v3210 = vadd.f32 0.0, %v3209
    %v3211 = vpop.f32.mrb[0].mxu0
    %3212 = vmatprep.mubr.bf16.mxu0 %v3105
    %3213 = vmatmul.mubr.bf16.gmra.mrb[0].mxu0 %v3104
    %v3214 = vpop.f32.mrb[0].mxu0
    %v3215 = vadd.f32 0.0, %v3214
    %v3216 = vpop.f32.mrb[0].mxu0
    %v3217 = vpop.f32.mrb[0].mxu0
    %v3218 = vadd.f32 0.0, %v3217
    %v3219 = vpop.f32.mrb[0].mxu0
    %3220 = vmatprep.mubr.bf16.mxu0 %v3109
    %3221 = vmatmul.mubr.bf16.gmra.mrb[0].mxu0 %v3108
    %v3222 = vpop.f32.mrb[0].mxu0
    %v3223 = vadd.f32 0.0, %v3222
    %v3224 = vpop.f32.mrb[0].mxu0
    %v3225 = vpop.f32.mrb[0].mxu0
    %v3226 = vadd.f32 0.0, %v3225
    %v3227 = vpop.f32.mrb[0].mxu0
    %3228 = vmatprep.mubr.bf16.mxu0 %v3113
    %3229 = vmatmul.mubr.bf16.gmra.mrb[0].mxu0 %v3112
    %v3230 = vpop.f32.mrb[0].mxu0
    %v3231 = vadd.f32 0.0, %v3230
    %v3232 = vpop.f32.mrb[0].mxu0
    %v3233 = vpop.f32.mrb[0].mxu0
    %v3234 = vadd.f32 0.0, %v3233
    %v3235 = vpop.f32.mrb[0].mxu0
    %3236 = vmatprep.mubr.bf16.mxu0 %v3117
    %3237 = vmatmul.mubr.bf16.gmra.mrb[0].mxu0 %v3116
    %v3238 = vpop.f32.mrb[0].mxu0
    %v3239 = vadd.f32 0.0, %v3238
    %v3240 = vpop.f32.mrb[0].mxu0
    %v3241 = vpop.f32.mrb[0].mxu0
    %v3242 = vadd.f32 0.0, %v3241
    %v3243 = vpop.f32.mrb[0].mxu0
    %3244 = vmatprep.mubr.bf16.mxu0 %v3121
    %3245 = vmatmul.mubr.bf16.gmra.mrb[0].mxu0 %v3120
    %v3246 = vpop.f32.mrb[0].mxu0
    %v3247 = vadd.f32 0.0, %v3246
    %v3248 = vpop.f32.mrb[0].mxu0
    %v3249 = vpop.f32.mrb[0].mxu0
    %v3250 = vadd.f32 0.0, %v3249
    %v3251 = vpop.f32.mrb[0].mxu0
    %3252 = vdwg.mxu0
    %3253 = vmatprep.subr.bf16.mxu0 0
    %3254 = vmatpush1.bf16.msra.mxu0 %v451
    %3255 = vmatprep.subr.bf16.mxu0 0
    %3256 = vmatpush1.bf16.msra.mxu0 %v452
    %3257 = vmatprep.subr.bf16.mxu0 0
    %3258 = vmatpush1.bf16.msra.mxu0 %v453
    %3259 = vmatprep.subr.bf16.mxu0 0
    %3260 = vmatpush1.bf16.msra.mxu0 %v454
    %3261 = vmatprep.subr.bf16.mxu0 0
    %3262 = vmatpush1.bf16.msra.mxu0 %v455
    %3263 = vmatprep.subr.bf16.mxu0 0
    %3264 = vmatpush1.bf16.msra.mxu0 %v456
    %3265 = vmatprep.subr.bf16.mxu0 0
    %3266 = vmatpush1.bf16.msra.mxu0 %v457
    %3267 = vmatprep.subr.bf16.mxu0 0
    %3268 = vmatpush1.bf16.msra.mxu0 %v458
    %3269 = vmatprep.subr.bf16.mxu0 0
    %3270 = vmatpush1.bf16.msra.mxu0 %v459
    %3271 = vmatprep.subr.bf16.mxu0 0
    %3272 = vmatpush1.bf16.msra.mxu0 %v460
    %3273 = vmatprep.subr.bf16.mxu0 0
    %3274 = vmatpush1.bf16.msra.mxu0 %v461
    %3275 = vmatprep.subr.bf16.mxu0 0
    %3276 = vmatpush1.bf16.msra.mxu0 %v462
    %3277 = vmatprep.subr.bf16.mxu0 0
    %3278 = vmatpush1.bf16.msra.mxu0 %v463
    %3279 = vmatprep.subr.bf16.mxu0 0
    %3280 = vmatpush1.bf16.msra.mxu0 %v464
    %3281 = vmatprep.subr.bf16.mxu0 0
    %3282 = vmatpush1.bf16.msra.mxu0 %v465
    %3283 = vmatprep.subr.bf16.mxu0 0
    %3284 = vmatpush1.bf16.msra.mxu0 %v466
    %3285 = vmatprep.mubr.bf16.mxu0 %v3095
    %3286 = vmatmul.mubr.bf16.gmra.mrb[0].mxu0 %v3094
    %v3287 = vpop.f32.mrb[0].mxu0
    %v3288 = vadd.f32 %v3191, %v3287
    %v3289 = vpop.f32.mrb[0].mxu0
    %v3290 = vpop.f32.mrb[0].mxu0
    %v3291 = vadd.f32 %v3194, %v3290
    %v3292 = vpop.f32.mrb[0].mxu0
    %3293 = vmatprep.mubr.bf16.mxu0 %v3099
    %3294 = vmatmul.mubr.bf16.gmra.mrb[0].mxu0 %v3098
    %v3295 = vpop.f32.mrb[0].mxu0
    %v3296 = vadd.f32 %v3199, %v3295
    %v3297 = vpop.f32.mrb[0].mxu0
    %v3298 = vpop.f32.mrb[0].mxu0
    %v3299 = vadd.f32 %v3202, %v3298
    %v3300 = vpop.f32.mrb[0].mxu0
    %3301 = vmatprep.mubr.bf16.mxu0 %v3103
    %3302 = vmatmul.mubr.bf16.gmra.mrb[0].mxu0 %v3102
    %v3303 = vpop.f32.mrb[0].mxu0
    %v3304 = vadd.f32 %v3207, %v3303
    %v3305 = vpop.f32.mrb[0].mxu0
    %v3306 = vpop.f32.mrb[0].mxu0
    %v3307 = vadd.f32 %v3210, %v3306
    %v3308 = vpop.f32.mrb[0].mxu0
    %3309 = vmatprep.mubr.bf16.mxu0 %v3107
    %3310 = vmatmul.mubr.bf16.gmra.mrb[0].mxu0 %v3106
    %v3311 = vpop.f32.mrb[0].mxu0
    %v3312 = vadd.f32 %v3215, %v3311
    %v3313 = vpop.f32.mrb[0].mxu0
    %v3314 = vpop.f32.mrb[0].mxu0
    %v3315 = vadd.f32 %v3218, %v3314
    %v3316 = vpop.f32.mrb[0].mxu0
    %3317 = vmatprep.mubr.bf16.mxu0 %v3111
    %3318 = vmatmul.mubr.bf16.gmra.mrb[0].mxu0 %v3110
    %v3319 = vpop.f32.mrb[0].mxu0
    %v3320 = vadd.f32 %v3223, %v3319
    %v3321 = vpop.f32.mrb[0].mxu0
    %v3322 = vpop.f32.mrb[0].mxu0
    %v3323 = vadd.f32 %v3226, %v3322
    %v3324 = vpop.f32.mrb[0].mxu0
    %3325 = vmatprep.mubr.bf16.mxu0 %v3115
    %3326 = vmatmul.mubr.bf16.gmra.mrb[0].mxu0 %v3114
    %v3327 = vpop.f32.mrb[0].mxu0
    %v3328 = vadd.f32 %v3231, %v3327
    %v3329 = vpop.f32.mrb[0].mxu0
    %v3330 = vpop.f32.mrb[0].mxu0
    %v3331 = vadd.f32 %v3234, %v3330
    %v3332 = vpop.f32.mrb[0].mxu0
    %3333 = vmatprep.mubr.bf16.mxu0 %v3119
    %3334 = vmatmul.mubr.bf16.gmra.mrb[0].mxu0 %v3118
    %v3335 = vpop.f32.mrb[0].mxu0
    %v3336 = vadd.f32 %v3239, %v3335
    %v3337 = vpop.f32.mrb[0].mxu0
    %v3338 = vpop.f32.mrb[0].mxu0
    %v3339 = vadd.f32 %v3242, %v3338
    %v3340 = vpop.f32.mrb[0].mxu0
    %3341 = vmatprep.mubr.bf16.mxu0 %v3123
    %3342 = vmatmul.mubr.bf16.gmra.mrb[0].mxu0 %v3122
    %v3343 = vpop.f32.mrb[0].mxu0
    %v3344 = vadd.f32 %v3247, %v3343
    %v3345 = vpop.f32.mrb[0].mxu0
    %v3346 = vpop.f32.mrb[0].mxu0
    %v3347 = vadd.f32 %v3250, %v3346
    %v3348 = vpop.f32.mrb[0].mxu0
    %3349 = vdwg.mxu0
    %v3350 = vpack.c.bf16 %v3291, %v3288
    %v3351 = vpack.c.bf16 %v3299, %v3296
    %v3352 = vpack.c.bf16 %v3307, %v3304
    %v3353 = vpack.c.bf16 %v3315, %v3312
    %v3354 = vpack.c.bf16 %v3323, %v3320
    %v3355 = vpack.c.bf16 %v3331, %v3328
    %v3356 = vpack.c.bf16 %v3339, %v3336
    %v3357 = vpack.c.bf16 %v3347, %v3344
    %s3358 = scalar_lea.vmem %s2, 10
    %v3359 = vld [vmem:[%s3358] sm:$0x3]
    %v3361 = vsel %vm1099, %v3350, 0
    %v3364 = vsel %vm1099, %v3351, 0
    %v3367 = vsel %vm1099, %v3352, 0
    %v3370 = vsel %vm1099, %v3353, 0
    %v3373 = vsel %vm1099, %v3354, 0
    %v3376 = vsel %vm1099, %v3355, 0
    %v3379 = vsel %vm1099, %v3356, 0
    %v3382 = vsel %vm1099, %v3357, 0
    %v3385 = vand.u32 %v3359, %v1127
    %3387 = vmatprep.subr.bf16.mxu0 0
    %3388 = vmatpush1.bf16.msra.mxu0 %v3385
    %3389 = vmatprep.subr.bf16.mxu0 0
    %3390 = vmatpush1.bf16.msra.mxu0 0
    %3391 = vmatprep.subr.bf16.mxu0 0
    %3392 = vmatpush1.bf16.msra.mxu0 0
    %3393 = vmatprep.subr.bf16.mxu0 0
    %3394 = vmatpush1.bf16.msra.mxu0 0
    %3395 = vmatprep.subr.bf16.mxu0 0
    %3396 = vmatpush1.bf16.msra.mxu0 0
    %3397 = vmatprep.subr.bf16.mxu0 0
    %3398 = vmatpush1.bf16.msra.mxu0 0
    %3399 = vmatprep.subr.bf16.mxu0 0
    %3400 = vmatpush1.bf16.msra.mxu0 0
    %3401 = vmatprep.subr.bf16.mxu0 0
    %3402 = vmatpush1.bf16.msra.mxu0 0
    %3403 = vmatprep.subr.bf16.mxu0 0
    %3404 = vmatpush1.bf16.msra.mxu0 0
    %3405 = vmatprep.subr.bf16.mxu0 0
    %3406 = vmatpush1.bf16.msra.mxu0 0
    %3407 = vmatprep.subr.bf16.mxu0 0
    %3408 = vmatpush1.bf16.msra.mxu0 0
    %3409 = vmatprep.subr.bf16.mxu0 0
    %3410 = vmatpush1.bf16.msra.mxu0 0
    %3411 = vmatprep.subr.bf16.mxu0 0
    %3412 = vmatpush1.bf16.msra.mxu0 0
    %3413 = vmatprep.subr.bf16.mxu0 0
    %3414 = vmatpush1.bf16.msra.mxu0 0
    %3415 = vmatprep.subr.bf16.mxu0 0
    %3416 = vmatpush1.bf16.msra.mxu0 0
    %3417 = vmatprep.subr.bf16.mxu0 0
    %3418 = vmatpush1.bf16.msra.mxu0 0
    %3419 = vmatprep.mubr.bf16.mxu0 0
    %3420 = vmatmul.mubr.bf16.gmra.mrb[0].mxu0 %v3361
    %v3421 = vpop.f32.mrb[0].mxu0
    %v3422 = vadd.f32 0.0, %v3421
    %v3423 = vpop.f32.mrb[0].mxu0
    %v3424 = vpop.f32.mrb[0].mxu0
    %v3425 = vadd.f32 0.0, %v3424
    %v3426 = vpop.f32.mrb[0].mxu0
    %3427 = vmatprep.mubr.bf16.mxu0 0
    %3428 = vmatmul.mubr.bf16.gmra.mrb[0].mxu0 %v3364
    %v3429 = vpop.f32.mrb[0].mxu0
    %v3430 = vadd.f32 0.0, %v3429
    %v3431 = vpop.f32.mrb[0].mxu0
    %v3432 = vpop.f32.mrb[0].mxu0
    %v3433 = vadd.f32 0.0, %v3432
    %v3434 = vpop.f32.mrb[0].mxu0
    %3435 = vmatprep.mubr.bf16.mxu0 0
    %3436 = vmatmul.mubr.bf16.gmra.mrb[0].mxu0 %v3367
    %v3437 = vpop.f32.mrb[0].mxu0
    %v3438 = vadd.f32 0.0, %v3437
    %v3439 = vpop.f32.mrb[0].mxu0
    %v3440 = vpop.f32.mrb[0].mxu0
    %v3441 = vadd.f32 0.0, %v3440
    %v3442 = vpop.f32.mrb[0].mxu0
    %3443 = vmatprep.mubr.bf16.mxu0 0
    %3444 = vmatmul.mubr.bf16.gmra.mrb[0].mxu0 %v3370
    %v3445 = vpop.f32.mrb[0].mxu0
    %v3446 = vadd.f32 0.0, %v3445
    %v3447 = vpop.f32.mrb[0].mxu0
    %v3448 = vpop.f32.mrb[0].mxu0
    %v3449 = vadd.f32 0.0, %v3448
    %v3450 = vpop.f32.mrb[0].mxu0
    %3451 = vmatprep.mubr.bf16.mxu0 0
    %3452 = vmatmul.mubr.bf16.gmra.mrb[0].mxu0 %v3373
    %v3453 = vpop.f32.mrb[0].mxu0
    %v3454 = vadd.f32 0.0, %v3453
    %v3455 = vpop.f32.mrb[0].mxu0
    %v3456 = vpop.f32.mrb[0].mxu0
    %v3457 = vadd.f32 0.0, %v3456
    %v3458 = vpop.f32.mrb[0].mxu0
    %3459 = vmatprep.mubr.bf16.mxu0 0
    %3460 = vmatmul.mubr.bf16.gmra.mrb[0].mxu0 %v3376
    %v3461 = vpop.f32.mrb[0].mxu0
    %v3462 = vadd.f32 0.0, %v3461
    %v3463 = vpop.f32.mrb[0].mxu0
    %v3464 = vpop.f32.mrb[0].mxu0
    %v3465 = vadd.f32 0.0, %v3464
    %v3466 = vpop.f32.mrb[0].mxu0
    %3467 = vmatprep.mubr.bf16.mxu0 0
    %3468 = vmatmul.mubr.bf16.gmra.mrb[0].mxu0 %v3379
    %v3469 = vpop.f32.mrb[0].mxu0
    %v3470 = vadd.f32 0.0, %v3469
    %v3471 = vpop.f32.mrb[0].mxu0
    %v3472 = vpop.f32.mrb[0].mxu0
    %v3473 = vadd.f32 0.0, %v3472
    %v3474 = vpop.f32.mrb[0].mxu0
    %3475 = vmatprep.mubr.bf16.mxu0 0
    %3476 = vmatmul.mubr.bf16.gmra.mrb[0].mxu0 %v3382
    %v3477 = vpop.f32.mrb[0].mxu0
    %v3478 = vadd.f32 0.0, %v3477
    %v3479 = vpop.f32.mrb[0].mxu0
    %v3480 = vpop.f32.mrb[0].mxu0
    %v3481 = vadd.f32 0.0, %v3480
    %v3482 = vpop.f32.mrb[0].mxu0
    %3483 = vdwg.mxu0
    %v3484 = vadd.f32 %v2947, %v3422
    %v3485 = vadd.f32 %v2948, %v3425
    %v3486 = vadd.f32 %v2949, %v3430
    %v3487 = vadd.f32 %v2950, %v3433
    %v3488 = vadd.f32 %v2951, %v3438
    %v3489 = vadd.f32 %v2952, %v3441
    %v3490 = vadd.f32 %v2953, %v3446
    %v3491 = vadd.f32 %v2954, %v3449
    %v3492 = vadd.f32 %v2955, %v3454
    %v3493 = vadd.f32 %v2956, %v3457
    %v3494 = vadd.f32 %v2957, %v3462
    %v3495 = vadd.f32 %v2958, %v3465
    %v3496 = vadd.f32 %v2959, %v3470
    %v3497 = vadd.f32 %v2960, %v3473
    %v3498 = vadd.f32 %v2961, %v3478
    %v3499 = vadd.f32 %v2962, %v3481
    %s3500 = scalar_lea.vmem %s1, 1536
    %v3501 = vld [vmem:[%s3500] sm:$0xff]
    %v3502 = vld [vmem:[%s3500 + $0x8] sm:$0xff]
    %v3503 = vld [vmem:[%s3500 + $0x10] sm:$0xff]
    %v3504 = vld [vmem:[%s3500 + $0x18] sm:$0xff]
    %v3505 = vld [vmem:[%s3500 + $0x20] sm:$0xff]
    %v3506 = vld [vmem:[%s3500 + $0x28] sm:$0xff]
    %v3507 = vld [vmem:[%s3500 + $0x30] sm:$0xff]
    %v3508 = vld [vmem:[%s3500 + $0x38] sm:$0xff]
    %v3509 = vld [vmem:[%s3500 + $0x40] sm:$0xff]
    %v3510 = vld [vmem:[%s3500 + $0x48] sm:$0xff]
    %v3511 = vld [vmem:[%s3500 + $0x50] sm:$0xff]
    %v3512 = vld [vmem:[%s3500 + $0x58] sm:$0xff]
    %v3513 = vld [vmem:[%s3500 + $0x60] sm:$0xff]
    %v3514 = vld [vmem:[%s3500 + $0x68] sm:$0xff]
    %v3515 = vld [vmem:[%s3500 + $0x70] sm:$0xff]
    %v3516 = vld [vmem:[%s3500 + $0x78] sm:$0xff]
    %v3517 = vld [vmem:[%s3500 + $0x80] sm:$0xff]
    %v3518 = vld [vmem:[%s3500 + $0x88] sm:$0xff]
    %v3519 = vld [vmem:[%s3500 + $0x90] sm:$0xff]
    %v3520 = vld [vmem:[%s3500 + $0x98] sm:$0xff]
    %v3521 = vld [vmem:[%s3500 + $0xa0] sm:$0xff]
    %v3522 = vld [vmem:[%s3500 + $0xa8] sm:$0xff]
    %v3523 = vld [vmem:[%s3500 + $0xb0] sm:$0xff]
    %v3524 = vld [vmem:[%s3500 + $0xb8] sm:$0xff]
    %v3525 = vld [vmem:[%s3500 + $0xc0] sm:$0xff]
    %v3526 = vld [vmem:[%s3500 + $0xc8] sm:$0xff]
    %v3527 = vld [vmem:[%s3500 + $0xd0] sm:$0xff]
    %v3528 = vld [vmem:[%s3500 + $0xd8] sm:$0xff]
    %v3529 = vld [vmem:[%s3500 + $0xe0] sm:$0xff]
    %v3530 = vld [vmem:[%s3500 + $0xe8] sm:$0xff]
    %v3531 = vld [vmem:[%s3500 + $0xf0] sm:$0xff]
    %v3532 = vld [vmem:[%s3500 + $0xf8] sm:$0xff]
    %v3565 = vunpack.c.l.b16 %v3501
    %v3566 = vunpack.c.h.b16 %v3501
    %v3567 = vunpack.c.l.b16 %v3502
    %v3568 = vunpack.c.h.b16 %v3502
    %v3569 = vunpack.c.l.b16 %v3503
    %v3570 = vunpack.c.h.b16 %v3503
    %v3571 = vunpack.c.l.b16 %v3504
    %v3572 = vunpack.c.h.b16 %v3504
    %v3573 = vunpack.c.l.b16 %v3505
    %v3574 = vunpack.c.h.b16 %v3505
    %v3575 = vunpack.c.l.b16 %v3506
    %v3576 = vunpack.c.h.b16 %v3506
    %v3577 = vunpack.c.l.b16 %v3507
    %v3578 = vunpack.c.h.b16 %v3507
    %v3579 = vunpack.c.l.b16 %v3508
    %v3580 = vunpack.c.h.b16 %v3508
    %v3581 = vunpack.c.l.b16 %v3509
    %v3582 = vunpack.c.h.b16 %v3509
    %v3583 = vunpack.c.l.b16 %v3510
    %v3584 = vunpack.c.h.b16 %v3510
    %v3585 = vunpack.c.l.b16 %v3511
    %v3586 = vunpack.c.h.b16 %v3511
    %v3587 = vunpack.c.l.b16 %v3512
    %v3588 = vunpack.c.h.b16 %v3512
    %v3589 = vunpack.c.l.b16 %v3513
    %v3590 = vunpack.c.h.b16 %v3513
    %v3591 = vunpack.c.l.b16 %v3514
    %v3592 = vunpack.c.h.b16 %v3514
    %v3593 = vunpack.c.l.b16 %v3515
    %v3594 = vunpack.c.h.b16 %v3515
    %v3595 = vunpack.c.l.b16 %v3516
    %v3596 = vunpack.c.h.b16 %v3516
    %v3597 = vunpack.c.l.b16 %v3517
    %v3598 = vunpack.c.h.b16 %v3517
    %v3599 = vunpack.c.l.b16 %v3518
    %v3600 = vunpack.c.h.b16 %v3518
    %v3601 = vunpack.c.l.b16 %v3519
    %v3602 = vunpack.c.h.b16 %v3519
    %v3603 = vunpack.c.l.b16 %v3520
    %v3604 = vunpack.c.h.b16 %v3520
    %v3605 = vunpack.c.l.b16 %v3521
    %v3606 = vunpack.c.h.b16 %v3521
    %v3607 = vunpack.c.l.b16 %v3522
    %v3608 = vunpack.c.h.b16 %v3522
    %v3609 = vunpack.c.l.b16 %v3523
    %v3610 = vunpack.c.h.b16 %v3523
    %v3611 = vunpack.c.l.b16 %v3524
    %v3612 = vunpack.c.h.b16 %v3524
    %v3613 = vunpack.c.l.b16 %v3525
    %v3614 = vunpack.c.h.b16 %v3525
    %v3615 = vunpack.c.l.b16 %v3526
    %v3616 = vunpack.c.h.b16 %v3526
    %v3617 = vunpack.c.l.b16 %v3527
    %v3618 = vunpack.c.h.b16 %v3527
    %v3619 = vunpack.c.l.b16 %v3528
    %v3620 = vunpack.c.h.b16 %v3528
    %v3621 = vunpack.c.l.b16 %v3529
    %v3622 = vunpack.c.h.b16 %v3529
    %v3623 = vunpack.c.l.b16 %v3530
    %v3624 = vunpack.c.h.b16 %v3530
    %v3625 = vunpack.c.l.b16 %v3531
    %v3626 = vunpack.c.h.b16 %v3531
    %v3627 = vunpack.c.l.b16 %v3532
    %v3628 = vunpack.c.h.b16 %v3532
    %v3629 = vpack.c.b16 %v3569, %v3565
    %v3630 = vpack.c.b16 %v3570, %v3566
    %v3631 = vpack.c.b16 %v3571, %v3567
    %v3632 = vpack.c.b16 %v3572, %v3568
    %v3633 = vpack.c.b16 %v3577, %v3573
    %v3634 = vpack.c.b16 %v3578, %v3574
    %v3635 = vpack.c.b16 %v3579, %v3575
    %v3636 = vpack.c.b16 %v3580, %v3576
    %v3637 = vpack.c.b16 %v3585, %v3581
    %v3638 = vpack.c.b16 %v3586, %v3582
    %v3639 = vpack.c.b16 %v3587, %v3583
    %v3640 = vpack.c.b16 %v3588, %v3584
    %v3641 = vpack.c.b16 %v3593, %v3589
    %v3642 = vpack.c.b16 %v3594, %v3590
    %v3643 = vpack.c.b16 %v3595, %v3591
    %v3644 = vpack.c.b16 %v3596, %v3592
    %v3645 = vpack.c.b16 %v3601, %v3597
    %v3646 = vpack.c.b16 %v3602, %v3598
    %v3647 = vpack.c.b16 %v3603, %v3599
    %v3648 = vpack.c.b16 %v3604, %v3600
    %v3649 = vpack.c.b16 %v3609, %v3605
    %v3650 = vpack.c.b16 %v3610, %v3606
    %v3651 = vpack.c.b16 %v3611, %v3607
    %v3652 = vpack.c.b16 %v3612, %v3608
    %v3653 = vpack.c.b16 %v3617, %v3613
    %v3654 = vpack.c.b16 %v3618, %v3614
    %v3655 = vpack.c.b16 %v3619, %v3615
    %v3656 = vpack.c.b16 %v3620, %v3616
    %v3657 = vpack.c.b16 %v3625, %v3621
    %v3658 = vpack.c.b16 %v3626, %v3622
    %v3659 = vpack.c.b16 %v3627, %v3623
    %v3660 = vpack.c.b16 %v3628, %v3624
    %3693 = vmatprep.subr.bf16.mxu0 0
    %3694 = vmatpush1.bf16.msra.mxu0 %v435
    %3695 = vmatprep.subr.bf16.mxu0 0
    %3696 = vmatpush1.bf16.msra.mxu0 %v436
    %3697 = vmatprep.subr.bf16.mxu0 0
    %3698 = vmatpush1.bf16.msra.mxu0 %v437
    %3699 = vmatprep.subr.bf16.mxu0 0
    %3700 = vmatpush1.bf16.msra.mxu0 %v438
    %3701 = vmatprep.subr.bf16.mxu0 0
    %3702 = vmatpush1.bf16.msra.mxu0 %v439
    %3703 = vmatprep.subr.bf16.mxu0 0
    %3704 = vmatpush1.bf16.msra.mxu0 %v440
    %3705 = vmatprep.subr.bf16.mxu0 0
    %3706 = vmatpush1.bf16.msra.mxu0 %v441
    %3707 = vmatprep.subr.bf16.mxu0 0
    %3708 = vmatpush1.bf16.msra.mxu0 %v442
    %3709 = vmatprep.subr.bf16.mxu0 0
    %3710 = vmatpush1.bf16.msra.mxu0 %v443
    %3711 = vmatprep.subr.bf16.mxu0 0
    %3712 = vmatpush1.bf16.msra.mxu0 %v444
    %3713 = vmatprep.subr.bf16.mxu0 0
    %3714 = vmatpush1.bf16.msra.mxu0 %v445
    %3715 = vmatprep.subr.bf16.mxu0 0
    %3716 = vmatpush1.bf16.msra.mxu0 %v446
    %3717 = vmatprep.subr.bf16.mxu0 0
    %3718 = vmatpush1.bf16.msra.mxu0 %v447
    %3719 = vmatprep.subr.bf16.mxu0 0
    %3720 = vmatpush1.bf16.msra.mxu0 %v448
    %3721 = vmatprep.subr.bf16.mxu0 0
    %3722 = vmatpush1.bf16.msra.mxu0 %v449
    %3723 = vmatprep.subr.bf16.mxu0 0
    %3724 = vmatpush1.bf16.msra.mxu0 %v450
    %3725 = vmatprep.mubr.bf16.mxu0 %v3630
    %3726 = vmatmul.mubr.bf16.gmra.mrb[0].mxu0 %v3629
    %v3727 = vpop.f32.mrb[0].mxu0
    %v3728 = vadd.f32 0.0, %v3727
    %v3729 = vpop.f32.mrb[0].mxu0
    %v3730 = vpop.f32.mrb[0].mxu0
    %v3731 = vadd.f32 0.0, %v3730
    %v3732 = vpop.f32.mrb[0].mxu0
    %3733 = vmatprep.mubr.bf16.mxu0 %v3634
    %3734 = vmatmul.mubr.bf16.gmra.mrb[0].mxu0 %v3633
    %v3735 = vpop.f32.mrb[0].mxu0
    %v3736 = vadd.f32 0.0, %v3735
    %v3737 = vpop.f32.mrb[0].mxu0
    %v3738 = vpop.f32.mrb[0].mxu0
    %v3739 = vadd.f32 0.0, %v3738
    %v3740 = vpop.f32.mrb[0].mxu0
    %3741 = vmatprep.mubr.bf16.mxu0 %v3638
    %3742 = vmatmul.mubr.bf16.gmra.mrb[0].mxu0 %v3637
    %v3743 = vpop.f32.mrb[0].mxu0
    %v3744 = vadd.f32 0.0, %v3743
    %v3745 = vpop.f32.mrb[0].mxu0
    %v3746 = vpop.f32.mrb[0].mxu0
    %v3747 = vadd.f32 0.0, %v3746
    %v3748 = vpop.f32.mrb[0].mxu0
    %3749 = vmatprep.mubr.bf16.mxu0 %v3642
    %3750 = vmatmul.mubr.bf16.gmra.mrb[0].mxu0 %v3641
    %v3751 = vpop.f32.mrb[0].mxu0
    %v3752 = vadd.f32 0.0, %v3751
    %v3753 = vpop.f32.mrb[0].mxu0
    %v3754 = vpop.f32.mrb[0].mxu0
    %v3755 = vadd.f32 0.0, %v3754
    %v3756 = vpop.f32.mrb[0].mxu0
    %3757 = vmatprep.mubr.bf16.mxu0 %v3646
    %3758 = vmatmul.mubr.bf16.gmra.mrb[0].mxu0 %v3645
    %v3759 = vpop.f32.mrb[0].mxu0
    %v3760 = vadd.f32 0.0, %v3759
    %v3761 = vpop.f32.mrb[0].mxu0
    %v3762 = vpop.f32.mrb[0].mxu0
    %v3763 = vadd.f32 0.0, %v3762
    %v3764 = vpop.f32.mrb[0].mxu0
    %3765 = vmatprep.mubr.bf16.mxu0 %v3650
    %3766 = vmatmul.mubr.bf16.gmra.mrb[0].mxu0 %v3649
    %v3767 = vpop.f32.mrb[0].mxu0
    %v3768 = vadd.f32 0.0, %v3767
    %v3769 = vpop.f32.mrb[0].mxu0
    %v3770 = vpop.f32.mrb[0].mxu0
    %v3771 = vadd.f32 0.0, %v3770
    %v3772 = vpop.f32.mrb[0].mxu0
    %3773 = vmatprep.mubr.bf16.mxu0 %v3654
    %3774 = vmatmul.mubr.bf16.gmra.mrb[0].mxu0 %v3653
    %v3775 = vpop.f32.mrb[0].mxu0
    %v3776 = vadd.f32 0.0, %v3775
    %v3777 = vpop.f32.mrb[0].mxu0
    %v3778 = vpop.f32.mrb[0].mxu0
    %v3779 = vadd.f32 0.0, %v3778
    %v3780 = vpop.f32.mrb[0].mxu0
    %3781 = vmatprep.mubr.bf16.mxu0 %v3658
    %3782 = vmatmul.mubr.bf16.gmra.mrb[0].mxu0 %v3657
    %v3783 = vpop.f32.mrb[0].mxu0
    %v3784 = vadd.f32 0.0, %v3783
    %v3785 = vpop.f32.mrb[0].mxu0
    %v3786 = vpop.f32.mrb[0].mxu0
    %v3787 = vadd.f32 0.0, %v3786
    %v3788 = vpop.f32.mrb[0].mxu0
    %3789 = vdwg.mxu0
    %3790 = vmatprep.subr.bf16.mxu0 0
    %3791 = vmatpush1.bf16.msra.mxu0 %v451
    %3792 = vmatprep.subr.bf16.mxu0 0
    %3793 = vmatpush1.bf16.msra.mxu0 %v452
    %3794 = vmatprep.subr.bf16.mxu0 0
    %3795 = vmatpush1.bf16.msra.mxu0 %v453
    %3796 = vmatprep.subr.bf16.mxu0 0
    %3797 = vmatpush1.bf16.msra.mxu0 %v454
    %3798 = vmatprep.subr.bf16.mxu0 0
    %3799 = vmatpush1.bf16.msra.mxu0 %v455
    %3800 = vmatprep.subr.bf16.mxu0 0
    %3801 = vmatpush1.bf16.msra.mxu0 %v456
    %3802 = vmatprep.subr.bf16.mxu0 0
    %3803 = vmatpush1.bf16.msra.mxu0 %v457
    %3804 = vmatprep.subr.bf16.mxu0 0
    %3805 = vmatpush1.bf16.msra.mxu0 %v458
    %3806 = vmatprep.subr.bf16.mxu0 0
    %3807 = vmatpush1.bf16.msra.mxu0 %v459
    %3808 = vmatprep.subr.bf16.mxu0 0
    %3809 = vmatpush1.bf16.msra.mxu0 %v460
    %3810 = vmatprep.subr.bf16.mxu0 0
    %3811 = vmatpush1.bf16.msra.mxu0 %v461
    %3812 = vmatprep.subr.bf16.mxu0 0
    %3813 = vmatpush1.bf16.msra.mxu0 %v462
    %3814 = vmatprep.subr.bf16.mxu0 0
    %3815 = vmatpush1.bf16.msra.mxu0 %v463
    %3816 = vmatprep.subr.bf16.mxu0 0
    %3817 = vmatpush1.bf16.msra.mxu0 %v464
    %3818 = vmatprep.subr.bf16.mxu0 0
    %3819 = vmatpush1.bf16.msra.mxu0 %v465
    %3820 = vmatprep.subr.bf16.mxu0 0
    %3821 = vmatpush1.bf16.msra.mxu0 %v466
    %3822 = vmatprep.mubr.bf16.mxu0 %v3632
    %3823 = vmatmul.mubr.bf16.gmra.mrb[0].mxu0 %v3631
    %v3824 = vpop.f32.mrb[0].mxu0
    %v3825 = vadd.f32 %v3728, %v3824
    %v3826 = vpop.f32.mrb[0].mxu0
    %v3827 = vpop.f32.mrb[0].mxu0
    %v3828 = vadd.f32 %v3731, %v3827
    %v3829 = vpop.f32.mrb[0].mxu0
    %3830 = vmatprep.mubr.bf16.mxu0 %v3636
    %3831 = vmatmul.mubr.bf16.gmra.mrb[0].mxu0 %v3635
    %v3832 = vpop.f32.mrb[0].mxu0
    %v3833 = vadd.f32 %v3736, %v3832
    %v3834 = vpop.f32.mrb[0].mxu0
    %v3835 = vpop.f32.mrb[0].mxu0
    %v3836 = vadd.f32 %v3739, %v3835
    %v3837 = vpop.f32.mrb[0].mxu0
    %3838 = vmatprep.mubr.bf16.mxu0 %v3640
    %3839 = vmatmul.mubr.bf16.gmra.mrb[0].mxu0 %v3639
    %v3840 = vpop.f32.mrb[0].mxu0
    %v3841 = vadd.f32 %v3744, %v3840
    %v3842 = vpop.f32.mrb[0].mxu0
    %v3843 = vpop.f32.mrb[0].mxu0
    %v3844 = vadd.f32 %v3747, %v3843
    %v3845 = vpop.f32.mrb[0].mxu0
    %3846 = vmatprep.mubr.bf16.mxu0 %v3644
    %3847 = vmatmul.mubr.bf16.gmra.mrb[0].mxu0 %v3643
    %v3848 = vpop.f32.mrb[0].mxu0
    %v3849 = vadd.f32 %v3752, %v3848
    %v3850 = vpop.f32.mrb[0].mxu0
    %v3851 = vpop.f32.mrb[0].mxu0
    %v3852 = vadd.f32 %v3755, %v3851
    %v3853 = vpop.f32.mrb[0].mxu0
    %3854 = vmatprep.mubr.bf16.mxu0 %v3648
    %3855 = vmatmul.mubr.bf16.gmra.mrb[0].mxu0 %v3647
    %v3856 = vpop.f32.mrb[0].mxu0
    %v3857 = vadd.f32 %v3760, %v3856
    %v3858 = vpop.f32.mrb[0].mxu0
    %v3859 = vpop.f32.mrb[0].mxu0
    %v3860 = vadd.f32 %v3763, %v3859
    %v3861 = vpop.f32.mrb[0].mxu0
    %3862 = vmatprep.mubr.bf16.mxu0 %v3652
    %3863 = vmatmul.mubr.bf16.gmra.mrb[0].mxu0 %v3651
    %v3864 = vpop.f32.mrb[0].mxu0
    %v3865 = vadd.f32 %v3768, %v3864
    %v3866 = vpop.f32.mrb[0].mxu0
    %v3867 = vpop.f32.mrb[0].mxu0
    %v3868 = vadd.f32 %v3771, %v3867
    %v3869 = vpop.f32.mrb[0].mxu0
    %3870 = vmatprep.mubr.bf16.mxu0 %v3656
    %3871 = vmatmul.mubr.bf16.gmra.mrb[0].mxu0 %v3655
    %v3872 = vpop.f32.mrb[0].mxu0
    %v3873 = vadd.f32 %v3776, %v3872
    %v3874 = vpop.f32.mrb[0].mxu0
    %v3875 = vpop.f32.mrb[0].mxu0
    %v3876 = vadd.f32 %v3779, %v3875
    %v3877 = vpop.f32.mrb[0].mxu0
    %3878 = vmatprep.mubr.bf16.mxu0 %v3660
    %3879 = vmatmul.mubr.bf16.gmra.mrb[0].mxu0 %v3659
    %v3880 = vpop.f32.mrb[0].mxu0
    %v3881 = vadd.f32 %v3784, %v3880
    %v3882 = vpop.f32.mrb[0].mxu0
    %v3883 = vpop.f32.mrb[0].mxu0
    %v3884 = vadd.f32 %v3787, %v3883
    %v3885 = vpop.f32.mrb[0].mxu0
    %3886 = vdwg.mxu0
    %v3887 = vpack.c.bf16 %v3828, %v3825
    %v3888 = vpack.c.bf16 %v3836, %v3833
    %v3889 = vpack.c.bf16 %v3844, %v3841
    %v3890 = vpack.c.bf16 %v3852, %v3849
    %v3891 = vpack.c.bf16 %v3860, %v3857
    %v3892 = vpack.c.bf16 %v3868, %v3865
    %v3893 = vpack.c.bf16 %v3876, %v3873
    %v3894 = vpack.c.bf16 %v3884, %v3881
    %s3895 = scalar_lea.vmem %s2, 12
    %v3896 = vld [vmem:[%s3895] sm:$0x3]
    %v3898 = vsel %vm1099, %v3887, 0
    %v3901 = vsel %vm1099, %v3888, 0
    %v3904 = vsel %vm1099, %v3889, 0
    %v3907 = vsel %vm1099, %v3890, 0
    %v3910 = vsel %vm1099, %v3891, 0
    %v3913 = vsel %vm1099, %v3892, 0
    %v3916 = vsel %vm1099, %v3893, 0
    %v3919 = vsel %vm1099, %v3894, 0
    %v3922 = vand.u32 %v3896, %v1127
    %3924 = vmatprep.subr.bf16.mxu0 0
    %3925 = vmatpush1.bf16.msra.mxu0 %v3922
    %3926 = vmatprep.subr.bf16.mxu0 0
    %3927 = vmatpush1.bf16.msra.mxu0 0
    %3928 = vmatprep.subr.bf16.mxu0 0
    %3929 = vmatpush1.bf16.msra.mxu0 0
    %3930 = vmatprep.subr.bf16.mxu0 0
    %3931 = vmatpush1.bf16.msra.mxu0 0
    %3932 = vmatprep.subr.bf16.mxu0 0
    %3933 = vmatpush1.bf16.msra.mxu0 0
    %3934 = vmatprep.subr.bf16.mxu0 0
    %3935 = vmatpush1.bf16.msra.mxu0 0
    %3936 = vmatprep.subr.bf16.mxu0 0
    %3937 = vmatpush1.bf16.msra.mxu0 0
    %3938 = vmatprep.subr.bf16.mxu0 0
    %3939 = vmatpush1.bf16.msra.mxu0 0
    %3940 = vmatprep.subr.bf16.mxu0 0
    %3941 = vmatpush1.bf16.msra.mxu0 0
    %3942 = vmatprep.subr.bf16.mxu0 0
    %3943 = vmatpush1.bf16.msra.mxu0 0
    %3944 = vmatprep.subr.bf16.mxu0 0
    %3945 = vmatpush1.bf16.msra.mxu0 0
    %3946 = vmatprep.subr.bf16.mxu0 0
    %3947 = vmatpush1.bf16.msra.mxu0 0
    %3948 = vmatprep.subr.bf16.mxu0 0
    %3949 = vmatpush1.bf16.msra.mxu0 0
    %3950 = vmatprep.subr.bf16.mxu0 0
    %3951 = vmatpush1.bf16.msra.mxu0 0
    %3952 = vmatprep.subr.bf16.mxu0 0
    %3953 = vmatpush1.bf16.msra.mxu0 0
    %3954 = vmatprep.subr.bf16.mxu0 0
    %3955 = vmatpush1.bf16.msra.mxu0 0
    %3956 = vmatprep.mubr.bf16.mxu0 0
    %3957 = vmatmul.mubr.bf16.gmra.mrb[0].mxu0 %v3898
    %v3958 = vpop.f32.mrb[0].mxu0
    %v3959 = vadd.f32 0.0, %v3958
    %v3960 = vpop.f32.mrb[0].mxu0
    %v3961 = vpop.f32.mrb[0].mxu0
    %v3962 = vadd.f32 0.0, %v3961
    %v3963 = vpop.f32.mrb[0].mxu0
    %3964 = vmatprep.mubr.bf16.mxu0 0
    %3965 = vmatmul.mubr.bf16.gmra.mrb[0].mxu0 %v3901
    %v3966 = vpop.f32.mrb[0].mxu0
    %v3967 = vadd.f32 0.0, %v3966
    %v3968 = vpop.f32.mrb[0].mxu0
    %v3969 = vpop.f32.mrb[0].mxu0
    %v3970 = vadd.f32 0.0, %v3969
    %v3971 = vpop.f32.mrb[0].mxu0
    %3972 = vmatprep.mubr.bf16.mxu0 0
    %3973 = vmatmul.mubr.bf16.gmra.mrb[0].mxu0 %v3904
    %v3974 = vpop.f32.mrb[0].mxu0
    %v3975 = vadd.f32 0.0, %v3974
    %v3976 = vpop.f32.mrb[0].mxu0
    %v3977 = vpop.f32.mrb[0].mxu0
    %v3978 = vadd.f32 0.0, %v3977
    %v3979 = vpop.f32.mrb[0].mxu0
    %3980 = vmatprep.mubr.bf16.mxu0 0
    %3981 = vmatmul.mubr.bf16.gmra.mrb[0].mxu0 %v3907
    %v3982 = vpop.f32.mrb[0].mxu0
    %v3983 = vadd.f32 0.0, %v3982
    %v3984 = vpop.f32.mrb[0].mxu0
    %v3985 = vpop.f32.mrb[0].mxu0
    %v3986 = vadd.f32 0.0, %v3985
    %v3987 = vpop.f32.mrb[0].mxu0
    %3988 = vmatprep.mubr.bf16.mxu0 0
    %3989 = vmatmul.mubr.bf16.gmra.mrb[0].mxu0 %v3910
    %v3990 = vpop.f32.mrb[0].mxu0
    %v3991 = vadd.f32 0.0, %v3990
    %v3992 = vpop.f32.mrb[0].mxu0
    %v3993 = vpop.f32.mrb[0].mxu0
    %v3994 = vadd.f32 0.0, %v3993
    %v3995 = vpop.f32.mrb[0].mxu0
    %3996 = vmatprep.mubr.bf16.mxu0 0
    %3997 = vmatmul.mubr.bf16.gmra.mrb[0].mxu0 %v3913
    %v3998 = vpop.f32.mrb[0].mxu0
    %v3999 = vadd.f32 0.0, %v3998
    %v4000 = vpop.f32.mrb[0].mxu0
    %v4001 = vpop.f32.mrb[0].mxu0
    %v4002 = vadd.f32 0.0, %v4001
    %v4003 = vpop.f32.mrb[0].mxu0
    %4004 = vmatprep.mubr.bf16.mxu0 0
    %4005 = vmatmul.mubr.bf16.gmra.mrb[0].mxu0 %v3916
    %v4006 = vpop.f32.mrb[0].mxu0
    %v4007 = vadd.f32 0.0, %v4006
    %v4008 = vpop.f32.mrb[0].mxu0
    %v4009 = vpop.f32.mrb[0].mxu0
    %v4010 = vadd.f32 0.0, %v4009
    %v4011 = vpop.f32.mrb[0].mxu0
    %4012 = vmatprep.mubr.bf16.mxu0 0
    %4013 = vmatmul.mubr.bf16.gmra.mrb[0].mxu0 %v3919
    %v4014 = vpop.f32.mrb[0].mxu0
    %v4015 = vadd.f32 0.0, %v4014
    %v4016 = vpop.f32.mrb[0].mxu0
    %v4017 = vpop.f32.mrb[0].mxu0
    %v4018 = vadd.f32 0.0, %v4017
    %v4019 = vpop.f32.mrb[0].mxu0
    %4020 = vdwg.mxu0
    %v4021 = vadd.f32 %v3484, %v3959
    %v4022 = vadd.f32 %v3485, %v3962
    %v4023 = vadd.f32 %v3486, %v3967
    %v4024 = vadd.f32 %v3487, %v3970
    %v4025 = vadd.f32 %v3488, %v3975
    %v4026 = vadd.f32 %v3489, %v3978
    %v4027 = vadd.f32 %v3490, %v3983
    %v4028 = vadd.f32 %v3491, %v3986
    %v4029 = vadd.f32 %v3492, %v3991
    %v4030 = vadd.f32 %v3493, %v3994
    %v4031 = vadd.f32 %v3494, %v3999
    %v4032 = vadd.f32 %v3495, %v4002
    %v4033 = vadd.f32 %v3496, %v4007
    %v4034 = vadd.f32 %v3497, %v4010
    %v4035 = vadd.f32 %v3498, %v4015
    %v4036 = vadd.f32 %v3499, %v4018
    %s4037 = scalar_lea.vmem %s1, 1792
    %v4038 = vld [vmem:[%s4037] sm:$0xff]
    %v4039 = vld [vmem:[%s4037 + $0x8] sm:$0xff]
    %v4040 = vld [vmem:[%s4037 + $0x10] sm:$0xff]
    %v4041 = vld [vmem:[%s4037 + $0x18] sm:$0xff]
    %v4042 = vld [vmem:[%s4037 + $0x20] sm:$0xff]
    %v4043 = vld [vmem:[%s4037 + $0x28] sm:$0xff]
    %v4044 = vld [vmem:[%s4037 + $0x30] sm:$0xff]
    %v4045 = vld [vmem:[%s4037 + $0x38] sm:$0xff]
    %v4046 = vld [vmem:[%s4037 + $0x40] sm:$0xff]
    %v4047 = vld [vmem:[%s4037 + $0x48] sm:$0xff]
    %v4048 = vld [vmem:[%s4037 + $0x50] sm:$0xff]
    %v4049 = vld [vmem:[%s4037 + $0x58] sm:$0xff]
    %v4050 = vld [vmem:[%s4037 + $0x60] sm:$0xff]
    %v4051 = vld [vmem:[%s4037 + $0x68] sm:$0xff]
    %v4052 = vld [vmem:[%s4037 + $0x70] sm:$0xff]
    %v4053 = vld [vmem:[%s4037 + $0x78] sm:$0xff]
    %v4054 = vld [vmem:[%s4037 + $0x80] sm:$0xff]
    %v4055 = vld [vmem:[%s4037 + $0x88] sm:$0xff]
    %v4056 = vld [vmem:[%s4037 + $0x90] sm:$0xff]
    %v4057 = vld [vmem:[%s4037 + $0x98] sm:$0xff]
    %v4058 = vld [vmem:[%s4037 + $0xa0] sm:$0xff]
    %v4059 = vld [vmem:[%s4037 + $0xa8] sm:$0xff]
    %v4060 = vld [vmem:[%s4037 + $0xb0] sm:$0xff]
    %v4061 = vld [vmem:[%s4037 + $0xb8] sm:$0xff]
    %v4062 = vld [vmem:[%s4037 + $0xc0] sm:$0xff]
    %v4063 = vld [vmem:[%s4037 + $0xc8] sm:$0xff]
    %v4064 = vld [vmem:[%s4037 + $0xd0] sm:$0xff]
    %v4065 = vld [vmem:[%s4037 + $0xd8] sm:$0xff]
    %v4066 = vld [vmem:[%s4037 + $0xe0] sm:$0xff]
    %v4067 = vld [vmem:[%s4037 + $0xe8] sm:$0xff]
    %v4068 = vld [vmem:[%s4037 + $0xf0] sm:$0xff]
    %v4069 = vld [vmem:[%s4037 + $0xf8] sm:$0xff]
    %v4102 = vunpack.c.l.b16 %v4038
    %v4103 = vunpack.c.h.b16 %v4038
    %v4104 = vunpack.c.l.b16 %v4039
    %v4105 = vunpack.c.h.b16 %v4039
    %v4106 = vunpack.c.l.b16 %v4040
    %v4107 = vunpack.c.h.b16 %v4040
    %v4108 = vunpack.c.l.b16 %v4041
    %v4109 = vunpack.c.h.b16 %v4041
    %v4110 = vunpack.c.l.b16 %v4042
    %v4111 = vunpack.c.h.b16 %v4042
    %v4112 = vunpack.c.l.b16 %v4043
    %v4113 = vunpack.c.h.b16 %v4043
    %v4114 = vunpack.c.l.b16 %v4044
    %v4115 = vunpack.c.h.b16 %v4044
    %v4116 = vunpack.c.l.b16 %v4045
    %v4117 = vunpack.c.h.b16 %v4045
    %v4118 = vunpack.c.l.b16 %v4046
    %v4119 = vunpack.c.h.b16 %v4046
    %v4120 = vunpack.c.l.b16 %v4047
    %v4121 = vunpack.c.h.b16 %v4047
    %v4122 = vunpack.c.l.b16 %v4048
    %v4123 = vunpack.c.h.b16 %v4048
    %v4124 = vunpack.c.l.b16 %v4049
    %v4125 = vunpack.c.h.b16 %v4049
    %v4126 = vunpack.c.l.b16 %v4050
    %v4127 = vunpack.c.h.b16 %v4050
    %v4128 = vunpack.c.l.b16 %v4051
    %v4129 = vunpack.c.h.b16 %v4051
    %v4130 = vunpack.c.l.b16 %v4052
    %v4131 = vunpack.c.h.b16 %v4052
    %v4132 = vunpack.c.l.b16 %v4053
    %v4133 = vunpack.c.h.b16 %v4053
    %v4134 = vunpack.c.l.b16 %v4054
    %v4135 = vunpack.c.h.b16 %v4054
    %v4136 = vunpack.c.l.b16 %v4055
    %v4137 = vunpack.c.h.b16 %v4055
    %v4138 = vunpack.c.l.b16 %v4056
    %v4139 = vunpack.c.h.b16 %v4056
    %v4140 = vunpack.c.l.b16 %v4057
    %v4141 = vunpack.c.h.b16 %v4057
    %v4142 = vunpack.c.l.b16 %v4058
    %v4143 = vunpack.c.h.b16 %v4058
    %v4144 = vunpack.c.l.b16 %v4059
    %v4145 = vunpack.c.h.b16 %v4059
    %v4146 = vunpack.c.l.b16 %v4060
    %v4147 = vunpack.c.h.b16 %v4060
    %v4148 = vunpack.c.l.b16 %v4061
    %v4149 = vunpack.c.h.b16 %v4061
    %v4150 = vunpack.c.l.b16 %v4062
    %v4151 = vunpack.c.h.b16 %v4062
    %v4152 = vunpack.c.l.b16 %v4063
    %v4153 = vunpack.c.h.b16 %v4063
    %v4154 = vunpack.c.l.b16 %v4064
    %v4155 = vunpack.c.h.b16 %v4064
    %v4156 = vunpack.c.l.b16 %v4065
    %v4157 = vunpack.c.h.b16 %v4065
    %v4158 = vunpack.c.l.b16 %v4066
    %v4159 = vunpack.c.h.b16 %v4066
    %v4160 = vunpack.c.l.b16 %v4067
    %v4161 = vunpack.c.h.b16 %v4067
    %v4162 = vunpack.c.l.b16 %v4068
    %v4163 = vunpack.c.h.b16 %v4068
    %v4164 = vunpack.c.l.b16 %v4069
    %v4165 = vunpack.c.h.b16 %v4069
    %v4166 = vpack.c.b16 %v4106, %v4102
    %v4167 = vpack.c.b16 %v4107, %v4103
    %v4168 = vpack.c.b16 %v4108, %v4104
    %v4169 = vpack.c.b16 %v4109, %v4105
    %v4170 = vpack.c.b16 %v4114, %v4110
    %v4171 = vpack.c.b16 %v4115, %v4111
    %v4172 = vpack.c.b16 %v4116, %v4112
    %v4173 = vpack.c.b16 %v4117, %v4113
    %v4174 = vpack.c.b16 %v4122, %v4118
    %v4175 = vpack.c.b16 %v4123, %v4119
    %v4176 = vpack.c.b16 %v4124, %v4120
    %v4177 = vpack.c.b16 %v4125, %v4121
    %v4178 = vpack.c.b16 %v4130, %v4126
    %v4179 = vpack.c.b16 %v4131, %v4127
    %v4180 = vpack.c.b16 %v4132, %v4128
    %v4181 = vpack.c.b16 %v4133, %v4129
    %v4182 = vpack.c.b16 %v4138, %v4134
    %v4183 = vpack.c.b16 %v4139, %v4135
    %v4184 = vpack.c.b16 %v4140, %v4136
    %v4185 = vpack.c.b16 %v4141, %v4137
    %v4186 = vpack.c.b16 %v4146, %v4142
    %v4187 = vpack.c.b16 %v4147, %v4143
    %v4188 = vpack.c.b16 %v4148, %v4144
    %v4189 = vpack.c.b16 %v4149, %v4145
    %v4190 = vpack.c.b16 %v4154, %v4150
    %v4191 = vpack.c.b16 %v4155, %v4151
    %v4192 = vpack.c.b16 %v4156, %v4152
    %v4193 = vpack.c.b16 %v4157, %v4153
    %v4194 = vpack.c.b16 %v4162, %v4158
    %v4195 = vpack.c.b16 %v4163, %v4159
    %v4196 = vpack.c.b16 %v4164, %v4160
    %v4197 = vpack.c.b16 %v4165, %v4161
    %4230 = vmatprep.subr.bf16.mxu0 0
    %4231 = vmatpush1.bf16.msra.mxu0 %v435
    %4232 = vmatprep.subr.bf16.mxu0 0
    %4233 = vmatpush1.bf16.msra.mxu0 %v436
    %4234 = vmatprep.subr.bf16.mxu0 0
    %4235 = vmatpush1.bf16.msra.mxu0 %v437
    %4236 = vmatprep.subr.bf16.mxu0 0
    %4237 = vmatpush1.bf16.msra.mxu0 %v438
    %4238 = vmatprep.subr.bf16.mxu0 0
    %4239 = vmatpush1.bf16.msra.mxu0 %v439
    %4240 = vmatprep.subr.bf16.mxu0 0
    %4241 = vmatpush1.bf16.msra.mxu0 %v440
    %4242 = vmatprep.subr.bf16.mxu0 0
    %4243 = vmatpush1.bf16.msra.mxu0 %v441
    %4244 = vmatprep.subr.bf16.mxu0 0
    %4245 = vmatpush1.bf16.msra.mxu0 %v442
    %4246 = vmatprep.subr.bf16.mxu0 0
    %4247 = vmatpush1.bf16.msra.mxu0 %v443
    %4248 = vmatprep.subr.bf16.mxu0 0
    %4249 = vmatpush1.bf16.msra.mxu0 %v444
    %4250 = vmatprep.subr.bf16.mxu0 0
    %4251 = vmatpush1.bf16.msra.mxu0 %v445
    %4252 = vmatprep.subr.bf16.mxu0 0
    %4253 = vmatpush1.bf16.msra.mxu0 %v446
    %4254 = vmatprep.subr.bf16.mxu0 0
    %4255 = vmatpush1.bf16.msra.mxu0 %v447
    %4256 = vmatprep.subr.bf16.mxu0 0
    %4257 = vmatpush1.bf16.msra.mxu0 %v448
    %4258 = vmatprep.subr.bf16.mxu0 0
    %4259 = vmatpush1.bf16.msra.mxu0 %v449
    %4260 = vmatprep.subr.bf16.mxu0 0
    %4261 = vmatpush1.bf16.msra.mxu0 %v450
    %4262 = vmatprep.mubr.bf16.mxu0 %v4167
    %4263 = vmatmul.mubr.bf16.gmra.mrb[0].mxu0 %v4166
    %v4264 = vpop.f32.mrb[0].mxu0
    %v4265 = vadd.f32 0.0, %v4264
    %v4266 = vpop.f32.mrb[0].mxu0
    %v4267 = vpop.f32.mrb[0].mxu0
    %v4268 = vadd.f32 0.0, %v4267
    %v4269 = vpop.f32.mrb[0].mxu0
    %4270 = vmatprep.mubr.bf16.mxu0 %v4171
    %4271 = vmatmul.mubr.bf16.gmra.mrb[0].mxu0 %v4170
    %v4272 = vpop.f32.mrb[0].mxu0
    %v4273 = vadd.f32 0.0, %v4272
    %v4274 = vpop.f32.mrb[0].mxu0
    %v4275 = vpop.f32.mrb[0].mxu0
    %v4276 = vadd.f32 0.0, %v4275
    %v4277 = vpop.f32.mrb[0].mxu0
    %4278 = vmatprep.mubr.bf16.mxu0 %v4175
    %4279 = vmatmul.mubr.bf16.gmra.mrb[0].mxu0 %v4174
    %v4280 = vpop.f32.mrb[0].mxu0
    %v4281 = vadd.f32 0.0, %v4280
    %v4282 = vpop.f32.mrb[0].mxu0
    %v4283 = vpop.f32.mrb[0].mxu0
    %v4284 = vadd.f32 0.0, %v4283
    %v4285 = vpop.f32.mrb[0].mxu0
    %4286 = vmatprep.mubr.bf16.mxu0 %v4179
    %4287 = vmatmul.mubr.bf16.gmra.mrb[0].mxu0 %v4178
    %v4288 = vpop.f32.mrb[0].mxu0
    %v4289 = vadd.f32 0.0, %v4288
    %v4290 = vpop.f32.mrb[0].mxu0
    %v4291 = vpop.f32.mrb[0].mxu0
    %v4292 = vadd.f32 0.0, %v4291
    %v4293 = vpop.f32.mrb[0].mxu0
    %4294 = vmatprep.mubr.bf16.mxu0 %v4183
    %4295 = vmatmul.mubr.bf16.gmra.mrb[0].mxu0 %v4182
    %v4296 = vpop.f32.mrb[0].mxu0
    %v4297 = vadd.f32 0.0, %v4296
    %v4298 = vpop.f32.mrb[0].mxu0
    %v4299 = vpop.f32.mrb[0].mxu0
    %v4300 = vadd.f32 0.0, %v4299
    %v4301 = vpop.f32.mrb[0].mxu0
    %4302 = vmatprep.mubr.bf16.mxu0 %v4187
    %4303 = vmatmul.mubr.bf16.gmra.mrb[0].mxu0 %v4186
    %v4304 = vpop.f32.mrb[0].mxu0
    %v4305 = vadd.f32 0.0, %v4304
    %v4306 = vpop.f32.mrb[0].mxu0
    %v4307 = vpop.f32.mrb[0].mxu0
    %v4308 = vadd.f32 0.0, %v4307
    %v4309 = vpop.f32.mrb[0].mxu0
    %4310 = vmatprep.mubr.bf16.mxu0 %v4191
    %4311 = vmatmul.mubr.bf16.gmra.mrb[0].mxu0 %v4190
    %v4312 = vpop.f32.mrb[0].mxu0
    %v4313 = vadd.f32 0.0, %v4312
    %v4314 = vpop.f32.mrb[0].mxu0
    %v4315 = vpop.f32.mrb[0].mxu0
    %v4316 = vadd.f32 0.0, %v4315
    %v4317 = vpop.f32.mrb[0].mxu0
    %4318 = vmatprep.mubr.bf16.mxu0 %v4195
    %4319 = vmatmul.mubr.bf16.gmra.mrb[0].mxu0 %v4194
    %v4320 = vpop.f32.mrb[0].mxu0
    %v4321 = vadd.f32 0.0, %v4320
    %v4322 = vpop.f32.mrb[0].mxu0
    %v4323 = vpop.f32.mrb[0].mxu0
    %v4324 = vadd.f32 0.0, %v4323
    %v4325 = vpop.f32.mrb[0].mxu0
    %4326 = vdwg.mxu0
    %4327 = vmatprep.subr.bf16.mxu0 0
    %4328 = vmatpush1.bf16.msra.mxu0 %v451
    %4329 = vmatprep.subr.bf16.mxu0 0
    %4330 = vmatpush1.bf16.msra.mxu0 %v452
    %4331 = vmatprep.subr.bf16.mxu0 0
    %4332 = vmatpush1.bf16.msra.mxu0 %v453
    %4333 = vmatprep.subr.bf16.mxu0 0
    %4334 = vmatpush1.bf16.msra.mxu0 %v454
    %4335 = vmatprep.subr.bf16.mxu0 0
    %4336 = vmatpush1.bf16.msra.mxu0 %v455
    %4337 = vmatprep.subr.bf16.mxu0 0
    %4338 = vmatpush1.bf16.msra.mxu0 %v456
    %4339 = vmatprep.subr.bf16.mxu0 0
    %4340 = vmatpush1.bf16.msra.mxu0 %v457
    %4341 = vmatprep.subr.bf16.mxu0 0
    %4342 = vmatpush1.bf16.msra.mxu0 %v458
    %4343 = vmatprep.subr.bf16.mxu0 0
    %4344 = vmatpush1.bf16.msra.mxu0 %v459
    %4345 = vmatprep.subr.bf16.mxu0 0
    %4346 = vmatpush1.bf16.msra.mxu0 %v460
    %4347 = vmatprep.subr.bf16.mxu0 0
    %4348 = vmatpush1.bf16.msra.mxu0 %v461
    %4349 = vmatprep.subr.bf16.mxu0 0
    %4350 = vmatpush1.bf16.msra.mxu0 %v462
    %4351 = vmatprep.subr.bf16.mxu0 0
    %4352 = vmatpush1.bf16.msra.mxu0 %v463
    %4353 = vmatprep.subr.bf16.mxu0 0
    %4354 = vmatpush1.bf16.msra.mxu0 %v464
    %4355 = vmatprep.subr.bf16.mxu0 0
    %4356 = vmatpush1.bf16.msra.mxu0 %v465
    %4357 = vmatprep.subr.bf16.mxu0 0
    %4358 = vmatpush1.bf16.msra.mxu0 %v466
    %4359 = vmatprep.mubr.bf16.mxu0 %v4169
    %4360 = vmatmul.mubr.bf16.gmra.mrb[0].mxu0 %v4168
    %v4361 = vpop.f32.mrb[0].mxu0
    %v4362 = vadd.f32 %v4265, %v4361
    %v4363 = vpop.f32.mrb[0].mxu0
    %v4364 = vpop.f32.mrb[0].mxu0
    %v4365 = vadd.f32 %v4268, %v4364
    %v4366 = vpop.f32.mrb[0].mxu0
    %4367 = vmatprep.mubr.bf16.mxu0 %v4173
    %4368 = vmatmul.mubr.bf16.gmra.mrb[0].mxu0 %v4172
    %v4369 = vpop.f32.mrb[0].mxu0
    %v4370 = vadd.f32 %v4273, %v4369
    %v4371 = vpop.f32.mrb[0].mxu0
    %v4372 = vpop.f32.mrb[0].mxu0
    %v4373 = vadd.f32 %v4276, %v4372
    %v4374 = vpop.f32.mrb[0].mxu0
    %4375 = vmatprep.mubr.bf16.mxu0 %v4177
    %4376 = vmatmul.mubr.bf16.gmra.mrb[0].mxu0 %v4176
    %v4377 = vpop.f32.mrb[0].mxu0
    %v4378 = vadd.f32 %v4281, %v4377
    %v4379 = vpop.f32.mrb[0].mxu0
    %v4380 = vpop.f32.mrb[0].mxu0
    %v4381 = vadd.f32 %v4284, %v4380
    %v4382 = vpop.f32.mrb[0].mxu0
    %4383 = vmatprep.mubr.bf16.mxu0 %v4181
    %4384 = vmatmul.mubr.bf16.gmra.mrb[0].mxu0 %v4180
    %v4385 = vpop.f32.mrb[0].mxu0
    %v4386 = vadd.f32 %v4289, %v4385
    %v4387 = vpop.f32.mrb[0].mxu0
    %v4388 = vpop.f32.mrb[0].mxu0
    %v4389 = vadd.f32 %v4292, %v4388
    %v4390 = vpop.f32.mrb[0].mxu0
    %4391 = vmatprep.mubr.bf16.mxu0 %v4185
    %4392 = vmatmul.mubr.bf16.gmra.mrb[0].mxu0 %v4184
    %v4393 = vpop.f32.mrb[0].mxu0
    %v4394 = vadd.f32 %v4297, %v4393
    %v4395 = vpop.f32.mrb[0].mxu0
    %v4396 = vpop.f32.mrb[0].mxu0
    %v4397 = vadd.f32 %v4300, %v4396
    %v4398 = vpop.f32.mrb[0].mxu0
    %4399 = vmatprep.mubr.bf16.mxu0 %v4189
    %4400 = vmatmul.mubr.bf16.gmra.mrb[0].mxu0 %v4188
    %v4401 = vpop.f32.mrb[0].mxu0
    %v4402 = vadd.f32 %v4305, %v4401
    %v4403 = vpop.f32.mrb[0].mxu0
    %v4404 = vpop.f32.mrb[0].mxu0
    %v4405 = vadd.f32 %v4308, %v4404
    %v4406 = vpop.f32.mrb[0].mxu0
    %4407 = vmatprep.mubr.bf16.mxu0 %v4193
    %4408 = vmatmul.mubr.bf16.gmra.mrb[0].mxu0 %v4192
    %v4409 = vpop.f32.mrb[0].mxu0
    %v4410 = vadd.f32 %v4313, %v4409
    %v4411 = vpop.f32.mrb[0].mxu0
    %v4412 = vpop.f32.mrb[0].mxu0
    %v4413 = vadd.f32 %v4316, %v4412
    %v4414 = vpop.f32.mrb[0].mxu0
    %4415 = vmatprep.mubr.bf16.mxu0 %v4197
    %4416 = vmatmul.mubr.bf16.gmra.mrb[0].mxu0 %v4196
    %v4417 = vpop.f32.mrb[0].mxu0
    %v4418 = vadd.f32 %v4321, %v4417
    %v4419 = vpop.f32.mrb[0].mxu0
    %v4420 = vpop.f32.mrb[0].mxu0
    %v4421 = vadd.f32 %v4324, %v4420
    %v4422 = vpop.f32.mrb[0].mxu0
    %4423 = vdwg.mxu0
    %v4424 = vpack.c.bf16 %v4365, %v4362
    %v4425 = vpack.c.bf16 %v4373, %v4370
    %v4426 = vpack.c.bf16 %v4381, %v4378
    %v4427 = vpack.c.bf16 %v4389, %v4386
    %v4428 = vpack.c.bf16 %v4397, %v4394
    %v4429 = vpack.c.bf16 %v4405, %v4402
    %v4430 = vpack.c.bf16 %v4413, %v4410
    %v4431 = vpack.c.bf16 %v4421, %v4418
    %s4432 = scalar_lea.vmem %s2, 14
    %v4433 = vld [vmem:[%s4432] sm:$0x3]
    %v4435 = vsel %vm1099, %v4424, 0
    %v4438 = vsel %vm1099, %v4425, 0
    %v4441 = vsel %vm1099, %v4426, 0
    %v4444 = vsel %vm1099, %v4427, 0
    %v4447 = vsel %vm1099, %v4428, 0
    %v4450 = vsel %vm1099, %v4429, 0
    %v4453 = vsel %vm1099, %v4430, 0
    %v4456 = vsel %vm1099, %v4431, 0
    %v4459 = vand.u32 %v4433, %v1127
    %4461 = vmatprep.subr.bf16.mxu0 0
    %4462 = vmatpush1.bf16.msra.mxu0 %v4459
    %4463 = vmatprep.subr.bf16.mxu0 0
    %4464 = vmatpush1.bf16.msra.mxu0 0
    %4465 = vmatprep.subr.bf16.mxu0 0
    %4466 = vmatpush1.bf16.msra.mxu0 0
    %4467 = vmatprep.subr.bf16.mxu0 0
    %4468 = vmatpush1.bf16.msra.mxu0 0
    %4469 = vmatprep.subr.bf16.mxu0 0
    %4470 = vmatpush1.bf16.msra.mxu0 0
    %4471 = vmatprep.subr.bf16.mxu0 0
    %4472 = vmatpush1.bf16.msra.mxu0 0
    %4473 = vmatprep.subr.bf16.mxu0 0
    %4474 = vmatpush1.bf16.msra.mxu0 0
    %4475 = vmatprep.subr.bf16.mxu0 0
    %4476 = vmatpush1.bf16.msra.mxu0 0
    %4477 = vmatprep.subr.bf16.mxu0 0
    %4478 = vmatpush1.bf16.msra.mxu0 0
    %4479 = vmatprep.subr.bf16.mxu0 0
    %4480 = vmatpush1.bf16.msra.mxu0 0
    %4481 = vmatprep.subr.bf16.mxu0 0
    %4482 = vmatpush1.bf16.msra.mxu0 0
    %4483 = vmatprep.subr.bf16.mxu0 0
    %4484 = vmatpush1.bf16.msra.mxu0 0
    %4485 = vmatprep.subr.bf16.mxu0 0
    %4486 = vmatpush1.bf16.msra.mxu0 0
    %4487 = vmatprep.subr.bf16.mxu0 0
    %4488 = vmatpush1.bf16.msra.mxu0 0
    %4489 = vmatprep.subr.bf16.mxu0 0
    %4490 = vmatpush1.bf16.msra.mxu0 0
    %4491 = vmatprep.subr.bf16.mxu0 0
    %4492 = vmatpush1.bf16.msra.mxu0 0
    %4493 = vmatprep.mubr.bf16.mxu0 0
    %4494 = vmatmul.mubr.bf16.gmra.mrb[0].mxu0 %v4435
    %v4495 = vpop.f32.mrb[0].mxu0
    %v4496 = vadd.f32 0.0, %v4495
    %v4497 = vpop.f32.mrb[0].mxu0
    %v4498 = vpop.f32.mrb[0].mxu0
    %v4499 = vadd.f32 0.0, %v4498
    %v4500 = vpop.f32.mrb[0].mxu0
    %4501 = vmatprep.mubr.bf16.mxu0 0
    %4502 = vmatmul.mubr.bf16.gmra.mrb[0].mxu0 %v4438
    %v4503 = vpop.f32.mrb[0].mxu0
    %v4504 = vadd.f32 0.0, %v4503
    %v4505 = vpop.f32.mrb[0].mxu0
    %v4506 = vpop.f32.mrb[0].mxu0
    %v4507 = vadd.f32 0.0, %v4506
    %v4508 = vpop.f32.mrb[0].mxu0
    %4509 = vmatprep.mubr.bf16.mxu0 0
    %4510 = vmatmul.mubr.bf16.gmra.mrb[0].mxu0 %v4441
    %v4511 = vpop.f32.mrb[0].mxu0
    %v4512 = vadd.f32 0.0, %v4511
    %v4513 = vpop.f32.mrb[0].mxu0
    %v4514 = vpop.f32.mrb[0].mxu0
    %v4515 = vadd.f32 0.0, %v4514
    %v4516 = vpop.f32.mrb[0].mxu0
    %4517 = vmatprep.mubr.bf16.mxu0 0
    %4518 = vmatmul.mubr.bf16.gmra.mrb[0].mxu0 %v4444
    %v4519 = vpop.f32.mrb[0].mxu0
    %v4520 = vadd.f32 0.0, %v4519
    %v4521 = vpop.f32.mrb[0].mxu0
    %v4522 = vpop.f32.mrb[0].mxu0
    %v4523 = vadd.f32 0.0, %v4522
    %v4524 = vpop.f32.mrb[0].mxu0
    %4525 = vmatprep.mubr.bf16.mxu0 0
    %4526 = vmatmul.mubr.bf16.gmra.mrb[0].mxu0 %v4447
    %v4527 = vpop.f32.mrb[0].mxu0
    %v4528 = vadd.f32 0.0, %v4527
    %v4529 = vpop.f32.mrb[0].mxu0
    %v4530 = vpop.f32.mrb[0].mxu0
    %v4531 = vadd.f32 0.0, %v4530
    %v4532 = vpop.f32.mrb[0].mxu0
    %4533 = vmatprep.mubr.bf16.mxu0 0
    %4534 = vmatmul.mubr.bf16.gmra.mrb[0].mxu0 %v4450
    %v4535 = vpop.f32.mrb[0].mxu0
    %v4536 = vadd.f32 0.0, %v4535
    %v4537 = vpop.f32.mrb[0].mxu0
    %v4538 = vpop.f32.mrb[0].mxu0
    %v4539 = vadd.f32 0.0, %v4538
    %v4540 = vpop.f32.mrb[0].mxu0
    %4541 = vmatprep.mubr.bf16.mxu0 0
    %4542 = vmatmul.mubr.bf16.gmra.mrb[0].mxu0 %v4453
    %v4543 = vpop.f32.mrb[0].mxu0
    %v4544 = vadd.f32 0.0, %v4543
    %v4545 = vpop.f32.mrb[0].mxu0
    %v4546 = vpop.f32.mrb[0].mxu0
    %v4547 = vadd.f32 0.0, %v4546
    %v4548 = vpop.f32.mrb[0].mxu0
    %4549 = vmatprep.mubr.bf16.mxu0 0
    %4550 = vmatmul.mubr.bf16.gmra.mrb[0].mxu0 %v4456
    %v4551 = vpop.f32.mrb[0].mxu0
    %v4552 = vadd.f32 0.0, %v4551
    %v4553 = vpop.f32.mrb[0].mxu0
    %v4554 = vpop.f32.mrb[0].mxu0
    %v4555 = vadd.f32 0.0, %v4554
    %v4556 = vpop.f32.mrb[0].mxu0
    %4557 = vdwg.mxu0
    %v4558 = vadd.f32 %v4021, %v4496
    %v4559 = vadd.f32 %v4022, %v4499
    %v4560 = vadd.f32 %v4023, %v4504
    %v4561 = vadd.f32 %v4024, %v4507
    %v4562 = vadd.f32 %v4025, %v4512
    %v4563 = vadd.f32 %v4026, %v4515
    %v4564 = vadd.f32 %v4027, %v4520
    %v4565 = vadd.f32 %v4028, %v4523
    %v4566 = vadd.f32 %v4029, %v4528
    %v4567 = vadd.f32 %v4030, %v4531
    %v4568 = vadd.f32 %v4031, %v4536
    %v4569 = vadd.f32 %v4032, %v4539
    %v4570 = vadd.f32 %v4033, %v4544
    %v4571 = vadd.f32 %v4034, %v4547
    %v4572 = vadd.f32 %v4035, %v4552
    %v4573 = vadd.f32 %v4036, %v4555
    %s4574 = scalar_lea.vmem %s1, 2048
    %v4575 = vld [vmem:[%s4574] sm:$0xff]
    %v4576 = vld [vmem:[%s4574 + $0x8] sm:$0xff]
    %v4577 = vld [vmem:[%s4574 + $0x10] sm:$0xff]
    %v4578 = vld [vmem:[%s4574 + $0x18] sm:$0xff]
    %v4579 = vld [vmem:[%s4574 + $0x20] sm:$0xff]
    %v4580 = vld [vmem:[%s4574 + $0x28] sm:$0xff]
    %v4581 = vld [vmem:[%s4574 + $0x30] sm:$0xff]
    %v4582 = vld [vmem:[%s4574 + $0x38] sm:$0xff]
    %v4583 = vld [vmem:[%s4574 + $0x40] sm:$0xff]
    %v4584 = vld [vmem:[%s4574 + $0x48] sm:$0xff]
    %v4585 = vld [vmem:[%s4574 + $0x50] sm:$0xff]
    %v4586 = vld [vmem:[%s4574 + $0x58] sm:$0xff]
    %v4587 = vld [vmem:[%s4574 + $0x60] sm:$0xff]
    %v4588 = vld [vmem:[%s4574 + $0x68] sm:$0xff]
    %v4589 = vld [vmem:[%s4574 + $0x70] sm:$0xff]
    %v4590 = vld [vmem:[%s4574 + $0x78] sm:$0xff]
    %v4591 = vld [vmem:[%s4574 + $0x80] sm:$0xff]
    %v4592 = vld [vmem:[%s4574 + $0x88] sm:$0xff]
    %v4593 = vld [vmem:[%s4574 + $0x90] sm:$0xff]
    %v4594 = vld [vmem:[%s4574 + $0x98] sm:$0xff]
    %v4595 = vld [vmem:[%s4574 + $0xa0] sm:$0xff]
    %v4596 = vld [vmem:[%s4574 + $0xa8] sm:$0xff]
    %v4597 = vld [vmem:[%s4574 + $0xb0] sm:$0xff]
    %v4598 = vld [vmem:[%s4574 + $0xb8] sm:$0xff]
    %v4599 = vld [vmem:[%s4574 + $0xc0] sm:$0xff]
    %v4600 = vld [vmem:[%s4574 + $0xc8] sm:$0xff]
    %v4601 = vld [vmem:[%s4574 + $0xd0] sm:$0xff]
    %v4602 = vld [vmem:[%s4574 + $0xd8] sm:$0xff]
    %v4603 = vld [vmem:[%s4574 + $0xe0] sm:$0xff]
    %v4604 = vld [vmem:[%s4574 + $0xe8] sm:$0xff]
    %v4605 = vld [vmem:[%s4574 + $0xf0] sm:$0xff]
    %v4606 = vld [vmem:[%s4574 + $0xf8] sm:$0xff]
    %v4639 = vunpack.c.l.b16 %v4575
    %v4640 = vunpack.c.h.b16 %v4575
    %v4641 = vunpack.c.l.b16 %v4576
    %v4642 = vunpack.c.h.b16 %v4576
    %v4643 = vunpack.c.l.b16 %v4577
    %v4644 = vunpack.c.h.b16 %v4577
    %v4645 = vunpack.c.l.b16 %v4578
    %v4646 = vunpack.c.h.b16 %v4578
    %v4647 = vunpack.c.l.b16 %v4579
    %v4648 = vunpack.c.h.b16 %v4579
    %v4649 = vunpack.c.l.b16 %v4580
    %v4650 = vunpack.c.h.b16 %v4580
    %v4651 = vunpack.c.l.b16 %v4581
    %v4652 = vunpack.c.h.b16 %v4581
    %v4653 = vunpack.c.l.b16 %v4582
    %v4654 = vunpack.c.h.b16 %v4582
    %v4655 = vunpack.c.l.b16 %v4583
    %v4656 = vunpack.c.h.b16 %v4583
    %v4657 = vunpack.c.l.b16 %v4584
    %v4658 = vunpack.c.h.b16 %v4584
    %v4659 = vunpack.c.l.b16 %v4585
    %v4660 = vunpack.c.h.b16 %v4585
    %v4661 = vunpack.c.l.b16 %v4586
    %v4662 = vunpack.c.h.b16 %v4586
    %v4663 = vunpack.c.l.b16 %v4587
    %v4664 = vunpack.c.h.b16 %v4587
    %v4665 = vunpack.c.l.b16 %v4588
    %v4666 = vunpack.c.h.b16 %v4588
    %v4667 = vunpack.c.l.b16 %v4589
    %v4668 = vunpack.c.h.b16 %v4589
    %v4669 = vunpack.c.l.b16 %v4590
    %v4670 = vunpack.c.h.b16 %v4590
    %v4671 = vunpack.c.l.b16 %v4591
    %v4672 = vunpack.c.h.b16 %v4591
    %v4673 = vunpack.c.l.b16 %v4592
    %v4674 = vunpack.c.h.b16 %v4592
    %v4675 = vunpack.c.l.b16 %v4593
    %v4676 = vunpack.c.h.b16 %v4593
    %v4677 = vunpack.c.l.b16 %v4594
    %v4678 = vunpack.c.h.b16 %v4594
    %v4679 = vunpack.c.l.b16 %v4595
    %v4680 = vunpack.c.h.b16 %v4595
    %v4681 = vunpack.c.l.b16 %v4596
    %v4682 = vunpack.c.h.b16 %v4596
    %v4683 = vunpack.c.l.b16 %v4597
    %v4684 = vunpack.c.h.b16 %v4597
    %v4685 = vunpack.c.l.b16 %v4598
    %v4686 = vunpack.c.h.b16 %v4598
    %v4687 = vunpack.c.l.b16 %v4599
    %v4688 = vunpack.c.h.b16 %v4599
    %v4689 = vunpack.c.l.b16 %v4600
    %v4690 = vunpack.c.h.b16 %v4600
    %v4691 = vunpack.c.l.b16 %v4601
    %v4692 = vunpack.c.h.b16 %v4601
    %v4693 = vunpack.c.l.b16 %v4602
    %v4694 = vunpack.c.h.b16 %v4602
    %v4695 = vunpack.c.l.b16 %v4603
    %v4696 = vunpack.c.h.b16 %v4603
    %v4697 = vunpack.c.l.b16 %v4604
    %v4698 = vunpack.c.h.b16 %v4604
    %v4699 = vunpack.c.l.b16 %v4605
    %v4700 = vunpack.c.h.b16 %v4605
    %v4701 = vunpack.c.l.b16 %v4606
    %v4702 = vunpack.c.h.b16 %v4606
    %v4703 = vpack.c.b16 %v4643, %v4639
    %v4704 = vpack.c.b16 %v4644, %v4640
    %v4705 = vpack.c.b16 %v4645, %v4641
    %v4706 = vpack.c.b16 %v4646, %v4642
    %v4707 = vpack.c.b16 %v4651, %v4647
    %v4708 = vpack.c.b16 %v4652, %v4648
    %v4709 = vpack.c.b16 %v4653, %v4649
    %v4710 = vpack.c.b16 %v4654, %v4650
    %v4711 = vpack.c.b16 %v4659, %v4655
    %v4712 = vpack.c.b16 %v4660, %v4656
    %v4713 = vpack.c.b16 %v4661, %v4657
    %v4714 = vpack.c.b16 %v4662, %v4658
    %v4715 = vpack.c.b16 %v4667, %v4663
    %v4716 = vpack.c.b16 %v4668, %v4664
    %v4717 = vpack.c.b16 %v4669, %v4665
    %v4718 = vpack.c.b16 %v4670, %v4666
    %v4719 = vpack.c.b16 %v4675, %v4671
    %v4720 = vpack.c.b16 %v4676, %v4672
    %v4721 = vpack.c.b16 %v4677, %v4673
    %v4722 = vpack.c.b16 %v4678, %v4674
    %v4723 = vpack.c.b16 %v4683, %v4679
    %v4724 = vpack.c.b16 %v4684, %v4680
    %v4725 = vpack.c.b16 %v4685, %v4681
    %v4726 = vpack.c.b16 %v4686, %v4682
    %v4727 = vpack.c.b16 %v4691, %v4687
    %v4728 = vpack.c.b16 %v4692, %v4688
    %v4729 = vpack.c.b16 %v4693, %v4689
    %v4730 = vpack.c.b16 %v4694, %v4690
    %v4731 = vpack.c.b16 %v4699, %v4695
    %v4732 = vpack.c.b16 %v4700, %v4696
    %v4733 = vpack.c.b16 %v4701, %v4697
    %v4734 = vpack.c.b16 %v4702, %v4698
    %4767 = vmatprep.subr.bf16.mxu0 0
    %4768 = vmatpush1.bf16.msra.mxu0 %v435
    %4769 = vmatprep.subr.bf16.mxu0 0
    %4770 = vmatpush1.bf16.msra.mxu0 %v436
    %4771 = vmatprep.subr.bf16.mxu0 0
    %4772 = vmatpush1.bf16.msra.mxu0 %v437
    %4773 = vmatprep.subr.bf16.mxu0 0
    %4774 = vmatpush1.bf16.msra.mxu0 %v438
    %4775 = vmatprep.subr.bf16.mxu0 0
    %4776 = vmatpush1.bf16.msra.mxu0 %v439
    %4777 = vmatprep.subr.bf16.mxu0 0
    %4778 = vmatpush1.bf16.msra.mxu0 %v440
    %4779 = vmatprep.subr.bf16.mxu0 0
    %4780 = vmatpush1.bf16.msra.mxu0 %v441
    %4781 = vmatprep.subr.bf16.mxu0 0
    %4782 = vmatpush1.bf16.msra.mxu0 %v442
    %4783 = vmatprep.subr.bf16.mxu0 0
    %4784 = vmatpush1.bf16.msra.mxu0 %v443
    %4785 = vmatprep.subr.bf16.mxu0 0
    %4786 = vmatpush1.bf16.msra.mxu0 %v444
    %4787 = vmatprep.subr.bf16.mxu0 0
    %4788 = vmatpush1.bf16.msra.mxu0 %v445
    %4789 = vmatprep.subr.bf16.mxu0 0
    %4790 = vmatpush1.bf16.msra.mxu0 %v446
    %4791 = vmatprep.subr.bf16.mxu0 0
    %4792 = vmatpush1.bf16.msra.mxu0 %v447
    %4793 = vmatprep.subr.bf16.mxu0 0
    %4794 = vmatpush1.bf16.msra.mxu0 %v448
    %4795 = vmatprep.subr.bf16.mxu0 0
    %4796 = vmatpush1.bf16.msra.mxu0 %v449
    %4797 = vmatprep.subr.bf16.mxu0 0
    %4798 = vmatpush1.bf16.msra.mxu0 %v450
    %4799 = vmatprep.mubr.bf16.mxu0 %v4704
    %4800 = vmatmul.mubr.bf16.gmra.mrb[0].mxu0 %v4703
    %v4801 = vpop.f32.mrb[0].mxu0
    %v4802 = vadd.f32 0.0, %v4801
    %v4803 = vpop.f32.mrb[0].mxu0
    %v4804 = vpop.f32.mrb[0].mxu0
    %v4805 = vadd.f32 0.0, %v4804
    %v4806 = vpop.f32.mrb[0].mxu0
    %4807 = vmatprep.mubr.bf16.mxu0 %v4708
    %4808 = vmatmul.mubr.bf16.gmra.mrb[0].mxu0 %v4707
    %v4809 = vpop.f32.mrb[0].mxu0
    %v4810 = vadd.f32 0.0, %v4809
    %v4811 = vpop.f32.mrb[0].mxu0
    %v4812 = vpop.f32.mrb[0].mxu0
    %v4813 = vadd.f32 0.0, %v4812
    %v4814 = vpop.f32.mrb[0].mxu0
    %4815 = vmatprep.mubr.bf16.mxu0 %v4712
    %4816 = vmatmul.mubr.bf16.gmra.mrb[0].mxu0 %v4711
    %v4817 = vpop.f32.mrb[0].mxu0
    %v4818 = vadd.f32 0.0, %v4817
    %v4819 = vpop.f32.mrb[0].mxu0
    %v4820 = vpop.f32.mrb[0].mxu0
    %v4821 = vadd.f32 0.0, %v4820
    %v4822 = vpop.f32.mrb[0].mxu0
    %4823 = vmatprep.mubr.bf16.mxu0 %v4716
    %4824 = vmatmul.mubr.bf16.gmra.mrb[0].mxu0 %v4715
    %v4825 = vpop.f32.mrb[0].mxu0
    %v4826 = vadd.f32 0.0, %v4825
    %v4827 = vpop.f32.mrb[0].mxu0
    %v4828 = vpop.f32.mrb[0].mxu0
    %v4829 = vadd.f32 0.0, %v4828
    %v4830 = vpop.f32.mrb[0].mxu0
    %4831 = vmatprep.mubr.bf16.mxu0 %v4720
    %4832 = vmatmul.mubr.bf16.gmra.mrb[0].mxu0 %v4719
    %v4833 = vpop.f32.mrb[0].mxu0
    %v4834 = vadd.f32 0.0, %v4833
    %v4835 = vpop.f32.mrb[0].mxu0
    %v4836 = vpop.f32.mrb[0].mxu0
    %v4837 = vadd.f32 0.0, %v4836
    %v4838 = vpop.f32.mrb[0].mxu0
    %4839 = vmatprep.mubr.bf16.mxu0 %v4724
    %4840 = vmatmul.mubr.bf16.gmra.mrb[0].mxu0 %v4723
    %v4841 = vpop.f32.mrb[0].mxu0
    %v4842 = vadd.f32 0.0, %v4841
    %v4843 = vpop.f32.mrb[0].mxu0
    %v4844 = vpop.f32.mrb[0].mxu0
    %v4845 = vadd.f32 0.0, %v4844
    %v4846 = vpop.f32.mrb[0].mxu0
    %4847 = vmatprep.mubr.bf16.mxu0 %v4728
    %4848 = vmatmul.mubr.bf16.gmra.mrb[0].mxu0 %v4727
    %v4849 = vpop.f32.mrb[0].mxu0
    %v4850 = vadd.f32 0.0, %v4849
    %v4851 = vpop.f32.mrb[0].mxu0
    %v4852 = vpop.f32.mrb[0].mxu0
    %v4853 = vadd.f32 0.0, %v4852
    %v4854 = vpop.f32.mrb[0].mxu0
    %4855 = vmatprep.mubr.bf16.mxu0 %v4732
    %4856 = vmatmul.mubr.bf16.gmra.mrb[0].mxu0 %v4731
    %v4857 = vpop.f32.mrb[0].mxu0
    %v4858 = vadd.f32 0.0, %v4857
    %v4859 = vpop.f32.mrb[0].mxu0
    %v4860 = vpop.f32.mrb[0].mxu0
    %v4861 = vadd.f32 0.0, %v4860
    %v4862 = vpop.f32.mrb[0].mxu0
    %4863 = vdwg.mxu0
    %4864 = vmatprep.subr.bf16.mxu0 0
    %4865 = vmatpush1.bf16.msra.mxu0 %v451
    %4866 = vmatprep.subr.bf16.mxu0 0
    %4867 = vmatpush1.bf16.msra.mxu0 %v452
    %4868 = vmatprep.subr.bf16.mxu0 0
    %4869 = vmatpush1.bf16.msra.mxu0 %v453
    %4870 = vmatprep.subr.bf16.mxu0 0
    %4871 = vmatpush1.bf16.msra.mxu0 %v454
    %4872 = vmatprep.subr.bf16.mxu0 0
    %4873 = vmatpush1.bf16.msra.mxu0 %v455
    %4874 = vmatprep.subr.bf16.mxu0 0
    %4875 = vmatpush1.bf16.msra.mxu0 %v456
    %4876 = vmatprep.subr.bf16.mxu0 0
    %4877 = vmatpush1.bf16.msra.mxu0 %v457
    %4878 = vmatprep.subr.bf16.mxu0 0
    %4879 = vmatpush1.bf16.msra.mxu0 %v458
    %4880 = vmatprep.subr.bf16.mxu0 0
    %4881 = vmatpush1.bf16.msra.mxu0 %v459
    %4882 = vmatprep.subr.bf16.mxu0 0
    %4883 = vmatpush1.bf16.msra.mxu0 %v460
    %4884 = vmatprep.subr.bf16.mxu0 0
    %4885 = vmatpush1.bf16.msra.mxu0 %v461
    %4886 = vmatprep.subr.bf16.mxu0 0
    %4887 = vmatpush1.bf16.msra.mxu0 %v462
    %4888 = vmatprep.subr.bf16.mxu0 0
    %4889 = vmatpush1.bf16.msra.mxu0 %v463
    %4890 = vmatprep.subr.bf16.mxu0 0
    %4891 = vmatpush1.bf16.msra.mxu0 %v464
    %4892 = vmatprep.subr.bf16.mxu0 0
    %4893 = vmatpush1.bf16.msra.mxu0 %v465
    %4894 = vmatprep.subr.bf16.mxu0 0
    %4895 = vmatpush1.bf16.msra.mxu0 %v466
    %4896 = vmatprep.mubr.bf16.mxu0 %v4706
    %4897 = vmatmul.mubr.bf16.gmra.mrb[0].mxu0 %v4705
    %v4898 = vpop.f32.mrb[0].mxu0
    %v4899 = vadd.f32 %v4802, %v4898
    %v4900 = vpop.f32.mrb[0].mxu0
    %v4901 = vpop.f32.mrb[0].mxu0
    %v4902 = vadd.f32 %v4805, %v4901
    %v4903 = vpop.f32.mrb[0].mxu0
    %4904 = vmatprep.mubr.bf16.mxu0 %v4710
    %4905 = vmatmul.mubr.bf16.gmra.mrb[0].mxu0 %v4709
    %v4906 = vpop.f32.mrb[0].mxu0
    %v4907 = vadd.f32 %v4810, %v4906
    %v4908 = vpop.f32.mrb[0].mxu0
    %v4909 = vpop.f32.mrb[0].mxu0
    %v4910 = vadd.f32 %v4813, %v4909
    %v4911 = vpop.f32.mrb[0].mxu0
    %4912 = vmatprep.mubr.bf16.mxu0 %v4714
    %4913 = vmatmul.mubr.bf16.gmra.mrb[0].mxu0 %v4713
    %v4914 = vpop.f32.mrb[0].mxu0
    %v4915 = vadd.f32 %v4818, %v4914
    %v4916 = vpop.f32.mrb[0].mxu0
    %v4917 = vpop.f32.mrb[0].mxu0
    %v4918 = vadd.f32 %v4821, %v4917
    %v4919 = vpop.f32.mrb[0].mxu0
    %4920 = vmatprep.mubr.bf16.mxu0 %v4718
    %4921 = vmatmul.mubr.bf16.gmra.mrb[0].mxu0 %v4717
    %v4922 = vpop.f32.mrb[0].mxu0
    %v4923 = vadd.f32 %v4826, %v4922
    %v4924 = vpop.f32.mrb[0].mxu0
    %v4925 = vpop.f32.mrb[0].mxu0
    %v4926 = vadd.f32 %v4829, %v4925
    %v4927 = vpop.f32.mrb[0].mxu0
    %4928 = vmatprep.mubr.bf16.mxu0 %v4722
    %4929 = vmatmul.mubr.bf16.gmra.mrb[0].mxu0 %v4721
    %v4930 = vpop.f32.mrb[0].mxu0
    %v4931 = vadd.f32 %v4834, %v4930
    %v4932 = vpop.f32.mrb[0].mxu0
    %v4933 = vpop.f32.mrb[0].mxu0
    %v4934 = vadd.f32 %v4837, %v4933
    %v4935 = vpop.f32.mrb[0].mxu0
    %4936 = vmatprep.mubr.bf16.mxu0 %v4726
    %4937 = vmatmul.mubr.bf16.gmra.mrb[0].mxu0 %v4725
    %v4938 = vpop.f32.mrb[0].mxu0
    %v4939 = vadd.f32 %v4842, %v4938
    %v4940 = vpop.f32.mrb[0].mxu0
    %v4941 = vpop.f32.mrb[0].mxu0
    %v4942 = vadd.f32 %v4845, %v4941
    %v4943 = vpop.f32.mrb[0].mxu0
    %4944 = vmatprep.mubr.bf16.mxu0 %v4730
    %4945 = vmatmul.mubr.bf16.gmra.mrb[0].mxu0 %v4729
    %v4946 = vpop.f32.mrb[0].mxu0
    %v4947 = vadd.f32 %v4850, %v4946
    %v4948 = vpop.f32.mrb[0].mxu0
    %v4949 = vpop.f32.mrb[0].mxu0
    %v4950 = vadd.f32 %v4853, %v4949
    %v4951 = vpop.f32.mrb[0].mxu0
    %4952 = vmatprep.mubr.bf16.mxu0 %v4734
    %4953 = vmatmul.mubr.bf16.gmra.mrb[0].mxu0 %v4733
    %v4954 = vpop.f32.mrb[0].mxu0
    %v4955 = vadd.f32 %v4858, %v4954
    %v4956 = vpop.f32.mrb[0].mxu0
    %v4957 = vpop.f32.mrb[0].mxu0
    %v4958 = vadd.f32 %v4861, %v4957
    %v4959 = vpop.f32.mrb[0].mxu0
    %4960 = vdwg.mxu0
    %v4961 = vpack.c.bf16 %v4902, %v4899
    %v4962 = vpack.c.bf16 %v4910, %v4907
    %v4963 = vpack.c.bf16 %v4918, %v4915
    %v4964 = vpack.c.bf16 %v4926, %v4923
    %v4965 = vpack.c.bf16 %v4934, %v4931
    %v4966 = vpack.c.bf16 %v4942, %v4939
    %v4967 = vpack.c.bf16 %v4950, %v4947
    %v4968 = vpack.c.bf16 %v4958, %v4955
    %s4969 = scalar_lea.vmem %s2, 16
    %v4970 = vld [vmem:[%s4969] sm:$0x3]
    %v4972 = vsel %vm1099, %v4961, 0
    %v4975 = vsel %vm1099, %v4962, 0
    %v4978 = vsel %vm1099, %v4963, 0
    %v4981 = vsel %vm1099, %v4964, 0
    %v4984 = vsel %vm1099, %v4965, 0
    %v4987 = vsel %vm1099, %v4966, 0
    %v4990 = vsel %vm1099, %v4967, 0
    %v4993 = vsel %vm1099, %v4968, 0
    %v4996 = vand.u32 %v4970, %v1127
    %4998 = vmatprep.subr.bf16.mxu0 0
    %4999 = vmatpush1.bf16.msra.mxu0 %v4996
    %5000 = vmatprep.subr.bf16.mxu0 0
    %5001 = vmatpush1.bf16.msra.mxu0 0
    %5002 = vmatprep.subr.bf16.mxu0 0
    %5003 = vmatpush1.bf16.msra.mxu0 0
    %5004 = vmatprep.subr.bf16.mxu0 0
    %5005 = vmatpush1.bf16.msra.mxu0 0
    %5006 = vmatprep.subr.bf16.mxu0 0
    %5007 = vmatpush1.bf16.msra.mxu0 0
    %5008 = vmatprep.subr.bf16.mxu0 0
    %5009 = vmatpush1.bf16.msra.mxu0 0
    %5010 = vmatprep.subr.bf16.mxu0 0
    %5011 = vmatpush1.bf16.msra.mxu0 0
    %5012 = vmatprep.subr.bf16.mxu0 0
    %5013 = vmatpush1.bf16.msra.mxu0 0
    %5014 = vmatprep.subr.bf16.mxu0 0
    %5015 = vmatpush1.bf16.msra.mxu0 0
    %5016 = vmatprep.subr.bf16.mxu0 0
    %5017 = vmatpush1.bf16.msra.mxu0 0
    %5018 = vmatprep.subr.bf16.mxu0 0
    %5019 = vmatpush1.bf16.msra.mxu0 0
    %5020 = vmatprep.subr.bf16.mxu0 0
    %5021 = vmatpush1.bf16.msra.mxu0 0
    %5022 = vmatprep.subr.bf16.mxu0 0
    %5023 = vmatpush1.bf16.msra.mxu0 0
    %5024 = vmatprep.subr.bf16.mxu0 0
    %5025 = vmatpush1.bf16.msra.mxu0 0
    %5026 = vmatprep.subr.bf16.mxu0 0
    %5027 = vmatpush1.bf16.msra.mxu0 0
    %5028 = vmatprep.subr.bf16.mxu0 0
    %5029 = vmatpush1.bf16.msra.mxu0 0
    %5030 = vmatprep.mubr.bf16.mxu0 0
    %5031 = vmatmul.mubr.bf16.gmra.mrb[0].mxu0 %v4972
    %v5032 = vpop.f32.mrb[0].mxu0
    %v5033 = vadd.f32 0.0, %v5032
    %v5034 = vpop.f32.mrb[0].mxu0
    %v5035 = vpop.f32.mrb[0].mxu0
    %v5036 = vadd.f32 0.0, %v5035
    %v5037 = vpop.f32.mrb[0].mxu0
    %5038 = vmatprep.mubr.bf16.mxu0 0
    %5039 = vmatmul.mubr.bf16.gmra.mrb[0].mxu0 %v4975
    %v5040 = vpop.f32.mrb[0].mxu0
    %v5041 = vadd.f32 0.0, %v5040
    %v5042 = vpop.f32.mrb[0].mxu0
    %v5043 = vpop.f32.mrb[0].mxu0
    %v5044 = vadd.f32 0.0, %v5043
    %v5045 = vpop.f32.mrb[0].mxu0
    %5046 = vmatprep.mubr.bf16.mxu0 0
    %5047 = vmatmul.mubr.bf16.gmra.mrb[0].mxu0 %v4978
    %v5048 = vpop.f32.mrb[0].mxu0
    %v5049 = vadd.f32 0.0, %v5048
    %v5050 = vpop.f32.mrb[0].mxu0
    %v5051 = vpop.f32.mrb[0].mxu0
    %v5052 = vadd.f32 0.0, %v5051
    %v5053 = vpop.f32.mrb[0].mxu0
    %5054 = vmatprep.mubr.bf16.mxu0 0
    %5055 = vmatmul.mubr.bf16.gmra.mrb[0].mxu0 %v4981
    %v5056 = vpop.f32.mrb[0].mxu0
    %v5057 = vadd.f32 0.0, %v5056
    %v5058 = vpop.f32.mrb[0].mxu0
    %v5059 = vpop.f32.mrb[0].mxu0
    %v5060 = vadd.f32 0.0, %v5059
    %v5061 = vpop.f32.mrb[0].mxu0
    %5062 = vmatprep.mubr.bf16.mxu0 0
    %5063 = vmatmul.mubr.bf16.gmra.mrb[0].mxu0 %v4984
    %v5064 = vpop.f32.mrb[0].mxu0
    %v5065 = vadd.f32 0.0, %v5064
    %v5066 = vpop.f32.mrb[0].mxu0
    %v5067 = vpop.f32.mrb[0].mxu0
    %v5068 = vadd.f32 0.0, %v5067
    %v5069 = vpop.f32.mrb[0].mxu0
    %5070 = vmatprep.mubr.bf16.mxu0 0
    %5071 = vmatmul.mubr.bf16.gmra.mrb[0].mxu0 %v4987
    %v5072 = vpop.f32.mrb[0].mxu0
    %v5073 = vadd.f32 0.0, %v5072
    %v5074 = vpop.f32.mrb[0].mxu0
    %v5075 = vpop.f32.mrb[0].mxu0
    %v5076 = vadd.f32 0.0, %v5075
    %v5077 = vpop.f32.mrb[0].mxu0
    %5078 = vmatprep.mubr.bf16.mxu0 0
    %5079 = vmatmul.mubr.bf16.gmra.mrb[0].mxu0 %v4990
    %v5080 = vpop.f32.mrb[0].mxu0
    %v5081 = vadd.f32 0.0, %v5080
    %v5082 = vpop.f32.mrb[0].mxu0
    %v5083 = vpop.f32.mrb[0].mxu0
    %v5084 = vadd.f32 0.0, %v5083
    %v5085 = vpop.f32.mrb[0].mxu0
    %5086 = vmatprep.mubr.bf16.mxu0 0
    %5087 = vmatmul.mubr.bf16.gmra.mrb[0].mxu0 %v4993
    %v5088 = vpop.f32.mrb[0].mxu0
    %v5089 = vadd.f32 0.0, %v5088
    %v5090 = vpop.f32.mrb[0].mxu0
    %v5091 = vpop.f32.mrb[0].mxu0
    %v5092 = vadd.f32 0.0, %v5091
    %v5093 = vpop.f32.mrb[0].mxu0
    %5094 = vdwg.mxu0
    %v5095 = vadd.f32 %v4558, %v5033
    %v5096 = vadd.f32 %v4559, %v5036
    %v5097 = vadd.f32 %v4560, %v5041
    %v5098 = vadd.f32 %v4561, %v5044
    %v5099 = vadd.f32 %v4562, %v5049
    %v5100 = vadd.f32 %v4563, %v5052
    %v5101 = vadd.f32 %v4564, %v5057
    %v5102 = vadd.f32 %v4565, %v5060
    %v5103 = vadd.f32 %v4566, %v5065
    %v5104 = vadd.f32 %v4567, %v5068
    %v5105 = vadd.f32 %v4568, %v5073
    %v5106 = vadd.f32 %v4569, %v5076
    %v5107 = vadd.f32 %v4570, %v5081
    %v5108 = vadd.f32 %v4571, %v5084
    %v5109 = vadd.f32 %v4572, %v5089
    %v5110 = vadd.f32 %v4573, %v5092
    %v5111 = vld [vmem:[%s3] sm:$0x1]
    %v5113 = vlaneseq
    %v5114 = vshrl.u32 %v5113, 7
    %v5115 = vsub.s32 0, %v5114
    %v5116 = vrot.slane %v5111, %v5115
    %v5118 = vadd.f32 %v5095, %v5116
    %v5119 = vadd.f32 %v5096, %v5116
    %v5120 = vadd.f32 %v5097, %v5116
    %v5121 = vadd.f32 %v5098, %v5116
    %v5122 = vadd.f32 %v5099, %v5116
    %v5123 = vadd.f32 %v5100, %v5116
    %v5124 = vadd.f32 %v5101, %v5116
    %v5125 = vadd.f32 %v5102, %v5116
    %v5126 = vadd.f32 %v5103, %v5116
    %v5127 = vadd.f32 %v5104, %v5116
    %v5128 = vadd.f32 %v5105, %v5116
    %v5129 = vadd.f32 %v5106, %v5116
    %v5130 = vadd.f32 %v5107, %v5116
    %v5131 = vadd.f32 %v5108, %v5116
    %v5132 = vadd.f32 %v5109, %v5116
    %v5133 = vadd.f32 %v5110, %v5116
    %v5134 = vmax.f32 %v5118, 0.0
    %v5135 = vmax.f32 %v5119, 0.0
    %v5136 = vmax.f32 %v5120, 0.0
    %v5137 = vmax.f32 %v5121, 0.0
    %v5138 = vmax.f32 %v5122, 0.0
    %v5139 = vmax.f32 %v5123, 0.0
    %v5140 = vmax.f32 %v5124, 0.0
    %v5141 = vmax.f32 %v5125, 0.0
    %v5142 = vmax.f32 %v5126, 0.0
    %v5143 = vmax.f32 %v5127, 0.0
    %v5144 = vmax.f32 %v5128, 0.0
    %v5145 = vmax.f32 %v5129, 0.0
    %v5146 = vmax.f32 %v5130, 0.0
    %v5147 = vmax.f32 %v5131, 0.0
    %v5148 = vmax.f32 %v5132, 0.0
    %v5149 = vmax.f32 %v5133, 0.0
    %vm5150 = vcmask 64512
    %5151 = vst.msk [vmem:[%s13] sm:$0xff] %vm5150, %v5134
    %5152 = vst.msk [vmem:[%s13 + $0x8] sm:$0xff] %vm5150, %v5135
    %5153 = vst.msk [vmem:[%s13 + $0x10] sm:$0xff] %vm5150, %v5136
    %5154 = vst.msk [vmem:[%s13 + $0x18] sm:$0xff] %vm5150, %v5137
    %5155 = vst.msk [vmem:[%s13 + $0x20] sm:$0xff] %vm5150, %v5138
    %5156 = vst.msk [vmem:[%s13 + $0x28] sm:$0xff] %vm5150, %v5139
    %5157 = vst.msk [vmem:[%s13 + $0x30] sm:$0xff] %vm5150, %v5140
    %5158 = vst.msk [vmem:[%s13 + $0x38] sm:$0xff] %vm5150, %v5141
    %5159 = vst.msk [vmem:[%s13 + $0x40] sm:$0xff] %vm5150, %v5142
    %5160 = vst.msk [vmem:[%s13 + $0x48] sm:$0xff] %vm5150, %v5143
    %5161 = vst.msk [vmem:[%s13 + $0x50] sm:$0xff] %vm5150, %v5144
    %5162 = vst.msk [vmem:[%s13 + $0x58] sm:$0xff] %vm5150, %v5145
    %5163 = vst.msk [vmem:[%s13 + $0x60] sm:$0xff] %vm5150, %v5146
    %5164 = vst.msk [vmem:[%s13 + $0x68] sm:$0xff] %vm5150, %v5147
    %5165 = vst.msk [vmem:[%s13 + $0x70] sm:$0xff] %vm5150, %v5148
    %5166 = vst.msk [vmem:[%s13 + $0x78] sm:$0xff] %vm5150, %v5149
    %v5167 = vpack.c.bf16 %v5135, %v5134
    %v5168 = vpack.c.bf16 %v5137, %v5136
    %v5169 = vpack.c.bf16 %v5139, %v5138
    %v5170 = vpack.c.bf16 %v5141, %v5140
    %v5171 = vpack.c.bf16 %v5143, %v5142
    %v5172 = vpack.c.bf16 %v5145, %v5144
    %v5173 = vpack.c.bf16 %v5147, %v5146
    %v5174 = vpack.c.bf16 %v5149, %v5148
    %v5175 = vld [vmem:[%s4] sm:$0xf]
    %v5176 = vld [vmem:[%s4 + $0x4] sm:$0xf]
    %v5177 = vld [vmem:[%s4 + $0x8] sm:$0xf]
    %v5178 = vld [vmem:[%s4 + $0xc] sm:$0xf]
    %v5183 = vunpack.c.l.b16 %v5175
    %v5184 = vunpack.c.l.b16 %v5176
    %v5185 = vunpack.c.l.b16 %v5177
    %v5186 = vunpack.c.l.b16 %v5178
    %v5187 = vpack.c.b16 %v5184, %v5183
    %v5188 = vpack.c.b16 %v5186, %v5185
    %5191 = vmatprep.subr.bf16.mxu0 0
    %5192 = vmatpush1.bf16.msra.mxu0 %v5167
    %5193 = vmatprep.subr.bf16.mxu0 0
    %5194 = vmatpush1.bf16.msra.mxu0 %v5168
    %5195 = vmatprep.subr.bf16.mxu0 0
    %5196 = vmatpush1.bf16.msra.mxu0 %v5169
    %5197 = vmatprep.subr.bf16.mxu0 0
    %5198 = vmatpush1.bf16.msra.mxu0 %v5170
    %5199 = vmatprep.subr.bf16.mxu0 0
    %5200 = vmatpush1.bf16.msra.mxu0 %v5171
    %5201 = vmatprep.subr.bf16.mxu0 0
    %5202 = vmatpush1.bf16.msra.mxu0 %v5172
    %5203 = vmatprep.subr.bf16.mxu0 0
    %5204 = vmatpush1.bf16.msra.mxu0 %v5173
    %5205 = vmatprep.subr.bf16.mxu0 0
    %5206 = vmatpush1.bf16.msra.mxu0 %v5174
    %5207 = vmatprep.subr.bf16.mxu0 0
    %5208 = vmatpush1.bf16.msra.mxu0 0
    %5209 = vmatprep.subr.bf16.mxu0 0
    %5210 = vmatpush1.bf16.msra.mxu0 0
    %5211 = vmatprep.subr.bf16.mxu0 0
    %5212 = vmatpush1.bf16.msra.mxu0 0
    %5213 = vmatprep.subr.bf16.mxu0 0
    %5214 = vmatpush1.bf16.msra.mxu0 0
    %5215 = vmatprep.subr.bf16.mxu0 0
    %5216 = vmatpush1.bf16.msra.mxu0 0
    %5217 = vmatprep.subr.bf16.mxu0 0
    %5218 = vmatpush1.bf16.msra.mxu0 0
    %5219 = vmatprep.subr.bf16.mxu0 0
    %5220 = vmatpush1.bf16.msra.mxu0 0
    %5221 = vmatprep.subr.bf16.mxu0 0
    %5222 = vmatpush1.bf16.msra.mxu0 0
    %5223 = vmatprep.mubr.bf16.mxu0 0
    %5224 = vmatmul.mubr.bf16.gmra.mrb[0].mxu0 %v5187
    %v5225 = vpop.f32.mrb[0].mxu0
    %v5226 = vadd.f32 0.0, %v5225
    %v5227 = vpop.f32.mrb[0].mxu0
    %v5228 = vpop.f32.mrb[0].mxu0
    %v5229 = vadd.f32 0.0, %v5228
    %v5230 = vpop.f32.mrb[0].mxu0
    %5231 = vmatprep.mubr.bf16.mxu0 0
    %5232 = vmatmul.mubr.bf16.gmra.mrb[0].mxu0 %v5188
    %v5233 = vpop.f32.mrb[0].mxu0
    %v5234 = vadd.f32 0.0, %v5233
    %v5235 = vpop.f32.mrb[0].mxu0
    %v5236 = vpop.f32.mrb[0].mxu0
    %v5237 = vadd.f32 0.0, %v5236
    %v5238 = vpop.f32.mrb[0].mxu0
    %5239 = vdwg.mxu0
    %v5240 = vpack.c.bf16 %v5229, %v5226
    %v5241 = vpack.c.bf16 %v5237, %v5234
    %v5242 = vld [vmem:[%s5] sm:$0xf]
    %s5243 = scalar_lea.vmem %s4, 16
    %v5244 = vld [vmem:[%s5243] sm:$0xf]
    %v5245 = vld [vmem:[%s5243 + $0x4] sm:$0xf]
    %v5246 = vld [vmem:[%s5243 + $0x8] sm:$0xf]
    %v5247 = vld [vmem:[%s5243 + $0xc] sm:$0xf]
    %v5252 = vunpack.c.l.b16 %v5244
    %v5253 = vunpack.c.l.b16 %v5245
    %v5254 = vunpack.c.l.b16 %v5246
    %v5255 = vunpack.c.l.b16 %v5247
    %v5256 = vpack.c.b16 %v5253, %v5252
    %v5257 = vpack.c.b16 %v5255, %v5254
    %5260 = vmatprep.subr.bf16.mxu0 0
    %5261 = vmatpush1.bf16.msra.mxu0 %v5167
    %5262 = vmatprep.subr.bf16.mxu0 0
    %5263 = vmatpush1.bf16.msra.mxu0 %v5168
    %5264 = vmatprep.subr.bf16.mxu0 0
    %5265 = vmatpush1.bf16.msra.mxu0 %v5169
    %5266 = vmatprep.subr.bf16.mxu0 0
    %5267 = vmatpush1.bf16.msra.mxu0 %v5170
    %5268 = vmatprep.subr.bf16.mxu0 0
    %5269 = vmatpush1.bf16.msra.mxu0 %v5171
    %5270 = vmatprep.subr.bf16.mxu0 0
    %5271 = vmatpush1.bf16.msra.mxu0 %v5172
    %5272 = vmatprep.subr.bf16.mxu0 0
    %5273 = vmatpush1.bf16.msra.mxu0 %v5173
    %5274 = vmatprep.subr.bf16.mxu0 0
    %5275 = vmatpush1.bf16.msra.mxu0 %v5174
    %5276 = vmatprep.subr.bf16.mxu0 0
    %5277 = vmatpush1.bf16.msra.mxu0 0
    %5278 = vmatprep.subr.bf16.mxu0 0
    %5279 = vmatpush1.bf16.msra.mxu0 0
    %5280 = vmatprep.subr.bf16.mxu0 0
    %5281 = vmatpush1.bf16.msra.mxu0 0
    %5282 = vmatprep.subr.bf16.mxu0 0
    %5283 = vmatpush1.bf16.msra.mxu0 0
    %5284 = vmatprep.subr.bf16.mxu0 0
    %5285 = vmatpush1.bf16.msra.mxu0 0
    %5286 = vmatprep.subr.bf16.mxu0 0
    %5287 = vmatpush1.bf16.msra.mxu0 0
    %5288 = vmatprep.subr.bf16.mxu0 0
    %5289 = vmatpush1.bf16.msra.mxu0 0
    %5290 = vmatprep.subr.bf16.mxu0 0
    %5291 = vmatpush1.bf16.msra.mxu0 0
    %5292 = vmatprep.mubr.bf16.mxu0 0
    %5293 = vmatmul.mubr.bf16.gmra.mrb[0].mxu0 %v5256
    %v5294 = vpop.f32.mrb[0].mxu0
    %v5295 = vadd.f32 0.0, %v5294
    %v5296 = vpop.f32.mrb[0].mxu0
    %v5297 = vpop.f32.mrb[0].mxu0
    %v5298 = vadd.f32 0.0, %v5297
    %v5299 = vpop.f32.mrb[0].mxu0
    %5300 = vmatprep.mubr.bf16.mxu0 0
    %5301 = vmatmul.mubr.bf16.gmra.mrb[0].mxu0 %v5257
    %v5302 = vpop.f32.mrb[0].mxu0
    %v5303 = vadd.f32 0.0, %v5302
    %v5304 = vpop.f32.mrb[0].mxu0
    %v5305 = vpop.f32.mrb[0].mxu0
    %v5306 = vadd.f32 0.0, %v5305
    %v5307 = vpop.f32.mrb[0].mxu0
    %5308 = vdwg.mxu0
    %v5309 = vpack.c.bf16 %v5298, %v5295
    %v5310 = vpack.c.bf16 %v5306, %v5303
    %s5311 = scalar_lea.vmem %s5, 4
    %v5312 = vld [vmem:[%s5311] sm:$0xf]
    %v5314 = vsel %vm5150, %v5309, 0
    %v5317 = vsel %vm5150, %v5310, 0
    %vm5319 = vcmask 1043456
    %v5321 = vsel %vm5319, %v5312, 0
    %5323 = vmatprep.subr.bf16.mxu0 0
    %5324 = vmatpush1.bf16.msra.mxu0 %v5321
    %5325 = vmatprep.subr.bf16.mxu0 0
    %5326 = vmatpush1.bf16.msra.mxu0 0
    %5327 = vmatprep.subr.bf16.mxu0 0
    %5328 = vmatpush1.bf16.msra.mxu0 0
    %5329 = vmatprep.subr.bf16.mxu0 0
    %5330 = vmatpush1.bf16.msra.mxu0 0
    %5331 = vmatprep.subr.bf16.mxu0 0
    %5332 = vmatpush1.bf16.msra.mxu0 0
    %5333 = vmatprep.subr.bf16.mxu0 0
    %5334 = vmatpush1.bf16.msra.mxu0 0
    %5335 = vmatprep.subr.bf16.mxu0 0
    %5336 = vmatpush1.bf16.msra.mxu0 0
    %5337 = vmatprep.subr.bf16.mxu0 0
    %5338 = vmatpush1.bf16.msra.mxu0 0
    %5339 = vmatprep.subr.bf16.mxu0 0
    %5340 = vmatpush1.bf16.msra.mxu0 0
    %5341 = vmatprep.subr.bf16.mxu0 0
    %5342 = vmatpush1.bf16.msra.mxu0 0
    %5343 = vmatprep.subr.bf16.mxu0 0
    %5344 = vmatpush1.bf16.msra.mxu0 0
    %5345 = vmatprep.subr.bf16.mxu0 0
    %5346 = vmatpush1.bf16.msra.mxu0 0
    %5347 = vmatprep.subr.bf16.mxu0 0
    %5348 = vmatpush1.bf16.msra.mxu0 0
    %5349 = vmatprep.subr.bf16.mxu0 0
    %5350 = vmatpush1.bf16.msra.mxu0 0
    %5351 = vmatprep.subr.bf16.mxu0 0
    %5352 = vmatpush1.bf16.msra.mxu0 0
    %5353 = vmatprep.subr.bf16.mxu0 0
    %5354 = vmatpush1.bf16.msra.mxu0 0
    %5355 = vmatprep.mubr.bf16.mxu0 0
    %5356 = vmatmul.mubr.bf16.gmra.mrb[0].mxu0 %v5314
    %v5357 = vpop.f32.mrb[0].mxu0
    %v5358 = vadd.f32 0.0, %v5357
    %v5359 = vpop.f32.mrb[0].mxu0
    %v5360 = vpop.f32.mrb[0].mxu0
    %v5361 = vadd.f32 0.0, %v5360
    %v5362 = vpop.f32.mrb[0].mxu0
    %5363 = vmatprep.mubr.bf16.mxu0 0
    %5364 = vmatmul.mubr.bf16.gmra.mrb[0].mxu0 %v5317
    %v5365 = vpop.f32.mrb[0].mxu0
    %v5366 = vadd.f32 0.0, %v5365
    %v5367 = vpop.f32.mrb[0].mxu0
    %v5368 = vpop.f32.mrb[0].mxu0
    %v5369 = vadd.f32 0.0, %v5368
    %v5370 = vpop.f32.mrb[0].mxu0
    %5371 = vdwg.mxu0
    %v5373 = vsel %vm5150, %v5240, 0
    %v5376 = vsel %vm5150, %v5241, 0
    %v5379 = vsel %vm5319, %v5242, 0
    %5381 = vmatprep.subr.bf16.mxu0 0
    %5382 = vmatpush1.bf16.msra.mxu0 %v5379
    %5383 = vmatprep.subr.bf16.mxu0 0
    %5384 = vmatpush1.bf16.msra.mxu0 0
    %5385 = vmatprep.subr.bf16.mxu0 0
    %5386 = vmatpush1.bf16.msra.mxu0 0
    %5387 = vmatprep.subr.bf16.mxu0 0
    %5388 = vmatpush1.bf16.msra.mxu0 0
    %5389 = vmatprep.subr.bf16.mxu0 0
    %5390 = vmatpush1.bf16.msra.mxu0 0
    %5391 = vmatprep.subr.bf16.mxu0 0
    %5392 = vmatpush1.bf16.msra.mxu0 0
    %5393 = vmatprep.subr.bf16.mxu0 0
    %5394 = vmatpush1.bf16.msra.mxu0 0
    %5395 = vmatprep.subr.bf16.mxu0 0
    %5396 = vmatpush1.bf16.msra.mxu0 0
    %5397 = vmatprep.subr.bf16.mxu0 0
    %5398 = vmatpush1.bf16.msra.mxu0 0
    %5399 = vmatprep.subr.bf16.mxu0 0
    %5400 = vmatpush1.bf16.msra.mxu0 0
    %5401 = vmatprep.subr.bf16.mxu0 0
    %5402 = vmatpush1.bf16.msra.mxu0 0
    %5403 = vmatprep.subr.bf16.mxu0 0
    %5404 = vmatpush1.bf16.msra.mxu0 0
    %5405 = vmatprep.subr.bf16.mxu0 0
    %5406 = vmatpush1.bf16.msra.mxu0 0
    %5407 = vmatprep.subr.bf16.mxu0 0
    %5408 = vmatpush1.bf16.msra.mxu0 0
    %5409 = vmatprep.subr.bf16.mxu0 0
    %5410 = vmatpush1.bf16.msra.mxu0 0
    %5411 = vmatprep.subr.bf16.mxu0 0
    %5412 = vmatpush1.bf16.msra.mxu0 0
    %5413 = vmatprep.mubr.bf16.mxu0 0
    %5414 = vmatmul.mubr.bf16.gmra.mrb[0].mxu0 %v5373
    %v5415 = vpop.f32.mrb[0].mxu0
    %v5416 = vadd.f32 %v5358, %v5415
    %v5417 = vpop.f32.mrb[0].mxu0
    %v5418 = vpop.f32.mrb[0].mxu0
    %v5419 = vadd.f32 %v5361, %v5418
    %v5420 = vpop.f32.mrb[0].mxu0
    %5421 = vmatprep.mubr.bf16.mxu0 0
    %5422 = vmatmul.mubr.bf16.gmra.mrb[0].mxu0 %v5376
    %v5423 = vpop.f32.mrb[0].mxu0
    %v5424 = vadd.f32 %v5366, %v5423
    %v5425 = vpop.f32.mrb[0].mxu0
    %v5426 = vpop.f32.mrb[0].mxu0
    %v5427 = vadd.f32 %v5369, %v5426
    %v5428 = vpop.f32.mrb[0].mxu0
    %5429 = vdwg.mxu0
    %s5430 = scalar_lea.vmem %s4, 32
    %v5431 = vld [vmem:[%s5430] sm:$0xf]
    %v5432 = vld [vmem:[%s5430 + $0x4] sm:$0xf]
    %v5433 = vld [vmem:[%s5430 + $0x8] sm:$0xf]
    %v5434 = vld [vmem:[%s5430 + $0xc] sm:$0xf]
    %v5439 = vunpack.c.l.b16 %v5431
    %v5440 = vunpack.c.l.b16 %v5432
    %v5441 = vunpack.c.l.b16 %v5433
    %v5442 = vunpack.c.l.b16 %v5434
    %v5443 = vpack.c.b16 %v5440, %v5439
    %v5444 = vpack.c.b16 %v5442, %v5441
    %5447 = vmatprep.subr.bf16.mxu0 0
    %5448 = vmatpush1.bf16.msra.mxu0 %v5167
    %5449 = vmatprep.subr.bf16.mxu0 0
    %5450 = vmatpush1.bf16.msra.mxu0 %v5168
    %5451 = vmatprep.subr.bf16.mxu0 0
    %5452 = vmatpush1.bf16.msra.mxu0 %v5169
    %5453 = vmatprep.subr.bf16.mxu0 0
    %5454 = vmatpush1.bf16.msra.mxu0 %v5170
    %5455 = vmatprep.subr.bf16.mxu0 0
    %5456 = vmatpush1.bf16.msra.mxu0 %v5171
    %5457 = vmatprep.subr.bf16.mxu0 0
    %5458 = vmatpush1.bf16.msra.mxu0 %v5172
    %5459 = vmatprep.subr.bf16.mxu0 0
    %5460 = vmatpush1.bf16.msra.mxu0 %v5173
    %5461 = vmatprep.subr.bf16.mxu0 0
    %5462 = vmatpush1.bf16.msra.mxu0 %v5174
    %5463 = vmatprep.subr.bf16.mxu0 0
    %5464 = vmatpush1.bf16.msra.mxu0 0
    %5465 = vmatprep.subr.bf16.mxu0 0
    %5466 = vmatpush1.bf16.msra.mxu0 0
    %5467 = vmatprep.subr.bf16.mxu0 0
    %5468 = vmatpush1.bf16.msra.mxu0 0
    %5469 = vmatprep.subr.bf16.mxu0 0
    %5470 = vmatpush1.bf16.msra.mxu0 0
    %5471 = vmatprep.subr.bf16.mxu0 0
    %5472 = vmatpush1.bf16.msra.mxu0 0
    %5473 = vmatprep.subr.bf16.mxu0 0
    %5474 = vmatpush1.bf16.msra.mxu0 0
    %5475 = vmatprep.subr.bf16.mxu0 0
    %5476 = vmatpush1.bf16.msra.mxu0 0
    %5477 = vmatprep.subr.bf16.mxu0 0
    %5478 = vmatpush1.bf16.msra.mxu0 0
    %5479 = vmatprep.mubr.bf16.mxu0 0
    %5480 = vmatmul.mubr.bf16.gmra.mrb[0].mxu0 %v5443
    %v5481 = vpop.f32.mrb[0].mxu0
    %v5482 = vadd.f32 0.0, %v5481
    %v5483 = vpop.f32.mrb[0].mxu0
    %v5484 = vpop.f32.mrb[0].mxu0
    %v5485 = vadd.f32 0.0, %v5484
    %v5486 = vpop.f32.mrb[0].mxu0
    %5487 = vmatprep.mubr.bf16.mxu0 0
    %5488 = vmatmul.mubr.bf16.gmra.mrb[0].mxu0 %v5444
    %v5489 = vpop.f32.mrb[0].mxu0
    %v5490 = vadd.f32 0.0, %v5489
    %v5491 = vpop.f32.mrb[0].mxu0
    %v5492 = vpop.f32.mrb[0].mxu0
    %v5493 = vadd.f32 0.0, %v5492
    %v5494 = vpop.f32.mrb[0].mxu0
    %5495 = vdwg.mxu0
    %v5496 = vpack.c.bf16 %v5485, %v5482
    %v5497 = vpack.c.bf16 %v5493, %v5490
    %s5498 = scalar_lea.vmem %s5, 8
    %v5499 = vld [vmem:[%s5498] sm:$0xf]
    %v5501 = vsel %vm5150, %v5496, 0
    %v5504 = vsel %vm5150, %v5497, 0
    %v5507 = vsel %vm5319, %v5499, 0
    %5509 = vmatprep.subr.bf16.mxu0 0
    %5510 = vmatpush1.bf16.msra.mxu0 %v5507
    %5511 = vmatprep.subr.bf16.mxu0 0
    %5512 = vmatpush1.bf16.msra.mxu0 0
    %5513 = vmatprep.subr.bf16.mxu0 0
    %5514 = vmatpush1.bf16.msra.mxu0 0
    %5515 = vmatprep.subr.bf16.mxu0 0
    %5516 = vmatpush1.bf16.msra.mxu0 0
    %5517 = vmatprep.subr.bf16.mxu0 0
    %5518 = vmatpush1.bf16.msra.mxu0 0
    %5519 = vmatprep.subr.bf16.mxu0 0
    %5520 = vmatpush1.bf16.msra.mxu0 0
    %5521 = vmatprep.subr.bf16.mxu0 0
    %5522 = vmatpush1.bf16.msra.mxu0 0
    %5523 = vmatprep.subr.bf16.mxu0 0
    %5524 = vmatpush1.bf16.msra.mxu0 0
    %5525 = vmatprep.subr.bf16.mxu0 0
    %5526 = vmatpush1.bf16.msra.mxu0 0
    %5527 = vmatprep.subr.bf16.mxu0 0
    %5528 = vmatpush1.bf16.msra.mxu0 0
    %5529 = vmatprep.subr.bf16.mxu0 0
    %5530 = vmatpush1.bf16.msra.mxu0 0
    %5531 = vmatprep.subr.bf16.mxu0 0
    %5532 = vmatpush1.bf16.msra.mxu0 0
    %5533 = vmatprep.subr.bf16.mxu0 0
    %5534 = vmatpush1.bf16.msra.mxu0 0
    %5535 = vmatprep.subr.bf16.mxu0 0
    %5536 = vmatpush1.bf16.msra.mxu0 0
    %5537 = vmatprep.subr.bf16.mxu0 0
    %5538 = vmatpush1.bf16.msra.mxu0 0
    %5539 = vmatprep.subr.bf16.mxu0 0
    %5540 = vmatpush1.bf16.msra.mxu0 0
    %5541 = vmatprep.mubr.bf16.mxu0 0
    %5542 = vmatmul.mubr.bf16.gmra.mrb[0].mxu0 %v5501
    %v5543 = vpop.f32.mrb[0].mxu0
    %v5544 = vadd.f32 0.0, %v5543
    %v5545 = vpop.f32.mrb[0].mxu0
    %v5546 = vpop.f32.mrb[0].mxu0
    %v5547 = vadd.f32 0.0, %v5546
    %v5548 = vpop.f32.mrb[0].mxu0
    %5549 = vmatprep.mubr.bf16.mxu0 0
    %5550 = vmatmul.mubr.bf16.gmra.mrb[0].mxu0 %v5504
    %v5551 = vpop.f32.mrb[0].mxu0
    %v5552 = vadd.f32 0.0, %v5551
    %v5553 = vpop.f32.mrb[0].mxu0
    %v5554 = vpop.f32.mrb[0].mxu0
    %v5555 = vadd.f32 0.0, %v5554
    %v5556 = vpop.f32.mrb[0].mxu0
    %5557 = vdwg.mxu0
    %v5558 = vadd.f32 %v5416, %v5544
    %v5559 = vadd.f32 %v5419, %v5547
    %v5560 = vadd.f32 %v5424, %v5552
    %v5561 = vadd.f32 %v5427, %v5555
    %s5562 = scalar_lea.vmem %s4, 48
    %v5563 = vld [vmem:[%s5562] sm:$0xf]
    %v5564 = vld [vmem:[%s5562 + $0x4] sm:$0xf]
    %v5565 = vld [vmem:[%s5562 + $0x8] sm:$0xf]
    %v5566 = vld [vmem:[%s5562 + $0xc] sm:$0xf]
    %v5571 = vunpack.c.l.b16 %v5563
    %v5572 = vunpack.c.l.b16 %v5564
    %v5573 = vunpack.c.l.b16 %v5565
    %v5574 = vunpack.c.l.b16 %v5566
    %v5575 = vpack.c.b16 %v5572, %v5571
    %v5576 = vpack.c.b16 %v5574, %v5573
    %5579 = vmatprep.subr.bf16.mxu0 0
    %5580 = vmatpush1.bf16.msra.mxu0 %v5167
    %5581 = vmatprep.subr.bf16.mxu0 0
    %5582 = vmatpush1.bf16.msra.mxu0 %v5168
    %5583 = vmatprep.subr.bf16.mxu0 0
    %5584 = vmatpush1.bf16.msra.mxu0 %v5169
    %5585 = vmatprep.subr.bf16.mxu0 0
    %5586 = vmatpush1.bf16.msra.mxu0 %v5170
    %5587 = vmatprep.subr.bf16.mxu0 0
    %5588 = vmatpush1.bf16.msra.mxu0 %v5171
    %5589 = vmatprep.subr.bf16.mxu0 0
    %5590 = vmatpush1.bf16.msra.mxu0 %v5172
    %5591 = vmatprep.subr.bf16.mxu0 0
    %5592 = vmatpush1.bf16.msra.mxu0 %v5173
    %5593 = vmatprep.subr.bf16.mxu0 0
    %5594 = vmatpush1.bf16.msra.mxu0 %v5174
    %5595 = vmatprep.subr.bf16.mxu0 0
    %5596 = vmatpush1.bf16.msra.mxu0 0
    %5597 = vmatprep.subr.bf16.mxu0 0
    %5598 = vmatpush1.bf16.msra.mxu0 0
    %5599 = vmatprep.subr.bf16.mxu0 0
    %5600 = vmatpush1.bf16.msra.mxu0 0
    %5601 = vmatprep.subr.bf16.mxu0 0
    %5602 = vmatpush1.bf16.msra.mxu0 0
    %5603 = vmatprep.subr.bf16.mxu0 0
    %5604 = vmatpush1.bf16.msra.mxu0 0
    %5605 = vmatprep.subr.bf16.mxu0 0
    %5606 = vmatpush1.bf16.msra.mxu0 0
    %5607 = vmatprep.subr.bf16.mxu0 0
    %5608 = vmatpush1.bf16.msra.mxu0 0
    %5609 = vmatprep.subr.bf16.mxu0 0
    %5610 = vmatpush1.bf16.msra.mxu0 0
    %5611 = vmatprep.mubr.bf16.mxu0 0
    %5612 = vmatmul.mubr.bf16.gmra.mrb[0].mxu0 %v5575
    %v5613 = vpop.f32.mrb[0].mxu0
    %v5614 = vadd.f32 0.0, %v5613
    %v5615 = vpop.f32.mrb[0].mxu0
    %v5616 = vpop.f32.mrb[0].mxu0
    %v5617 = vadd.f32 0.0, %v5616
    %v5618 = vpop.f32.mrb[0].mxu0
    %5619 = vmatprep.mubr.bf16.mxu0 0
    %5620 = vmatmul.mubr.bf16.gmra.mrb[0].mxu0 %v5576
    %v5621 = vpop.f32.mrb[0].mxu0
    %v5622 = vadd.f32 0.0, %v5621
    %v5623 = vpop.f32.mrb[0].mxu0
    %v5624 = vpop.f32.mrb[0].mxu0
    %v5625 = vadd.f32 0.0, %v5624
    %v5626 = vpop.f32.mrb[0].mxu0
    %5627 = vdwg.mxu0
    %v5628 = vpack.c.bf16 %v5617, %v5614
    %v5629 = vpack.c.bf16 %v5625, %v5622
    %s5630 = scalar_lea.vmem %s5, 12
    %v5631 = vld [vmem:[%s5630] sm:$0xf]
    %v5633 = vsel %vm5150, %v5628, 0
    %v5636 = vsel %vm5150, %v5629, 0
    %v5639 = vsel %vm5319, %v5631, 0
    %5641 = vmatprep.subr.bf16.mxu0 0
    %5642 = vmatpush1.bf16.msra.mxu0 %v5639
    %5643 = vmatprep.subr.bf16.mxu0 0
    %5644 = vmatpush1.bf16.msra.mxu0 0
    %5645 = vmatprep.subr.bf16.mxu0 0
    %5646 = vmatpush1.bf16.msra.mxu0 0
    %5647 = vmatprep.subr.bf16.mxu0 0
    %5648 = vmatpush1.bf16.msra.mxu0 0
    %5649 = vmatprep.subr.bf16.mxu0 0
    %5650 = vmatpush1.bf16.msra.mxu0 0
    %5651 = vmatprep.subr.bf16.mxu0 0
    %5652 = vmatpush1.bf16.msra.mxu0 0
    %5653 = vmatprep.subr.bf16.mxu0 0
    %5654 = vmatpush1.bf16.msra.mxu0 0
    %5655 = vmatprep.subr.bf16.mxu0 0
    %5656 = vmatpush1.bf16.msra.mxu0 0
    %5657 = vmatprep.subr.bf16.mxu0 0
    %5658 = vmatpush1.bf16.msra.mxu0 0
    %5659 = vmatprep.subr.bf16.mxu0 0
    %5660 = vmatpush1.bf16.msra.mxu0 0
    %5661 = vmatprep.subr.bf16.mxu0 0
    %5662 = vmatpush1.bf16.msra.mxu0 0
    %5663 = vmatprep.subr.bf16.mxu0 0
    %5664 = vmatpush1.bf16.msra.mxu0 0
    %5665 = vmatprep.subr.bf16.mxu0 0
    %5666 = vmatpush1.bf16.msra.mxu0 0
    %5667 = vmatprep.subr.bf16.mxu0 0
    %5668 = vmatpush1.bf16.msra.mxu0 0
    %5669 = vmatprep.subr.bf16.mxu0 0
    %5670 = vmatpush1.bf16.msra.mxu0 0
    %5671 = vmatprep.subr.bf16.mxu0 0
    %5672 = vmatpush1.bf16.msra.mxu0 0
    %5673 = vmatprep.mubr.bf16.mxu0 0
    %5674 = vmatmul.mubr.bf16.gmra.mrb[0].mxu0 %v5633
    %v5675 = vpop.f32.mrb[0].mxu0
    %v5676 = vadd.f32 0.0, %v5675
    %v5677 = vpop.f32.mrb[0].mxu0
    %v5678 = vpop.f32.mrb[0].mxu0
    %v5679 = vadd.f32 0.0, %v5678
    %v5680 = vpop.f32.mrb[0].mxu0
    %5681 = vmatprep.mubr.bf16.mxu0 0
    %5682 = vmatmul.mubr.bf16.gmra.mrb[0].mxu0 %v5636
    %v5683 = vpop.f32.mrb[0].mxu0
    %v5684 = vadd.f32 0.0, %v5683
    %v5685 = vpop.f32.mrb[0].mxu0
    %v5686 = vpop.f32.mrb[0].mxu0
    %v5687 = vadd.f32 0.0, %v5686
    %v5688 = vpop.f32.mrb[0].mxu0
    %5689 = vdwg.mxu0
    %v5690 = vadd.f32 %v5558, %v5676
    %v5691 = vadd.f32 %v5559, %v5679
    %v5692 = vadd.f32 %v5560, %v5684
    %v5693 = vadd.f32 %v5561, %v5687
    %s5694 = scalar_lea.vmem %s4, 64
    %v5695 = vld [vmem:[%s5694] sm:$0xf]
    %v5696 = vld [vmem:[%s5694 + $0x4] sm:$0xf]
    %v5697 = vld [vmem:[%s5694 + $0x8] sm:$0xf]
    %v5698 = vld [vmem:[%s5694 + $0xc] sm:$0xf]
    %v5703 = vunpack.c.l.b16 %v5695
    %v5704 = vunpack.c.l.b16 %v5696
    %v5705 = vunpack.c.l.b16 %v5697
    %v5706 = vunpack.c.l.b16 %v5698
    %v5707 = vpack.c.b16 %v5704, %v5703
    %v5708 = vpack.c.b16 %v5706, %v5705
    %5711 = vmatprep.subr.bf16.mxu0 0
    %5712 = vmatpush1.bf16.msra.mxu0 %v5167
    %5713 = vmatprep.subr.bf16.mxu0 0
    %5714 = vmatpush1.bf16.msra.mxu0 %v5168
    %5715 = vmatprep.subr.bf16.mxu0 0
    %5716 = vmatpush1.bf16.msra.mxu0 %v5169
    %5717 = vmatprep.subr.bf16.mxu0 0
    %5718 = vmatpush1.bf16.msra.mxu0 %v5170
    %5719 = vmatprep.subr.bf16.mxu0 0
    %5720 = vmatpush1.bf16.msra.mxu0 %v5171
    %5721 = vmatprep.subr.bf16.mxu0 0
    %5722 = vmatpush1.bf16.msra.mxu0 %v5172
    %5723 = vmatprep.subr.bf16.mxu0 0
    %5724 = vmatpush1.bf16.msra.mxu0 %v5173
    %5725 = vmatprep.subr.bf16.mxu0 0
    %5726 = vmatpush1.bf16.msra.mxu0 %v5174
    %5727 = vmatprep.subr.bf16.mxu0 0
    %5728 = vmatpush1.bf16.msra.mxu0 0
    %5729 = vmatprep.subr.bf16.mxu0 0
    %5730 = vmatpush1.bf16.msra.mxu0 0
    %5731 = vmatprep.subr.bf16.mxu0 0
    %5732 = vmatpush1.bf16.msra.mxu0 0
    %5733 = vmatprep.subr.bf16.mxu0 0
    %5734 = vmatpush1.bf16.msra.mxu0 0
    %5735 = vmatprep.subr.bf16.mxu0 0
    %5736 = vmatpush1.bf16.msra.mxu0 0
    %5737 = vmatprep.subr.bf16.mxu0 0
    %5738 = vmatpush1.bf16.msra.mxu0 0
    %5739 = vmatprep.subr.bf16.mxu0 0
    %5740 = vmatpush1.bf16.msra.mxu0 0
    %5741 = vmatprep.subr.bf16.mxu0 0
    %5742 = vmatpush1.bf16.msra.mxu0 0
    %5743 = vmatprep.mubr.bf16.mxu0 0
    %5744 = vmatmul.mubr.bf16.gmra.mrb[0].mxu0 %v5707
    %v5745 = vpop.f32.mrb[0].mxu0
    %v5746 = vadd.f32 0.0, %v5745
    %v5747 = vpop.f32.mrb[0].mxu0
    %v5748 = vpop.f32.mrb[0].mxu0
    %v5749 = vadd.f32 0.0, %v5748
    %v5750 = vpop.f32.mrb[0].mxu0
    %5751 = vmatprep.mubr.bf16.mxu0 0
    %5752 = vmatmul.mubr.bf16.gmra.mrb[0].mxu0 %v5708
    %v5753 = vpop.f32.mrb[0].mxu0
    %v5754 = vadd.f32 0.0, %v5753
    %v5755 = vpop.f32.mrb[0].mxu0
    %v5756 = vpop.f32.mrb[0].mxu0
    %v5757 = vadd.f32 0.0, %v5756
    %v5758 = vpop.f32.mrb[0].mxu0
    %5759 = vdwg.mxu0
    %v5760 = vpack.c.bf16 %v5749, %v5746
    %v5761 = vpack.c.bf16 %v5757, %v5754
    %s5762 = scalar_lea.vmem %s5, 16
    %v5763 = vld [vmem:[%s5762] sm:$0xf]
    %v5765 = vsel %vm5150, %v5760, 0
    %v5768 = vsel %vm5150, %v5761, 0
    %v5771 = vsel %vm5319, %v5763, 0
    %5773 = vmatprep.subr.bf16.mxu0 0
    %5774 = vmatpush1.bf16.msra.mxu0 %v5771
    %5775 = vmatprep.subr.bf16.mxu0 0
    %5776 = vmatpush1.bf16.msra.mxu0 0
    %5777 = vmatprep.subr.bf16.mxu0 0
    %5778 = vmatpush1.bf16.msra.mxu0 0
    %5779 = vmatprep.subr.bf16.mxu0 0
    %5780 = vmatpush1.bf16.msra.mxu0 0
    %5781 = vmatprep.subr.bf16.mxu0 0
    %5782 = vmatpush1.bf16.msra.mxu0 0
    %5783 = vmatprep.subr.bf16.mxu0 0
    %5784 = vmatpush1.bf16.msra.mxu0 0
    %5785 = vmatprep.subr.bf16.mxu0 0
    %5786 = vmatpush1.bf16.msra.mxu0 0
    %5787 = vmatprep.subr.bf16.mxu0 0
    %5788 = vmatpush1.bf16.msra.mxu0 0
    %5789 = vmatprep.subr.bf16.mxu0 0
    %5790 = vmatpush1.bf16.msra.mxu0 0
    %5791 = vmatprep.subr.bf16.mxu0 0
    %5792 = vmatpush1.bf16.msra.mxu0 0
    %5793 = vmatprep.subr.bf16.mxu0 0
    %5794 = vmatpush1.bf16.msra.mxu0 0
    %5795 = vmatprep.subr.bf16.mxu0 0
    %5796 = vmatpush1.bf16.msra.mxu0 0
    %5797 = vmatprep.subr.bf16.mxu0 0
    %5798 = vmatpush1.bf16.msra.mxu0 0
    %5799 = vmatprep.subr.bf16.mxu0 0
    %5800 = vmatpush1.bf16.msra.mxu0 0
    %5801 = vmatprep.subr.bf16.mxu0 0
    %5802 = vmatpush1.bf16.msra.mxu0 0
    %5803 = vmatprep.subr.bf16.mxu0 0
    %5804 = vmatpush1.bf16.msra.mxu0 0
    %5805 = vmatprep.mubr.bf16.mxu0 0
    %5806 = vmatmul.mubr.bf16.gmra.mrb[0].mxu0 %v5765
    %v5807 = vpop.f32.mrb[0].mxu0
    %v5808 = vadd.f32 0.0, %v5807
    %v5809 = vpop.f32.mrb[0].mxu0
    %v5810 = vpop.f32.mrb[0].mxu0
    %v5811 = vadd.f32 0.0, %v5810
    %v5812 = vpop.f32.mrb[0].mxu0
    %5813 = vmatprep.mubr.bf16.mxu0 0
    %5814 = vmatmul.mubr.bf16.gmra.mrb[0].mxu0 %v5768
    %v5815 = vpop.f32.mrb[0].mxu0
    %v5816 = vadd.f32 0.0, %v5815
    %v5817 = vpop.f32.mrb[0].mxu0
    %v5818 = vpop.f32.mrb[0].mxu0
    %v5819 = vadd.f32 0.0, %v5818
    %v5820 = vpop.f32.mrb[0].mxu0
    %5821 = vdwg.mxu0
    %v5822 = vadd.f32 %v5690, %v5808
    %v5823 = vadd.f32 %v5691, %v5811
    %v5824 = vadd.f32 %v5692, %v5816
    %v5825 = vadd.f32 %v5693, %v5819
    %s5826 = scalar_lea.vmem %s4, 80
    %v5827 = vld [vmem:[%s5826] sm:$0xf]
    %v5828 = vld [vmem:[%s5826 + $0x4] sm:$0xf]
    %v5829 = vld [vmem:[%s5826 + $0x8] sm:$0xf]
    %v5830 = vld [vmem:[%s5826 + $0xc] sm:$0xf]
    %v5835 = vunpack.c.l.b16 %v5827
    %v5836 = vunpack.c.l.b16 %v5828
    %v5837 = vunpack.c.l.b16 %v5829
    %v5838 = vunpack.c.l.b16 %v5830
    %v5839 = vpack.c.b16 %v5836, %v5835
    %v5840 = vpack.c.b16 %v5838, %v5837
    %5843 = vmatprep.subr.bf16.mxu0 0
    %5844 = vmatpush1.bf16.msra.mxu0 %v5167
    %5845 = vmatprep.subr.bf16.mxu0 0
    %5846 = vmatpush1.bf16.msra.mxu0 %v5168
    %5847 = vmatprep.subr.bf16.mxu0 0
    %5848 = vmatpush1.bf16.msra.mxu0 %v5169
    %5849 = vmatprep.subr.bf16.mxu0 0
    %5850 = vmatpush1.bf16.msra.mxu0 %v5170
    %5851 = vmatprep.subr.bf16.mxu0 0
    %5852 = vmatpush1.bf16.msra.mxu0 %v5171
    %5853 = vmatprep.subr.bf16.mxu0 0
    %5854 = vmatpush1.bf16.msra.mxu0 %v5172
    %5855 = vmatprep.subr.bf16.mxu0 0
    %5856 = vmatpush1.bf16.msra.mxu0 %v5173
    %5857 = vmatprep.subr.bf16.mxu0 0
    %5858 = vmatpush1.bf16.msra.mxu0 %v5174
    %5859 = vmatprep.subr.bf16.mxu0 0
    %5860 = vmatpush1.bf16.msra.mxu0 0
    %5861 = vmatprep.subr.bf16.mxu0 0
    %5862 = vmatpush1.bf16.msra.mxu0 0
    %5863 = vmatprep.subr.bf16.mxu0 0
    %5864 = vmatpush1.bf16.msra.mxu0 0
    %5865 = vmatprep.subr.bf16.mxu0 0
    %5866 = vmatpush1.bf16.msra.mxu0 0
    %5867 = vmatprep.subr.bf16.mxu0 0
    %5868 = vmatpush1.bf16.msra.mxu0 0
    %5869 = vmatprep.subr.bf16.mxu0 0
    %5870 = vmatpush1.bf16.msra.mxu0 0
    %5871 = vmatprep.subr.bf16.mxu0 0
    %5872 = vmatpush1.bf16.msra.mxu0 0
    %5873 = vmatprep.subr.bf16.mxu0 0
    %5874 = vmatpush1.bf16.msra.mxu0 0
    %5875 = vmatprep.mubr.bf16.mxu0 0
    %5876 = vmatmul.mubr.bf16.gmra.mrb[0].mxu0 %v5839
    %v5877 = vpop.f32.mrb[0].mxu0
    %v5878 = vadd.f32 0.0, %v5877
    %v5879 = vpop.f32.mrb[0].mxu0
    %v5880 = vpop.f32.mrb[0].mxu0
    %v5881 = vadd.f32 0.0, %v5880
    %v5882 = vpop.f32.mrb[0].mxu0
    %5883 = vmatprep.mubr.bf16.mxu0 0
    %5884 = vmatmul.mubr.bf16.gmra.mrb[0].mxu0 %v5840
    %v5885 = vpop.f32.mrb[0].mxu0
    %v5886 = vadd.f32 0.0, %v5885
    %v5887 = vpop.f32.mrb[0].mxu0
    %v5888 = vpop.f32.mrb[0].mxu0
    %v5889 = vadd.f32 0.0, %v5888
    %v5890 = vpop.f32.mrb[0].mxu0
    %5891 = vdwg.mxu0
    %v5892 = vpack.c.bf16 %v5881, %v5878
    %v5893 = vpack.c.bf16 %v5889, %v5886
    %s5894 = scalar_lea.vmem %s5, 20
    %v5895 = vld [vmem:[%s5894] sm:$0xf]
    %v5897 = vsel %vm5150, %v5892, 0
    %v5900 = vsel %vm5150, %v5893, 0
    %v5903 = vsel %vm5319, %v5895, 0
    %5905 = vmatprep.subr.bf16.mxu0 0
    %5906 = vmatpush1.bf16.msra.mxu0 %v5903
    %5907 = vmatprep.subr.bf16.mxu0 0
    %5908 = vmatpush1.bf16.msra.mxu0 0
    %5909 = vmatprep.subr.bf16.mxu0 0
    %5910 = vmatpush1.bf16.msra.mxu0 0
    %5911 = vmatprep.subr.bf16.mxu0 0
    %5912 = vmatpush1.bf16.msra.mxu0 0
    %5913 = vmatprep.subr.bf16.mxu0 0
    %5914 = vmatpush1.bf16.msra.mxu0 0
    %5915 = vmatprep.subr.bf16.mxu0 0
    %5916 = vmatpush1.bf16.msra.mxu0 0
    %5917 = vmatprep.subr.bf16.mxu0 0
    %5918 = vmatpush1.bf16.msra.mxu0 0
    %5919 = vmatprep.subr.bf16.mxu0 0
    %5920 = vmatpush1.bf16.msra.mxu0 0
    %5921 = vmatprep.subr.bf16.mxu0 0
    %5922 = vmatpush1.bf16.msra.mxu0 0
    %5923 = vmatprep.subr.bf16.mxu0 0
    %5924 = vmatpush1.bf16.msra.mxu0 0
    %5925 = vmatprep.subr.bf16.mxu0 0
    %5926 = vmatpush1.bf16.msra.mxu0 0
    %5927 = vmatprep.subr.bf16.mxu0 0
    %5928 = vmatpush1.bf16.msra.mxu0 0
    %5929 = vmatprep.subr.bf16.mxu0 0
    %5930 = vmatpush1.bf16.msra.mxu0 0
    %5931 = vmatprep.subr.bf16.mxu0 0
    %5932 = vmatpush1.bf16.msra.mxu0 0
    %5933 = vmatprep.subr.bf16.mxu0 0
    %5934 = vmatpush1.bf16.msra.mxu0 0
    %5935 = vmatprep.subr.bf16.mxu0 0
    %5936 = vmatpush1.bf16.msra.mxu0 0
    %5937 = vmatprep.mubr.bf16.mxu0 0
    %5938 = vmatmul.mubr.bf16.gmra.mrb[0].mxu0 %v5897
    %v5939 = vpop.f32.mrb[0].mxu0
    %v5940 = vadd.f32 0.0, %v5939
    %v5941 = vpop.f32.mrb[0].mxu0
    %v5942 = vpop.f32.mrb[0].mxu0
    %v5943 = vadd.f32 0.0, %v5942
    %v5944 = vpop.f32.mrb[0].mxu0
    %5945 = vmatprep.mubr.bf16.mxu0 0
    %5946 = vmatmul.mubr.bf16.gmra.mrb[0].mxu0 %v5900
    %v5947 = vpop.f32.mrb[0].mxu0
    %v5948 = vadd.f32 0.0, %v5947
    %v5949 = vpop.f32.mrb[0].mxu0
    %v5950 = vpop.f32.mrb[0].mxu0
    %v5951 = vadd.f32 0.0, %v5950
    %v5952 = vpop.f32.mrb[0].mxu0
    %5953 = vdwg.mxu0
    %v5954 = vadd.f32 %v5822, %v5940
    %v5955 = vadd.f32 %v5823, %v5943
    %v5956 = vadd.f32 %v5824, %v5948
    %v5957 = vadd.f32 %v5825, %v5951
    %s5958 = scalar_lea.vmem %s4, 96
    %v5959 = vld [vmem:[%s5958] sm:$0xf]
    %v5960 = vld [vmem:[%s5958 + $0x4] sm:$0xf]
    %v5961 = vld [vmem:[%s5958 + $0x8] sm:$0xf]
    %v5962 = vld [vmem:[%s5958 + $0xc] sm:$0xf]
    %v5967 = vunpack.c.l.b16 %v5959
    %v5968 = vunpack.c.l.b16 %v5960
    %v5969 = vunpack.c.l.b16 %v5961
    %v5970 = vunpack.c.l.b16 %v5962
    %v5971 = vpack.c.b16 %v5968, %v5967
    %v5972 = vpack.c.b16 %v5970, %v5969
    %5975 = vmatprep.subr.bf16.mxu0 0
    %5976 = vmatpush1.bf16.msra.mxu0 %v5167
    %5977 = vmatprep.subr.bf16.mxu0 0
    %5978 = vmatpush1.bf16.msra.mxu0 %v5168
    %5979 = vmatprep.subr.bf16.mxu0 0
    %5980 = vmatpush1.bf16.msra.mxu0 %v5169
    %5981 = vmatprep.subr.bf16.mxu0 0
    %5982 = vmatpush1.bf16.msra.mxu0 %v5170
    %5983 = vmatprep.subr.bf16.mxu0 0
    %5984 = vmatpush1.bf16.msra.mxu0 %v5171
    %5985 = vmatprep.subr.bf16.mxu0 0
    %5986 = vmatpush1.bf16.msra.mxu0 %v5172
    %5987 = vmatprep.subr.bf16.mxu0 0
    %5988 = vmatpush1.bf16.msra.mxu0 %v5173
    %5989 = vmatprep.subr.bf16.mxu0 0
    %5990 = vmatpush1.bf16.msra.mxu0 %v5174
    %5991 = vmatprep.subr.bf16.mxu0 0
    %5992 = vmatpush1.bf16.msra.mxu0 0
    %5993 = vmatprep.subr.bf16.mxu0 0
    %5994 = vmatpush1.bf16.msra.mxu0 0
    %5995 = vmatprep.subr.bf16.mxu0 0
    %5996 = vmatpush1.bf16.msra.mxu0 0
    %5997 = vmatprep.subr.bf16.mxu0 0
    %5998 = vmatpush1.bf16.msra.mxu0 0
    %5999 = vmatprep.subr.bf16.mxu0 0
    %6000 = vmatpush1.bf16.msra.mxu0 0
    %6001 = vmatprep.subr.bf16.mxu0 0
    %6002 = vmatpush1.bf16.msra.mxu0 0
    %6003 = vmatprep.subr.bf16.mxu0 0
    %6004 = vmatpush1.bf16.msra.mxu0 0
    %6005 = vmatprep.subr.bf16.mxu0 0
    %6006 = vmatpush1.bf16.msra.mxu0 0
    %6007 = vmatprep.mubr.bf16.mxu0 0
    %6008 = vmatmul.mubr.bf16.gmra.mrb[0].mxu0 %v5971
    %v6009 = vpop.f32.mrb[0].mxu0
    %v6010 = vadd.f32 0.0, %v6009
    %v6011 = vpop.f32.mrb[0].mxu0
    %v6012 = vpop.f32.mrb[0].mxu0
    %v6013 = vadd.f32 0.0, %v6012
    %v6014 = vpop.f32.mrb[0].mxu0
    %6015 = vmatprep.mubr.bf16.mxu0 0
    %6016 = vmatmul.mubr.bf16.gmra.mrb[0].mxu0 %v5972
    %v6017 = vpop.f32.mrb[0].mxu0
    %v6018 = vadd.f32 0.0, %v6017
    %v6019 = vpop.f32.mrb[0].mxu0
    %v6020 = vpop.f32.mrb[0].mxu0
    %v6021 = vadd.f32 0.0, %v6020
    %v6022 = vpop.f32.mrb[0].mxu0
    %6023 = vdwg.mxu0
    %v6024 = vpack.c.bf16 %v6013, %v6010
    %v6025 = vpack.c.bf16 %v6021, %v6018
    %s6026 = scalar_lea.vmem %s5, 24
    %v6027 = vld [vmem:[%s6026] sm:$0xf]
    %v6029 = vsel %vm5150, %v6024, 0
    %v6032 = vsel %vm5150, %v6025, 0
    %v6035 = vsel %vm5319, %v6027, 0
    %6037 = vmatprep.subr.bf16.mxu0 0
    %6038 = vmatpush1.bf16.msra.mxu0 %v6035
    %6039 = vmatprep.subr.bf16.mxu0 0
    %6040 = vmatpush1.bf16.msra.mxu0 0
    %6041 = vmatprep.subr.bf16.mxu0 0
    %6042 = vmatpush1.bf16.msra.mxu0 0
    %6043 = vmatprep.subr.bf16.mxu0 0
    %6044 = vmatpush1.bf16.msra.mxu0 0
    %6045 = vmatprep.subr.bf16.mxu0 0
    %6046 = vmatpush1.bf16.msra.mxu0 0
    %6047 = vmatprep.subr.bf16.mxu0 0
    %6048 = vmatpush1.bf16.msra.mxu0 0
    %6049 = vmatprep.subr.bf16.mxu0 0
    %6050 = vmatpush1.bf16.msra.mxu0 0
    %6051 = vmatprep.subr.bf16.mxu0 0
    %6052 = vmatpush1.bf16.msra.mxu0 0
    %6053 = vmatprep.subr.bf16.mxu0 0
    %6054 = vmatpush1.bf16.msra.mxu0 0
    %6055 = vmatprep.subr.bf16.mxu0 0
    %6056 = vmatpush1.bf16.msra.mxu0 0
    %6057 = vmatprep.subr.bf16.mxu0 0
    %6058 = vmatpush1.bf16.msra.mxu0 0
    %6059 = vmatprep.subr.bf16.mxu0 0
    %6060 = vmatpush1.bf16.msra.mxu0 0
    %6061 = vmatprep.subr.bf16.mxu0 0
    %6062 = vmatpush1.bf16.msra.mxu0 0
    %6063 = vmatprep.subr.bf16.mxu0 0
    %6064 = vmatpush1.bf16.msra.mxu0 0
    %6065 = vmatprep.subr.bf16.mxu0 0
    %6066 = vmatpush1.bf16.msra.mxu0 0
    %6067 = vmatprep.subr.bf16.mxu0 0
    %6068 = vmatpush1.bf16.msra.mxu0 0
    %6069 = vmatprep.mubr.bf16.mxu0 0
    %6070 = vmatmul.mubr.bf16.gmra.mrb[0].mxu0 %v6029
    %v6071 = vpop.f32.mrb[0].mxu0
    %v6072 = vadd.f32 0.0, %v6071
    %v6073 = vpop.f32.mrb[0].mxu0
    %v6074 = vpop.f32.mrb[0].mxu0
    %v6075 = vadd.f32 0.0, %v6074
    %v6076 = vpop.f32.mrb[0].mxu0
    %6077 = vmatprep.mubr.bf16.mxu0 0
    %6078 = vmatmul.mubr.bf16.gmra.mrb[0].mxu0 %v6032
    %v6079 = vpop.f32.mrb[0].mxu0
    %v6080 = vadd.f32 0.0, %v6079
    %v6081 = vpop.f32.mrb[0].mxu0
    %v6082 = vpop.f32.mrb[0].mxu0
    %v6083 = vadd.f32 0.0, %v6082
    %v6084 = vpop.f32.mrb[0].mxu0
    %6085 = vdwg.mxu0
    %v6086 = vadd.f32 %v5954, %v6072
    %v6087 = vadd.f32 %v5955, %v6075
    %v6088 = vadd.f32 %v5956, %v6080
    %v6089 = vadd.f32 %v5957, %v6083
    %s6090 = scalar_lea.vmem %s4, 112
    %v6091 = vld [vmem:[%s6090] sm:$0xf]
    %v6092 = vld [vmem:[%s6090 + $0x4] sm:$0xf]
    %v6093 = vld [vmem:[%s6090 + $0x8] sm:$0xf]
    %v6094 = vld [vmem:[%s6090 + $0xc] sm:$0xf]
    %v6099 = vunpack.c.l.b16 %v6091
    %v6100 = vunpack.c.l.b16 %v6092
    %v6101 = vunpack.c.l.b16 %v6093
    %v6102 = vunpack.c.l.b16 %v6094
    %v6103 = vpack.c.b16 %v6100, %v6099
    %v6104 = vpack.c.b16 %v6102, %v6101
    %6107 = vmatprep.subr.bf16.mxu0 0
    %6108 = vmatpush1.bf16.msra.mxu0 %v5167
    %6109 = vmatprep.subr.bf16.mxu0 0
    %6110 = vmatpush1.bf16.msra.mxu0 %v5168
    %6111 = vmatprep.subr.bf16.mxu0 0
    %6112 = vmatpush1.bf16.msra.mxu0 %v5169
    %6113 = vmatprep.subr.bf16.mxu0 0
    %6114 = vmatpush1.bf16.msra.mxu0 %v5170
    %6115 = vmatprep.subr.bf16.mxu0 0
    %6116 = vmatpush1.bf16.msra.mxu0 %v5171
    %6117 = vmatprep.subr.bf16.mxu0 0
    %6118 = vmatpush1.bf16.msra.mxu0 %v5172
    %6119 = vmatprep.subr.bf16.mxu0 0
    %6120 = vmatpush1.bf16.msra.mxu0 %v5173
    %6121 = vmatprep.subr.bf16.mxu0 0
    %6122 = vmatpush1.bf16.msra.mxu0 %v5174
    %6123 = vmatprep.subr.bf16.mxu0 0
    %6124 = vmatpush1.bf16.msra.mxu0 0
    %6125 = vmatprep.subr.bf16.mxu0 0
    %6126 = vmatpush1.bf16.msra.mxu0 0
    %6127 = vmatprep.subr.bf16.mxu0 0
    %6128 = vmatpush1.bf16.msra.mxu0 0
    %6129 = vmatprep.subr.bf16.mxu0 0
    %6130 = vmatpush1.bf16.msra.mxu0 0
    %6131 = vmatprep.subr.bf16.mxu0 0
    %6132 = vmatpush1.bf16.msra.mxu0 0
    %6133 = vmatprep.subr.bf16.mxu0 0
    %6134 = vmatpush1.bf16.msra.mxu0 0
    %6135 = vmatprep.subr.bf16.mxu0 0
    %6136 = vmatpush1.bf16.msra.mxu0 0
    %6137 = vmatprep.subr.bf16.mxu0 0
    %6138 = vmatpush1.bf16.msra.mxu0 0
    %6139 = vmatprep.mubr.bf16.mxu0 0
    %6140 = vmatmul.mubr.bf16.gmra.mrb[0].mxu0 %v6103
    %v6141 = vpop.f32.mrb[0].mxu0
    %v6142 = vadd.f32 0.0, %v6141
    %v6143 = vpop.f32.mrb[0].mxu0
    %v6144 = vpop.f32.mrb[0].mxu0
    %v6145 = vadd.f32 0.0, %v6144
    %v6146 = vpop.f32.mrb[0].mxu0
    %6147 = vmatprep.mubr.bf16.mxu0 0
    %6148 = vmatmul.mubr.bf16.gmra.mrb[0].mxu0 %v6104
    %v6149 = vpop.f32.mrb[0].mxu0
    %v6150 = vadd.f32 0.0, %v6149
    %v6151 = vpop.f32.mrb[0].mxu0
    %v6152 = vpop.f32.mrb[0].mxu0
    %v6153 = vadd.f32 0.0, %v6152
    %v6154 = vpop.f32.mrb[0].mxu0
    %6155 = vdwg.mxu0
    %v6156 = vpack.c.bf16 %v6145, %v6142
    %v6157 = vpack.c.bf16 %v6153, %v6150
    %s6158 = scalar_lea.vmem %s5, 28
    %v6159 = vld [vmem:[%s6158] sm:$0xf]
    %v6161 = vsel %vm5150, %v6156, 0
    %v6164 = vsel %vm5150, %v6157, 0
    %v6167 = vsel %vm5319, %v6159, 0
    %6169 = vmatprep.subr.bf16.mxu0 0
    %6170 = vmatpush1.bf16.msra.mxu0 %v6167
    %6171 = vmatprep.subr.bf16.mxu0 0
    %6172 = vmatpush1.bf16.msra.mxu0 0
    %6173 = vmatprep.subr.bf16.mxu0 0
    %6174 = vmatpush1.bf16.msra.mxu0 0
    %6175 = vmatprep.subr.bf16.mxu0 0
    %6176 = vmatpush1.bf16.msra.mxu0 0
    %6177 = vmatprep.subr.bf16.mxu0 0
    %6178 = vmatpush1.bf16.msra.mxu0 0
    %6179 = vmatprep.subr.bf16.mxu0 0
    %6180 = vmatpush1.bf16.msra.mxu0 0
    %6181 = vmatprep.subr.bf16.mxu0 0
    %6182 = vmatpush1.bf16.msra.mxu0 0
    %6183 = vmatprep.subr.bf16.mxu0 0
    %6184 = vmatpush1.bf16.msra.mxu0 0
    %6185 = vmatprep.subr.bf16.mxu0 0
    %6186 = vmatpush1.bf16.msra.mxu0 0
    %6187 = vmatprep.subr.bf16.mxu0 0
    %6188 = vmatpush1.bf16.msra.mxu0 0
    %6189 = vmatprep.subr.bf16.mxu0 0
    %6190 = vmatpush1.bf16.msra.mxu0 0
    %6191 = vmatprep.subr.bf16.mxu0 0
    %6192 = vmatpush1.bf16.msra.mxu0 0
    %6193 = vmatprep.subr.bf16.mxu0 0
    %6194 = vmatpush1.bf16.msra.mxu0 0
    %6195 = vmatprep.subr.bf16.mxu0 0
    %6196 = vmatpush1.bf16.msra.mxu0 0
    %6197 = vmatprep.subr.bf16.mxu0 0
    %6198 = vmatpush1.bf16.msra.mxu0 0
    %6199 = vmatprep.subr.bf16.mxu0 0
    %6200 = vmatpush1.bf16.msra.mxu0 0
    %6201 = vmatprep.mubr.bf16.mxu0 0
    %6202 = vmatmul.mubr.bf16.gmra.mrb[0].mxu0 %v6161
    %v6203 = vpop.f32.mrb[0].mxu0
    %v6204 = vadd.f32 0.0, %v6203
    %v6205 = vpop.f32.mrb[0].mxu0
    %v6206 = vpop.f32.mrb[0].mxu0
    %v6207 = vadd.f32 0.0, %v6206
    %v6208 = vpop.f32.mrb[0].mxu0
    %6209 = vmatprep.mubr.bf16.mxu0 0
    %6210 = vmatmul.mubr.bf16.gmra.mrb[0].mxu0 %v6164
    %v6211 = vpop.f32.mrb[0].mxu0
    %v6212 = vadd.f32 0.0, %v6211
    %v6213 = vpop.f32.mrb[0].mxu0
    %v6214 = vpop.f32.mrb[0].mxu0
    %v6215 = vadd.f32 0.0, %v6214
    %v6216 = vpop.f32.mrb[0].mxu0
    %6217 = vdwg.mxu0
    %v6218 = vadd.f32 %v6086, %v6204
    %v6219 = vadd.f32 %v6087, %v6207
    %v6220 = vadd.f32 %v6088, %v6212
    %v6221 = vadd.f32 %v6089, %v6215
    %s6222 = scalar_lea.vmem %s4, 128
    %v6223 = vld [vmem:[%s6222] sm:$0xf]
    %v6224 = vld [vmem:[%s6222 + $0x4] sm:$0xf]
    %v6225 = vld [vmem:[%s6222 + $0x8] sm:$0xf]
    %v6226 = vld [vmem:[%s6222 + $0xc] sm:$0xf]
    %v6231 = vunpack.c.l.b16 %v6223
    %v6232 = vunpack.c.l.b16 %v6224
    %v6233 = vunpack.c.l.b16 %v6225
    %v6234 = vunpack.c.l.b16 %v6226
    %v6235 = vpack.c.b16 %v6232, %v6231
    %v6236 = vpack.c.b16 %v6234, %v6233
    %6239 = vmatprep.subr.bf16.mxu0 0
    %6240 = vmatpush1.bf16.msra.mxu0 %v5167
    %6241 = vmatprep.subr.bf16.mxu0 0
    %6242 = vmatpush1.bf16.msra.mxu0 %v5168
    %6243 = vmatprep.subr.bf16.mxu0 0
    %6244 = vmatpush1.bf16.msra.mxu0 %v5169
    %6245 = vmatprep.subr.bf16.mxu0 0
    %6246 = vmatpush1.bf16.msra.mxu0 %v5170
    %6247 = vmatprep.subr.bf16.mxu0 0
    %6248 = vmatpush1.bf16.msra.mxu0 %v5171
    %6249 = vmatprep.subr.bf16.mxu0 0
    %6250 = vmatpush1.bf16.msra.mxu0 %v5172
    %6251 = vmatprep.subr.bf16.mxu0 0
    %6252 = vmatpush1.bf16.msra.mxu0 %v5173
    %6253 = vmatprep.subr.bf16.mxu0 0
    %6254 = vmatpush1.bf16.msra.mxu0 %v5174
    %6255 = vmatprep.subr.bf16.mxu0 0
    %6256 = vmatpush1.bf16.msra.mxu0 0
    %6257 = vmatprep.subr.bf16.mxu0 0
    %6258 = vmatpush1.bf16.msra.mxu0 0
    %6259 = vmatprep.subr.bf16.mxu0 0
    %6260 = vmatpush1.bf16.msra.mxu0 0
    %6261 = vmatprep.subr.bf16.mxu0 0
    %6262 = vmatpush1.bf16.msra.mxu0 0
    %6263 = vmatprep.subr.bf16.mxu0 0
    %6264 = vmatpush1.bf16.msra.mxu0 0
    %6265 = vmatprep.subr.bf16.mxu0 0
    %6266 = vmatpush1.bf16.msra.mxu0 0
    %6267 = vmatprep.subr.bf16.mxu0 0
    %6268 = vmatpush1.bf16.msra.mxu0 0
    %6269 = vmatprep.subr.bf16.mxu0 0
    %6270 = vmatpush1.bf16.msra.mxu0 0
    %6271 = vmatprep.mubr.bf16.mxu0 0
    %6272 = vmatmul.mubr.bf16.gmra.mrb[0].mxu0 %v6235
    %v6273 = vpop.f32.mrb[0].mxu0
    %v6274 = vadd.f32 0.0, %v6273
    %v6275 = vpop.f32.mrb[0].mxu0
    %v6276 = vpop.f32.mrb[0].mxu0
    %v6277 = vadd.f32 0.0, %v6276
    %v6278 = vpop.f32.mrb[0].mxu0
    %6279 = vmatprep.mubr.bf16.mxu0 0
    %6280 = vmatmul.mubr.bf16.gmra.mrb[0].mxu0 %v6236
    %v6281 = vpop.f32.mrb[0].mxu0
    %v6282 = vadd.f32 0.0, %v6281
    %v6283 = vpop.f32.mrb[0].mxu0
    %v6284 = vpop.f32.mrb[0].mxu0
    %v6285 = vadd.f32 0.0, %v6284
    %v6286 = vpop.f32.mrb[0].mxu0
    %6287 = vdwg.mxu0
    %v6288 = vpack.c.bf16 %v6277, %v6274
    %v6289 = vpack.c.bf16 %v6285, %v6282
    %s6290 = scalar_lea.vmem %s5, 32
    %v6291 = vld [vmem:[%s6290] sm:$0xf]
    %v6293 = vsel %vm5150, %v6288, 0
    %v6296 = vsel %vm5150, %v6289, 0
    %v6299 = vsel %vm5319, %v6291, 0
    %6301 = vmatprep.subr.bf16.mxu0 0
    %6302 = vmatpush1.bf16.msra.mxu0 %v6299
    %6303 = vmatprep.subr.bf16.mxu0 0
    %6304 = vmatpush1.bf16.msra.mxu0 0
    %6305 = vmatprep.subr.bf16.mxu0 0
    %6306 = vmatpush1.bf16.msra.mxu0 0
    %6307 = vmatprep.subr.bf16.mxu0 0
    %6308 = vmatpush1.bf16.msra.mxu0 0
    %6309 = vmatprep.subr.bf16.mxu0 0
    %6310 = vmatpush1.bf16.msra.mxu0 0
    %6311 = vmatprep.subr.bf16.mxu0 0
    %6312 = vmatpush1.bf16.msra.mxu0 0
    %6313 = vmatprep.subr.bf16.mxu0 0
    %6314 = vmatpush1.bf16.msra.mxu0 0
    %6315 = vmatprep.subr.bf16.mxu0 0
    %6316 = vmatpush1.bf16.msra.mxu0 0
    %6317 = vmatprep.subr.bf16.mxu0 0
    %6318 = vmatpush1.bf16.msra.mxu0 0
    %6319 = vmatprep.subr.bf16.mxu0 0
    %6320 = vmatpush1.bf16.msra.mxu0 0
    %6321 = vmatprep.subr.bf16.mxu0 0
    %6322 = vmatpush1.bf16.msra.mxu0 0
    %6323 = vmatprep.subr.bf16.mxu0 0
    %6324 = vmatpush1.bf16.msra.mxu0 0
    %6325 = vmatprep.subr.bf16.mxu0 0
    %6326 = vmatpush1.bf16.msra.mxu0 0
    %6327 = vmatprep.subr.bf16.mxu0 0
    %6328 = vmatpush1.bf16.msra.mxu0 0
    %6329 = vmatprep.subr.bf16.mxu0 0
    %6330 = vmatpush1.bf16.msra.mxu0 0
    %6331 = vmatprep.subr.bf16.mxu0 0
    %6332 = vmatpush1.bf16.msra.mxu0 0
    %6333 = vmatprep.mubr.bf16.mxu0 0
    %6334 = vmatmul.mubr.bf16.gmra.mrb[0].mxu0 %v6293
    %v6335 = vpop.f32.mrb[0].mxu0
    %v6336 = vadd.f32 0.0, %v6335
    %v6337 = vpop.f32.mrb[0].mxu0
    %v6338 = vpop.f32.mrb[0].mxu0
    %v6339 = vadd.f32 0.0, %v6338
    %v6340 = vpop.f32.mrb[0].mxu0
    %6341 = vmatprep.mubr.bf16.mxu0 0
    %6342 = vmatmul.mubr.bf16.gmra.mrb[0].mxu0 %v6296
    %v6343 = vpop.f32.mrb[0].mxu0
    %v6344 = vadd.f32 0.0, %v6343
    %v6345 = vpop.f32.mrb[0].mxu0
    %v6346 = vpop.f32.mrb[0].mxu0
    %v6347 = vadd.f32 0.0, %v6346
    %v6348 = vpop.f32.mrb[0].mxu0
    %6349 = vdwg.mxu0
    %v6350 = vadd.f32 %v6218, %v6336
    %v6351 = vadd.f32 %v6219, %v6339
    %v6352 = vadd.f32 %v6220, %v6344
    %v6353 = vadd.f32 %v6221, %v6347
    %v6354 = vld [vmem:[%s6] sm:$0x1]
    %v6356 = vlaneseq
    %v6357 = vshrl.u32 %v6356, 7
    %v6358 = vsub.s32 0, %v6357
    %v6359 = vrot.slane %v6354, %v6358
    %v6361 = vadd.f32 %v6350, %v6359
    %v6362 = vadd.f32 %v6351, %v6359
    %v6363 = vadd.f32 %v6352, %v6359
    %v6364 = vadd.f32 %v6353, %v6359
    %v6365 = vmax.f32 %v6361, 0.0
    %v6366 = vmax.f32 %v6362, 0.0
    %v6367 = vmax.f32 %v6363, 0.0
    %v6368 = vmax.f32 %v6364, 0.0
    %vm6369 = vcmask 130048
    %6370 = vst.msk [vmem:[#allocation2] sm:$0xff] %vm6369, %v6365
    %6371 = vst.msk [vmem:[#allocation2 + $0x8] sm:$0xff] %vm6369, %v6366
    %6372 = vst.msk [vmem:[#allocation2 + $0x10] sm:$0xff] %vm6369, %v6367
    %6373 = vst.msk [vmem:[#allocation2 + $0x18] sm:$0xff] %vm6369, %v6368
    %v6374 = vpack.c.bf16 %v6366, %v6365
    %v6375 = vpack.c.bf16 %v6368, %v6367
    %v6376 = vld [vmem:[%s7] sm:$0xf]
    %vm6377 = vcmask 261120
    %v6379 = vsel %vm6377, %v6376, 0
    %6381 = vmatprep.subr.bf16.mxu0 0
    %6382 = vmatpush1.bf16.msra.mxu0 %v6374
    %6383 = vmatprep.subr.bf16.mxu0 0
    %6384 = vmatpush1.bf16.msra.mxu0 %v6375
    %6385 = vmatprep.subr.bf16.mxu0 0
    %6386 = vmatpush1.bf16.msra.mxu0 0
    %6387 = vmatprep.subr.bf16.mxu0 0
    %6388 = vmatpush1.bf16.msra.mxu0 0
    %6389 = vmatprep.subr.bf16.mxu0 0
    %6390 = vmatpush1.bf16.msra.mxu0 0
    %6391 = vmatprep.subr.bf16.mxu0 0
    %6392 = vmatpush1.bf16.msra.mxu0 0
    %6393 = vmatprep.subr.bf16.mxu0 0
    %6394 = vmatpush1.bf16.msra.mxu0 0
    %6395 = vmatprep.subr.bf16.mxu0 0
    %6396 = vmatpush1.bf16.msra.mxu0 0
    %6397 = vmatprep.subr.bf16.mxu0 0
    %6398 = vmatpush1.bf16.msra.mxu0 0
    %6399 = vmatprep.subr.bf16.mxu0 0
    %6400 = vmatpush1.bf16.msra.mxu0 0
    %6401 = vmatprep.subr.bf16.mxu0 0
    %6402 = vmatpush1.bf16.msra.mxu0 0
    %6403 = vmatprep.subr.bf16.mxu0 0
    %6404 = vmatpush1.bf16.msra.mxu0 0
    %6405 = vmatprep.subr.bf16.mxu0 0
    %6406 = vmatpush1.bf16.msra.mxu0 0
    %6407 = vmatprep.subr.bf16.mxu0 0
    %6408 = vmatpush1.bf16.msra.mxu0 0
    %6409 = vmatprep.subr.bf16.mxu0 0
    %6410 = vmatpush1.bf16.msra.mxu0 0
    %6411 = vmatprep.subr.bf16.mxu0 0
    %6412 = vmatpush1.bf16.msra.mxu0 0
    %6413 = vmatprep.mubr.bf16.mxu0 0
    %6414 = vmatmul.mubr.bf16.gmra.mrb[0].mxu0 %v6379
    %v6415 = vpop.f32.mrb[0].mxu0
    %v6416 = vadd.f32 0.0, %v6415
    %v6417 = vpop.f32.mrb[0].mxu0
    %v6418 = vpop.f32.mrb[0].mxu0
    %v6419 = vpop.f32.mrb[0].mxu0
    %6420 = vdwg.mxu0
    %v6421 = vpack.c.bf16 %v6416, %v6416
    %v6422 = vld [vmem:[%s8] sm:$0xf]
    %v6423 = vld [vmem:[%s8 + $0x4] sm:$0xf]
    %s6424 = scalar_lea.vmem %s7, 4
    %v6425 = vld [vmem:[%s6424] sm:$0xf]
    %v6427 = vsel %vm6377, %v6425, 0
    %6429 = vmatprep.subr.bf16.mxu0 0
    %6430 = vmatpush1.bf16.msra.mxu0 %v6374
    %6431 = vmatprep.subr.bf16.mxu0 0
    %6432 = vmatpush1.bf16.msra.mxu0 %v6375
    %6433 = vmatprep.subr.bf16.mxu0 0
    %6434 = vmatpush1.bf16.msra.mxu0 0
    %6435 = vmatprep.subr.bf16.mxu0 0
    %6436 = vmatpush1.bf16.msra.mxu0 0
    %6437 = vmatprep.subr.bf16.mxu0 0
    %6438 = vmatpush1.bf16.msra.mxu0 0
    %6439 = vmatprep.subr.bf16.mxu0 0
    %6440 = vmatpush1.bf16.msra.mxu0 0
    %6441 = vmatprep.subr.bf16.mxu0 0
    %6442 = vmatpush1.bf16.msra.mxu0 0
    %6443 = vmatprep.subr.bf16.mxu0 0
    %6444 = vmatpush1.bf16.msra.mxu0 0
    %6445 = vmatprep.subr.bf16.mxu0 0
    %6446 = vmatpush1.bf16.msra.mxu0 0
    %6447 = vmatprep.subr.bf16.mxu0 0
    %6448 = vmatpush1.bf16.msra.mxu0 0
    %6449 = vmatprep.subr.bf16.mxu0 0
    %6450 = vmatpush1.bf16.msra.mxu0 0
    %6451 = vmatprep.subr.bf16.mxu0 0
    %6452 = vmatpush1.bf16.msra.mxu0 0
    %6453 = vmatprep.subr.bf16.mxu0 0
    %6454 = vmatpush1.bf16.msra.mxu0 0
    %6455 = vmatprep.subr.bf16.mxu0 0
    %6456 = vmatpush1.bf16.msra.mxu0 0
    %6457 = vmatprep.subr.bf16.mxu0 0
    %6458 = vmatpush1.bf16.msra.mxu0 0
    %6459 = vmatprep.subr.bf16.mxu0 0
    %6460 = vmatpush1.bf16.msra.mxu0 0
    %6461 = vmatprep.mubr.bf16.mxu0 0
    %6462 = vmatmul.mubr.bf16.gmra.mrb[0].mxu0 %v6427
    %v6463 = vpop.f32.mrb[0].mxu0
    %v6464 = vadd.f32 0.0, %v6463
    %v6465 = vpop.f32.mrb[0].mxu0
    %v6466 = vpop.f32.mrb[0].mxu0
    %v6467 = vpop.f32.mrb[0].mxu0
    %6468 = vdwg.mxu0
    %v6469 = vpack.c.bf16 %v6464, %v6464
    %s6470 = scalar_lea.vmem %s8, 8
    %v6471 = vld [vmem:[%s6470] sm:$0xf]
    %v6472 = vld [vmem:[%s6470 + $0x4] sm:$0xf]
    %v6475 = vunpack.c.l.b16 %v6471
    %v6476 = vunpack.c.l.b16 %v6472
    %v6477 = vpack.c.b16 %v6476, %v6475
    %v6480 = vsel %vm6369, %v6469, 0
    %6482 = vmatprep.subr.bf16.mxu0 0
    %6483 = vmatpush1.bf16.msra.mxu0 %v6477
    %6484 = vmatprep.subr.bf16.mxu0 0
    %6485 = vmatpush1.bf16.msra.mxu0 0
    %6486 = vmatprep.subr.bf16.mxu0 0
    %6487 = vmatpush1.bf16.msra.mxu0 0
    %6488 = vmatprep.subr.bf16.mxu0 0
    %6489 = vmatpush1.bf16.msra.mxu0 0
    %6490 = vmatprep.subr.bf16.mxu0 0
    %6491 = vmatpush1.bf16.msra.mxu0 0
    %6492 = vmatprep.subr.bf16.mxu0 0
    %6493 = vmatpush1.bf16.msra.mxu0 0
    %6494 = vmatprep.subr.bf16.mxu0 0
    %6495 = vmatpush1.bf16.msra.mxu0 0
    %6496 = vmatprep.subr.bf16.mxu0 0
    %6497 = vmatpush1.bf16.msra.mxu0 0
    %6498 = vmatprep.subr.bf16.mxu0 0
    %6499 = vmatpush1.bf16.msra.mxu0 0
    %6500 = vmatprep.subr.bf16.mxu0 0
    %6501 = vmatpush1.bf16.msra.mxu0 0
    %6502 = vmatprep.subr.bf16.mxu0 0
    %6503 = vmatpush1.bf16.msra.mxu0 0
    %6504 = vmatprep.subr.bf16.mxu0 0
    %6505 = vmatpush1.bf16.msra.mxu0 0
    %6506 = vmatprep.subr.bf16.mxu0 0
    %6507 = vmatpush1.bf16.msra.mxu0 0
    %6508 = vmatprep.subr.bf16.mxu0 0
    %6509 = vmatpush1.bf16.msra.mxu0 0
    %6510 = vmatprep.subr.bf16.mxu0 0
    %6511 = vmatpush1.bf16.msra.mxu0 0
    %6512 = vmatprep.subr.bf16.mxu0 0
    %6513 = vmatpush1.bf16.msra.mxu0 0
    %6514 = vmatprep.mubr.bf16.mxu0 0
    %6515 = vmatmul.mubr.bf16.gmra.mrb[0].mxu0 %v6480
    %v6516 = vpop.f32.mrb[0].mxu0
    %v6517 = vadd.f32 0.0, %v6516
    %v6518 = vpop.f32.mrb[0].mxu0
    %v6519 = vpop.f32.mrb[0].mxu0
    %v6520 = vpop.f32.mrb[0].mxu0
    %6521 = vdwg.mxu0
    %v6524 = vunpack.c.l.b16 %v6422
    %v6525 = vunpack.c.l.b16 %v6423
    %v6526 = vpack.c.b16 %v6525, %v6524
    %v6529 = vsel %vm6369, %v6421, 0
    %6531 = vmatprep.subr.bf16.mxu0 0
    %6532 = vmatpush1.bf16.msra.mxu0 %v6526
    %6533 = vmatprep.subr.bf16.mxu0 0
    %6534 = vmatpush1.bf16.msra.mxu0 0
    %6535 = vmatprep.subr.bf16.mxu0 0
    %6536 = vmatpush1.bf16.msra.mxu0 0
    %6537 = vmatprep.subr.bf16.mxu0 0
    %6538 = vmatpush1.bf16.msra.mxu0 0
    %6539 = vmatprep.subr.bf16.mxu0 0
    %6540 = vmatpush1.bf16.msra.mxu0 0
    %6541 = vmatprep.subr.bf16.mxu0 0
    %6542 = vmatpush1.bf16.msra.mxu0 0
    %6543 = vmatprep.subr.bf16.mxu0 0
    %6544 = vmatpush1.bf16.msra.mxu0 0
    %6545 = vmatprep.subr.bf16.mxu0 0
    %6546 = vmatpush1.bf16.msra.mxu0 0
    %6547 = vmatprep.subr.bf16.mxu0 0
    %6548 = vmatpush1.bf16.msra.mxu0 0
    %6549 = vmatprep.subr.bf16.mxu0 0
    %6550 = vmatpush1.bf16.msra.mxu0 0
    %6551 = vmatprep.subr.bf16.mxu0 0
    %6552 = vmatpush1.bf16.msra.mxu0 0
    %6553 = vmatprep.subr.bf16.mxu0 0
    %6554 = vmatpush1.bf16.msra.mxu0 0
    %6555 = vmatprep.subr.bf16.mxu0 0
    %6556 = vmatpush1.bf16.msra.mxu0 0
    %6557 = vmatprep.subr.bf16.mxu0 0
    %6558 = vmatpush1.bf16.msra.mxu0 0
    %6559 = vmatprep.subr.bf16.mxu0 0
    %6560 = vmatpush1.bf16.msra.mxu0 0
    %6561 = vmatprep.subr.bf16.mxu0 0
    %6562 = vmatpush1.bf16.msra.mxu0 0
    %6563 = vmatprep.mubr.bf16.mxu0 0
    %6564 = vmatmul.mubr.bf16.gmra.mrb[0].mxu0 %v6529
    %v6565 = vpop.f32.mrb[0].mxu0
    %v6566 = vadd.f32 %v6517, %v6565
    %v6567 = vpop.f32.mrb[0].mxu0
    %v6568 = vpop.f32.mrb[0].mxu0
    %v6569 = vpop.f32.mrb[0].mxu0
    %6570 = vdwg.mxu0
    %s6571 = scalar_lea.vmem %s7, 8
    %v6572 = vld [vmem:[%s6571] sm:$0xf]
    %v6574 = vsel %vm6377, %v6572, 0
    %6576 = vmatprep.subr.bf16.mxu0 0
    %6577 = vmatpush1.bf16.msra.mxu0 %v6374
    %6578 = vmatprep.subr.bf16.mxu0 0
    %6579 = vmatpush1.bf16.msra.mxu0 %v6375
    %6580 = vmatprep.subr.bf16.mxu0 0
    %6581 = vmatpush1.bf16.msra.mxu0 0
    %6582 = vmatprep.subr.bf16.mxu0 0
    %6583 = vmatpush1.bf16.msra.mxu0 0
    %6584 = vmatprep.subr.bf16.mxu0 0
    %6585 = vmatpush1.bf16.msra.mxu0 0
    %6586 = vmatprep.subr.bf16.mxu0 0
    %6587 = vmatpush1.bf16.msra.mxu0 0
    %6588 = vmatprep.subr.bf16.mxu0 0
    %6589 = vmatpush1.bf16.msra.mxu0 0
    %6590 = vmatprep.subr.bf16.mxu0 0
    %6591 = vmatpush1.bf16.msra.mxu0 0
    %6592 = vmatprep.subr.bf16.mxu0 0
    %6593 = vmatpush1.bf16.msra.mxu0 0
    %6594 = vmatprep.subr.bf16.mxu0 0
    %6595 = vmatpush1.bf16.msra.mxu0 0
    %6596 = vmatprep.subr.bf16.mxu0 0
    %6597 = vmatpush1.bf16.msra.mxu0 0
    %6598 = vmatprep.subr.bf16.mxu0 0
    %6599 = vmatpush1.bf16.msra.mxu0 0
    %6600 = vmatprep.subr.bf16.mxu0 0
    %6601 = vmatpush1.bf16.msra.mxu0 0
    %6602 = vmatprep.subr.bf16.mxu0 0
    %6603 = vmatpush1.bf16.msra.mxu0 0
    %6604 = vmatprep.subr.bf16.mxu0 0
    %6605 = vmatpush1.bf16.msra.mxu0 0
    %6606 = vmatprep.subr.bf16.mxu0 0
    %6607 = vmatpush1.bf16.msra.mxu0 0
    %6608 = vmatprep.mubr.bf16.mxu0 0
    %6609 = vmatmul.mubr.bf16.gmra.mrb[0].mxu0 %v6574
    %v6610 = vpop.f32.mrb[0].mxu0
    %v6611 = vadd.f32 0.0, %v6610
    %v6612 = vpop.f32.mrb[0].mxu0
    %v6613 = vpop.f32.mrb[0].mxu0
    %v6614 = vpop.f32.mrb[0].mxu0
    %6615 = vdwg.mxu0
    %v6616 = vpack.c.bf16 %v6611, %v6611
    %s6617 = scalar_lea.vmem %s8, 16
    %v6618 = vld [vmem:[%s6617] sm:$0xf]
    %v6619 = vld [vmem:[%s6617 + $0x4] sm:$0xf]
    %v6622 = vunpack.c.l.b16 %v6618
    %v6623 = vunpack.c.l.b16 %v6619
    %v6624 = vpack.c.b16 %v6623, %v6622
    %v6627 = vsel %vm6369, %v6616, 0
    %6629 = vmatprep.subr.bf16.mxu0 0
    %6630 = vmatpush1.bf16.msra.mxu0 %v6624
    %6631 = vmatprep.subr.bf16.mxu0 0
    %6632 = vmatpush1.bf16.msra.mxu0 0
    %6633 = vmatprep.subr.bf16.mxu0 0
    %6634 = vmatpush1.bf16.msra.mxu0 0
    %6635 = vmatprep.subr.bf16.mxu0 0
    %6636 = vmatpush1.bf16.msra.mxu0 0
    %6637 = vmatprep.subr.bf16.mxu0 0
    %6638 = vmatpush1.bf16.msra.mxu0 0
    %6639 = vmatprep.subr.bf16.mxu0 0
    %6640 = vmatpush1.bf16.msra.mxu0 0
    %6641 = vmatprep.subr.bf16.mxu0 0
    %6642 = vmatpush1.bf16.msra.mxu0 0
    %6643 = vmatprep.subr.bf16.mxu0 0
    %6644 = vmatpush1.bf16.msra.mxu0 0
    %6645 = vmatprep.subr.bf16.mxu0 0
    %6646 = vmatpush1.bf16.msra.mxu0 0
    %6647 = vmatprep.subr.bf16.mxu0 0
    %6648 = vmatpush1.bf16.msra.mxu0 0
    %6649 = vmatprep.subr.bf16.mxu0 0
    %6650 = vmatpush1.bf16.msra.mxu0 0
    %6651 = vmatprep.subr.bf16.mxu0 0
    %6652 = vmatpush1.bf16.msra.mxu0 0
    %6653 = vmatprep.subr.bf16.mxu0 0
    %6654 = vmatpush1.bf16.msra.mxu0 0
    %6655 = vmatprep.subr.bf16.mxu0 0
    %6656 = vmatpush1.bf16.msra.mxu0 0
    %6657 = vmatprep.subr.bf16.mxu0 0
    %6658 = vmatpush1.bf16.msra.mxu0 0
    %6659 = vmatprep.subr.bf16.mxu0 0
    %6660 = vmatpush1.bf16.msra.mxu0 0
    %6661 = vmatprep.mubr.bf16.mxu0 0
    %6662 = vmatmul.mubr.bf16.gmra.mrb[0].mxu0 %v6627
    %v6663 = vpop.f32.mrb[0].mxu0
    %v6664 = vadd.f32 0.0, %v6663
    %v6665 = vpop.f32.mrb[0].mxu0
    %v6666 = vpop.f32.mrb[0].mxu0
    %v6667 = vpop.f32.mrb[0].mxu0
    %6668 = vdwg.mxu0
    %v6669 = vadd.f32 %v6566, %v6664
    %s6670 = scalar_lea.vmem %s7, 12
    %v6671 = vld [vmem:[%s6670] sm:$0xf]
    %v6673 = vsel %vm6377, %v6671, 0
    %6675 = vmatprep.subr.bf16.mxu0 0
    %6676 = vmatpush1.bf16.msra.mxu0 %v6374
    %6677 = vmatprep.subr.bf16.mxu0 0
    %6678 = vmatpush1.bf16.msra.mxu0 %v6375
    %6679 = vmatprep.subr.bf16.mxu0 0
    %6680 = vmatpush1.bf16.msra.mxu0 0
    %6681 = vmatprep.subr.bf16.mxu0 0
    %6682 = vmatpush1.bf16.msra.mxu0 0
    %6683 = vmatprep.subr.bf16.mxu0 0
    %6684 = vmatpush1.bf16.msra.mxu0 0
    %6685 = vmatprep.subr.bf16.mxu0 0
    %6686 = vmatpush1.bf16.msra.mxu0 0
    %6687 = vmatprep.subr.bf16.mxu0 0
    %6688 = vmatpush1.bf16.msra.mxu0 0
    %6689 = vmatprep.subr.bf16.mxu0 0
    %6690 = vmatpush1.bf16.msra.mxu0 0
    %6691 = vmatprep.subr.bf16.mxu0 0
    %6692 = vmatpush1.bf16.msra.mxu0 0
    %6693 = vmatprep.subr.bf16.mxu0 0
    %6694 = vmatpush1.bf16.msra.mxu0 0
    %6695 = vmatprep.subr.bf16.mxu0 0
    %6696 = vmatpush1.bf16.msra.mxu0 0
    %6697 = vmatprep.subr.bf16.mxu0 0
    %6698 = vmatpush1.bf16.msra.mxu0 0
    %6699 = vmatprep.subr.bf16.mxu0 0
    %6700 = vmatpush1.bf16.msra.mxu0 0
    %6701 = vmatprep.subr.bf16.mxu0 0
    %6702 = vmatpush1.bf16.msra.mxu0 0
    %6703 = vmatprep.subr.bf16.mxu0 0
    %6704 = vmatpush1.bf16.msra.mxu0 0
    %6705 = vmatprep.subr.bf16.mxu0 0
    %6706 = vmatpush1.bf16.msra.mxu0 0
    %6707 = vmatprep.mubr.bf16.mxu0 0
    %6708 = vmatmul.mubr.bf16.gmra.mrb[0].mxu0 %v6673
    %v6709 = vpop.f32.mrb[0].mxu0
    %v6710 = vadd.f32 0.0, %v6709
    %v6711 = vpop.f32.mrb[0].mxu0
    %v6712 = vpop.f32.mrb[0].mxu0
    %v6713 = vpop.f32.mrb[0].mxu0
    %6714 = vdwg.mxu0
    %v6715 = vpack.c.bf16 %v6710, %v6710
    %s6716 = scalar_lea.vmem %s8, 24
    %v6717 = vld [vmem:[%s6716] sm:$0xf]
    %v6718 = vld [vmem:[%s6716 + $0x4] sm:$0xf]
    %v6721 = vunpack.c.l.b16 %v6717
    %v6722 = vunpack.c.l.b16 %v6718
    %v6723 = vpack.c.b16 %v6722, %v6721
    %v6726 = vsel %vm6369, %v6715, 0
    %6728 = vmatprep.subr.bf16.mxu0 0
    %6729 = vmatpush1.bf16.msra.mxu0 %v6723
    %6730 = vmatprep.subr.bf16.mxu0 0
    %6731 = vmatpush1.bf16.msra.mxu0 0
    %6732 = vmatprep.subr.bf16.mxu0 0
    %6733 = vmatpush1.bf16.msra.mxu0 0
    %6734 = vmatprep.subr.bf16.mxu0 0
    %6735 = vmatpush1.bf16.msra.mxu0 0
    %6736 = vmatprep.subr.bf16.mxu0 0
    %6737 = vmatpush1.bf16.msra.mxu0 0
    %6738 = vmatprep.subr.bf16.mxu0 0
    %6739 = vmatpush1.bf16.msra.mxu0 0
    %6740 = vmatprep.subr.bf16.mxu0 0
    %6741 = vmatpush1.bf16.msra.mxu0 0
    %6742 = vmatprep.subr.bf16.mxu0 0
    %6743 = vmatpush1.bf16.msra.mxu0 0
    %6744 = vmatprep.subr.bf16.mxu0 0
    %6745 = vmatpush1.bf16.msra.mxu0 0
    %6746 = vmatprep.subr.bf16.mxu0 0
    %6747 = vmatpush1.bf16.msra.mxu0 0
    %6748 = vmatprep.subr.bf16.mxu0 0
    %6749 = vmatpush1.bf16.msra.mxu0 0
    %6750 = vmatprep.subr.bf16.mxu0 0
    %6751 = vmatpush1.bf16.msra.mxu0 0
    %6752 = vmatprep.subr.bf16.mxu0 0
    %6753 = vmatpush1.bf16.msra.mxu0 0
    %6754 = vmatprep.subr.bf16.mxu0 0
    %6755 = vmatpush1.bf16.msra.mxu0 0
    %6756 = vmatprep.subr.bf16.mxu0 0
    %6757 = vmatpush1.bf16.msra.mxu0 0
    %6758 = vmatprep.subr.bf16.mxu0 0
    %6759 = vmatpush1.bf16.msra.mxu0 0
    %6760 = vmatprep.mubr.bf16.mxu0 0
    %6761 = vmatmul.mubr.bf16.gmra.mrb[0].mxu0 %v6726
    %v6762 = vpop.f32.mrb[0].mxu0
    %v6763 = vadd.f32 0.0, %v6762
    %v6764 = vpop.f32.mrb[0].mxu0
    %v6765 = vpop.f32.mrb[0].mxu0
    %v6766 = vpop.f32.mrb[0].mxu0
    %6767 = vdwg.mxu0
    %v6768 = vadd.f32 %v6669, %v6763
    %s6769 = scalar_lea.vmem %s7, 16
    %v6770 = vld [vmem:[%s6769] sm:$0xf]
    %v6772 = vsel %vm6377, %v6770, 0
    %6774 = vmatprep.subr.bf16.mxu0 0
    %6775 = vmatpush1.bf16.msra.mxu0 %v6374
    %6776 = vmatprep.subr.bf16.mxu0 0
    %6777 = vmatpush1.bf16.msra.mxu0 %v6375
    %6778 = vmatprep.subr.bf16.mxu0 0
    %6779 = vmatpush1.bf16.msra.mxu0 0
    %6780 = vmatprep.subr.bf16.mxu0 0
    %6781 = vmatpush1.bf16.msra.mxu0 0
    %6782 = vmatprep.subr.bf16.mxu0 0
    %6783 = vmatpush1.bf16.msra.mxu0 0
    %6784 = vmatprep.subr.bf16.mxu0 0
    %6785 = vmatpush1.bf16.msra.mxu0 0
    %6786 = vmatprep.subr.bf16.mxu0 0
    %6787 = vmatpush1.bf16.msra.mxu0 0
    %6788 = vmatprep.subr.bf16.mxu0 0
    %6789 = vmatpush1.bf16.msra.mxu0 0
    %6790 = vmatprep.subr.bf16.mxu0 0
    %6791 = vmatpush1.bf16.msra.mxu0 0
    %6792 = vmatprep.subr.bf16.mxu0 0
    %6793 = vmatpush1.bf16.msra.mxu0 0
    %6794 = vmatprep.subr.bf16.mxu0 0
    %6795 = vmatpush1.bf16.msra.mxu0 0
    %6796 = vmatprep.subr.bf16.mxu0 0
    %6797 = vmatpush1.bf16.msra.mxu0 0
    %6798 = vmatprep.subr.bf16.mxu0 0
    %6799 = vmatpush1.bf16.msra.mxu0 0
    %6800 = vmatprep.subr.bf16.mxu0 0
    %6801 = vmatpush1.bf16.msra.mxu0 0
    %6802 = vmatprep.subr.bf16.mxu0 0
    %6803 = vmatpush1.bf16.msra.mxu0 0
    %6804 = vmatprep.subr.bf16.mxu0 0
    %6805 = vmatpush1.bf16.msra.mxu0 0
    %6806 = vmatprep.mubr.bf16.mxu0 0
    %6807 = vmatmul.mubr.bf16.gmra.mrb[0].mxu0 %v6772
    %v6808 = vpop.f32.mrb[0].mxu0
    %v6809 = vadd.f32 0.0, %v6808
    %v6810 = vpop.f32.mrb[0].mxu0
    %v6811 = vpop.f32.mrb[0].mxu0
    %v6812 = vpop.f32.mrb[0].mxu0
    %6813 = vdwg.mxu0
    %v6814 = vpack.c.bf16 %v6809, %v6809
    %s6815 = scalar_lea.vmem %s8, 32
    %v6816 = vld [vmem:[%s6815] sm:$0xf]
    %v6817 = vld [vmem:[%s6815 + $0x4] sm:$0xf]
    %v6820 = vunpack.c.l.b16 %v6816
    %v6821 = vunpack.c.l.b16 %v6817
    %v6822 = vpack.c.b16 %v6821, %v6820
    %v6825 = vsel %vm6369, %v6814, 0
    %6827 = vmatprep.subr.bf16.mxu0 0
    %6828 = vmatpush1.bf16.msra.mxu0 %v6822
    %6829 = vmatprep.subr.bf16.mxu0 0
    %6830 = vmatpush1.bf16.msra.mxu0 0
    %6831 = vmatprep.subr.bf16.mxu0 0
    %6832 = vmatpush1.bf16.msra.mxu0 0
    %6833 = vmatprep.subr.bf16.mxu0 0
    %6834 = vmatpush1.bf16.msra.mxu0 0
    %6835 = vmatprep.subr.bf16.mxu0 0
    %6836 = vmatpush1.bf16.msra.mxu0 0
    %6837 = vmatprep.subr.bf16.mxu0 0
    %6838 = vmatpush1.bf16.msra.mxu0 0
    %6839 = vmatprep.subr.bf16.mxu0 0
    %6840 = vmatpush1.bf16.msra.mxu0 0
    %6841 = vmatprep.subr.bf16.mxu0 0
    %6842 = vmatpush1.bf16.msra.mxu0 0
    %6843 = vmatprep.subr.bf16.mxu0 0
    %6844 = vmatpush1.bf16.msra.mxu0 0
    %6845 = vmatprep.subr.bf16.mxu0 0
    %6846 = vmatpush1.bf16.msra.mxu0 0
    %6847 = vmatprep.subr.bf16.mxu0 0
    %6848 = vmatpush1.bf16.msra.mxu0 0
    %6849 = vmatprep.subr.bf16.mxu0 0
    %6850 = vmatpush1.bf16.msra.mxu0 0
    %6851 = vmatprep.subr.bf16.mxu0 0
    %6852 = vmatpush1.bf16.msra.mxu0 0
    %6853 = vmatprep.subr.bf16.mxu0 0
    %6854 = vmatpush1.bf16.msra.mxu0 0
    %6855 = vmatprep.subr.bf16.mxu0 0
    %6856 = vmatpush1.bf16.msra.mxu0 0
    %6857 = vmatprep.subr.bf16.mxu0 0
    %6858 = vmatpush1.bf16.msra.mxu0 0
    %6859 = vmatprep.mubr.bf16.mxu0 0
    %6860 = vmatmul.mubr.bf16.gmra.mrb[0].mxu0 %v6825
    %v6861 = vpop.f32.mrb[0].mxu0
    %v6862 = vadd.f32 0.0, %v6861
    %v6863 = vpop.f32.mrb[0].mxu0
    %v6864 = vpop.f32.mrb[0].mxu0
    %v6865 = vpop.f32.mrb[0].mxu0
    %6866 = vdwg.mxu0
    %v6867 = vadd.f32 %v6768, %v6862
    %s6868 = scalar_lea.vmem %s7, 20
    %v6869 = vld [vmem:[%s6868] sm:$0xf]
    %v6871 = vsel %vm6377, %v6869, 0
    %6873 = vmatprep.subr.bf16.mxu0 0
    %6874 = vmatpush1.bf16.msra.mxu0 %v6374
    %6875 = vmatprep.subr.bf16.mxu0 0
    %6876 = vmatpush1.bf16.msra.mxu0 %v6375
    %6877 = vmatprep.subr.bf16.mxu0 0
    %6878 = vmatpush1.bf16.msra.mxu0 0
    %6879 = vmatprep.subr.bf16.mxu0 0
    %6880 = vmatpush1.bf16.msra.mxu0 0
    %6881 = vmatprep.subr.bf16.mxu0 0
    %6882 = vmatpush1.bf16.msra.mxu0 0
    %6883 = vmatprep.subr.bf16.mxu0 0
    %6884 = vmatpush1.bf16.msra.mxu0 0
    %6885 = vmatprep.subr.bf16.mxu0 0
    %6886 = vmatpush1.bf16.msra.mxu0 0
    %6887 = vmatprep.subr.bf16.mxu0 0
    %6888 = vmatpush1.bf16.msra.mxu0 0
    %6889 = vmatprep.subr.bf16.mxu0 0
    %6890 = vmatpush1.bf16.msra.mxu0 0
    %6891 = vmatprep.subr.bf16.mxu0 0
    %6892 = vmatpush1.bf16.msra.mxu0 0
    %6893 = vmatprep.subr.bf16.mxu0 0
    %6894 = vmatpush1.bf16.msra.mxu0 0
    %6895 = vmatprep.subr.bf16.mxu0 0
    %6896 = vmatpush1.bf16.msra.mxu0 0
    %6897 = vmatprep.subr.bf16.mxu0 0
    %6898 = vmatpush1.bf16.msra.mxu0 0
    %6899 = vmatprep.subr.bf16.mxu0 0
    %6900 = vmatpush1.bf16.msra.mxu0 0
    %6901 = vmatprep.subr.bf16.mxu0 0
    %6902 = vmatpush1.bf16.msra.mxu0 0
    %6903 = vmatprep.subr.bf16.mxu0 0
    %6904 = vmatpush1.bf16.msra.mxu0 0
    %6905 = vmatprep.mubr.bf16.mxu0 0
    %6906 = vmatmul.mubr.bf16.gmra.mrb[0].mxu0 %v6871
    %v6907 = vpop.f32.mrb[0].mxu0
    %v6908 = vadd.f32 0.0, %v6907
    %v6909 = vpop.f32.mrb[0].mxu0
    %v6910 = vpop.f32.mrb[0].mxu0
    %v6911 = vpop.f32.mrb[0].mxu0
    %6912 = vdwg.mxu0
    %v6913 = vpack.c.bf16 %v6908, %v6908
    %s6914 = scalar_lea.vmem %s8, 40
    %v6915 = vld [vmem:[%s6914] sm:$0xf]
    %v6916 = vld [vmem:[%s6914 + $0x4] sm:$0xf]
    %v6919 = vunpack.c.l.b16 %v6915
    %v6920 = vunpack.c.l.b16 %v6916
    %v6921 = vpack.c.b16 %v6920, %v6919
    %v6924 = vsel %vm6369, %v6913, 0
    %6926 = vmatprep.subr.bf16.mxu0 0
    %6927 = vmatpush1.bf16.msra.mxu0 %v6921
    %6928 = vmatprep.subr.bf16.mxu0 0
    %6929 = vmatpush1.bf16.msra.mxu0 0
    %6930 = vmatprep.subr.bf16.mxu0 0
    %6931 = vmatpush1.bf16.msra.mxu0 0
    %6932 = vmatprep.subr.bf16.mxu0 0
    %6933 = vmatpush1.bf16.msra.mxu0 0
    %6934 = vmatprep.subr.bf16.mxu0 0
    %6935 = vmatpush1.bf16.msra.mxu0 0
    %6936 = vmatprep.subr.bf16.mxu0 0
    %6937 = vmatpush1.bf16.msra.mxu0 0
    %6938 = vmatprep.subr.bf16.mxu0 0
    %6939 = vmatpush1.bf16.msra.mxu0 0
    %6940 = vmatprep.subr.bf16.mxu0 0
    %6941 = vmatpush1.bf16.msra.mxu0 0
    %6942 = vmatprep.subr.bf16.mxu0 0
    %6943 = vmatpush1.bf16.msra.mxu0 0
    %6944 = vmatprep.subr.bf16.mxu0 0
    %6945 = vmatpush1.bf16.msra.mxu0 0
    %6946 = vmatprep.subr.bf16.mxu0 0
    %6947 = vmatpush1.bf16.msra.mxu0 0
    %6948 = vmatprep.subr.bf16.mxu0 0
    %6949 = vmatpush1.bf16.msra.mxu0 0
    %6950 = vmatprep.subr.bf16.mxu0 0
    %6951 = vmatpush1.bf16.msra.mxu0 0
    %6952 = vmatprep.subr.bf16.mxu0 0
    %6953 = vmatpush1.bf16.msra.mxu0 0
    %6954 = vmatprep.subr.bf16.mxu0 0
    %6955 = vmatpush1.bf16.msra.mxu0 0
    %6956 = vmatprep.subr.bf16.mxu0 0
    %6957 = vmatpush1.bf16.msra.mxu0 0
    %6958 = vmatprep.mubr.bf16.mxu0 0
    %6959 = vmatmul.mubr.bf16.gmra.mrb[0].mxu0 %v6924
    %v6960 = vpop.f32.mrb[0].mxu0
    %v6961 = vadd.f32 0.0, %v6960
    %v6962 = vpop.f32.mrb[0].mxu0
    %v6963 = vpop.f32.mrb[0].mxu0
    %v6964 = vpop.f32.mrb[0].mxu0
    %6965 = vdwg.mxu0
    %v6966 = vadd.f32 %v6867, %v6961
    %s6967 = scalar_lea.vmem %s7, 24
    %v6968 = vld [vmem:[%s6967] sm:$0xf]
    %v6970 = vsel %vm6377, %v6968, 0
    %6972 = vmatprep.subr.bf16.mxu0 0
    %6973 = vmatpush1.bf16.msra.mxu0 %v6374
    %6974 = vmatprep.subr.bf16.mxu0 0
    %6975 = vmatpush1.bf16.msra.mxu0 %v6375
    %6976 = vmatprep.subr.bf16.mxu0 0
    %6977 = vmatpush1.bf16.msra.mxu0 0
    %6978 = vmatprep.subr.bf16.mxu0 0
    %6979 = vmatpush1.bf16.msra.mxu0 0
    %6980 = vmatprep.subr.bf16.mxu0 0
    %6981 = vmatpush1.bf16.msra.mxu0 0
    %6982 = vmatprep.subr.bf16.mxu0 0
    %6983 = vmatpush1.bf16.msra.mxu0 0
    %6984 = vmatprep.subr.bf16.mxu0 0
    %6985 = vmatpush1.bf16.msra.mxu0 0
    %6986 = vmatprep.subr.bf16.mxu0 0
    %6987 = vmatpush1.bf16.msra.mxu0 0
    %6988 = vmatprep.subr.bf16.mxu0 0
    %6989 = vmatpush1.bf16.msra.mxu0 0
    %6990 = vmatprep.subr.bf16.mxu0 0
    %6991 = vmatpush1.bf16.msra.mxu0 0
    %6992 = vmatprep.subr.bf16.mxu0 0
    %6993 = vmatpush1.bf16.msra.mxu0 0
    %6994 = vmatprep.subr.bf16.mxu0 0
    %6995 = vmatpush1.bf16.msra.mxu0 0
    %6996 = vmatprep.subr.bf16.mxu0 0
    %6997 = vmatpush1.bf16.msra.mxu0 0
    %6998 = vmatprep.subr.bf16.mxu0 0
    %6999 = vmatpush1.bf16.msra.mxu0 0
    %7000 = vmatprep.subr.bf16.mxu0 0
    %7001 = vmatpush1.bf16.msra.mxu0 0
    %7002 = vmatprep.subr.bf16.mxu0 0
    %7003 = vmatpush1.bf16.msra.mxu0 0
    %7004 = vmatprep.mubr.bf16.mxu0 0
    %7005 = vmatmul.mubr.bf16.gmra.mrb[0].mxu0 %v6970
    %v7006 = vpop.f32.mrb[0].mxu0
    %v7007 = vadd.f32 0.0, %v7006
    %v7008 = vpop.f32.mrb[0].mxu0
    %v7009 = vpop.f32.mrb[0].mxu0
    %v7010 = vpop.f32.mrb[0].mxu0
    %7011 = vdwg.mxu0
    %v7012 = vpack.c.bf16 %v7007, %v7007
    %s7013 = scalar_lea.vmem %s8, 48
    %v7014 = vld [vmem:[%s7013] sm:$0xf]
    %v7015 = vld [vmem:[%s7013 + $0x4] sm:$0xf]
    %v7018 = vunpack.c.l.b16 %v7014
    %v7019 = vunpack.c.l.b16 %v7015
    %v7020 = vpack.c.b16 %v7019, %v7018
    %v7023 = vsel %vm6369, %v7012, 0
    %7025 = vmatprep.subr.bf16.mxu0 0
    %7026 = vmatpush1.bf16.msra.mxu0 %v7020
    %7027 = vmatprep.subr.bf16.mxu0 0
    %7028 = vmatpush1.bf16.msra.mxu0 0
    %7029 = vmatprep.subr.bf16.mxu0 0
    %7030 = vmatpush1.bf16.msra.mxu0 0
    %7031 = vmatprep.subr.bf16.mxu0 0
    %7032 = vmatpush1.bf16.msra.mxu0 0
    %7033 = vmatprep.subr.bf16.mxu0 0
    %7034 = vmatpush1.bf16.msra.mxu0 0
    %7035 = vmatprep.subr.bf16.mxu0 0
    %7036 = vmatpush1.bf16.msra.mxu0 0
    %7037 = vmatprep.subr.bf16.mxu0 0
    %7038 = vmatpush1.bf16.msra.mxu0 0
    %7039 = vmatprep.subr.bf16.mxu0 0
    %7040 = vmatpush1.bf16.msra.mxu0 0
    %7041 = vmatprep.subr.bf16.mxu0 0
    %7042 = vmatpush1.bf16.msra.mxu0 0
    %7043 = vmatprep.subr.bf16.mxu0 0
    %7044 = vmatpush1.bf16.msra.mxu0 0
    %7045 = vmatprep.subr.bf16.mxu0 0
    %7046 = vmatpush1.bf16.msra.mxu0 0
    %7047 = vmatprep.subr.bf16.mxu0 0
    %7048 = vmatpush1.bf16.msra.mxu0 0
    %7049 = vmatprep.subr.bf16.mxu0 0
    %7050 = vmatpush1.bf16.msra.mxu0 0
    %7051 = vmatprep.subr.bf16.mxu0 0
    %7052 = vmatpush1.bf16.msra.mxu0 0
    %7053 = vmatprep.subr.bf16.mxu0 0
    %7054 = vmatpush1.bf16.msra.mxu0 0
    %7055 = vmatprep.subr.bf16.mxu0 0
    %7056 = vmatpush1.bf16.msra.mxu0 0
    %7057 = vmatprep.mubr.bf16.mxu0 0
    %7058 = vmatmul.mubr.bf16.gmra.mrb[0].mxu0 %v7023
    %v7059 = vpop.f32.mrb[0].mxu0
    %v7060 = vadd.f32 0.0, %v7059
    %v7061 = vpop.f32.mrb[0].mxu0
    %v7062 = vpop.f32.mrb[0].mxu0
    %v7063 = vpop.f32.mrb[0].mxu0
    %7064 = vdwg.mxu0
    %v7065 = vadd.f32 %v6966, %v7060
    %s7066 = scalar_lea.vmem %s7, 28
    %v7067 = vld [vmem:[%s7066] sm:$0xf]
    %v7069 = vsel %vm6377, %v7067, 0
    %7071 = vmatprep.subr.bf16.mxu0 0
    %7072 = vmatpush1.bf16.msra.mxu0 %v6374
    %7073 = vmatprep.subr.bf16.mxu0 0
    %7074 = vmatpush1.bf16.msra.mxu0 %v6375
    %7075 = vmatprep.subr.bf16.mxu0 0
    %7076 = vmatpush1.bf16.msra.mxu0 0
    %7077 = vmatprep.subr.bf16.mxu0 0
    %7078 = vmatpush1.bf16.msra.mxu0 0
    %7079 = vmatprep.subr.bf16.mxu0 0
    %7080 = vmatpush1.bf16.msra.mxu0 0
    %7081 = vmatprep.subr.bf16.mxu0 0
    %7082 = vmatpush1.bf16.msra.mxu0 0
    %7083 = vmatprep.subr.bf16.mxu0 0
    %7084 = vmatpush1.bf16.msra.mxu0 0
    %7085 = vmatprep.subr.bf16.mxu0 0
    %7086 = vmatpush1.bf16.msra.mxu0 0
    %7087 = vmatprep.subr.bf16.mxu0 0
    %7088 = vmatpush1.bf16.msra.mxu0 0
    %7089 = vmatprep.subr.bf16.mxu0 0
    %7090 = vmatpush1.bf16.msra.mxu0 0
    %7091 = vmatprep.subr.bf16.mxu0 0
    %7092 = vmatpush1.bf16.msra.mxu0 0
    %7093 = vmatprep.subr.bf16.mxu0 0
    %7094 = vmatpush1.bf16.msra.mxu0 0
    %7095 = vmatprep.subr.bf16.mxu0 0
    %7096 = vmatpush1.bf16.msra.mxu0 0
    %7097 = vmatprep.subr.bf16.mxu0 0
    %7098 = vmatpush1.bf16.msra.mxu0 0
    %7099 = vmatprep.subr.bf16.mxu0 0
    %7100 = vmatpush1.bf16.msra.mxu0 0
    %7101 = vmatprep.subr.bf16.mxu0 0
    %7102 = vmatpush1.bf16.msra.mxu0 0
    %7103 = vmatprep.mubr.bf16.mxu0 0
    %7104 = vmatmul.mubr.bf16.gmra.mrb[0].mxu0 %v7069
    %v7105 = vpop.f32.mrb[0].mxu0
    %v7106 = vadd.f32 0.0, %v7105
    %v7107 = vpop.f32.mrb[0].mxu0
    %v7108 = vpop.f32.mrb[0].mxu0
    %v7109 = vpop.f32.mrb[0].mxu0
    %7110 = vdwg.mxu0
    %v7111 = vpack.c.bf16 %v7106, %v7106
    %s7112 = scalar_lea.vmem %s8, 56
    %v7113 = vld [vmem:[%s7112] sm:$0xf]
    %v7114 = vld [vmem:[%s7112 + $0x4] sm:$0xf]
    %v7117 = vunpack.c.l.b16 %v7113
    %v7118 = vunpack.c.l.b16 %v7114
    %v7119 = vpack.c.b16 %v7118, %v7117
    %v7122 = vsel %vm6369, %v7111, 0
    %7124 = vmatprep.subr.bf16.mxu0 0
    %7125 = vmatpush1.bf16.msra.mxu0 %v7119
    %7126 = vmatprep.subr.bf16.mxu0 0
    %7127 = vmatpush1.bf16.msra.mxu0 0
    %7128 = vmatprep.subr.bf16.mxu0 0
    %7129 = vmatpush1.bf16.msra.mxu0 0
    %7130 = vmatprep.subr.bf16.mxu0 0
    %7131 = vmatpush1.bf16.msra.mxu0 0
    %7132 = vmatprep.subr.bf16.mxu0 0
    %7133 = vmatpush1.bf16.msra.mxu0 0
    %7134 = vmatprep.subr.bf16.mxu0 0
    %7135 = vmatpush1.bf16.msra.mxu0 0
    %7136 = vmatprep.subr.bf16.mxu0 0
    %7137 = vmatpush1.bf16.msra.mxu0 0
    %7138 = vmatprep.subr.bf16.mxu0 0
    %7139 = vmatpush1.bf16.msra.mxu0 0
    %7140 = vmatprep.subr.bf16.mxu0 0
    %7141 = vmatpush1.bf16.msra.mxu0 0
    %7142 = vmatprep.subr.bf16.mxu0 0
    %7143 = vmatpush1.bf16.msra.mxu0 0
    %7144 = vmatprep.subr.bf16.mxu0 0
    %7145 = vmatpush1.bf16.msra.mxu0 0
    %7146 = vmatprep.subr.bf16.mxu0 0
    %7147 = vmatpush1.bf16.msra.mxu0 0
    %7148 = vmatprep.subr.bf16.mxu0 0
    %7149 = vmatpush1.bf16.msra.mxu0 0
    %7150 = vmatprep.subr.bf16.mxu0 0
    %7151 = vmatpush1.bf16.msra.mxu0 0
    %7152 = vmatprep.subr.bf16.mxu0 0
    %7153 = vmatpush1.bf16.msra.mxu0 0
    %7154 = vmatprep.subr.bf16.mxu0 0
    %7155 = vmatpush1.bf16.msra.mxu0 0
    %7156 = vmatprep.mubr.bf16.mxu0 0
    %7157 = vmatmul.mubr.bf16.gmra.mrb[0].mxu0 %v7122
    %v7158 = vpop.f32.mrb[0].mxu0
    %v7159 = vadd.f32 0.0, %v7158
    %v7160 = vpop.f32.mrb[0].mxu0
    %v7161 = vpop.f32.mrb[0].mxu0
    %v7162 = vpop.f32.mrb[0].mxu0
    %7163 = vdwg.mxu0
    %v7164 = vadd.f32 %v7065, %v7159
    %s7165 = scalar_lea.vmem %s7, 32
    %v7166 = vld [vmem:[%s7165] sm:$0xf]
    %v7168 = vsel %vm6377, %v7166, 0
    %7170 = vmatprep.subr.bf16.mxu0 0
    %7171 = vmatpush1.bf16.msra.mxu0 %v6374
    %7172 = vmatprep.subr.bf16.mxu0 0
    %7173 = vmatpush1.bf16.msra.mxu0 %v6375
    %7174 = vmatprep.subr.bf16.mxu0 0
    %7175 = vmatpush1.bf16.msra.mxu0 0
    %7176 = vmatprep.subr.bf16.mxu0 0
    %7177 = vmatpush1.bf16.msra.mxu0 0
    %7178 = vmatprep.subr.bf16.mxu0 0
    %7179 = vmatpush1.bf16.msra.mxu0 0
    %7180 = vmatprep.subr.bf16.mxu0 0
    %7181 = vmatpush1.bf16.msra.mxu0 0
    %7182 = vmatprep.subr.bf16.mxu0 0
    %7183 = vmatpush1.bf16.msra.mxu0 0
    %7184 = vmatprep.subr.bf16.mxu0 0
    %7185 = vmatpush1.bf16.msra.mxu0 0
    %7186 = vmatprep.subr.bf16.mxu0 0
    %7187 = vmatpush1.bf16.msra.mxu0 0
    %7188 = vmatprep.subr.bf16.mxu0 0
    %7189 = vmatpush1.bf16.msra.mxu0 0
    %7190 = vmatprep.subr.bf16.mxu0 0
    %7191 = vmatpush1.bf16.msra.mxu0 0
    %7192 = vmatprep.subr.bf16.mxu0 0
    %7193 = vmatpush1.bf16.msra.mxu0 0
    %7194 = vmatprep.subr.bf16.mxu0 0
    %7195 = vmatpush1.bf16.msra.mxu0 0
    %7196 = vmatprep.subr.bf16.mxu0 0
    %7197 = vmatpush1.bf16.msra.mxu0 0
    %7198 = vmatprep.subr.bf16.mxu0 0
    %7199 = vmatpush1.bf16.msra.mxu0 0
    %7200 = vmatprep.subr.bf16.mxu0 0
    %7201 = vmatpush1.bf16.msra.mxu0 0
    %7202 = vmatprep.mubr.bf16.mxu0 0
    %7203 = vmatmul.mubr.bf16.gmra.mrb[0].mxu0 %v7168
    %v7204 = vpop.f32.mrb[0].mxu0
    %v7205 = vadd.f32 0.0, %v7204
    %v7206 = vpop.f32.mrb[0].mxu0
    %v7207 = vpop.f32.mrb[0].mxu0
    %v7208 = vpop.f32.mrb[0].mxu0
    %7209 = vdwg.mxu0
    %v7210 = vpack.c.bf16 %v7205, %v7205
    %s7211 = scalar_lea.vmem %s8, 64
    %v7212 = vld [vmem:[%s7211] sm:$0xf]
    %v7213 = vld [vmem:[%s7211 + $0x4] sm:$0xf]
    %v7216 = vunpack.c.l.b16 %v7212
    %v7217 = vunpack.c.l.b16 %v7213
    %v7218 = vpack.c.b16 %v7217, %v7216
    %v7221 = vsel %vm6369, %v7210, 0
    %7223 = vmatprep.subr.bf16.mxu0 0
    %7224 = vmatpush1.bf16.msra.mxu0 %v7218
    %7225 = vmatprep.subr.bf16.mxu0 0
    %7226 = vmatpush1.bf16.msra.mxu0 0
    %7227 = vmatprep.subr.bf16.mxu0 0
    %7228 = vmatpush1.bf16.msra.mxu0 0
    %7229 = vmatprep.subr.bf16.mxu0 0
    %7230 = vmatpush1.bf16.msra.mxu0 0
    %7231 = vmatprep.subr.bf16.mxu0 0
    %7232 = vmatpush1.bf16.msra.mxu0 0
    %7233 = vmatprep.subr.bf16.mxu0 0
    %7234 = vmatpush1.bf16.msra.mxu0 0
    %7235 = vmatprep.subr.bf16.mxu0 0
    %7236 = vmatpush1.bf16.msra.mxu0 0
    %7237 = vmatprep.subr.bf16.mxu0 0
    %7238 = vmatpush1.bf16.msra.mxu0 0
    %7239 = vmatprep.subr.bf16.mxu0 0
    %7240 = vmatpush1.bf16.msra.mxu0 0
    %7241 = vmatprep.subr.bf16.mxu0 0
    %7242 = vmatpush1.bf16.msra.mxu0 0
    %7243 = vmatprep.subr.bf16.mxu0 0
    %7244 = vmatpush1.bf16.msra.mxu0 0
    %7245 = vmatprep.subr.bf16.mxu0 0
    %7246 = vmatpush1.bf16.msra.mxu0 0
    %7247 = vmatprep.subr.bf16.mxu0 0
    %7248 = vmatpush1.bf16.msra.mxu0 0
    %7249 = vmatprep.subr.bf16.mxu0 0
    %7250 = vmatpush1.bf16.msra.mxu0 0
    %7251 = vmatprep.subr.bf16.mxu0 0
    %7252 = vmatpush1.bf16.msra.mxu0 0
    %7253 = vmatprep.subr.bf16.mxu0 0
    %7254 = vmatpush1.bf16.msra.mxu0 0
    %7255 = vmatprep.mubr.bf16.mxu0 0
    %7256 = vmatmul.mubr.bf16.gmra.mrb[0].mxu0 %v7221
    %v7257 = vpop.f32.mrb[0].mxu0
    %v7258 = vadd.f32 0.0, %v7257
    %v7259 = vpop.f32.mrb[0].mxu0
    %v7260 = vpop.f32.mrb[0].mxu0
    %v7261 = vpop.f32.mrb[0].mxu0
    %7262 = vdwg.mxu0
    %v7263 = vadd.f32 %v7164, %v7258
    %v7264 = vld [vmem:[%s9] sm:$0x1]
    %v7266 = vlaneseq
    %v7267 = vshrl.u32 %v7266, 7
    %v7268 = vsub.s32 0, %v7267
    %v7269 = vrot.slane %v7264, %v7268
    %v7271 = vadd.f32 %v7263, %v7269
    %v7272 = vmax.f32 %v7271, 0.0
    %vm7273 = vcmask 195584
    %7274 = vst.msk [vmem:[#allocation4] sm:$0xff] %vm7273, %v7272
    %v7275 = vpack.c.bf16 %v7272, %v7272
    %v7276 = vld [vmem:[%s10] sm:$0x1]
    %v7278 = vsel %vm5150, %v7276, 0
    %v7281 = vsel %vm5319, %v7275, 0
    %7283 = vmatprep.subr.bf16.mxu0 0
    %7284 = vmatpush1.bf16.msra.mxu0 %v7281
    %7285 = vmatprep.subr.bf16.mxu0 0
    %7286 = vmatpush1.bf16.msra.mxu0 0
    %7287 = vmatprep.subr.bf16.mxu0 0
    %7288 = vmatpush1.bf16.msra.mxu0 0
    %7289 = vmatprep.subr.bf16.mxu0 0
    %7290 = vmatpush1.bf16.msra.mxu0 0
    %7291 = vmatprep.subr.bf16.mxu0 0
    %7292 = vmatpush1.bf16.msra.mxu0 0
    %7293 = vmatprep.subr.bf16.mxu0 0
    %7294 = vmatpush1.bf16.msra.mxu0 0
    %7295 = vmatprep.subr.bf16.mxu0 0
    %7296 = vmatpush1.bf16.msra.mxu0 0
    %7297 = vmatprep.subr.bf16.mxu0 0
    %7298 = vmatpush1.bf16.msra.mxu0 0
    %7299 = vmatprep.subr.bf16.mxu0 0
    %7300 = vmatpush1.bf16.msra.mxu0 0
    %7301 = vmatprep.subr.bf16.mxu0 0
    %7302 = vmatpush1.bf16.msra.mxu0 0
    %7303 = vmatprep.subr.bf16.mxu0 0
    %7304 = vmatpush1.bf16.msra.mxu0 0
    %7305 = vmatprep.subr.bf16.mxu0 0
    %7306 = vmatpush1.bf16.msra.mxu0 0
    %7307 = vmatprep.subr.bf16.mxu0 0
    %7308 = vmatpush1.bf16.msra.mxu0 0
    %7309 = vmatprep.subr.bf16.mxu0 0
    %7310 = vmatpush1.bf16.msra.mxu0 0
    %7311 = vmatprep.subr.bf16.mxu0 0
    %7312 = vmatpush1.bf16.msra.mxu0 0
    %7313 = vmatprep.subr.bf16.mxu0 0
    %7314 = vmatpush1.bf16.msra.mxu0 0
    %7315 = vmatprep.mubr.bf16.mxu0 0
    %7316 = vmatmul.mubr.bf16.gmra.mrb[0].mxu0 %v7278
    %v7317 = vpop.f32.mrb[0].mxu0
    %v7318 = vadd.f32 0.0, %v7317
    %v7319 = vpop.f32.mrb[0].mxu0
    %v7320 = vpop.f32.mrb[0].mxu0
    %v7321 = vpop.f32.mrb[0].mxu0
    %7322 = vdwg.mxu0
    %v7323 = vpack.c.bf16 %v7318, %v7318
    %v7324 = vld [vmem:[%s11] sm:$0xf]
    %v7325 = vld [vmem:[%s11 + $0x4] sm:$0xf]
    %v7326 = vld [vmem:[%s11 + $0x8] sm:$0xf]
    %s7327 = scalar_lea.vmem %s10, 1
    %v7328 = vld [vmem:[%s7327] sm:$0x1]
    %v7330 = vsel %vm5150, %v7328, 0
    %7332 = vmatprep.subr.bf16.mxu0 0
    %7333 = vmatpush1.bf16.msra.mxu0 %v7281
    %7334 = vmatprep.subr.bf16.mxu0 0
    %7335 = vmatpush1.bf16.msra.mxu0 0
    %7336 = vmatprep.subr.bf16.mxu0 0
    %7337 = vmatpush1.bf16.msra.mxu0 0
    %7338 = vmatprep.subr.bf16.mxu0 0
    %7339 = vmatpush1.bf16.msra.mxu0 0
    %7340 = vmatprep.subr.bf16.mxu0 0
    %7341 = vmatpush1.bf16.msra.mxu0 0
    %7342 = vmatprep.subr.bf16.mxu0 0
    %7343 = vmatpush1.bf16.msra.mxu0 0
    %7344 = vmatprep.subr.bf16.mxu0 0
    %7345 = vmatpush1.bf16.msra.mxu0 0
    %7346 = vmatprep.subr.bf16.mxu0 0
    %7347 = vmatpush1.bf16.msra.mxu0 0
    %7348 = vmatprep.subr.bf16.mxu0 0
    %7349 = vmatpush1.bf16.msra.mxu0 0
    %7350 = vmatprep.subr.bf16.mxu0 0
    %7351 = vmatpush1.bf16.msra.mxu0 0
    %7352 = vmatprep.subr.bf16.mxu0 0
    %7353 = vmatpush1.bf16.msra.mxu0 0
    %7354 = vmatprep.subr.bf16.mxu0 0
    %7355 = vmatpush1.bf16.msra.mxu0 0
    %7356 = vmatprep.subr.bf16.mxu0 0
    %7357 = vmatpush1.bf16.msra.mxu0 0
    %7358 = vmatprep.subr.bf16.mxu0 0
    %7359 = vmatpush1.bf16.msra.mxu0 0
    %7360 = vmatprep.subr.bf16.mxu0 0
    %7361 = vmatpush1.bf16.msra.mxu0 0
    %7362 = vmatprep.subr.bf16.mxu0 0
    %7363 = vmatpush1.bf16.msra.mxu0 0
    %7364 = vmatprep.mubr.bf16.mxu0 0
    %7365 = vmatmul.mubr.bf16.gmra.mrb[0].mxu0 %v7330
    %v7366 = vpop.f32.mrb[0].mxu0
    %v7367 = vadd.f32 0.0, %v7366
    %v7368 = vpop.f32.mrb[0].mxu0
    %v7369 = vpop.f32.mrb[0].mxu0
    %v7370 = vpop.f32.mrb[0].mxu0
    %7371 = vdwg.mxu0
    %v7372 = vpack.c.bf16 %v7367, %v7367
    %s7373 = scalar_lea.vmem %s11, 12
    %v7374 = vld [vmem:[%s7373] sm:$0xf]
    %v7375 = vld [vmem:[%s7373 + $0x4] sm:$0xf]
    %v7376 = vld [vmem:[%s7373 + $0x8] sm:$0xf]
    %v7380 = vunpack.c.l.b16 %v7374
    %v7381 = vunpack.c.l.b16 %v7375
    %v7382 = vunpack.c.l.b16 %v7376
    %v7383 = vpack.c.b16 %v7381, %v7380
    %v7384 = vpack.c.b16 %v7382, %v7382
    %v7387 = vsel %vm7273, %v7372, 0
    %v7390 = vsel %vm5319, %v7384, 0
    %7392 = vmatprep.subr.bf16.mxu0 0
    %7393 = vmatpush1.bf16.msra.mxu0 %v7383
    %7394 = vmatprep.subr.bf16.mxu0 0
    %7395 = vmatpush1.bf16.msra.mxu0 %v7390
    %7396 = vmatprep.subr.bf16.mxu0 0
    %7397 = vmatpush1.bf16.msra.mxu0 0
    %7398 = vmatprep.subr.bf16.mxu0 0
    %7399 = vmatpush1.bf16.msra.mxu0 0
    %7400 = vmatprep.subr.bf16.mxu0 0
    %7401 = vmatpush1.bf16.msra.mxu0 0
    %7402 = vmatprep.subr.bf16.mxu0 0
    %7403 = vmatpush1.bf16.msra.mxu0 0
    %7404 = vmatprep.subr.bf16.mxu0 0
    %7405 = vmatpush1.bf16.msra.mxu0 0
    %7406 = vmatprep.subr.bf16.mxu0 0
    %7407 = vmatpush1.bf16.msra.mxu0 0
    %7408 = vmatprep.subr.bf16.mxu0 0
    %7409 = vmatpush1.bf16.msra.mxu0 0
    %7410 = vmatprep.subr.bf16.mxu0 0
    %7411 = vmatpush1.bf16.msra.mxu0 0
    %7412 = vmatprep.subr.bf16.mxu0 0
    %7413 = vmatpush1.bf16.msra.mxu0 0
    %7414 = vmatprep.subr.bf16.mxu0 0
    %7415 = vmatpush1.bf16.msra.mxu0 0
    %7416 = vmatprep.subr.bf16.mxu0 0
    %7417 = vmatpush1.bf16.msra.mxu0 0
    %7418 = vmatprep.subr.bf16.mxu0 0
    %7419 = vmatpush1.bf16.msra.mxu0 0
    %7420 = vmatprep.subr.bf16.mxu0 0
    %7421 = vmatpush1.bf16.msra.mxu0 0
    %7422 = vmatprep.subr.bf16.mxu0 0
    %7423 = vmatpush1.bf16.msra.mxu0 0
    %7424 = vmatprep.mubr.bf16.mxu0 0
    %7425 = vmatmul.mubr.bf16.gmra.mrb[0].mxu0 %v7387
    %v7426 = vpop.f32.mrb[0].mxu0
    %v7427 = vadd.f32 0.0, %v7426
    %v7428 = vpop.f32.mrb[0].mxu0
    %v7429 = vpop.f32.mrb[0].mxu0
    %v7430 = vpop.f32.mrb[0].mxu0
    %7431 = vdwg.mxu0
    %v7435 = vunpack.c.l.b16 %v7324
    %v7436 = vunpack.c.l.b16 %v7325
    %v7437 = vunpack.c.l.b16 %v7326
    %v7438 = vpack.c.b16 %v7436, %v7435
    %v7439 = vpack.c.b16 %v7437, %v7437
    %v7442 = vsel %vm7273, %v7323, 0
    %v7445 = vsel %vm5319, %v7439, 0
    %7447 = vmatprep.subr.bf16.mxu0 0
    %7448 = vmatpush1.bf16.msra.mxu0 %v7438
    %7449 = vmatprep.subr.bf16.mxu0 0
    %7450 = vmatpush1.bf16.msra.mxu0 %v7445
    %7451 = vmatprep.subr.bf16.mxu0 0
    %7452 = vmatpush1.bf16.msra.mxu0 0
    %7453 = vmatprep.subr.bf16.mxu0 0
    %7454 = vmatpush1.bf16.msra.mxu0 0
    %7455 = vmatprep.subr.bf16.mxu0 0
    %7456 = vmatpush1.bf16.msra.mxu0 0
    %7457 = vmatprep.subr.bf16.mxu0 0
    %7458 = vmatpush1.bf16.msra.mxu0 0
    %7459 = vmatprep.subr.bf16.mxu0 0
    %7460 = vmatpush1.bf16.msra.mxu0 0
    %7461 = vmatprep.subr.bf16.mxu0 0
    %7462 = vmatpush1.bf16.msra.mxu0 0
    %7463 = vmatprep.subr.bf16.mxu0 0
    %7464 = vmatpush1.bf16.msra.mxu0 0
    %7465 = vmatprep.subr.bf16.mxu0 0
    %7466 = vmatpush1.bf16.msra.mxu0 0
    %7467 = vmatprep.subr.bf16.mxu0 0
    %7468 = vmatpush1.bf16.msra.mxu0 0
    %7469 = vmatprep.subr.bf16.mxu0 0
    %7470 = vmatpush1.bf16.msra.mxu0 0
    %7471 = vmatprep.subr.bf16.mxu0 0
    %7472 = vmatpush1.bf16.msra.mxu0 0
    %7473 = vmatprep.subr.bf16.mxu0 0
    %7474 = vmatpush1.bf16.msra.mxu0 0
    %7475 = vmatprep.subr.bf16.mxu0 0
    %7476 = vmatpush1.bf16.msra.mxu0 0
    %7477 = vmatprep.subr.bf16.mxu0 0
    %7478 = vmatpush1.bf16.msra.mxu0 0
    %7479 = vmatprep.mubr.bf16.mxu0 0
    %7480 = vmatmul.mubr.bf16.gmra.mrb[0].mxu0 %v7442
    %v7481 = vpop.f32.mrb[0].mxu0
    %v7482 = vadd.f32 %v7427, %v7481
    %v7483 = vpop.f32.mrb[0].mxu0
    %v7484 = vpop.f32.mrb[0].mxu0
    %v7485 = vpop.f32.mrb[0].mxu0
    %7486 = vdwg.mxu0
    %s7487 = scalar_lea.vmem %s10, 2
    %v7488 = vld [vmem:[%s7487] sm:$0x1]
    %v7490 = vsel %vm5150, %v7488, 0
    %7492 = vmatprep.subr.bf16.mxu0 0
    %7493 = vmatpush1.bf16.msra.mxu0 %v7281
    %7494 = vmatprep.subr.bf16.mxu0 0
    %7495 = vmatpush1.bf16.msra.mxu0 0
    %7496 = vmatprep.subr.bf16.mxu0 0
    %7497 = vmatpush1.bf16.msra.mxu0 0
    %7498 = vmatprep.subr.bf16.mxu0 0
    %7499 = vmatpush1.bf16.msra.mxu0 0
    %7500 = vmatprep.subr.bf16.mxu0 0
    %7501 = vmatpush1.bf16.msra.mxu0 0
    %7502 = vmatprep.subr.bf16.mxu0 0
    %7503 = vmatpush1.bf16.msra.mxu0 0
    %7504 = vmatprep.subr.bf16.mxu0 0
    %7505 = vmatpush1.bf16.msra.mxu0 0
    %7506 = vmatprep.subr.bf16.mxu0 0
    %7507 = vmatpush1.bf16.msra.mxu0 0
    %7508 = vmatprep.subr.bf16.mxu0 0
    %7509 = vmatpush1.bf16.msra.mxu0 0
    %7510 = vmatprep.subr.bf16.mxu0 0
    %7511 = vmatpush1.bf16.msra.mxu0 0
    %7512 = vmatprep.subr.bf16.mxu0 0
    %7513 = vmatpush1.bf16.msra.mxu0 0
    %7514 = vmatprep.subr.bf16.mxu0 0
    %7515 = vmatpush1.bf16.msra.mxu0 0
    %7516 = vmatprep.subr.bf16.mxu0 0
    %7517 = vmatpush1.bf16.msra.mxu0 0
    %7518 = vmatprep.subr.bf16.mxu0 0
    %7519 = vmatpush1.bf16.msra.mxu0 0
    %7520 = vmatprep.subr.bf16.mxu0 0
    %7521 = vmatpush1.bf16.msra.mxu0 0
    %7522 = vmatprep.subr.bf16.mxu0 0
    %7523 = vmatpush1.bf16.msra.mxu0 0
    %7524 = vmatprep.mubr.bf16.mxu0 0
    %7525 = vmatmul.mubr.bf16.gmra.mrb[0].mxu0 %v7490
    %v7526 = vpop.f32.mrb[0].mxu0
    %v7527 = vadd.f32 0.0, %v7526
    %v7528 = vpop.f32.mrb[0].mxu0
    %v7529 = vpop.f32.mrb[0].mxu0
    %v7530 = vpop.f32.mrb[0].mxu0
    %7531 = vdwg.mxu0
    %v7532 = vpack.c.bf16 %v7527, %v7527
    %s7533 = scalar_lea.vmem %s11, 24
    %v7534 = vld [vmem:[%s7533] sm:$0xf]
    %v7535 = vld [vmem:[%s7533 + $0x4] sm:$0xf]
    %v7536 = vld [vmem:[%s7533 + $0x8] sm:$0xf]
    %v7540 = vunpack.c.l.b16 %v7534
    %v7541 = vunpack.c.l.b16 %v7535
    %v7542 = vunpack.c.l.b16 %v7536
    %v7543 = vpack.c.b16 %v7541, %v7540
    %v7544 = vpack.c.b16 %v7542, %v7542
    %v7547 = vsel %vm7273, %v7532, 0
    %v7550 = vsel %vm5319, %v7544, 0
    %7552 = vmatprep.subr.bf16.mxu0 0
    %7553 = vmatpush1.bf16.msra.mxu0 %v7543
    %7554 = vmatprep.subr.bf16.mxu0 0
    %7555 = vmatpush1.bf16.msra.mxu0 %v7550
    %7556 = vmatprep.subr.bf16.mxu0 0
    %7557 = vmatpush1.bf16.msra.mxu0 0
    %7558 = vmatprep.subr.bf16.mxu0 0
    %7559 = vmatpush1.bf16.msra.mxu0 0
    %7560 = vmatprep.subr.bf16.mxu0 0
    %7561 = vmatpush1.bf16.msra.mxu0 0
    %7562 = vmatprep.subr.bf16.mxu0 0
    %7563 = vmatpush1.bf16.msra.mxu0 0
    %7564 = vmatprep.subr.bf16.mxu0 0
    %7565 = vmatpush1.bf16.msra.mxu0 0
    %7566 = vmatprep.subr.bf16.mxu0 0
    %7567 = vmatpush1.bf16.msra.mxu0 0
    %7568 = vmatprep.subr.bf16.mxu0 0
    %7569 = vmatpush1.bf16.msra.mxu0 0
    %7570 = vmatprep.subr.bf16.mxu0 0
    %7571 = vmatpush1.bf16.msra.mxu0 0
    %7572 = vmatprep.subr.bf16.mxu0 0
    %7573 = vmatpush1.bf16.msra.mxu0 0
    %7574 = vmatprep.subr.bf16.mxu0 0
    %7575 = vmatpush1.bf16.msra.mxu0 0
    %7576 = vmatprep.subr.bf16.mxu0 0
    %7577 = vmatpush1.bf16.msra.mxu0 0
    %7578 = vmatprep.subr.bf16.mxu0 0
    %7579 = vmatpush1.bf16.msra.mxu0 0
    %7580 = vmatprep.subr.bf16.mxu0 0
    %7581 = vmatpush1.bf16.msra.mxu0 0
    %7582 = vmatprep.subr.bf16.mxu0 0
    %7583 = vmatpush1.bf16.msra.mxu0 0
    %7584 = vmatprep.mubr.bf16.mxu0 0
    %7585 = vmatmul.mubr.bf16.gmra.mrb[0].mxu0 %v7547
    %v7586 = vpop.f32.mrb[0].mxu0
    %v7587 = vadd.f32 0.0, %v7586
    %v7588 = vpop.f32.mrb[0].mxu0
    %v7589 = vpop.f32.mrb[0].mxu0
    %v7590 = vpop.f32.mrb[0].mxu0
    %7591 = vdwg.mxu0
    %v7592 = vadd.f32 %v7482, %v7587
    %s7593 = scalar_lea.vmem %s10, 3
    %v7594 = vld [vmem:[%s7593] sm:$0x1]
    %v7596 = vsel %vm5150, %v7594, 0
    %7598 = vmatprep.subr.bf16.mxu0 0
    %7599 = vmatpush1.bf16.msra.mxu0 %v7281
    %7600 = vmatprep.subr.bf16.mxu0 0
    %7601 = vmatpush1.bf16.msra.mxu0 0
    %7602 = vmatprep.subr.bf16.mxu0 0
    %7603 = vmatpush1.bf16.msra.mxu0 0
    %7604 = vmatprep.subr.bf16.mxu0 0
    %7605 = vmatpush1.bf16.msra.mxu0 0
    %7606 = vmatprep.subr.bf16.mxu0 0
    %7607 = vmatpush1.bf16.msra.mxu0 0
    %7608 = vmatprep.subr.bf16.mxu0 0
    %7609 = vmatpush1.bf16.msra.mxu0 0
    %7610 = vmatprep.subr.bf16.mxu0 0
    %7611 = vmatpush1.bf16.msra.mxu0 0
    %7612 = vmatprep.subr.bf16.mxu0 0
    %7613 = vmatpush1.bf16.msra.mxu0 0
    %7614 = vmatprep.subr.bf16.mxu0 0
    %7615 = vmatpush1.bf16.msra.mxu0 0
    %7616 = vmatprep.subr.bf16.mxu0 0
    %7617 = vmatpush1.bf16.msra.mxu0 0
    %7618 = vmatprep.subr.bf16.mxu0 0
    %7619 = vmatpush1.bf16.msra.mxu0 0
    %7620 = vmatprep.subr.bf16.mxu0 0
    %7621 = vmatpush1.bf16.msra.mxu0 0
    %7622 = vmatprep.subr.bf16.mxu0 0
    %7623 = vmatpush1.bf16.msra.mxu0 0
    %7624 = vmatprep.subr.bf16.mxu0 0
    %7625 = vmatpush1.bf16.msra.mxu0 0
    %7626 = vmatprep.subr.bf16.mxu0 0
    %7627 = vmatpush1.bf16.msra.mxu0 0
    %7628 = vmatprep.subr.bf16.mxu0 0
    %7629 = vmatpush1.bf16.msra.mxu0 0
    %7630 = vmatprep.mubr.bf16.mxu0 0
    %7631 = vmatmul.mubr.bf16.gmra.mrb[0].mxu0 %v7596
    %v7632 = vpop.f32.mrb[0].mxu0
    %v7633 = vadd.f32 0.0, %v7632
    %v7634 = vpop.f32.mrb[0].mxu0
    %v7635 = vpop.f32.mrb[0].mxu0
    %v7636 = vpop.f32.mrb[0].mxu0
    %7637 = vdwg.mxu0
    %v7638 = vpack.c.bf16 %v7633, %v7633
    %s7639 = scalar_lea.vmem %s11, 36
    %v7640 = vld [vmem:[%s7639] sm:$0xf]
    %v7641 = vld [vmem:[%s7639 + $0x4] sm:$0xf]
    %v7642 = vld [vmem:[%s7639 + $0x8] sm:$0xf]
    %v7646 = vunpack.c.l.b16 %v7640
    %v7647 = vunpack.c.l.b16 %v7641
    %v7648 = vunpack.c.l.b16 %v7642
    %v7649 = vpack.c.b16 %v7647, %v7646
    %v7650 = vpack.c.b16 %v7648, %v7648
    %v7653 = vsel %vm7273, %v7638, 0
    %v7656 = vsel %vm5319, %v7650, 0
    %7658 = vmatprep.subr.bf16.mxu0 0
    %7659 = vmatpush1.bf16.msra.mxu0 %v7649
    %7660 = vmatprep.subr.bf16.mxu0 0
    %7661 = vmatpush1.bf16.msra.mxu0 %v7656
    %7662 = vmatprep.subr.bf16.mxu0 0
    %7663 = vmatpush1.bf16.msra.mxu0 0
    %7664 = vmatprep.subr.bf16.mxu0 0
    %7665 = vmatpush1.bf16.msra.mxu0 0
    %7666 = vmatprep.subr.bf16.mxu0 0
    %7667 = vmatpush1.bf16.msra.mxu0 0
    %7668 = vmatprep.subr.bf16.mxu0 0
    %7669 = vmatpush1.bf16.msra.mxu0 0
    %7670 = vmatprep.subr.bf16.mxu0 0
    %7671 = vmatpush1.bf16.msra.mxu0 0
    %7672 = vmatprep.subr.bf16.mxu0 0
    %7673 = vmatpush1.bf16.msra.mxu0 0
    %7674 = vmatprep.subr.bf16.mxu0 0
    %7675 = vmatpush1.bf16.msra.mxu0 0
    %7676 = vmatprep.subr.bf16.mxu0 0
    %7677 = vmatpush1.bf16.msra.mxu0 0
    %7678 = vmatprep.subr.bf16.mxu0 0
    %7679 = vmatpush1.bf16.msra.mxu0 0
    %7680 = vmatprep.subr.bf16.mxu0 0
    %7681 = vmatpush1.bf16.msra.mxu0 0
    %7682 = vmatprep.subr.bf16.mxu0 0
    %7683 = vmatpush1.bf16.msra.mxu0 0
    %7684 = vmatprep.subr.bf16.mxu0 0
    %7685 = vmatpush1.bf16.msra.mxu0 0
    %7686 = vmatprep.subr.bf16.mxu0 0
    %7687 = vmatpush1.bf16.msra.mxu0 0
    %7688 = vmatprep.subr.bf16.mxu0 0
    %7689 = vmatpush1.bf16.msra.mxu0 0
    %7690 = vmatprep.mubr.bf16.mxu0 0
    %7691 = vmatmul.mubr.bf16.gmra.mrb[0].mxu0 %v7653
    %v7692 = vpop.f32.mrb[0].mxu0
    %v7693 = vadd.f32 0.0, %v7692
    %v7694 = vpop.f32.mrb[0].mxu0
    %v7695 = vpop.f32.mrb[0].mxu0
    %v7696 = vpop.f32.mrb[0].mxu0
    %7697 = vdwg.mxu0
    %v7698 = vadd.f32 %v7592, %v7693
    %s7699 = scalar_lea.vmem %s10, 4
    %v7700 = vld [vmem:[%s7699] sm:$0x1]
    %v7702 = vsel %vm5150, %v7700, 0
    %7704 = vmatprep.subr.bf16.mxu0 0
    %7705 = vmatpush1.bf16.msra.mxu0 %v7281
    %7706 = vmatprep.subr.bf16.mxu0 0
    %7707 = vmatpush1.bf16.msra.mxu0 0
    %7708 = vmatprep.subr.bf16.mxu0 0
    %7709 = vmatpush1.bf16.msra.mxu0 0
    %7710 = vmatprep.subr.bf16.mxu0 0
    %7711 = vmatpush1.bf16.msra.mxu0 0
    %7712 = vmatprep.subr.bf16.mxu0 0
    %7713 = vmatpush1.bf16.msra.mxu0 0
    %7714 = vmatprep.subr.bf16.mxu0 0
    %7715 = vmatpush1.bf16.msra.mxu0 0
    %7716 = vmatprep.subr.bf16.mxu0 0
    %7717 = vmatpush1.bf16.msra.mxu0 0
    %7718 = vmatprep.subr.bf16.mxu0 0
    %7719 = vmatpush1.bf16.msra.mxu0 0
    %7720 = vmatprep.subr.bf16.mxu0 0
    %7721 = vmatpush1.bf16.msra.mxu0 0
    %7722 = vmatprep.subr.bf16.mxu0 0
    %7723 = vmatpush1.bf16.msra.mxu0 0
    %7724 = vmatprep.subr.bf16.mxu0 0
    %7725 = vmatpush1.bf16.msra.mxu0 0
    %7726 = vmatprep.subr.bf16.mxu0 0
    %7727 = vmatpush1.bf16.msra.mxu0 0
    %7728 = vmatprep.subr.bf16.mxu0 0
    %7729 = vmatpush1.bf16.msra.mxu0 0
    %7730 = vmatprep.subr.bf16.mxu0 0
    %7731 = vmatpush1.bf16.msra.mxu0 0
    %7732 = vmatprep.subr.bf16.mxu0 0
    %7733 = vmatpush1.bf16.msra.mxu0 0
    %7734 = vmatprep.subr.bf16.mxu0 0
    %7735 = vmatpush1.bf16.msra.mxu0 0
    %7736 = vmatprep.mubr.bf16.mxu0 0
    %7737 = vmatmul.mubr.bf16.gmra.mrb[0].mxu0 %v7702
    %v7738 = vpop.f32.mrb[0].mxu0
    %v7739 = vadd.f32 0.0, %v7738
    %v7740 = vpop.f32.mrb[0].mxu0
    %v7741 = vpop.f32.mrb[0].mxu0
    %v7742 = vpop.f32.mrb[0].mxu0
    %7743 = vdwg.mxu0
    %v7744 = vpack.c.bf16 %v7739, %v7739
    %s7745 = scalar_lea.vmem %s11, 48
    %v7746 = vld [vmem:[%s7745] sm:$0xf]
    %v7747 = vld [vmem:[%s7745 + $0x4] sm:$0xf]
    %v7748 = vld [vmem:[%s7745 + $0x8] sm:$0xf]
    %v7752 = vunpack.c.l.b16 %v7746
    %v7753 = vunpack.c.l.b16 %v7747
    %v7754 = vunpack.c.l.b16 %v7748
    %v7755 = vpack.c.b16 %v7753, %v7752
    %v7756 = vpack.c.b16 %v7754, %v7754
    %v7759 = vsel %vm7273, %v7744, 0
    %v7762 = vsel %vm5319, %v7756, 0
    %7764 = vmatprep.subr.bf16.mxu0 0
    %7765 = vmatpush1.bf16.msra.mxu0 %v7755
    %7766 = vmatprep.subr.bf16.mxu0 0
    %7767 = vmatpush1.bf16.msra.mxu0 %v7762
    %7768 = vmatprep.subr.bf16.mxu0 0
    %7769 = vmatpush1.bf16.msra.mxu0 0
    %7770 = vmatprep.subr.bf16.mxu0 0
    %7771 = vmatpush1.bf16.msra.mxu0 0
    %7772 = vmatprep.subr.bf16.mxu0 0
    %7773 = vmatpush1.bf16.msra.mxu0 0
    %7774 = vmatprep.subr.bf16.mxu0 0
    %7775 = vmatpush1.bf16.msra.mxu0 0
    %7776 = vmatprep.subr.bf16.mxu0 0
    %7777 = vmatpush1.bf16.msra.mxu0 0
    %7778 = vmatprep.subr.bf16.mxu0 0
    %7779 = vmatpush1.bf16.msra.mxu0 0
    %7780 = vmatprep.subr.bf16.mxu0 0
    %7781 = vmatpush1.bf16.msra.mxu0 0
    %7782 = vmatprep.subr.bf16.mxu0 0
    %7783 = vmatpush1.bf16.msra.mxu0 0
    %7784 = vmatprep.subr.bf16.mxu0 0
    %7785 = vmatpush1.bf16.msra.mxu0 0
    %7786 = vmatprep.subr.bf16.mxu0 0
    %7787 = vmatpush1.bf16.msra.mxu0 0
    %7788 = vmatprep.subr.bf16.mxu0 0
    %7789 = vmatpush1.bf16.msra.mxu0 0
    %7790 = vmatprep.subr.bf16.mxu0 0
    %7791 = vmatpush1.bf16.msra.mxu0 0
    %7792 = vmatprep.subr.bf16.mxu0 0
    %7793 = vmatpush1.bf16.msra.mxu0 0
    %7794 = vmatprep.subr.bf16.mxu0 0
    %7795 = vmatpush1.bf16.msra.mxu0 0
    %7796 = vmatprep.mubr.bf16.mxu0 0
    %7797 = vmatmul.mubr.bf16.gmra.mrb[0].mxu0 %v7759
    %v7798 = vpop.f32.mrb[0].mxu0
    %v7799 = vadd.f32 0.0, %v7798
    %v7800 = vpop.f32.mrb[0].mxu0
    %v7801 = vpop.f32.mrb[0].mxu0
    %v7802 = vpop.f32.mrb[0].mxu0
    %7803 = vdwg.mxu0
    %v7804 = vadd.f32 %v7698, %v7799
    %s7805 = scalar_lea.vmem %s10, 5
    %v7806 = vld [vmem:[%s7805] sm:$0x1]
    %v7808 = vsel %vm5150, %v7806, 0
    %7810 = vmatprep.subr.bf16.mxu0 0
    %7811 = vmatpush1.bf16.msra.mxu0 %v7281
    %7812 = vmatprep.subr.bf16.mxu0 0
    %7813 = vmatpush1.bf16.msra.mxu0 0
    %7814 = vmatprep.subr.bf16.mxu0 0
    %7815 = vmatpush1.bf16.msra.mxu0 0
    %7816 = vmatprep.subr.bf16.mxu0 0
    %7817 = vmatpush1.bf16.msra.mxu0 0
    %7818 = vmatprep.subr.bf16.mxu0 0
    %7819 = vmatpush1.bf16.msra.mxu0 0
    %7820 = vmatprep.subr.bf16.mxu0 0
    %7821 = vmatpush1.bf16.msra.mxu0 0
    %7822 = vmatprep.subr.bf16.mxu0 0
    %7823 = vmatpush1.bf16.msra.mxu0 0
    %7824 = vmatprep.subr.bf16.mxu0 0
    %7825 = vmatpush1.bf16.msra.mxu0 0
    %7826 = vmatprep.subr.bf16.mxu0 0
    %7827 = vmatpush1.bf16.msra.mxu0 0
    %7828 = vmatprep.subr.bf16.mxu0 0
    %7829 = vmatpush1.bf16.msra.mxu0 0
    %7830 = vmatprep.subr.bf16.mxu0 0
    %7831 = vmatpush1.bf16.msra.mxu0 0
    %7832 = vmatprep.subr.bf16.mxu0 0
    %7833 = vmatpush1.bf16.msra.mxu0 0
    %7834 = vmatprep.subr.bf16.mxu0 0
    %7835 = vmatpush1.bf16.msra.mxu0 0
    %7836 = vmatprep.subr.bf16.mxu0 0
    %7837 = vmatpush1.bf16.msra.mxu0 0
    %7838 = vmatprep.subr.bf16.mxu0 0
    %7839 = vmatpush1.bf16.msra.mxu0 0
    %7840 = vmatprep.subr.bf16.mxu0 0
    %7841 = vmatpush1.bf16.msra.mxu0 0
    %7842 = vmatprep.mubr.bf16.mxu0 0
    %7843 = vmatmul.mubr.bf16.gmra.mrb[0].mxu0 %v7808
    %v7844 = vpop.f32.mrb[0].mxu0
    %v7845 = vadd.f32 0.0, %v7844
    %v7846 = vpop.f32.mrb[0].mxu0
    %v7847 = vpop.f32.mrb[0].mxu0
    %v7848 = vpop.f32.mrb[0].mxu0
    %7849 = vdwg.mxu0
    %v7850 = vpack.c.bf16 %v7845, %v7845
    %s7851 = scalar_lea.vmem %s11, 60
    %v7852 = vld [vmem:[%s7851] sm:$0xf]
    %v7853 = vld [vmem:[%s7851 + $0x4] sm:$0xf]
    %v7854 = vld [vmem:[%s7851 + $0x8] sm:$0xf]
    %v7858 = vunpack.c.l.b16 %v7852
    %v7859 = vunpack.c.l.b16 %v7853
    %v7860 = vunpack.c.l.b16 %v7854
    %v7861 = vpack.c.b16 %v7859, %v7858
    %v7862 = vpack.c.b16 %v7860, %v7860
    %v7865 = vsel %vm7273, %v7850, 0
    %v7868 = vsel %vm5319, %v7862, 0
    %7870 = vmatprep.subr.bf16.mxu0 0
    %7871 = vmatpush1.bf16.msra.mxu0 %v7861
    %7872 = vmatprep.subr.bf16.mxu0 0
    %7873 = vmatpush1.bf16.msra.mxu0 %v7868
    %7874 = vmatprep.subr.bf16.mxu0 0
    %7875 = vmatpush1.bf16.msra.mxu0 0
    %7876 = vmatprep.subr.bf16.mxu0 0
    %7877 = vmatpush1.bf16.msra.mxu0 0
    %7878 = vmatprep.subr.bf16.mxu0 0
    %7879 = vmatpush1.bf16.msra.mxu0 0
    %7880 = vmatprep.subr.bf16.mxu0 0
    %7881 = vmatpush1.bf16.msra.mxu0 0
    %7882 = vmatprep.subr.bf16.mxu0 0
    %7883 = vmatpush1.bf16.msra.mxu0 0
    %7884 = vmatprep.subr.bf16.mxu0 0
    %7885 = vmatpush1.bf16.msra.mxu0 0
    %7886 = vmatprep.subr.bf16.mxu0 0
    %7887 = vmatpush1.bf16.msra.mxu0 0
    %7888 = vmatprep.subr.bf16.mxu0 0
    %7889 = vmatpush1.bf16.msra.mxu0 0
    %7890 = vmatprep.subr.bf16.mxu0 0
    %7891 = vmatpush1.bf16.msra.mxu0 0
    %7892 = vmatprep.subr.bf16.mxu0 0
    %7893 = vmatpush1.bf16.msra.mxu0 0
    %7894 = vmatprep.subr.bf16.mxu0 0
    %7895 = vmatpush1.bf16.msra.mxu0 0
    %7896 = vmatprep.subr.bf16.mxu0 0
    %7897 = vmatpush1.bf16.msra.mxu0 0
    %7898 = vmatprep.subr.bf16.mxu0 0
    %7899 = vmatpush1.bf16.msra.mxu0 0
    %7900 = vmatprep.subr.bf16.mxu0 0
    %7901 = vmatpush1.bf16.msra.mxu0 0
    %7902 = vmatprep.mubr.bf16.mxu0 0
    %7903 = vmatmul.mubr.bf16.gmra.mrb[0].mxu0 %v7865
    %v7904 = vpop.f32.mrb[0].mxu0
    %v7905 = vadd.f32 0.0, %v7904
    %v7906 = vpop.f32.mrb[0].mxu0
    %v7907 = vpop.f32.mrb[0].mxu0
    %v7908 = vpop.f32.mrb[0].mxu0
    %7909 = vdwg.mxu0
    %v7910 = vadd.f32 %v7804, %v7905
    %s7911 = scalar_lea.vmem %s10, 6
    %v7912 = vld [vmem:[%s7911] sm:$0x1]
    %v7914 = vsel %vm5150, %v7912, 0
    %7916 = vmatprep.subr.bf16.mxu0 0
    %7917 = vmatpush1.bf16.msra.mxu0 %v7281
    %7918 = vmatprep.subr.bf16.mxu0 0
    %7919 = vmatpush1.bf16.msra.mxu0 0
    %7920 = vmatprep.subr.bf16.mxu0 0
    %7921 = vmatpush1.bf16.msra.mxu0 0
    %7922 = vmatprep.subr.bf16.mxu0 0
    %7923 = vmatpush1.bf16.msra.mxu0 0
    %7924 = vmatprep.subr.bf16.mxu0 0
    %7925 = vmatpush1.bf16.msra.mxu0 0
    %7926 = vmatprep.subr.bf16.mxu0 0
    %7927 = vmatpush1.bf16.msra.mxu0 0
    %7928 = vmatprep.subr.bf16.mxu0 0
    %7929 = vmatpush1.bf16.msra.mxu0 0
    %7930 = vmatprep.subr.bf16.mxu0 0
    %7931 = vmatpush1.bf16.msra.mxu0 0
    %7932 = vmatprep.subr.bf16.mxu0 0
    %7933 = vmatpush1.bf16.msra.mxu0 0
    %7934 = vmatprep.subr.bf16.mxu0 0
    %7935 = vmatpush1.bf16.msra.mxu0 0
    %7936 = vmatprep.subr.bf16.mxu0 0
    %7937 = vmatpush1.bf16.msra.mxu0 0
    %7938 = vmatprep.subr.bf16.mxu0 0
    %7939 = vmatpush1.bf16.msra.mxu0 0
    %7940 = vmatprep.subr.bf16.mxu0 0
    %7941 = vmatpush1.bf16.msra.mxu0 0
    %7942 = vmatprep.subr.bf16.mxu0 0
    %7943 = vmatpush1.bf16.msra.mxu0 0
    %7944 = vmatprep.subr.bf16.mxu0 0
    %7945 = vmatpush1.bf16.msra.mxu0 0
    %7946 = vmatprep.subr.bf16.mxu0 0
    %7947 = vmatpush1.bf16.msra.mxu0 0
    %7948 = vmatprep.mubr.bf16.mxu0 0
    %7949 = vmatmul.mubr.bf16.gmra.mrb[0].mxu0 %v7914
    %v7950 = vpop.f32.mrb[0].mxu0
    %v7951 = vadd.f32 0.0, %v7950
    %v7952 = vpop.f32.mrb[0].mxu0
    %v7953 = vpop.f32.mrb[0].mxu0
    %v7954 = vpop.f32.mrb[0].mxu0
    %7955 = vdwg.mxu0
    %v7956 = vpack.c.bf16 %v7951, %v7951
    %s7957 = scalar_lea.vmem %s11, 72
    %v7958 = vld [vmem:[%s7957] sm:$0xf]
    %v7959 = vld [vmem:[%s7957 + $0x4] sm:$0xf]
    %v7960 = vld [vmem:[%s7957 + $0x8] sm:$0xf]
    %v7964 = vunpack.c.l.b16 %v7958
    %v7965 = vunpack.c.l.b16 %v7959
    %v7966 = vunpack.c.l.b16 %v7960
    %v7967 = vpack.c.b16 %v7965, %v7964
    %v7968 = vpack.c.b16 %v7966, %v7966
    %v7971 = vsel %vm7273, %v7956, 0
    %v7974 = vsel %vm5319, %v7968, 0
    %7976 = vmatprep.subr.bf16.mxu0 0
    %7977 = vmatpush1.bf16.msra.mxu0 %v7967
    %7978 = vmatprep.subr.bf16.mxu0 0
    %7979 = vmatpush1.bf16.msra.mxu0 %v7974
    %7980 = vmatprep.subr.bf16.mxu0 0
    %7981 = vmatpush1.bf16.msra.mxu0 0
    %7982 = vmatprep.subr.bf16.mxu0 0
    %7983 = vmatpush1.bf16.msra.mxu0 0
    %7984 = vmatprep.subr.bf16.mxu0 0
    %7985 = vmatpush1.bf16.msra.mxu0 0
    %7986 = vmatprep.subr.bf16.mxu0 0
    %7987 = vmatpush1.bf16.msra.mxu0 0
    %7988 = vmatprep.subr.bf16.mxu0 0
    %7989 = vmatpush1.bf16.msra.mxu0 0
    %7990 = vmatprep.subr.bf16.mxu0 0
    %7991 = vmatpush1.bf16.msra.mxu0 0
    %7992 = vmatprep.subr.bf16.mxu0 0
    %7993 = vmatpush1.bf16.msra.mxu0 0
    %7994 = vmatprep.subr.bf16.mxu0 0
    %7995 = vmatpush1.bf16.msra.mxu0 0
    %7996 = vmatprep.subr.bf16.mxu0 0
    %7997 = vmatpush1.bf16.msra.mxu0 0
    %7998 = vmatprep.subr.bf16.mxu0 0
    %7999 = vmatpush1.bf16.msra.mxu0 0
    %8000 = vmatprep.subr.bf16.mxu0 0
    %8001 = vmatpush1.bf16.msra.mxu0 0
    %8002 = vmatprep.subr.bf16.mxu0 0
    %8003 = vmatpush1.bf16.msra.mxu0 0
    %8004 = vmatprep.subr.bf16.mxu0 0
    %8005 = vmatpush1.bf16.msra.mxu0 0
    %8006 = vmatprep.subr.bf16.mxu0 0
    %8007 = vmatpush1.bf16.msra.mxu0 0
    %8008 = vmatprep.mubr.bf16.mxu0 0
    %8009 = vmatmul.mubr.bf16.gmra.mrb[0].mxu0 %v7971
    %v8010 = vpop.f32.mrb[0].mxu0
    %v8011 = vadd.f32 0.0, %v8010
    %v8012 = vpop.f32.mrb[0].mxu0
    %v8013 = vpop.f32.mrb[0].mxu0
    %v8014 = vpop.f32.mrb[0].mxu0
    %8015 = vdwg.mxu0
    %v8016 = vadd.f32 %v7910, %v8011
    %s8017 = scalar_lea.vmem %s10, 7
    %v8018 = vld [vmem:[%s8017] sm:$0x1]
    %v8020 = vsel %vm5150, %v8018, 0
    %8022 = vmatprep.subr.bf16.mxu0 0
    %8023 = vmatpush1.bf16.msra.mxu0 %v7281
    %8024 = vmatprep.subr.bf16.mxu0 0
    %8025 = vmatpush1.bf16.msra.mxu0 0
    %8026 = vmatprep.subr.bf16.mxu0 0
    %8027 = vmatpush1.bf16.msra.mxu0 0
    %8028 = vmatprep.subr.bf16.mxu0 0
    %8029 = vmatpush1.bf16.msra.mxu0 0
    %8030 = vmatprep.subr.bf16.mxu0 0
    %8031 = vmatpush1.bf16.msra.mxu0 0
    %8032 = vmatprep.subr.bf16.mxu0 0
    %8033 = vmatpush1.bf16.msra.mxu0 0
    %8034 = vmatprep.subr.bf16.mxu0 0
    %8035 = vmatpush1.bf16.msra.mxu0 0
    %8036 = vmatprep.subr.bf16.mxu0 0
    %8037 = vmatpush1.bf16.msra.mxu0 0
    %8038 = vmatprep.subr.bf16.mxu0 0
    %8039 = vmatpush1.bf16.msra.mxu0 0
    %8040 = vmatprep.subr.bf16.mxu0 0
    %8041 = vmatpush1.bf16.msra.mxu0 0
    %8042 = vmatprep.subr.bf16.mxu0 0
    %8043 = vmatpush1.bf16.msra.mxu0 0
    %8044 = vmatprep.subr.bf16.mxu0 0
    %8045 = vmatpush1.bf16.msra.mxu0 0
    %8046 = vmatprep.subr.bf16.mxu0 0
    %8047 = vmatpush1.bf16.msra.mxu0 0
    %8048 = vmatprep.subr.bf16.mxu0 0
    %8049 = vmatpush1.bf16.msra.mxu0 0
    %8050 = vmatprep.subr.bf16.mxu0 0
    %8051 = vmatpush1.bf16.msra.mxu0 0
    %8052 = vmatprep.subr.bf16.mxu0 0
    %8053 = vmatpush1.bf16.msra.mxu0 0
    %8054 = vmatprep.mubr.bf16.mxu0 0
    %8055 = vmatmul.mubr.bf16.gmra.mrb[0].mxu0 %v8020
    %v8056 = vpop.f32.mrb[0].mxu0
    %v8057 = vadd.f32 0.0, %v8056
    %v8058 = vpop.f32.mrb[0].mxu0
    %v8059 = vpop.f32.mrb[0].mxu0
    %v8060 = vpop.f32.mrb[0].mxu0
    %8061 = vdwg.mxu0
    %v8062 = vpack.c.bf16 %v8057, %v8057
    %s8063 = scalar_lea.vmem %s11, 84
    %v8064 = vld [vmem:[%s8063] sm:$0xf]
    %v8065 = vld [vmem:[%s8063 + $0x4] sm:$0xf]
    %v8066 = vld [vmem:[%s8063 + $0x8] sm:$0xf]
    %v8070 = vunpack.c.l.b16 %v8064
    %v8071 = vunpack.c.l.b16 %v8065
    %v8072 = vunpack.c.l.b16 %v8066
    %v8073 = vpack.c.b16 %v8071, %v8070
    %v8074 = vpack.c.b16 %v8072, %v8072
    %v8077 = vsel %vm7273, %v8062, 0
    %v8080 = vsel %vm5319, %v8074, 0
    %8082 = vmatprep.subr.bf16.mxu0 0
    %8083 = vmatpush1.bf16.msra.mxu0 %v8073
    %8084 = vmatprep.subr.bf16.mxu0 0
    %8085 = vmatpush1.bf16.msra.mxu0 %v8080
    %8086 = vmatprep.subr.bf16.mxu0 0
    %8087 = vmatpush1.bf16.msra.mxu0 0
    %8088 = vmatprep.subr.bf16.mxu0 0
    %8089 = vmatpush1.bf16.msra.mxu0 0
    %8090 = vmatprep.subr.bf16.mxu0 0
    %8091 = vmatpush1.bf16.msra.mxu0 0
    %8092 = vmatprep.subr.bf16.mxu0 0
    %8093 = vmatpush1.bf16.msra.mxu0 0
    %8094 = vmatprep.subr.bf16.mxu0 0
    %8095 = vmatpush1.bf16.msra.mxu0 0
    %8096 = vmatprep.subr.bf16.mxu0 0
    %8097 = vmatpush1.bf16.msra.mxu0 0
    %8098 = vmatprep.subr.bf16.mxu0 0
    %8099 = vmatpush1.bf16.msra.mxu0 0
    %8100 = vmatprep.subr.bf16.mxu0 0
    %8101 = vmatpush1.bf16.msra.mxu0 0
    %8102 = vmatprep.subr.bf16.mxu0 0
    %8103 = vmatpush1.bf16.msra.mxu0 0
    %8104 = vmatprep.subr.bf16.mxu0 0
    %8105 = vmatpush1.bf16.msra.mxu0 0
    %8106 = vmatprep.subr.bf16.mxu0 0
    %8107 = vmatpush1.bf16.msra.mxu0 0
    %8108 = vmatprep.subr.bf16.mxu0 0
    %8109 = vmatpush1.bf16.msra.mxu0 0
    %8110 = vmatprep.subr.bf16.mxu0 0
    %8111 = vmatpush1.bf16.msra.mxu0 0
    %8112 = vmatprep.subr.bf16.mxu0 0
    %8113 = vmatpush1.bf16.msra.mxu0 0
    %8114 = vmatprep.mubr.bf16.mxu0 0
    %8115 = vmatmul.mubr.bf16.gmra.mrb[0].mxu0 %v8077
    %v8116 = vpop.f32.mrb[0].mxu0
    %v8117 = vadd.f32 0.0, %v8116
    %v8118 = vpop.f32.mrb[0].mxu0
    %v8119 = vpop.f32.mrb[0].mxu0
    %v8120 = vpop.f32.mrb[0].mxu0
    %8121 = vdwg.mxu0
    %v8122 = vadd.f32 %v8016, %v8117
    %s8123 = scalar_lea.vmem %s10, 8
    %v8124 = vld [vmem:[%s8123] sm:$0x1]
    %v8126 = vsel %vm5150, %v8124, 0
    %8128 = vmatprep.subr.bf16.mxu0 0
    %8129 = vmatpush1.bf16.msra.mxu0 %v7281
    %8130 = vmatprep.subr.bf16.mxu0 0
    %8131 = vmatpush1.bf16.msra.mxu0 0
    %8132 = vmatprep.subr.bf16.mxu0 0
    %8133 = vmatpush1.bf16.msra.mxu0 0
    %8134 = vmatprep.subr.bf16.mxu0 0
    %8135 = vmatpush1.bf16.msra.mxu0 0
    %8136 = vmatprep.subr.bf16.mxu0 0
    %8137 = vmatpush1.bf16.msra.mxu0 0
    %8138 = vmatprep.subr.bf16.mxu0 0
    %8139 = vmatpush1.bf16.msra.mxu0 0
    %8140 = vmatprep.subr.bf16.mxu0 0
    %8141 = vmatpush1.bf16.msra.mxu0 0
    %8142 = vmatprep.subr.bf16.mxu0 0
    %8143 = vmatpush1.bf16.msra.mxu0 0
    %8144 = vmatprep.subr.bf16.mxu0 0
    %8145 = vmatpush1.bf16.msra.mxu0 0
    %8146 = vmatprep.subr.bf16.mxu0 0
    %8147 = vmatpush1.bf16.msra.mxu0 0
    %8148 = vmatprep.subr.bf16.mxu0 0
    %8149 = vmatpush1.bf16.msra.mxu0 0
    %8150 = vmatprep.subr.bf16.mxu0 0
    %8151 = vmatpush1.bf16.msra.mxu0 0
    %8152 = vmatprep.subr.bf16.mxu0 0
    %8153 = vmatpush1.bf16.msra.mxu0 0
    %8154 = vmatprep.subr.bf16.mxu0 0
    %8155 = vmatpush1.bf16.msra.mxu0 0
    %8156 = vmatprep.subr.bf16.mxu0 0
    %8157 = vmatpush1.bf16.msra.mxu0 0
    %8158 = vmatprep.subr.bf16.mxu0 0
    %8159 = vmatpush1.bf16.msra.mxu0 0
    %8160 = vmatprep.mubr.bf16.mxu0 0
    %8161 = vmatmul.mubr.bf16.gmra.mrb[0].mxu0 %v8126
    %v8162 = vpop.f32.mrb[0].mxu0
    %v8163 = vadd.f32 0.0, %v8162
    %v8164 = vpop.f32.mrb[0].mxu0
    %v8165 = vpop.f32.mrb[0].mxu0
    %v8166 = vpop.f32.mrb[0].mxu0
    %8167 = vdwg.mxu0
    %v8168 = vpack.c.bf16 %v8163, %v8163
    %s8169 = scalar_lea.vmem %s11, 96
    %v8170 = vld [vmem:[%s8169] sm:$0xf]
    %v8171 = vld [vmem:[%s8169 + $0x4] sm:$0xf]
    %v8172 = vld [vmem:[%s8169 + $0x8] sm:$0xf]
    %v8176 = vunpack.c.l.b16 %v8170
    %v8177 = vunpack.c.l.b16 %v8171
    %v8178 = vunpack.c.l.b16 %v8172
    %v8179 = vpack.c.b16 %v8177, %v8176
    %v8180 = vpack.c.b16 %v8178, %v8178
    %v8183 = vsel %vm7273, %v8168, 0
    %v8186 = vsel %vm5319, %v8180, 0
    %8188 = vmatprep.subr.bf16.mxu0 0
    %8189 = vmatpush1.bf16.msra.mxu0 %v8179
    %8190 = vmatprep.subr.bf16.mxu0 0
    %8191 = vmatpush1.bf16.msra.mxu0 %v8186
    %8192 = vmatprep.subr.bf16.mxu0 0
    %8193 = vmatpush1.bf16.msra.mxu0 0
    %8194 = vmatprep.subr.bf16.mxu0 0
    %8195 = vmatpush1.bf16.msra.mxu0 0
    %8196 = vmatprep.subr.bf16.mxu0 0
    %8197 = vmatpush1.bf16.msra.mxu0 0
    %8198 = vmatprep.subr.bf16.mxu0 0
    %8199 = vmatpush1.bf16.msra.mxu0 0
    %8200 = vmatprep.subr.bf16.mxu0 0
    %8201 = vmatpush1.bf16.msra.mxu0 0
    %8202 = vmatprep.subr.bf16.mxu0 0
    %8203 = vmatpush1.bf16.msra.mxu0 0
    %8204 = vmatprep.subr.bf16.mxu0 0
    %8205 = vmatpush1.bf16.msra.mxu0 0
    %8206 = vmatprep.subr.bf16.mxu0 0
    %8207 = vmatpush1.bf16.msra.mxu0 0
    %8208 = vmatprep.subr.bf16.mxu0 0
    %8209 = vmatpush1.bf16.msra.mxu0 0
    %8210 = vmatprep.subr.bf16.mxu0 0
    %8211 = vmatpush1.bf16.msra.mxu0 0
    %8212 = vmatprep.subr.bf16.mxu0 0
    %8213 = vmatpush1.bf16.msra.mxu0 0
    %8214 = vmatprep.subr.bf16.mxu0 0
    %8215 = vmatpush1.bf16.msra.mxu0 0
    %8216 = vmatprep.subr.bf16.mxu0 0
    %8217 = vmatpush1.bf16.msra.mxu0 0
    %8218 = vmatprep.subr.bf16.mxu0 0
    %8219 = vmatpush1.bf16.msra.mxu0 0
    %8220 = vmatprep.mubr.bf16.mxu0 0
    %8221 = vmatmul.mubr.bf16.gmra.mrb[0].mxu0 %v8183
    %v8222 = vpop.f32.mrb[0].mxu0
    %v8223 = vadd.f32 0.0, %v8222
    %v8224 = vpop.f32.mrb[0].mxu0
    %v8225 = vpop.f32.mrb[0].mxu0
    %v8226 = vpop.f32.mrb[0].mxu0
    %8227 = vdwg.mxu0
    %v8228 = vadd.f32 %v8122, %v8223
    %v8229 = vld [vmem:[%s12] sm:$0x1]
    %v8231 = vlaneseq
    %v8232 = vshrl.u32 %v8231, 7
    %v8233 = vsub.s32 0, %v8232
    %v8234 = vrot.slane %v8229, %v8233
    %v8236 = vadd.f32 %v8228, %v8234
    %v8237 = vmax.f32 %v8236, 0.0
    %vm8238 = vcmask 254976
    %8239 = vst.msk [vmem:[#allocation6] sm:$0x3] %vm8238, %v8237
    // Predicated region
    $region54: #{_forward_impl.1} parent=1 // pred_check
      _
    $region55: #{_forward_impl.1} parent=1 // pred_check_branch
      %8241 = sbr.rel (0) target = $region57
    $region56: #{_forward_impl.1} parent=1 // pred_region
      _
    $region57: #{_forward_impl.1} parent=1 // pred_fallthru
      _
    // Predicated region
    $region58: #{_forward_impl.1} parent=1 // pred_check
      _
    $region59: #{_forward_impl.1} parent=1 // pred_check_branch
      %8243 = sbr.rel (0) target = $region61
    $region60: #{_forward_impl.1} parent=1 // pred_region
      %s8245 = ssub.s32 512, 512
      %8246 = vsyncadd [#allocation3], %s8245
      %s8247 = sshll.u32 [#allocation2], 4
      %s8248 = int_to_ptr.vmem [resolvable:$true] %s8247
      %8253 = dma.vmem_to_hbm [thread:$0]  %s8248, 512, %s14, [#allocation3], 128, 128, 8
    $region61: #{_forward_impl.1} parent=1 // pred_fallthru
      _
    // Predicated region
    $region62: #{_forward_impl.1} parent=1 // pred_check
      _
    $region63: #{_forward_impl.1} parent=1 // pred_check_branch
      %8255 = sbr.rel (0) target = $region65
    $region64: #{_forward_impl.1} parent=1 // pred_region
      %s8257 = ssub.s32 128, 128
      %8258 = vsyncadd [#allocation5], %s8257
      %s8260 = sshll.u32 [#allocation4], 4
      %s8261 = int_to_ptr.vmem [resolvable:$true] %s8260
      %8263 = dma.vmem_to_hbm [thread:$0]  %s8261, 128, %s15, [#allocation5]
    $region65: #{_forward_impl.1} parent=1 // pred_fallthru
      _
    // Predicated region
    $region66: #{_forward_impl.1} parent=1 // pred_check
      _
    $region67: #{_forward_impl.1} parent=1 // pred_check_branch
      %8265 = sbr.rel (0) target = $region69
    $region68: #{_forward_impl.1} parent=1 // pred_region
      %s8267 = ssub.s32 32, 32
      %8268 = vsyncadd [#allocation5], %s8267
      %s8270 = sshll.u32 [#allocation6], 4
      %s8271 = int_to_ptr.vmem [resolvable:$true] %s8270
      %8273 = dma.vmem_to_hbm [thread:$0]  %s8271, 32, %s16, [#allocation5]
    $region69: #{_forward_impl.1} parent=1 // pred_fallthru
      _
    // Predicated region
    $region70: #{_forward_impl.1} parent=1 // pred_check
      _
    $region71: #{_forward_impl.1} parent=1 // pred_check_branch
      %8275 = sbr.rel (0) target = $region73
    $region72: #{_forward_impl.1} parent=1 // pred_region
      _
    $region73: #{_forward_impl.1} parent=1 // pred_fallthru
      _
    // Predicated region
    $region74: #{_forward_impl.1} parent=1 // pred_check
      _
    $region75: #{_forward_impl.1} parent=1 // pred_check_branch
      %8277 = sbr.rel (0) target = $region77
    $region76: #{_forward_impl.1} parent=1 // pred_region
      %8278 = dma.done [#allocation3], 512
    $region77: #{_forward_impl.1} parent=1 // pred_fallthru
      _
    // Predicated region
    $region78: #{_forward_impl.1} parent=1 // pred_check
      _
    $region79: #{_forward_impl.1} parent=1 // pred_check_branch
      %8280 = sbr.rel (0) target = $region81
    $region80: #{_forward_impl.1} parent=1 // pred_region
      %8281 = dma.done [#allocation5], 128
    $region81: #{_forward_impl.1} parent=1 // pred_fallthru
      _
    // Predicated region
    $region82: #{_forward_impl.1} parent=1 // pred_check
      _
    $region83: #{_forward_impl.1} parent=1 // pred_check_branch
      %8283 = sbr.rel (0) target = $region85
    $region84: #{_forward_impl.1} parent=1 // pred_region
      %8284 = dma.done [#allocation5], 32
    $region85: #{_forward_impl.1} parent=1 // pred_fallthru
      _
    %8285 = vsyncpa [#allocation3], 1
    %8286 = vsyncpa [#allocation5], 1

</llo_original>
